<compile_context>
chip_gen: v7x
topology: tpu7x:2x2x1
jax: 0.10.0
libtpu: 0.0.40
codegen_flags: <defaults>
</compile_context>

<pallas_src>
import functools

import jax
import jax.numpy as jnp
from jax.experimental import pallas as pl
from jax.experimental.pallas import tpu as pltpu


def _round_bf16(a):
    """Round f32 values onto the bf16 grid (keeps dtype f32)."""
    return a.astype(jnp.bfloat16).astype(jnp.float32)


# ----------------------------------------------------------------------------
# Fused kernel: reflect-pad + conv3x3 + InstanceNorm + ReLU
#               -> reflect-pad + conv7x7 + Tanh         (one batch image/step)
# ----------------------------------------------------------------------------
def _fused_head_kernel(x_ref, w1_ref, b1_ref, w2_ref, b2_ref, o_ref,
                       xpad_ref, col1_ref, hpad_ref, col2_ref,
                       *, H, W, Cin, Cmid, Cout, ks1, ks2, eps):
    p1, p2 = ks1 // 2, ks2 // 2
    Hp1, Wp1 = H + 2 * p1, W + 2 * p1
    Hp2, Wp2 = H + 2 * p2, W + 2 * p2
    L1, L2 = Hp1 * Wp1, Hp2 * Wp2

    def _reflect(i, n):  # PyTorch ReflectionPad index map (no edge repeat)
        return -i if i < 0 else (2 * (n - 1) - i if i >= n else i)

    def _pad_row(row, p):
        # row: (C, W) -> (C, W + 2p); reflect padding along the lane axis.
        left = [row[:, p - i:p - i + 1] for i in range(p)]
        right = [row[:, W - 2 - i:W - 1 - i] for i in range(p)]
        return jnp.concatenate(left + [row] + right, axis=1)

    # ---------------- layer 1: reflect(1) + conv3x3 + InstanceNorm + ReLU ----
    xf = x_ref[0]                                          # (Cin, H*W) f32
    # Build the reflect-padded image directly in flattened (C, Hp*Wp) form.
    for r in range(Hp1):
        src = _reflect(r - p1, H)
        xpad_ref[:, r * Wp1:(r + 1) * Wp1] = _pad_row(
            xf[:, src * W:(src + 1) * W], p1)
    xpad = xpad_ref[...]                                   # (Cin, L1)
    # im2col via contiguous lane slices of the flattened padded image: the
    # column block of tap (dy,dx) is xpad shifted left by dy*Wp1+dx.  Unwritten
    # tails only feed output columns that lie outside the valid H*W region.
    for dy in range(ks1):
        for dx in range(ks1):
            off = dy * Wp1 + dx
            t = dy * ks1 + dx
            col1_ref[t * Cin:(t + 1) * Cin, 0:L1 - off] = xpad[:, off:]
    y1 = jnp.dot(w1_ref[...], col1_ref[...],               # one K=9*Cin matmul
                 preferred_element_type=jnp.float32)        # (Cmid, L1)
    y1 = y1 + b1_ref[...]   # cancels under InstanceNorm; kept for fidelity
    # Gather the valid output columns into a lane-dense (Cmid, H*W) block.
    h = jnp.concatenate([y1[:, r * Wp1:r * Wp1 + W] for r in range(H)], axis=1)
    mean = jnp.mean(h, axis=1, keepdims=True)
    cen = h - mean
    var = jnp.mean(cen * cen, axis=1, keepdims=True)       # biased variance
    h = jnp.maximum(cen * jax.lax.rsqrt(var + eps), 0.0)   # (Cmid, H*W) f32

    # ---------------- layer 2: reflect(3) + conv7x7 + Tanh (bf16 MXU) --------
    for r in range(Hp2):
        src = _reflect(r - p2, H)
        hpad_ref[:, r * Wp2:(r + 1) * Wp2] = _pad_row(
            h[:, src * W:(src + 1) * W], p2).astype(jnp.bfloat16)
    hpad = hpad_ref[...]                                   # (Cmid, L2) bf16
    for dy in range(ks2):
        for dx in range(ks2):
            off = dy * Wp2 + dx
            t = dy * ks2 + dx
            col2_ref[t * Cmid:(t + 1) * Cmid, 0:L2 - off] = hpad[:, off:]
    y2 = jnp.dot(w2_ref[...], col2_ref[...],               # one K=49*ngf matmul
                 preferred_element_type=jnp.float32)        # (Cout, L2) f32
    y2 = y2 + b2_ref[...]
    out = jnp.concatenate([y2[:, r * Wp2:r * Wp2 + W] for r in range(H)], axis=1)
    o_ref[0] = jnp.tanh(out)                               # (Cout, H*W) lane-dense


# ----------------------------------------------------------------------------
# Wrapper
# ----------------------------------------------------------------------------
@jax.jit
def image_generator_forward(x_nchw, params):
    """ImageGenerator forward. Input/output are NCHW (PyTorch layout)."""
    N, Cin, H, W = x_nchw.shape
    w1, b1 = params["w1"], params["b1"]          # (3,3,Cin,ngf), (ngf,)
    w2, b2 = params["w2"], params["b2"]          # (7,7,ngf,3),  (3,)
    ks1, Cmid = w1.shape[0], w1.shape[-1]
    ks2, Cout = w2.shape[0], w2.shape[-1]
    p1, p2 = ks1 // 2, ks2 // 2
    assert H > p2 and W > p2, "reflection padding requires H, W > ks//2"
    L1 = (H + 2 * p1) * (W + 2 * p1)
    L2 = (H + 2 * p2) * (W + 2 * p2)

    # im2col weight layout: (Cout, ks*ks*Cin); row order matches the col buffer.
    w1f = _round_bf16(jnp.transpose(w1, (3, 0, 1, 2)).reshape(Cmid, ks1 * ks1 * Cin))
    w2f = jnp.transpose(w2, (3, 0, 1, 2)).reshape(Cout, ks2 * ks2 * Cmid).astype(jnp.bfloat16)
    b1c = b1.reshape(Cmid, 1).astype(jnp.float32)
    b2c = b2.reshape(Cout, 1).astype(jnp.float32)
    # Free metadata reshape NCHW -> (N, C, H*W); values rounded to the bf16
    # grid so the kernel's MXU products are exact regardless of MXU precision.
    xf = _round_bf16(x_nchw).reshape(N, Cin, H * W)

    kern = functools.partial(_fused_head_kernel, H=H, W=W, Cin=Cin, Cmid=Cmid,
                             Cout=Cout, ks1=ks1, ks2=ks2, eps=1e-5)
    out = pl.pallas_call(
        kern,
        out_shape=jax.ShapeDtypeStruct((N, Cout, H * W), jnp.float32),
        grid_spec=pltpu.PrefetchScalarGridSpec(
            num_scalar_prefetch=0,
            grid=(N,),  # one grid step per batch image
            in_specs=[
                pl.BlockSpec((1, Cin, H * W), lambda n: (n, 0, 0)),
                pl.BlockSpec((Cmid, ks1 * ks1 * Cin), lambda n: (0, 0)),
                pl.BlockSpec((Cmid, 1), lambda n: (0, 0)),
                pl.BlockSpec((Cout, ks2 * ks2 * Cmid), lambda n: (0, 0)),
                pl.BlockSpec((Cout, 1), lambda n: (0, 0)),
            ],
            out_specs=pl.BlockSpec((1, Cout, H * W), lambda n: (n, 0, 0)),
            scratch_shapes=[
                pltpu.VMEM((Cin, L1), jnp.float32),                # padded input (flat)
                pltpu.VMEM((ks1 * ks1 * Cin, L1), jnp.float32),     # layer-1 im2col
                pltpu.VMEM((Cmid, L2), jnp.bfloat16),               # padded hidden (flat)
                pltpu.VMEM((ks2 * ks2 * Cmid, L2), jnp.bfloat16),   # layer-2 im2col
            ]),
        compiler_params=pltpu.CompilerParams(
            dimension_semantics=("parallel",),
            vmem_limit_bytes=32 * 1024 * 1024),
    )(xf, w1f, b1c, w2f, b2c)
    return out.reshape(N, Cout, H, W)   # free reshape (already channel-major)


def init_params(key, in_channels, ngf):
    """Deterministic synthetic parameters (shapes match the PyTorch module)."""
    k1, k2, k3, k4 = jax.random.split(key, 4)
    return dict(
        w1=jax.random.normal(k1, (3, 3, in_channels, ngf), jnp.float32) * 0.1,
        b1=jax.random.normal(k2, (ngf,), jnp.float32) * 0.1,
        w2=jax.random.normal(k3, (7, 7, ngf, 3), jnp.float32) * 0.05,
        b2=jax.random.normal(k4, (3,), jnp.float32) * 0.05,
    )


# ----------------------------------------------------------------------------
# Pure-JAX reference (mirrors the kernel's bf16 rounding of matmul operands)
# ----------------------------------------------------------------------------
def _ref_forward(x_nchw, params):
    x = jnp.transpose(_round_bf16(x_nchw), (0, 2, 3, 1))

    def conv(inp, w, b, ks):
        p = ks // 2
        xp = jnp.pad(inp, ((0, 0), (p, p), (p, p), (0, 0)), mode="reflect")
        y = jax.lax.conv_general_dilated(
            xp, w, (1, 1), "VALID",
            dimension_numbers=("NHWC", "HWIO", "NHWC"),
            precision=jax.lax.Precision.HIGHEST)
        return y + b

    h = conv(x, _round_bf16(params["w1"]), params["b1"], 3)
    mean = jnp.mean(h, axis=(1, 2), keepdims=True)
    var = jnp.mean((h - mean) ** 2, axis=(1, 2), keepdims=True)
    h = jnp.maximum((h - mean) * jax.lax.rsqrt(var + 1e-5), 0.0)
    h = _round_bf16(h)                      # kernel feeds layer 2 as bf16
    y = jnp.tanh(conv(h, _round_bf16(params["w2"]), params["b2"], 7))
    return jnp.transpose(y, (0, 3, 1, 2))


# ----------------------------------------------------------------------------
# Main
# ----------------------------------------------------------------------------
if __name__ == "__main__":
    N, in_channels, H, W = 2, 4, 16, 16
    ngf = 32

    key = jax.random.PRNGKey(0)
    kx, kp = jax.random.split(key)
    x = jax.random.normal(kx, (N, in_channels, H, W), jnp.float32)
    params = init_params(kp, in_channels, ngf)

    out = jax.block_until_ready(image_generator_forward(x, params))
    assert out.shape == (N, 3, H, W), out.shape

    ref = jax.block_until_ready(_ref_forward(x, params))
    max_err = float(jnp.max(jnp.abs(out - ref)))
    assert jnp.allclose(out, ref, atol=1e-2, rtol=1e-2), max_err

    print("KERNEL_OK")
</pallas_src>

<mosaic_0001>
module attributes {stable_mosaic.version = 11 : i64} {
  func.func @_fused_head_kernel(%arg0: i32, %arg1: memref<1x4x256xf32, #tpu.memory_space<vmem>>, %arg2: memref<32x36xf32, #tpu.memory_space<vmem>>, %arg3: memref<32x1xf32, #tpu.memory_space<vmem>>, %arg4: memref<3x1568xbf16, #tpu.memory_space<vmem>>, %arg5: memref<3x1xf32, #tpu.memory_space<vmem>>, %arg6: memref<1x3x256xf32, #tpu.memory_space<vmem>>, %arg7: memref<4x324xf32, #tpu.memory_space<vmem>>, %arg8: memref<36x324xf32, #tpu.memory_space<vmem>>, %arg9: memref<32x484xbf16, #tpu.memory_space<vmem>>, %arg10: memref<1568x484xbf16, #tpu.memory_space<vmem>>) attributes {dimension_semantics = [#tpu.dimension_semantics<parallel>], iteration_bounds = array<i64: 2>, scalar_prefetch = 0 : i64, scratch_operands = 4 : i64, tpu.core_type = #tpu.core_type<tc>, window_params = [{transform_indices = @transform_0, window_bounds = array<i64: 1, 4, 256>}, {pipeline_mode = #tpu.pipeline_mode<synchronous>, transform_indices = @transform_1, window_bounds = array<i64: 32, 36>}, {pipeline_mode = #tpu.pipeline_mode<synchronous>, transform_indices = @transform_2, window_bounds = array<i64: 32, 1>}, {pipeline_mode = #tpu.pipeline_mode<synchronous>, transform_indices = @transform_3, window_bounds = array<i64: 3, 1568>}, {pipeline_mode = #tpu.pipeline_mode<synchronous>, transform_indices = @transform_4, window_bounds = array<i64: 3, 1>}, {transform_indices = @transform_5, window_bounds = array<i64: 1, 3, 256>}]} {
    %c0 = arith.constant 0 : index
    %c0_0 = arith.constant 0 : index
    %c0_1 = arith.constant 0 : index
    %0 = vector.load %arg1[%c0, %c0_0, %c0_1] : memref<1x4x256xf32, #tpu.memory_space<vmem>>, vector<1x4x256xf32>
    %1 = vector.shape_cast %0 : vector<1x4x256xf32> to vector<4x256xf32>
    %2 = vector.extract_strided_slice %1 {offsets = [0, 16], sizes = [4, 16], strides = [1, 1]} : vector<4x256xf32> to vector<4x16xf32>
    %3 = vector.extract_strided_slice %2 {offsets = [0, 1], sizes = [4, 1], strides = [1, 1]} : vector<4x16xf32> to vector<4x1xf32>
    %4 = vector.extract_strided_slice %2 {offsets = [0, 14], sizes = [4, 1], strides = [1, 1]} : vector<4x16xf32> to vector<4x1xf32>
    %5 = tpu.concatenate %3, %2, %4 in 1 : vector<4x1xf32>, vector<4x16xf32>, vector<4x1xf32> -> vector<4x18xf32>
    %c0_2 = arith.constant 0 : index
    %c0_3 = arith.constant 0 : index
    %6 = vector.load %arg7[%c0_2, %c0_3] : memref<4x324xf32, #tpu.memory_space<vmem>>, vector<4x18xf32>
    tpu.vector_store %arg7[%c0_2, %c0_3], %5 {strides = array<i32>} : memref<4x324xf32, #tpu.memory_space<vmem>>, vector<4x18xf32>,
    %7 = vector.extract_strided_slice %1 {offsets = [0, 0], sizes = [4, 16], strides = [1, 1]} : vector<4x256xf32> to vector<4x16xf32>
    %8 = vector.extract_strided_slice %7 {offsets = [0, 1], sizes = [4, 1], strides = [1, 1]} : vector<4x16xf32> to vector<4x1xf32>
    %9 = vector.extract_strided_slice %7 {offsets = [0, 14], sizes = [4, 1], strides = [1, 1]} : vector<4x16xf32> to vector<4x1xf32>
    %10 = tpu.concatenate %8, %7, %9 in 1 : vector<4x1xf32>, vector<4x16xf32>, vector<4x1xf32> -> vector<4x18xf32>
    %c0_4 = arith.constant 0 : index
    %c18 = arith.constant 18 : index
    %11 = vector.load %arg7[%c0_4, %c18] : memref<4x324xf32, #tpu.memory_space<vmem>>, vector<4x18xf32>
    tpu.vector_store %arg7[%c0_4, %c18], %10 {strides = array<i32>} : memref<4x324xf32, #tpu.memory_space<vmem>>, vector<4x18xf32>,
    %12 = vector.extract_strided_slice %1 {offsets = [0, 16], sizes = [4, 16], strides = [1, 1]} : vector<4x256xf32> to vector<4x16xf32>
    %13 = vector.extract_strided_slice %12 {offsets = [0, 1], sizes = [4, 1], strides = [1, 1]} : vector<4x16xf32> to vector<4x1xf32>
    %14 = vector.extract_strided_slice %12 {offsets = [0, 14], sizes = [4, 1], strides = [1, 1]} : vector<4x16xf32> to vector<4x1xf32>
    %15 = tpu.concatenate %13, %12, %14 in 1 : vector<4x1xf32>, vector<4x16xf32>, vector<4x1xf32> -> vector<4x18xf32>
    %c0_5 = arith.constant 0 : index
    %c36 = arith.constant 36 : index
    %16 = vector.load %arg7[%c0_5, %c36] : memref<4x324xf32, #tpu.memory_space<vmem>>, vector<4x18xf32>
    tpu.vector_store %arg7[%c0_5, %c36], %15 {strides = array<i32>} : memref<4x324xf32, #tpu.memory_space<vmem>>, vector<4x18xf32>,
    %17 = vector.extract_strided_slice %1 {offsets = [0, 32], sizes = [4, 16], strides = [1, 1]} : vector<4x256xf32> to vector<4x16xf32>
    %18 = vector.extract_strided_slice %17 {offsets = [0, 1], sizes = [4, 1], strides = [1, 1]} : vector<4x16xf32> to vector<4x1xf32>
    %19 = vector.extract_strided_slice %17 {offsets = [0, 14], sizes = [4, 1], strides = [1, 1]} : vector<4x16xf32> to vector<4x1xf32>
    %20 = tpu.concatenate %18, %17, %19 in 1 : vector<4x1xf32>, vector<4x16xf32>, vector<4x1xf32> -> vector<4x18xf32>
    %c0_6 = arith.constant 0 : index
    %c54 = arith.constant 54 : index
    %21 = vector.load %arg7[%c0_6, %c54] : memref<4x324xf32, #tpu.memory_space<vmem>>, vector<4x18xf32>
    tpu.vector_store %arg7[%c0_6, %c54], %20 {strides = array<i32>} : memref<4x324xf32, #tpu.memory_space<vmem>>, vector<4x18xf32>,
    %22 = vector.extract_strided_slice %1 {offsets = [0, 48], sizes = [4, 16], strides = [1, 1]} : vector<4x256xf32> to vector<4x16xf32>
    %23 = vector.extract_strided_slice %22 {offsets = [0, 1], sizes = [4, 1], strides = [1, 1]} : vector<4x16xf32> to vector<4x1xf32>
    %24 = vector.extract_strided_slice %22 {offsets = [0, 14], sizes = [4, 1], strides = [1, 1]} : vector<4x16xf32> to vector<4x1xf32>
    %25 = tpu.concatenate %23, %22, %24 in 1 : vector<4x1xf32>, vector<4x16xf32>, vector<4x1xf32> -> vector<4x18xf32>
    %c0_7 = arith.constant 0 : index
    %c72 = arith.constant 72 : index
    %26 = vector.load %arg7[%c0_7, %c72] : memref<4x324xf32, #tpu.memory_space<vmem>>, vector<4x18xf32>
    tpu.vector_store %arg7[%c0_7, %c72], %25 {strides = array<i32>} : memref<4x324xf32, #tpu.memory_space<vmem>>, vector<4x18xf32>,
    %27 = vector.extract_strided_slice %1 {offsets = [0, 64], sizes = [4, 16], strides = [1, 1]} : vector<4x256xf32> to vector<4x16xf32>
    %28 = vector.extract_strided_slice %27 {offsets = [0, 1], sizes = [4, 1], strides = [1, 1]} : vector<4x16xf32> to vector<4x1xf32>
    %29 = vector.extract_strided_slice %27 {offsets = [0, 14], sizes = [4, 1], strides = [1, 1]} : vector<4x16xf32> to vector<4x1xf32>
    %30 = tpu.concatenate %28, %27, %29 in 1 : vector<4x1xf32>, vector<4x16xf32>, vector<4x1xf32> -> vector<4x18xf32>
    %c0_8 = arith.constant 0 : index
    %c90 = arith.constant 90 : index
    %31 = vector.load %arg7[%c0_8, %c90] : memref<4x324xf32, #tpu.memory_space<vmem>>, vector<4x18xf32>
    tpu.vector_store %arg7[%c0_8, %c90], %30 {strides = array<i32>} : memref<4x324xf32, #tpu.memory_space<vmem>>, vector<4x18xf32>,
    %32 = vector.extract_strided_slice %1 {offsets = [0, 80], sizes = [4, 16], strides = [1, 1]} : vector<4x256xf32> to vector<4x16xf32>
    %33 = vector.extract_strided_slice %32 {offsets = [0, 1], sizes = [4, 1], strides = [1, 1]} : vector<4x16xf32> to vector<4x1xf32>
    %34 = vector.extract_strided_slice %32 {offsets = [0, 14], sizes = [4, 1], strides = [1, 1]} : vector<4x16xf32> to vector<4x1xf32>
    %35 = tpu.concatenate %33, %32, %34 in 1 : vector<4x1xf32>, vector<4x16xf32>, vector<4x1xf32> -> vector<4x18xf32>
    %c0_9 = arith.constant 0 : index
    %c108 = arith.constant 108 : index
    %36 = vector.load %arg7[%c0_9, %c108] : memref<4x324xf32, #tpu.memory_space<vmem>>, vector<4x18xf32>
    tpu.vector_store %arg7[%c0_9, %c108], %35 {strides = array<i32>} : memref<4x324xf32, #tpu.memory_space<vmem>>, vector<4x18xf32>,
    %37 = vector.extract_strided_slice %1 {offsets = [0, 96], sizes = [4, 16], strides = [1, 1]} : vector<4x256xf32> to vector<4x16xf32>
    %38 = vector.extract_strided_slice %37 {offsets = [0, 1], sizes = [4, 1], strides = [1, 1]} : vector<4x16xf32> to vector<4x1xf32>
    %39 = vector.extract_strided_slice %37 {offsets = [0, 14], sizes = [4, 1], strides = [1, 1]} : vector<4x16xf32> to vector<4x1xf32>
    %40 = tpu.concatenate %38, %37, %39 in 1 : vector<4x1xf32>, vector<4x16xf32>, vector<4x1xf32> -> vector<4x18xf32>
    %c0_10 = arith.constant 0 : index
    %c126 = arith.constant 126 : index
    %41 = vector.load %arg7[%c0_10, %c126] : memref<4x324xf32, #tpu.memory_space<vmem>>, vector<4x18xf32>
    tpu.vector_store %arg7[%c0_10, %c126], %40 {strides = array<i32>} : memref<4x324xf32, #tpu.memory_space<vmem>>, vector<4x18xf32>,
    %42 = vector.extract_strided_slice %1 {offsets = [0, 112], sizes = [4, 16], strides = [1, 1]} : vector<4x256xf32> to vector<4x16xf32>
    %43 = vector.extract_strided_slice %42 {offsets = [0, 1], sizes = [4, 1], strides = [1, 1]} : vector<4x16xf32> to vector<4x1xf32>
    %44 = vector.extract_strided_slice %42 {offsets = [0, 14], sizes = [4, 1], strides = [1, 1]} : vector<4x16xf32> to vector<4x1xf32>
    %45 = tpu.concatenate %43, %42, %44 in 1 : vector<4x1xf32>, vector<4x16xf32>, vector<4x1xf32> -> vector<4x18xf32>
    %c0_11 = arith.constant 0 : index
    %c144 = arith.constant 144 : index
    %46 = vector.load %arg7[%c0_11, %c144] : memref<4x324xf32, #tpu.memory_space<vmem>>, vector<4x18xf32>
    tpu.vector_store %arg7[%c0_11, %c144], %45 {strides = array<i32>} : memref<4x324xf32, #tpu.memory_space<vmem>>, vector<4x18xf32>,
    %47 = vector.extract_strided_slice %1 {offsets = [0, 128], sizes = [4, 16], strides = [1, 1]} : vector<4x256xf32> to vector<4x16xf32>
    %48 = vector.extract_strided_slice %47 {offsets = [0, 1], sizes = [4, 1], strides = [1, 1]} : vector<4x16xf32> to vector<4x1xf32>
    %49 = vector.extract_strided_slice %47 {offsets = [0, 14], sizes = [4, 1], strides = [1, 1]} : vector<4x16xf32> to vector<4x1xf32>
    %50 = tpu.concatenate %48, %47, %49 in 1 : vector<4x1xf32>, vector<4x16xf32>, vector<4x1xf32> -> vector<4x18xf32>
    %c0_12 = arith.constant 0 : index
    %c162 = arith.constant 162 : index
    %51 = vector.load %arg7[%c0_12, %c162] : memref<4x324xf32, #tpu.memory_space<vmem>>, vector<4x18xf32>
    tpu.vector_store %arg7[%c0_12, %c162], %50 {strides = array<i32>} : memref<4x324xf32, #tpu.memory_space<vmem>>, vector<4x18xf32>,
    %52 = vector.extract_strided_slice %1 {offsets = [0, 144], sizes = [4, 16], strides = [1, 1]} : vector<4x256xf32> to vector<4x16xf32>
    %53 = vector.extract_strided_slice %52 {offsets = [0, 1], sizes = [4, 1], strides = [1, 1]} : vector<4x16xf32> to vector<4x1xf32>
    %54 = vector.extract_strided_slice %52 {offsets = [0, 14], sizes = [4, 1], strides = [1, 1]} : vector<4x16xf32> to vector<4x1xf32>
    %55 = tpu.concatenate %53, %52, %54 in 1 : vector<4x1xf32>, vector<4x16xf32>, vector<4x1xf32> -> vector<4x18xf32>
    %c0_13 = arith.constant 0 : index
    %c180 = arith.constant 180 : index
    %56 = vector.load %arg7[%c0_13, %c180] : memref<4x324xf32, #tpu.memory_space<vmem>>, vector<4x18xf32>
    tpu.vector_store %arg7[%c0_13, %c180], %55 {strides = array<i32>} : memref<4x324xf32, #tpu.memory_space<vmem>>, vector<4x18xf32>,
    %57 = vector.extract_strided_slice %1 {offsets = [0, 160], sizes = [4, 16], strides = [1, 1]} : vector<4x256xf32> to vector<4x16xf32>
    %58 = vector.extract_strided_slice %57 {offsets = [0, 1], sizes = [4, 1], strides = [1, 1]} : vector<4x16xf32> to vector<4x1xf32>
    %59 = vector.extract_strided_slice %57 {offsets = [0, 14], sizes = [4, 1], strides = [1, 1]} : vector<4x16xf32> to vector<4x1xf32>
    %60 = tpu.concatenate %58, %57, %59 in 1 : vector<4x1xf32>, vector<4x16xf32>, vector<4x1xf32> -> vector<4x18xf32>
    %c0_14 = arith.constant 0 : index
    %c198 = arith.constant 198 : index
    %61 = vector.load %arg7[%c0_14, %c198] : memref<4x324xf32, #tpu.memory_space<vmem>>, vector<4x18xf32>
    tpu.vector_store %arg7[%c0_14, %c198], %60 {strides = array<i32>} : memref<4x324xf32, #tpu.memory_space<vmem>>, vector<4x18xf32>,
    %62 = vector.extract_strided_slice %1 {offsets = [0, 176], sizes = [4, 16], strides = [1, 1]} : vector<4x256xf32> to vector<4x16xf32>
    %63 = vector.extract_strided_slice %62 {offsets = [0, 1], sizes = [4, 1], strides = [1, 1]} : vector<4x16xf32> to vector<4x1xf32>
    %64 = vector.extract_strided_slice %62 {offsets = [0, 14], sizes = [4, 1], strides = [1, 1]} : vector<4x16xf32> to vector<4x1xf32>
    %65 = tpu.concatenate %63, %62, %64 in 1 : vector<4x1xf32>, vector<4x16xf32>, vector<4x1xf32> -> vector<4x18xf32>
    %c0_15 = arith.constant 0 : index
    %c216 = arith.constant 216 : index
    %66 = vector.load %arg7[%c0_15, %c216] : memref<4x324xf32, #tpu.memory_space<vmem>>, vector<4x18xf32>
    tpu.vector_store %arg7[%c0_15, %c216], %65 {strides = array<i32>} : memref<4x324xf32, #tpu.memory_space<vmem>>, vector<4x18xf32>,
    %67 = vector.extract_strided_slice %1 {offsets = [0, 192], sizes = [4, 16], strides = [1, 1]} : vector<4x256xf32> to vector<4x16xf32>
    %68 = vector.extract_strided_slice %67 {offsets = [0, 1], sizes = [4, 1], strides = [1, 1]} : vector<4x16xf32> to vector<4x1xf32>
    %69 = vector.extract_strided_slice %67 {offsets = [0, 14], sizes = [4, 1], strides = [1, 1]} : vector<4x16xf32> to vector<4x1xf32>
    %70 = tpu.concatenate %68, %67, %69 in 1 : vector<4x1xf32>, vector<4x16xf32>, vector<4x1xf32> -> vector<4x18xf32>
    %c0_16 = arith.constant 0 : index
    %c234 = arith.constant 234 : index
    %71 = vector.load %arg7[%c0_16, %c234] : memref<4x324xf32, #tpu.memory_space<vmem>>, vector<4x18xf32>
    tpu.vector_store %arg7[%c0_16, %c234], %70 {strides = array<i32>} : memref<4x324xf32, #tpu.memory_space<vmem>>, vector<4x18xf32>,
    %72 = vector.extract_strided_slice %1 {offsets = [0, 208], sizes = [4, 16], strides = [1, 1]} : vector<4x256xf32> to vector<4x16xf32>
    %73 = vector.extract_strided_slice %72 {offsets = [0, 1], sizes = [4, 1], strides = [1, 1]} : vector<4x16xf32> to vector<4x1xf32>
    %74 = vector.extract_strided_slice %72 {offsets = [0, 14], sizes = [4, 1], strides = [1, 1]} : vector<4x16xf32> to vector<4x1xf32>
    %75 = tpu.concatenate %73, %72, %74 in 1 : vector<4x1xf32>, vector<4x16xf32>, vector<4x1xf32> -> vector<4x18xf32>
    %c0_17 = arith.constant 0 : index
    %c252 = arith.constant 252 : index
    %76 = vector.load %arg7[%c0_17, %c252] : memref<4x324xf32, #tpu.memory_space<vmem>>, vector<4x18xf32>
    tpu.vector_store %arg7[%c0_17, %c252], %75 {strides = array<i32>} : memref<4x324xf32, #tpu.memory_space<vmem>>, vector<4x18xf32>,
    %77 = vector.extract_strided_slice %1 {offsets = [0, 224], sizes = [4, 16], strides = [1, 1]} : vector<4x256xf32> to vector<4x16xf32>
    %78 = vector.extract_strided_slice %77 {offsets = [0, 1], sizes = [4, 1], strides = [1, 1]} : vector<4x16xf32> to vector<4x1xf32>
    %79 = vector.extract_strided_slice %77 {offsets = [0, 14], sizes = [4, 1], strides = [1, 1]} : vector<4x16xf32> to vector<4x1xf32>
    %80 = tpu.concatenate %78, %77, %79 in 1 : vector<4x1xf32>, vector<4x16xf32>, vector<4x1xf32> -> vector<4x18xf32>
    %c0_18 = arith.constant 0 : index
    %c270 = arith.constant 270 : index
    %81 = vector.load %arg7[%c0_18, %c270] : memref<4x324xf32, #tpu.memory_space<vmem>>, vector<4x18xf32>
    tpu.vector_store %arg7[%c0_18, %c270], %80 {strides = array<i32>} : memref<4x324xf32, #tpu.memory_space<vmem>>, vector<4x18xf32>,
    %82 = vector.extract_strided_slice %1 {offsets = [0, 240], sizes = [4, 16], strides = [1, 1]} : vector<4x256xf32> to vector<4x16xf32>
    %83 = vector.extract_strided_slice %82 {offsets = [0, 1], sizes = [4, 1], strides = [1, 1]} : vector<4x16xf32> to vector<4x1xf32>
    %84 = vector.extract_strided_slice %82 {offsets = [0, 14], sizes = [4, 1], strides = [1, 1]} : vector<4x16xf32> to vector<4x1xf32>
    %85 = tpu.concatenate %83, %82, %84 in 1 : vector<4x1xf32>, vector<4x16xf32>, vector<4x1xf32> -> vector<4x18xf32>
    %c0_19 = arith.constant 0 : index
    %c288 = arith.constant 288 : index
    %86 = vector.load %arg7[%c0_19, %c288] : memref<4x324xf32, #tpu.memory_space<vmem>>, vector<4x18xf32>
    tpu.vector_store %arg7[%c0_19, %c288], %85 {strides = array<i32>} : memref<4x324xf32, #tpu.memory_space<vmem>>, vector<4x18xf32>,
    %87 = vector.extract_strided_slice %1 {offsets = [0, 224], sizes = [4, 16], strides = [1, 1]} : vector<4x256xf32> to vector<4x16xf32>
    %88 = vector.extract_strided_slice %87 {offsets = [0, 1], sizes = [4, 1], strides = [1, 1]} : vector<4x16xf32> to vector<4x1xf32>
    %89 = vector.extract_strided_slice %87 {offsets = [0, 14], sizes = [4, 1], strides = [1, 1]} : vector<4x16xf32> to vector<4x1xf32>
    %90 = tpu.concatenate %88, %87, %89 in 1 : vector<4x1xf32>, vector<4x16xf32>, vector<4x1xf32> -> vector<4x18xf32>
    %c0_20 = arith.constant 0 : index
    %c306 = arith.constant 306 : index
    %91 = vector.load %arg7[%c0_20, %c306] : memref<4x324xf32, #tpu.memory_space<vmem>>, vector<4x18xf32>
    tpu.vector_store %arg7[%c0_20, %c306], %90 {strides = array<i32>} : memref<4x324xf32, #tpu.memory_space<vmem>>, vector<4x18xf32>,
    %c0_21 = arith.constant 0 : index
    %c0_22 = arith.constant 0 : index
    %92 = vector.load %arg7[%c0_21, %c0_22] : memref<4x324xf32, #tpu.memory_space<vmem>>, vector<4x324xf32>
    %c0_23 = arith.constant 0 : index
    %c0_24 = arith.constant 0 : index
    %93 = vector.load %arg8[%c0_23, %c0_24] : memref<36x324xf32, #tpu.memory_space<vmem>>, vector<4x324xf32>
    tpu.vector_store %arg8[%c0_23, %c0_24], %92 {strides = array<i32>} : memref<36x324xf32, #tpu.memory_space<vmem>>, vector<4x324xf32>,
    %94 = vector.extract_strided_slice %92 {offsets = [0, 1], sizes = [4, 323], strides = [1, 1]} : vector<4x324xf32> to vector<4x323xf32>
    %c4 = arith.constant 4 : index
    %c0_25 = arith.constant 0 : index
    %95 = vector.load %arg8[%c4, %c0_25] : memref<36x324xf32, #tpu.memory_space<vmem>>, vector<4x323xf32>
    tpu.vector_store %arg8[%c4, %c0_25], %94 {strides = array<i32>} : memref<36x324xf32, #tpu.memory_space<vmem>>, vector<4x323xf32>,
    %96 = vector.extract_strided_slice %92 {offsets = [0, 2], sizes = [4, 322], strides = [1, 1]} : vector<4x324xf32> to vector<4x322xf32>
    %c8 = arith.constant 8 : index
    %c0_26 = arith.constant 0 : index
    %97 = vector.load %arg8[%c8, %c0_26] : memref<36x324xf32, #tpu.memory_space<vmem>>, vector<4x322xf32>
    tpu.vector_store %arg8[%c8, %c0_26], %96 {strides = array<i32>} : memref<36x324xf32, #tpu.memory_space<vmem>>, vector<4x322xf32>,
    %98 = vector.extract_strided_slice %92 {offsets = [0, 18], sizes = [4, 306], strides = [1, 1]} : vector<4x324xf32> to vector<4x306xf32>
    %c12 = arith.constant 12 : index
    %c0_27 = arith.constant 0 : index
    %99 = vector.load %arg8[%c12, %c0_27] : memref<36x324xf32, #tpu.memory_space<vmem>>, vector<4x306xf32>
    tpu.vector_store %arg8[%c12, %c0_27], %98 {strides = array<i32>} : memref<36x324xf32, #tpu.memory_space<vmem>>, vector<4x306xf32>,
    %100 = vector.extract_strided_slice %92 {offsets = [0, 19], sizes = [4, 305], strides = [1, 1]} : vector<4x324xf32> to vector<4x305xf32>
    %c16 = arith.constant 16 : index
    %c0_28 = arith.constant 0 : index
    %101 = vector.load %arg8[%c16, %c0_28] : memref<36x324xf32, #tpu.memory_space<vmem>>, vector<4x305xf32>
    tpu.vector_store %arg8[%c16, %c0_28], %100 {strides = array<i32>} : memref<36x324xf32, #tpu.memory_space<vmem>>, vector<4x305xf32>,
    %102 = vector.extract_strided_slice %92 {offsets = [0, 20], sizes = [4, 304], strides = [1, 1]} : vector<4x324xf32> to vector<4x304xf32>
    %c20 = arith.constant 20 : index
    %c0_29 = arith.constant 0 : index
    %103 = vector.load %arg8[%c20, %c0_29] : memref<36x324xf32, #tpu.memory_space<vmem>>, vector<4x304xf32>
    tpu.vector_store %arg8[%c20, %c0_29], %102 {strides = array<i32>} : memref<36x324xf32, #tpu.memory_space<vmem>>, vector<4x304xf32>,
    %104 = vector.extract_strided_slice %92 {offsets = [0, 36], sizes = [4, 288], strides = [1, 1]} : vector<4x324xf32> to vector<4x288xf32>
    %c24 = arith.constant 24 : index
    %c0_30 = arith.constant 0 : index
    %105 = vector.load %arg8[%c24, %c0_30] : memref<36x324xf32, #tpu.memory_space<vmem>>, vector<4x288xf32>
    tpu.vector_store %arg8[%c24, %c0_30], %104 {strides = array<i32>} : memref<36x324xf32, #tpu.memory_space<vmem>>, vector<4x288xf32>,
    %106 = vector.extract_strided_slice %92 {offsets = [0, 37], sizes = [4, 287], strides = [1, 1]} : vector<4x324xf32> to vector<4x287xf32>
    %c28 = arith.constant 28 : index
    %c0_31 = arith.constant 0 : index
    %107 = vector.load %arg8[%c28, %c0_31] : memref<36x324xf32, #tpu.memory_space<vmem>>, vector<4x287xf32>
    tpu.vector_store %arg8[%c28, %c0_31], %106 {strides = array<i32>} : memref<36x324xf32, #tpu.memory_space<vmem>>, vector<4x287xf32>,
    %108 = vector.extract_strided_slice %92 {offsets = [0, 38], sizes = [4, 286], strides = [1, 1]} : vector<4x324xf32> to vector<4x286xf32>
    %c32 = arith.constant 32 : index
    %c0_32 = arith.constant 0 : index
    %109 = vector.load %arg8[%c32, %c0_32] : memref<36x324xf32, #tpu.memory_space<vmem>>, vector<4x286xf32>
    tpu.vector_store %arg8[%c32, %c0_32], %108 {strides = array<i32>} : memref<36x324xf32, #tpu.memory_space<vmem>>, vector<4x286xf32>,
    %c0_33 = arith.constant 0 : index
    %c0_34 = arith.constant 0 : index
    %110 = vector.load %arg2[%c0_33, %c0_34] : memref<32x36xf32, #tpu.memory_space<vmem>>, vector<32x36xf32>
    %c0_35 = arith.constant 0 : index
    %c0_36 = arith.constant 0 : index
    %111 = vector.load %arg8[%c0_35, %c0_36] : memref<36x324xf32, #tpu.memory_space<vmem>>, vector<36x324xf32>
    %cst = arith.constant dense<0.000000e+00> : vector<32x324xf32>
    %112 = tpu.matmul %110, %111, %cst {dimension_numbers = #tpu.dot_dimension_numbers<[1], [0], [0], [1], [0, 0, 1, 1], [], []>} : vector<32x36xf32>, vector<36x324xf32>, vector<32x324xf32> -> vector<32x324xf32>
    %c0_37 = arith.constant 0 : index
    %c0_38 = arith.constant 0 : index
    %113 = vector.load %arg3[%c0_37, %c0_38] : memref<32x1xf32, #tpu.memory_space<vmem>>, vector<32x1xf32>
    %114 = vector.broadcast %113 : vector<32x1xf32> to vector<32x324xf32>
    %115 = arith.addf %112, %114 : vector<32x324xf32>
    %116 = vector.extract_strided_slice %115 {offsets = [0, 0], sizes = [32, 16], strides = [1, 1]} : vector<32x324xf32> to vector<32x16xf32>
    %117 = vector.extract_strided_slice %115 {offsets = [0, 18], sizes = [32, 16], strides = [1, 1]} : vector<32x324xf32> to vector<32x16xf32>
    %118 = vector.extract_strided_slice %115 {offsets = [0, 36], sizes = [32, 16], strides = [1, 1]} : vector<32x324xf32> to vector<32x16xf32>
    %119 = vector.extract_strided_slice %115 {offsets = [0, 54], sizes = [32, 16], strides = [1, 1]} : vector<32x324xf32> to vector<32x16xf32>
    %120 = vector.extract_strided_slice %115 {offsets = [0, 72], sizes = [32, 16], strides = [1, 1]} : vector<32x324xf32> to vector<32x16xf32>
    %121 = vector.extract_strided_slice %115 {offsets = [0, 90], sizes = [32, 16], strides = [1, 1]} : vector<32x324xf32> to vector<32x16xf32>
    %122 = vector.extract_strided_slice %115 {offsets = [0, 108], sizes = [32, 16], strides = [1, 1]} : vector<32x324xf32> to vector<32x16xf32>
    %123 = vector.extract_strided_slice %115 {offsets = [0, 126], sizes = [32, 16], strides = [1, 1]} : vector<32x324xf32> to vector<32x16xf32>
    %124 = vector.extract_strided_slice %115 {offsets = [0, 144], sizes = [32, 16], strides = [1, 1]} : vector<32x324xf32> to vector<32x16xf32>
    %125 = vector.extract_strided_slice %115 {offsets = [0, 162], sizes = [32, 16], strides = [1, 1]} : vector<32x324xf32> to vector<32x16xf32>
    %126 = vector.extract_strided_slice %115 {offsets = [0, 180], sizes = [32, 16], strides = [1, 1]} : vector<32x324xf32> to vector<32x16xf32>
    %127 = vector.extract_strided_slice %115 {offsets = [0, 198], sizes = [32, 16], strides = [1, 1]} : vector<32x324xf32> to vector<32x16xf32>
    %128 = vector.extract_strided_slice %115 {offsets = [0, 216], sizes = [32, 16], strides = [1, 1]} : vector<32x324xf32> to vector<32x16xf32>
    %129 = vector.extract_strided_slice %115 {offsets = [0, 234], sizes = [32, 16], strides = [1, 1]} : vector<32x324xf32> to vector<32x16xf32>
    %130 = vector.extract_strided_slice %115 {offsets = [0, 252], sizes = [32, 16], strides = [1, 1]} : vector<32x324xf32> to vector<32x16xf32>
    %131 = vector.extract_strided_slice %115 {offsets = [0, 270], sizes = [32, 16], strides = [1, 1]} : vector<32x324xf32> to vector<32x16xf32>
    %132 = tpu.concatenate %116, %117, %118, %119, %120, %121, %122, %123, %124, %125, %126, %127, %128, %129, %130, %131 in 1 : vector<32x16xf32>, vector<32x16xf32>, vector<32x16xf32>, vector<32x16xf32>, vector<32x16xf32>, vector<32x16xf32>, vector<32x16xf32>, vector<32x16xf32>, vector<32x16xf32>, vector<32x16xf32>, vector<32x16xf32>, vector<32x16xf32>, vector<32x16xf32>, vector<32x16xf32>, vector<32x16xf32>, vector<32x16xf32> -> vector<32x256xf32>
    %cst_39 = arith.constant dense<0.000000e+00> : vector<32xf32>
    %133 = vector.multi_reduction <add>, %132, %cst_39 [1] : vector<32x256xf32> to vector<32xf32>
    %134 = vector.shape_cast %133 : vector<32xf32> to vector<32x1xf32>
    %cst_40 = arith.constant 2.560000e+02 : f32
    %135 = vector.broadcast %cst_40 : f32 to vector<32x1xf32>
    %136 = arith.divf %134, %135 : vector<32x1xf32>
    %137 = vector.broadcast %136 : vector<32x1xf32> to vector<32x256xf32>
    %138 = arith.subf %132, %137 : vector<32x256xf32>
    %139 = arith.mulf %138, %138 : vector<32x256xf32>
    %cst_41 = arith.constant dense<0.000000e+00> : vector<32xf32>
    %140 = vector.multi_reduction <add>, %139, %cst_41 [1] : vector<32x256xf32> to vector<32xf32>
    %141 = vector.shape_cast %140 : vector<32xf32> to vector<32x1xf32>
    %cst_42 = arith.constant 2.560000e+02 : f32
    %142 = vector.broadcast %cst_42 : f32 to vector<32x1xf32>
    %143 = arith.divf %141, %142 : vector<32x1xf32>
    %cst_43 = arith.constant 9.99999974E-6 : f32
    %144 = vector.broadcast %cst_43 : f32 to vector<32x1xf32>
    %145 = arith.addf %143, %144 : vector<32x1xf32>
    %146 = math.rsqrt %145 : vector<32x1xf32>
    %147 = vector.broadcast %146 : vector<32x1xf32> to vector<32x256xf32>
    %148 = arith.mulf %138, %147 : vector<32x256xf32>
    %cst_44 = arith.constant 0.000000e+00 : f32
    %149 = vector.broadcast %cst_44 : f32 to vector<32x256xf32>
    %150 = arith.maximumf %148, %149 : vector<32x256xf32>
    %151 = vector.extract_strided_slice %150 {offsets = [0, 48], sizes = [32, 16], strides = [1, 1]} : vector<32x256xf32> to vector<32x16xf32>
    %152 = vector.extract_strided_slice %151 {offsets = [0, 3], sizes = [32, 1], strides = [1, 1]} : vector<32x16xf32> to vector<32x1xf32>
    %153 = vector.extract_strided_slice %151 {offsets = [0, 2], sizes = [32, 1], strides = [1, 1]} : vector<32x16xf32> to vector<32x1xf32>
    %154 = vector.extract_strided_slice %151 {offsets = [0, 1], sizes = [32, 1], strides = [1, 1]} : vector<32x16xf32> to vector<32x1xf32>
    %155 = vector.extract_strided_slice %151 {offsets = [0, 14], sizes = [32, 1], strides = [1, 1]} : vector<32x16xf32> to vector<32x1xf32>
    %156 = vector.extract_strided_slice %151 {offsets = [0, 13], sizes = [32, 1], strides = [1, 1]} : vector<32x16xf32> to vector<32x1xf32>
    %157 = vector.extract_strided_slice %151 {offsets = [0, 12], sizes = [32, 1], strides = [1, 1]} : vector<32x16xf32> to vector<32x1xf32>
    %158 = tpu.concatenate %152, %153, %154, %151, %155, %156, %157 in 1 : vector<32x1xf32>, vector<32x1xf32>, vector<32x1xf32>, vector<32x16xf32>, vector<32x1xf32>, vector<32x1xf32>, vector<32x1xf32> -> vector<32x22xf32>
    %159 = arith.truncf %158 : vector<32x22xf32> to vector<32x22xbf16>
    %c0_45 = arith.constant 0 : index
    %c0_46 = arith.constant 0 : index
    %160 = vector.load %arg9[%c0_45, %c0_46] : memref<32x484xbf16, #tpu.memory_space<vmem>>, vector<32x22xbf16>
    tpu.vector_store %arg9[%c0_45, %c0_46], %159 {strides = array<i32>} : memref<32x484xbf16, #tpu.memory_space<vmem>>, vector<32x22xbf16>,
    %161 = vector.extract_strided_slice %150 {offsets = [0, 32], sizes = [32, 16], strides = [1, 1]} : vector<32x256xf32> to vector<32x16xf32>
    %162 = vector.extract_strided_slice %161 {offsets = [0, 3], sizes = [32, 1], strides = [1, 1]} : vector<32x16xf32> to vector<32x1xf32>
    %163 = vector.extract_strided_slice %161 {offsets = [0, 2], sizes = [32, 1], strides = [1, 1]} : vector<32x16xf32> to vector<32x1xf32>
    %164 = vector.extract_strided_slice %161 {offsets = [0, 1], sizes = [32, 1], strides = [1, 1]} : vector<32x16xf32> to vector<32x1xf32>
    %165 = vector.extract_strided_slice %161 {offsets = [0, 14], sizes = [32, 1], strides = [1, 1]} : vector<32x16xf32> to vector<32x1xf32>
    %166 = vector.extract_strided_slice %161 {offsets = [0, 13], sizes = [32, 1], strides = [1, 1]} : vector<32x16xf32> to vector<32x1xf32>
    %167 = vector.extract_strided_slice %161 {offsets = [0, 12], sizes = [32, 1], strides = [1, 1]} : vector<32x16xf32> to vector<32x1xf32>
    %168 = tpu.concatenate %162, %163, %164, %161, %165, %166, %167 in 1 : vector<32x1xf32>, vector<32x1xf32>, vector<32x1xf32>, vector<32x16xf32>, vector<32x1xf32>, vector<32x1xf32>, vector<32x1xf32> -> vector<32x22xf32>
    %169 = arith.truncf %168 : vector<32x22xf32> to vector<32x22xbf16>
    %c0_47 = arith.constant 0 : index
    %c22 = arith.constant 22 : index
    %170 = vector.load %arg9[%c0_47, %c22] : memref<32x484xbf16, #tpu.memory_space<vmem>>, vector<32x22xbf16>
    tpu.vector_store %arg9[%c0_47, %c22], %169 {strides = array<i32>} : memref<32x484xbf16, #tpu.memory_space<vmem>>, vector<32x22xbf16>,
    %171 = vector.extract_strided_slice %150 {offsets = [0, 16], sizes = [32, 16], strides = [1, 1]} : vector<32x256xf32> to vector<32x16xf32>
    %172 = vector.extract_strided_slice %171 {offsets = [0, 3], sizes = [32, 1], strides = [1, 1]} : vector<32x16xf32> to vector<32x1xf32>
    %173 = vector.extract_strided_slice %171 {offsets = [0, 2], sizes = [32, 1], strides = [1, 1]} : vector<32x16xf32> to vector<32x1xf32>
    %174 = vector.extract_strided_slice %171 {offsets = [0, 1], sizes = [32, 1], strides = [1, 1]} : vector<32x16xf32> to vector<32x1xf32>
    %175 = vector.extract_strided_slice %171 {offsets = [0, 14], sizes = [32, 1], strides = [1, 1]} : vector<32x16xf32> to vector<32x1xf32>
    %176 = vector.extract_strided_slice %171 {offsets = [0, 13], sizes = [32, 1], strides = [1, 1]} : vector<32x16xf32> to vector<32x1xf32>
    %177 = vector.extract_strided_slice %171 {offsets = [0, 12], sizes = [32, 1], strides = [1, 1]} : vector<32x16xf32> to vector<32x1xf32>
    %178 = tpu.concatenate %172, %173, %174, %171, %175, %176, %177 in 1 : vector<32x1xf32>, vector<32x1xf32>, vector<32x1xf32>, vector<32x16xf32>, vector<32x1xf32>, vector<32x1xf32>, vector<32x1xf32> -> vector<32x22xf32>
    %179 = arith.truncf %178 : vector<32x22xf32> to vector<32x22xbf16>
    %c0_48 = arith.constant 0 : index
    %c44 = arith.constant 44 : index
    %180 = vector.load %arg9[%c0_48, %c44] : memref<32x484xbf16, #tpu.memory_space<vmem>>, vector<32x22xbf16>
    tpu.vector_store %arg9[%c0_48, %c44], %179 {strides = array<i32>} : memref<32x484xbf16, #tpu.memory_space<vmem>>, vector<32x22xbf16>,
    %181 = vector.extract_strided_slice %150 {offsets = [0, 0], sizes = [32, 16], strides = [1, 1]} : vector<32x256xf32> to vector<32x16xf32>
    %182 = vector.extract_strided_slice %181 {offsets = [0, 3], sizes = [32, 1], strides = [1, 1]} : vector<32x16xf32> to vector<32x1xf32>
    %183 = vector.extract_strided_slice %181 {offsets = [0, 2], sizes = [32, 1], strides = [1, 1]} : vector<32x16xf32> to vector<32x1xf32>
    %184 = vector.extract_strided_slice %181 {offsets = [0, 1], sizes = [32, 1], strides = [1, 1]} : vector<32x16xf32> to vector<32x1xf32>
    %185 = vector.extract_strided_slice %181 {offsets = [0, 14], sizes = [32, 1], strides = [1, 1]} : vector<32x16xf32> to vector<32x1xf32>
    %186 = vector.extract_strided_slice %181 {offsets = [0, 13], sizes = [32, 1], strides = [1, 1]} : vector<32x16xf32> to vector<32x1xf32>
    %187 = vector.extract_strided_slice %181 {offsets = [0, 12], sizes = [32, 1], strides = [1, 1]} : vector<32x16xf32> to vector<32x1xf32>
    %188 = tpu.concatenate %182, %183, %184, %181, %185, %186, %187 in 1 : vector<32x1xf32>, vector<32x1xf32>, vector<32x1xf32>, vector<32x16xf32>, vector<32x1xf32>, vector<32x1xf32>, vector<32x1xf32> -> vector<32x22xf32>
    %189 = arith.truncf %188 : vector<32x22xf32> to vector<32x22xbf16>
    %c0_49 = arith.constant 0 : index
    %c66 = arith.constant 66 : index
    %190 = vector.load %arg9[%c0_49, %c66] : memref<32x484xbf16, #tpu.memory_space<vmem>>, vector<32x22xbf16>
    tpu.vector_store %arg9[%c0_49, %c66], %189 {strides = array<i32>} : memref<32x484xbf16, #tpu.memory_space<vmem>>, vector<32x22xbf16>,
    %191 = vector.extract_strided_slice %150 {offsets = [0, 16], sizes = [32, 16], strides = [1, 1]} : vector<32x256xf32> to vector<32x16xf32>
    %192 = vector.extract_strided_slice %191 {offsets = [0, 3], sizes = [32, 1], strides = [1, 1]} : vector<32x16xf32> to vector<32x1xf32>
    %193 = vector.extract_strided_slice %191 {offsets = [0, 2], sizes = [32, 1], strides = [1, 1]} : vector<32x16xf32> to vector<32x1xf32>
    %194 = vector.extract_strided_slice %191 {offsets = [0, 1], sizes = [32, 1], strides = [1, 1]} : vector<32x16xf32> to vector<32x1xf32>
    %195 = vector.extract_strided_slice %191 {offsets = [0, 14], sizes = [32, 1], strides = [1, 1]} : vector<32x16xf32> to vector<32x1xf32>
    %196 = vector.extract_strided_slice %191 {offsets = [0, 13], sizes = [32, 1], strides = [1, 1]} : vector<32x16xf32> to vector<32x1xf32>
    %197 = vector.extract_strided_slice %191 {offsets = [0, 12], sizes = [32, 1], strides = [1, 1]} : vector<32x16xf32> to vector<32x1xf32>
    %198 = tpu.concatenate %192, %193, %194, %191, %195, %196, %197 in 1 : vector<32x1xf32>, vector<32x1xf32>, vector<32x1xf32>, vector<32x16xf32>, vector<32x1xf32>, vector<32x1xf32>, vector<32x1xf32> -> vector<32x22xf32>
    %199 = arith.truncf %198 : vector<32x22xf32> to vector<32x22xbf16>
    %c0_50 = arith.constant 0 : index
    %c88 = arith.constant 88 : index
    %200 = vector.load %arg9[%c0_50, %c88] : memref<32x484xbf16, #tpu.memory_space<vmem>>, vector<32x22xbf16>
    tpu.vector_store %arg9[%c0_50, %c88], %199 {strides = array<i32>} : memref<32x484xbf16, #tpu.memory_space<vmem>>, vector<32x22xbf16>,
    %201 = vector.extract_strided_slice %150 {offsets = [0, 32], sizes = [32, 16], strides = [1, 1]} : vector<32x256xf32> to vector<32x16xf32>
    %202 = vector.extract_strided_slice %201 {offsets = [0, 3], sizes = [32, 1], strides = [1, 1]} : vector<32x16xf32> to vector<32x1xf32>
    %203 = vector.extract_strided_slice %201 {offsets = [0, 2], sizes = [32, 1], strides = [1, 1]} : vector<32x16xf32> to vector<32x1xf32>
    %204 = vector.extract_strided_slice %201 {offsets = [0, 1], sizes = [32, 1], strides = [1, 1]} : vector<32x16xf32> to vector<32x1xf32>
    %205 = vector.extract_strided_slice %201 {offsets = [0, 14], sizes = [32, 1], strides = [1, 1]} : vector<32x16xf32> to vector<32x1xf32>
    %206 = vector.extract_strided_slice %201 {offsets = [0, 13], sizes = [32, 1], strides = [1, 1]} : vector<32x16xf32> to vector<32x1xf32>
    %207 = vector.extract_strided_slice %201 {offsets = [0, 12], sizes = [32, 1], strides = [1, 1]} : vector<32x16xf32> to vector<32x1xf32>
    %208 = tpu.concatenate %202, %203, %204, %201, %205, %206, %207 in 1 : vector<32x1xf32>, vector<32x1xf32>, vector<32x1xf32>, vector<32x16xf32>, vector<32x1xf32>, vector<32x1xf32>, vector<32x1xf32> -> vector<32x22xf32>
    %209 = arith.truncf %208 : vector<32x22xf32> to vector<32x22xbf16>
    %c0_51 = arith.constant 0 : index
    %c110 = arith.constant 110 : index
    %210 = vector.load %arg9[%c0_51, %c110] : memref<32x484xbf16, #tpu.memory_space<vmem>>, vector<32x22xbf16>
    tpu.vector_store %arg9[%c0_51, %c110], %209 {strides = array<i32>} : memref<32x484xbf16, #tpu.memory_space<vmem>>, vector<32x22xbf16>,
    %211 = vector.extract_strided_slice %150 {offsets = [0, 48], sizes = [32, 16], strides = [1, 1]} : vector<32x256xf32> to vector<32x16xf32>
    %212 = vector.extract_strided_slice %211 {offsets = [0, 3], sizes = [32, 1], strides = [1, 1]} : vector<32x16xf32> to vector<32x1xf32>
    %213 = vector.extract_strided_slice %211 {offsets = [0, 2], sizes = [32, 1], strides = [1, 1]} : vector<32x16xf32> to vector<32x1xf32>
    %214 = vector.extract_strided_slice %211 {offsets = [0, 1], sizes = [32, 1], strides = [1, 1]} : vector<32x16xf32> to vector<32x1xf32>
    %215 = vector.extract_strided_slice %211 {offsets = [0, 14], sizes = [32, 1], strides = [1, 1]} : vector<32x16xf32> to vector<32x1xf32>
    %216 = vector.extract_strided_slice %211 {offsets = [0, 13], sizes = [32, 1], strides = [1, 1]} : vector<32x16xf32> to vector<32x1xf32>
    %217 = vector.extract_strided_slice %211 {offsets = [0, 12], sizes = [32, 1], strides = [1, 1]} : vector<32x16xf32> to vector<32x1xf32>
    %218 = tpu.concatenate %212, %213, %214, %211, %215, %216, %217 in 1 : vector<32x1xf32>, vector<32x1xf32>, vector<32x1xf32>, vector<32x16xf32>, vector<32x1xf32>, vector<32x1xf32>, vector<32x1xf32> -> vector<32x22xf32>
    %219 = arith.truncf %218 : vector<32x22xf32> to vector<32x22xbf16>
    %c0_52 = arith.constant 0 : index
    %c132 = arith.constant 132 : index
    %220 = vector.load %arg9[%c0_52, %c132] : memref<32x484xbf16, #tpu.memory_space<vmem>>, vector<32x22xbf16>
    tpu.vector_store %arg9[%c0_52, %c132], %219 {strides = array<i32>} : memref<32x484xbf16, #tpu.memory_space<vmem>>, vector<32x22xbf16>,
    %221 = vector.extract_strided_slice %150 {offsets = [0, 64], sizes = [32, 16], strides = [1, 1]} : vector<32x256xf32> to vector<32x16xf32>
    %222 = vector.extract_strided_slice %221 {offsets = [0, 3], sizes = [32, 1], strides = [1, 1]} : vector<32x16xf32> to vector<32x1xf32>
    %223 = vector.extract_strided_slice %221 {offsets = [0, 2], sizes = [32, 1], strides = [1, 1]} : vector<32x16xf32> to vector<32x1xf32>
    %224 = vector.extract_strided_slice %221 {offsets = [0, 1], sizes = [32, 1], strides = [1, 1]} : vector<32x16xf32> to vector<32x1xf32>
    %225 = vector.extract_strided_slice %221 {offsets = [0, 14], sizes = [32, 1], strides = [1, 1]} : vector<32x16xf32> to vector<32x1xf32>
    %226 = vector.extract_strided_slice %221 {offsets = [0, 13], sizes = [32, 1], strides = [1, 1]} : vector<32x16xf32> to vector<32x1xf32>
    %227 = vector.extract_strided_slice %221 {offsets = [0, 12], sizes = [32, 1], strides = [1, 1]} : vector<32x16xf32> to vector<32x1xf32>
    %228 = tpu.concatenate %222, %223, %224, %221, %225, %226, %227 in 1 : vector<32x1xf32>, vector<32x1xf32>, vector<32x1xf32>, vector<32x16xf32>, vector<32x1xf32>, vector<32x1xf32>, vector<32x1xf32> -> vector<32x22xf32>
    %229 = arith.truncf %228 : vector<32x22xf32> to vector<32x22xbf16>
    %c0_53 = arith.constant 0 : index
    %c154 = arith.constant 154 : index
    %230 = vector.load %arg9[%c0_53, %c154] : memref<32x484xbf16, #tpu.memory_space<vmem>>, vector<32x22xbf16>
    tpu.vector_store %arg9[%c0_53, %c154], %229 {strides = array<i32>} : memref<32x484xbf16, #tpu.memory_space<vmem>>, vector<32x22xbf16>,
    %231 = vector.extract_strided_slice %150 {offsets = [0, 80], sizes = [32, 16], strides = [1, 1]} : vector<32x256xf32> to vector<32x16xf32>
    %232 = vector.extract_strided_slice %231 {offsets = [0, 3], sizes = [32, 1], strides = [1, 1]} : vector<32x16xf32> to vector<32x1xf32>
    %233 = vector.extract_strided_slice %231 {offsets = [0, 2], sizes = [32, 1], strides = [1, 1]} : vector<32x16xf32> to vector<32x1xf32>
    %234 = vector.extract_strided_slice %231 {offsets = [0, 1], sizes = [32, 1], strides = [1, 1]} : vector<32x16xf32> to vector<32x1xf32>
    %235 = vector.extract_strided_slice %231 {offsets = [0, 14], sizes = [32, 1], strides = [1, 1]} : vector<32x16xf32> to vector<32x1xf32>
    %236 = vector.extract_strided_slice %231 {offsets = [0, 13], sizes = [32, 1], strides = [1, 1]} : vector<32x16xf32> to vector<32x1xf32>
    %237 = vector.extract_strided_slice %231 {offsets = [0, 12], sizes = [32, 1], strides = [1, 1]} : vector<32x16xf32> to vector<32x1xf32>
    %238 = tpu.concatenate %232, %233, %234, %231, %235, %236, %237 in 1 : vector<32x1xf32>, vector<32x1xf32>, vector<32x1xf32>, vector<32x16xf32>, vector<32x1xf32>, vector<32x1xf32>, vector<32x1xf32> -> vector<32x22xf32>
    %239 = arith.truncf %238 : vector<32x22xf32> to vector<32x22xbf16>
    %c0_54 = arith.constant 0 : index
    %c176 = arith.constant 176 : index
    %240 = vector.load %arg9[%c0_54, %c176] : memref<32x484xbf16, #tpu.memory_space<vmem>>, vector<32x22xbf16>
    tpu.vector_store %arg9[%c0_54, %c176], %239 {strides = array<i32>} : memref<32x484xbf16, #tpu.memory_space<vmem>>, vector<32x22xbf16>,
    %241 = vector.extract_strided_slice %150 {offsets = [0, 96], sizes = [32, 16], strides = [1, 1]} : vector<32x256xf32> to vector<32x16xf32>
    %242 = vector.extract_strided_slice %241 {offsets = [0, 3], sizes = [32, 1], strides = [1, 1]} : vector<32x16xf32> to vector<32x1xf32>
    %243 = vector.extract_strided_slice %241 {offsets = [0, 2], sizes = [32, 1], strides = [1, 1]} : vector<32x16xf32> to vector<32x1xf32>
    %244 = vector.extract_strided_slice %241 {offsets = [0, 1], sizes = [32, 1], strides = [1, 1]} : vector<32x16xf32> to vector<32x1xf32>
    %245 = vector.extract_strided_slice %241 {offsets = [0, 14], sizes = [32, 1], strides = [1, 1]} : vector<32x16xf32> to vector<32x1xf32>
    %246 = vector.extract_strided_slice %241 {offsets = [0, 13], sizes = [32, 1], strides = [1, 1]} : vector<32x16xf32> to vector<32x1xf32>
    %247 = vector.extract_strided_slice %241 {offsets = [0, 12], sizes = [32, 1], strides = [1, 1]} : vector<32x16xf32> to vector<32x1xf32>
    %248 = tpu.concatenate %242, %243, %244, %241, %245, %246, %247 in 1 : vector<32x1xf32>, vector<32x1xf32>, vector<32x1xf32>, vector<32x16xf32>, vector<32x1xf32>, vector<32x1xf32>, vector<32x1xf32> -> vector<32x22xf32>
    %249 = arith.truncf %248 : vector<32x22xf32> to vector<32x22xbf16>
    %c0_55 = arith.constant 0 : index
    %c198_56 = arith.constant 198 : index
    %250 = vector.load %arg9[%c0_55, %c198_56] : memref<32x484xbf16, #tpu.memory_space<vmem>>, vector<32x22xbf16>
    tpu.vector_store %arg9[%c0_55, %c198_56], %249 {strides = array<i32>} : memref<32x484xbf16, #tpu.memory_space<vmem>>, vector<32x22xbf16>,
    %251 = vector.extract_strided_slice %150 {offsets = [0, 112], sizes = [32, 16], strides = [1, 1]} : vector<32x256xf32> to vector<32x16xf32>
    %252 = vector.extract_strided_slice %251 {offsets = [0, 3], sizes = [32, 1], strides = [1, 1]} : vector<32x16xf32> to vector<32x1xf32>
    %253 = vector.extract_strided_slice %251 {offsets = [0, 2], sizes = [32, 1], strides = [1, 1]} : vector<32x16xf32> to vector<32x1xf32>
    %254 = vector.extract_strided_slice %251 {offsets = [0, 1], sizes = [32, 1], strides = [1, 1]} : vector<32x16xf32> to vector<32x1xf32>
    %255 = vector.extract_strided_slice %251 {offsets = [0, 14], sizes = [32, 1], strides = [1, 1]} : vector<32x16xf32> to vector<32x1xf32>
    %256 = vector.extract_strided_slice %251 {offsets = [0, 13], sizes = [32, 1], strides = [1, 1]} : vector<32x16xf32> to vector<32x1xf32>
    %257 = vector.extract_strided_slice %251 {offsets = [0, 12], sizes = [32, 1], strides = [1, 1]} : vector<32x16xf32> to vector<32x1xf32>
    %258 = tpu.concatenate %252, %253, %254, %251, %255, %256, %257 in 1 : vector<32x1xf32>, vector<32x1xf32>, vector<32x1xf32>, vector<32x16xf32>, vector<32x1xf32>, vector<32x1xf32>, vector<32x1xf32> -> vector<32x22xf32>
    %259 = arith.truncf %258 : vector<32x22xf32> to vector<32x22xbf16>
    %c0_57 = arith.constant 0 : index
    %c220 = arith.constant 220 : index
    %260 = vector.load %arg9[%c0_57, %c220] : memref<32x484xbf16, #tpu.memory_space<vmem>>, vector<32x22xbf16>
    tpu.vector_store %arg9[%c0_57, %c220], %259 {strides = array<i32>} : memref<32x484xbf16, #tpu.memory_space<vmem>>, vector<32x22xbf16>,
    %261 = vector.extract_strided_slice %150 {offsets = [0, 128], sizes = [32, 16], strides = [1, 1]} : vector<32x256xf32> to vector<32x16xf32>
    %262 = vector.extract_strided_slice %261 {offsets = [0, 3], sizes = [32, 1], strides = [1, 1]} : vector<32x16xf32> to vector<32x1xf32>
    %263 = vector.extract_strided_slice %261 {offsets = [0, 2], sizes = [32, 1], strides = [1, 1]} : vector<32x16xf32> to vector<32x1xf32>
    %264 = vector.extract_strided_slice %261 {offsets = [0, 1], sizes = [32, 1], strides = [1, 1]} : vector<32x16xf32> to vector<32x1xf32>
    %265 = vector.extract_strided_slice %261 {offsets = [0, 14], sizes = [32, 1], strides = [1, 1]} : vector<32x16xf32> to vector<32x1xf32>
    %266 = vector.extract_strided_slice %261 {offsets = [0, 13], sizes = [32, 1], strides = [1, 1]} : vector<32x16xf32> to vector<32x1xf32>
    %267 = vector.extract_strided_slice %261 {offsets = [0, 12], sizes = [32, 1], strides = [1, 1]} : vector<32x16xf32> to vector<32x1xf32>
    %268 = tpu.concatenate %262, %263, %264, %261, %265, %266, %267 in 1 : vector<32x1xf32>, vector<32x1xf32>, vector<32x1xf32>, vector<32x16xf32>, vector<32x1xf32>, vector<32x1xf32>, vector<32x1xf32> -> vector<32x22xf32>
    %269 = arith.truncf %268 : vector<32x22xf32> to vector<32x22xbf16>
    %c0_58 = arith.constant 0 : index
    %c242 = arith.constant 242 : index
    %270 = vector.load %arg9[%c0_58, %c242] : memref<32x484xbf16, #tpu.memory_space<vmem>>, vector<32x22xbf16>
    tpu.vector_store %arg9[%c0_58, %c242], %269 {strides = array<i32>} : memref<32x484xbf16, #tpu.memory_space<vmem>>, vector<32x22xbf16>,
    %271 = vector.extract_strided_slice %150 {offsets = [0, 144], sizes = [32, 16], strides = [1, 1]} : vector<32x256xf32> to vector<32x16xf32>
    %272 = vector.extract_strided_slice %271 {offsets = [0, 3], sizes = [32, 1], strides = [1, 1]} : vector<32x16xf32> to vector<32x1xf32>
    %273 = vector.extract_strided_slice %271 {offsets = [0, 2], sizes = [32, 1], strides = [1, 1]} : vector<32x16xf32> to vector<32x1xf32>
    %274 = vector.extract_strided_slice %271 {offsets = [0, 1], sizes = [32, 1], strides = [1, 1]} : vector<32x16xf32> to vector<32x1xf32>
    %275 = vector.extract_strided_slice %271 {offsets = [0, 14], sizes = [32, 1], strides = [1, 1]} : vector<32x16xf32> to vector<32x1xf32>
    %276 = vector.extract_strided_slice %271 {offsets = [0, 13], sizes = [32, 1], strides = [1, 1]} : vector<32x16xf32> to vector<32x1xf32>
    %277 = vector.extract_strided_slice %271 {offsets = [0, 12], sizes = [32, 1], strides = [1, 1]} : vector<32x16xf32> to vector<32x1xf32>
    %278 = tpu.concatenate %272, %273, %274, %271, %275, %276, %277 in 1 : vector<32x1xf32>, vector<32x1xf32>, vector<32x1xf32>, vector<32x16xf32>, vector<32x1xf32>, vector<32x1xf32>, vector<32x1xf32> -> vector<32x22xf32>
    %279 = arith.truncf %278 : vector<32x22xf32> to vector<32x22xbf16>
    %c0_59 = arith.constant 0 : index
    %c264 = arith.constant 264 : index
    %280 = vector.load %arg9[%c0_59, %c264] : memref<32x484xbf16, #tpu.memory_space<vmem>>, vector<32x22xbf16>
    tpu.vector_store %arg9[%c0_59, %c264], %279 {strides = array<i32>} : memref<32x484xbf16, #tpu.memory_space<vmem>>, vector<32x22xbf16>,
    %281 = vector.extract_strided_slice %150 {offsets = [0, 160], sizes = [32, 16], strides = [1, 1]} : vector<32x256xf32> to vector<32x16xf32>
    %282 = vector.extract_strided_slice %281 {offsets = [0, 3], sizes = [32, 1], strides = [1, 1]} : vector<32x16xf32> to vector<32x1xf32>
    %283 = vector.extract_strided_slice %281 {offsets = [0, 2], sizes = [32, 1], strides = [1, 1]} : vector<32x16xf32> to vector<32x1xf32>
    %284 = vector.extract_strided_slice %281 {offsets = [0, 1], sizes = [32, 1], strides = [1, 1]} : vector<32x16xf32> to vector<32x1xf32>
    %285 = vector.extract_strided_slice %281 {offsets = [0, 14], sizes = [32, 1], strides = [1, 1]} : vector<32x16xf32> to vector<32x1xf32>
    %286 = vector.extract_strided_slice %281 {offsets = [0, 13], sizes = [32, 1], strides = [1, 1]} : vector<32x16xf32> to vector<32x1xf32>
    %287 = vector.extract_strided_slice %281 {offsets = [0, 12], sizes = [32, 1], strides = [1, 1]} : vector<32x16xf32> to vector<32x1xf32>
    %288 = tpu.concatenate %282, %283, %284, %281, %285, %286, %287 in 1 : vector<32x1xf32>, vector<32x1xf32>, vector<32x1xf32>, vector<32x16xf32>, vector<32x1xf32>, vector<32x1xf32>, vector<32x1xf32> -> vector<32x22xf32>
    %289 = arith.truncf %288 : vector<32x22xf32> to vector<32x22xbf16>
    %c0_60 = arith.constant 0 : index
    %c286 = arith.constant 286 : index
    %290 = vector.load %arg9[%c0_60, %c286] : memref<32x484xbf16, #tpu.memory_space<vmem>>, vector<32x22xbf16>
    tpu.vector_store %arg9[%c0_60, %c286], %289 {strides = array<i32>} : memref<32x484xbf16, #tpu.memory_space<vmem>>, vector<32x22xbf16>,
    %291 = vector.extract_strided_slice %150 {offsets = [0, 176], sizes = [32, 16], strides = [1, 1]} : vector<32x256xf32> to vector<32x16xf32>
    %292 = vector.extract_strided_slice %291 {offsets = [0, 3], sizes = [32, 1], strides = [1, 1]} : vector<32x16xf32> to vector<32x1xf32>
    %293 = vector.extract_strided_slice %291 {offsets = [0, 2], sizes = [32, 1], strides = [1, 1]} : vector<32x16xf32> to vector<32x1xf32>
    %294 = vector.extract_strided_slice %291 {offsets = [0, 1], sizes = [32, 1], strides = [1, 1]} : vector<32x16xf32> to vector<32x1xf32>
    %295 = vector.extract_strided_slice %291 {offsets = [0, 14], sizes = [32, 1], strides = [1, 1]} : vector<32x16xf32> to vector<32x1xf32>
    %296 = vector.extract_strided_slice %291 {offsets = [0, 13], sizes = [32, 1], strides = [1, 1]} : vector<32x16xf32> to vector<32x1xf32>
    %297 = vector.extract_strided_slice %291 {offsets = [0, 12], sizes = [32, 1], strides = [1, 1]} : vector<32x16xf32> to vector<32x1xf32>
    %298 = tpu.concatenate %292, %293, %294, %291, %295, %296, %297 in 1 : vector<32x1xf32>, vector<32x1xf32>, vector<32x1xf32>, vector<32x16xf32>, vector<32x1xf32>, vector<32x1xf32>, vector<32x1xf32> -> vector<32x22xf32>
    %299 = arith.truncf %298 : vector<32x22xf32> to vector<32x22xbf16>
    %c0_61 = arith.constant 0 : index
    %c308 = arith.constant 308 : index
    %300 = vector.load %arg9[%c0_61, %c308] : memref<32x484xbf16, #tpu.memory_space<vmem>>, vector<32x22xbf16>
    tpu.vector_store %arg9[%c0_61, %c308], %299 {strides = array<i32>} : memref<32x484xbf16, #tpu.memory_space<vmem>>, vector<32x22xbf16>,
    %301 = vector.extract_strided_slice %150 {offsets = [0, 192], sizes = [32, 16], strides = [1, 1]} : vector<32x256xf32> to vector<32x16xf32>
    %302 = vector.extract_strided_slice %301 {offsets = [0, 3], sizes = [32, 1], strides = [1, 1]} : vector<32x16xf32> to vector<32x1xf32>
    %303 = vector.extract_strided_slice %301 {offsets = [0, 2], sizes = [32, 1], strides = [1, 1]} : vector<32x16xf32> to vector<32x1xf32>
    %304 = vector.extract_strided_slice %301 {offsets = [0, 1], sizes = [32, 1], strides = [1, 1]} : vector<32x16xf32> to vector<32x1xf32>
    %305 = vector.extract_strided_slice %301 {offsets = [0, 14], sizes = [32, 1], strides = [1, 1]} : vector<32x16xf32> to vector<32x1xf32>
    %306 = vector.extract_strided_slice %301 {offsets = [0, 13], sizes = [32, 1], strides = [1, 1]} : vector<32x16xf32> to vector<32x1xf32>
    %307 = vector.extract_strided_slice %301 {offsets = [0, 12], sizes = [32, 1], strides = [1, 1]} : vector<32x16xf32> to vector<32x1xf32>
    %308 = tpu.concatenate %302, %303, %304, %301, %305, %306, %307 in 1 : vector<32x1xf32>, vector<32x1xf32>, vector<32x1xf32>, vector<32x16xf32>, vector<32x1xf32>, vector<32x1xf32>, vector<32x1xf32> -> vector<32x22xf32>
    %309 = arith.truncf %308 : vector<32x22xf32> to vector<32x22xbf16>
    %c0_62 = arith.constant 0 : index
    %c330 = arith.constant 330 : index
    %310 = vector.load %arg9[%c0_62, %c330] : memref<32x484xbf16, #tpu.memory_space<vmem>>, vector<32x22xbf16>
    tpu.vector_store %arg9[%c0_62, %c330], %309 {strides = array<i32>} : memref<32x484xbf16, #tpu.memory_space<vmem>>, vector<32x22xbf16>,
    %311 = vector.extract_strided_slice %150 {offsets = [0, 208], sizes = [32, 16], strides = [1, 1]} : vector<32x256xf32> to vector<32x16xf32>
    %312 = vector.extract_strided_slice %311 {offsets = [0, 3], sizes = [32, 1], strides = [1, 1]} : vector<32x16xf32> to vector<32x1xf32>
    %313 = vector.extract_strided_slice %311 {offsets = [0, 2], sizes = [32, 1], strides = [1, 1]} : vector<32x16xf32> to vector<32x1xf32>
    %314 = vector.extract_strided_slice %311 {offsets = [0, 1], sizes = [32, 1], strides = [1, 1]} : vector<32x16xf32> to vector<32x1xf32>
    %315 = vector.extract_strided_slice %311 {offsets = [0, 14], sizes = [32, 1], strides = [1, 1]} : vector<32x16xf32> to vector<32x1xf32>
    %316 = vector.extract_strided_slice %311 {offsets = [0, 13], sizes = [32, 1], strides = [1, 1]} : vector<32x16xf32> to vector<32x1xf32>
    %317 = vector.extract_strided_slice %311 {offsets = [0, 12], sizes = [32, 1], strides = [1, 1]} : vector<32x16xf32> to vector<32x1xf32>
    %318 = tpu.concatenate %312, %313, %314, %311, %315, %316, %317 in 1 : vector<32x1xf32>, vector<32x1xf32>, vector<32x1xf32>, vector<32x16xf32>, vector<32x1xf32>, vector<32x1xf32>, vector<32x1xf32> -> vector<32x22xf32>
    %319 = arith.truncf %318 : vector<32x22xf32> to vector<32x22xbf16>
    %c0_63 = arith.constant 0 : index
    %c352 = arith.constant 352 : index
    %320 = vector.load %arg9[%c0_63, %c352] : memref<32x484xbf16, #tpu.memory_space<vmem>>, vector<32x22xbf16>
    tpu.vector_store %arg9[%c0_63, %c352], %319 {strides = array<i32>} : memref<32x484xbf16, #tpu.memory_space<vmem>>, vector<32x22xbf16>,
    %321 = vector.extract_strided_slice %150 {offsets = [0, 224], sizes = [32, 16], strides = [1, 1]} : vector<32x256xf32> to vector<32x16xf32>
    %322 = vector.extract_strided_slice %321 {offsets = [0, 3], sizes = [32, 1], strides = [1, 1]} : vector<32x16xf32> to vector<32x1xf32>
    %323 = vector.extract_strided_slice %321 {offsets = [0, 2], sizes = [32, 1], strides = [1, 1]} : vector<32x16xf32> to vector<32x1xf32>
    %324 = vector.extract_strided_slice %321 {offsets = [0, 1], sizes = [32, 1], strides = [1, 1]} : vector<32x16xf32> to vector<32x1xf32>
    %325 = vector.extract_strided_slice %321 {offsets = [0, 14], sizes = [32, 1], strides = [1, 1]} : vector<32x16xf32> to vector<32x1xf32>
    %326 = vector.extract_strided_slice %321 {offsets = [0, 13], sizes = [32, 1], strides = [1, 1]} : vector<32x16xf32> to vector<32x1xf32>
    %327 = vector.extract_strided_slice %321 {offsets = [0, 12], sizes = [32, 1], strides = [1, 1]} : vector<32x16xf32> to vector<32x1xf32>
    %328 = tpu.concatenate %322, %323, %324, %321, %325, %326, %327 in 1 : vector<32x1xf32>, vector<32x1xf32>, vector<32x1xf32>, vector<32x16xf32>, vector<32x1xf32>, vector<32x1xf32>, vector<32x1xf32> -> vector<32x22xf32>
    %329 = arith.truncf %328 : vector<32x22xf32> to vector<32x22xbf16>
    %c0_64 = arith.constant 0 : index
    %c374 = arith.constant 374 : index
    %330 = vector.load %arg9[%c0_64, %c374] : memref<32x484xbf16, #tpu.memory_space<vmem>>, vector<32x22xbf16>
    tpu.vector_store %arg9[%c0_64, %c374], %329 {strides = array<i32>} : memref<32x484xbf16, #tpu.memory_space<vmem>>, vector<32x22xbf16>,
    %331 = vector.extract_strided_slice %150 {offsets = [0, 240], sizes = [32, 16], strides = [1, 1]} : vector<32x256xf32> to vector<32x16xf32>
    %332 = vector.extract_strided_slice %331 {offsets = [0, 3], sizes = [32, 1], strides = [1, 1]} : vector<32x16xf32> to vector<32x1xf32>
    %333 = vector.extract_strided_slice %331 {offsets = [0, 2], sizes = [32, 1], strides = [1, 1]} : vector<32x16xf32> to vector<32x1xf32>
    %334 = vector.extract_strided_slice %331 {offsets = [0, 1], sizes = [32, 1], strides = [1, 1]} : vector<32x16xf32> to vector<32x1xf32>
    %335 = vector.extract_strided_slice %331 {offsets = [0, 14], sizes = [32, 1], strides = [1, 1]} : vector<32x16xf32> to vector<32x1xf32>
    %336 = vector.extract_strided_slice %331 {offsets = [0, 13], sizes = [32, 1], strides = [1, 1]} : vector<32x16xf32> to vector<32x1xf32>
    %337 = vector.extract_strided_slice %331 {offsets = [0, 12], sizes = [32, 1], strides = [1, 1]} : vector<32x16xf32> to vector<32x1xf32>
    %338 = tpu.concatenate %332, %333, %334, %331, %335, %336, %337 in 1 : vector<32x1xf32>, vector<32x1xf32>, vector<32x1xf32>, vector<32x16xf32>, vector<32x1xf32>, vector<32x1xf32>, vector<32x1xf32> -> vector<32x22xf32>
    %339 = arith.truncf %338 : vector<32x22xf32> to vector<32x22xbf16>
    %c0_65 = arith.constant 0 : index
    %c396 = arith.constant 396 : index
    %340 = vector.load %arg9[%c0_65, %c396] : memref<32x484xbf16, #tpu.memory_space<vmem>>, vector<32x22xbf16>
    tpu.vector_store %arg9[%c0_65, %c396], %339 {strides = array<i32>} : memref<32x484xbf16, #tpu.memory_space<vmem>>, vector<32x22xbf16>,
    %341 = vector.extract_strided_slice %150 {offsets = [0, 224], sizes = [32, 16], strides = [1, 1]} : vector<32x256xf32> to vector<32x16xf32>
    %342 = vector.extract_strided_slice %341 {offsets = [0, 3], sizes = [32, 1], strides = [1, 1]} : vector<32x16xf32> to vector<32x1xf32>
    %343 = vector.extract_strided_slice %341 {offsets = [0, 2], sizes = [32, 1], strides = [1, 1]} : vector<32x16xf32> to vector<32x1xf32>
    %344 = vector.extract_strided_slice %341 {offsets = [0, 1], sizes = [32, 1], strides = [1, 1]} : vector<32x16xf32> to vector<32x1xf32>
    %345 = vector.extract_strided_slice %341 {offsets = [0, 14], sizes = [32, 1], strides = [1, 1]} : vector<32x16xf32> to vector<32x1xf32>
    %346 = vector.extract_strided_slice %341 {offsets = [0, 13], sizes = [32, 1], strides = [1, 1]} : vector<32x16xf32> to vector<32x1xf32>
    %347 = vector.extract_strided_slice %341 {offsets = [0, 12], sizes = [32, 1], strides = [1, 1]} : vector<32x16xf32> to vector<32x1xf32>
    %348 = tpu.concatenate %342, %343, %344, %341, %345, %346, %347 in 1 : vector<32x1xf32>, vector<32x1xf32>, vector<32x1xf32>, vector<32x16xf32>, vector<32x1xf32>, vector<32x1xf32>, vector<32x1xf32> -> vector<32x22xf32>
    %349 = arith.truncf %348 : vector<32x22xf32> to vector<32x22xbf16>
    %c0_66 = arith.constant 0 : index
    %c418 = arith.constant 418 : index
    %350 = vector.load %arg9[%c0_66, %c418] : memref<32x484xbf16, #tpu.memory_space<vmem>>, vector<32x22xbf16>
    tpu.vector_store %arg9[%c0_66, %c418], %349 {strides = array<i32>} : memref<32x484xbf16, #tpu.memory_space<vmem>>, vector<32x22xbf16>,
    %351 = vector.extract_strided_slice %150 {offsets = [0, 208], sizes = [32, 16], strides = [1, 1]} : vector<32x256xf32> to vector<32x16xf32>
    %352 = vector.extract_strided_slice %351 {offsets = [0, 3], sizes = [32, 1], strides = [1, 1]} : vector<32x16xf32> to vector<32x1xf32>
    %353 = vector.extract_strided_slice %351 {offsets = [0, 2], sizes = [32, 1], strides = [1, 1]} : vector<32x16xf32> to vector<32x1xf32>
    %354 = vector.extract_strided_slice %351 {offsets = [0, 1], sizes = [32, 1], strides = [1, 1]} : vector<32x16xf32> to vector<32x1xf32>
    %355 = vector.extract_strided_slice %351 {offsets = [0, 14], sizes = [32, 1], strides = [1, 1]} : vector<32x16xf32> to vector<32x1xf32>
    %356 = vector.extract_strided_slice %351 {offsets = [0, 13], sizes = [32, 1], strides = [1, 1]} : vector<32x16xf32> to vector<32x1xf32>
    %357 = vector.extract_strided_slice %351 {offsets = [0, 12], sizes = [32, 1], strides = [1, 1]} : vector<32x16xf32> to vector<32x1xf32>
    %358 = tpu.concatenate %352, %353, %354, %351, %355, %356, %357 in 1 : vector<32x1xf32>, vector<32x1xf32>, vector<32x1xf32>, vector<32x16xf32>, vector<32x1xf32>, vector<32x1xf32>, vector<32x1xf32> -> vector<32x22xf32>
    %359 = arith.truncf %358 : vector<32x22xf32> to vector<32x22xbf16>
    %c0_67 = arith.constant 0 : index
    %c440 = arith.constant 440 : index
    %360 = vector.load %arg9[%c0_67, %c440] : memref<32x484xbf16, #tpu.memory_space<vmem>>, vector<32x22xbf16>
    tpu.vector_store %arg9[%c0_67, %c440], %359 {strides = array<i32>} : memref<32x484xbf16, #tpu.memory_space<vmem>>, vector<32x22xbf16>,
    %361 = vector.extract_strided_slice %150 {offsets = [0, 192], sizes = [32, 16], strides = [1, 1]} : vector<32x256xf32> to vector<32x16xf32>
    %362 = vector.extract_strided_slice %361 {offsets = [0, 3], sizes = [32, 1], strides = [1, 1]} : vector<32x16xf32> to vector<32x1xf32>
    %363 = vector.extract_strided_slice %361 {offsets = [0, 2], sizes = [32, 1], strides = [1, 1]} : vector<32x16xf32> to vector<32x1xf32>
    %364 = vector.extract_strided_slice %361 {offsets = [0, 1], sizes = [32, 1], strides = [1, 1]} : vector<32x16xf32> to vector<32x1xf32>
    %365 = vector.extract_strided_slice %361 {offsets = [0, 14], sizes = [32, 1], strides = [1, 1]} : vector<32x16xf32> to vector<32x1xf32>
    %366 = vector.extract_strided_slice %361 {offsets = [0, 13], sizes = [32, 1], strides = [1, 1]} : vector<32x16xf32> to vector<32x1xf32>
    %367 = vector.extract_strided_slice %361 {offsets = [0, 12], sizes = [32, 1], strides = [1, 1]} : vector<32x16xf32> to vector<32x1xf32>
    %368 = tpu.concatenate %362, %363, %364, %361, %365, %366, %367 in 1 : vector<32x1xf32>, vector<32x1xf32>, vector<32x1xf32>, vector<32x16xf32>, vector<32x1xf32>, vector<32x1xf32>, vector<32x1xf32> -> vector<32x22xf32>
    %369 = arith.truncf %368 : vector<32x22xf32> to vector<32x22xbf16>
    %c0_68 = arith.constant 0 : index
    %c462 = arith.constant 462 : index
    %370 = vector.load %arg9[%c0_68, %c462] : memref<32x484xbf16, #tpu.memory_space<vmem>>, vector<32x22xbf16>
    tpu.vector_store %arg9[%c0_68, %c462], %369 {strides = array<i32>} : memref<32x484xbf16, #tpu.memory_space<vmem>>, vector<32x22xbf16>,
    %c0_69 = arith.constant 0 : index
    %c0_70 = arith.constant 0 : index
    %371 = vector.load %arg9[%c0_69, %c0_70] : memref<32x484xbf16, #tpu.memory_space<vmem>>, vector<32x484xbf16>
    %c0_71 = arith.constant 0 : index
    %c0_72 = arith.constant 0 : index
    %372 = vector.load %arg10[%c0_71, %c0_72] : memref<1568x484xbf16, #tpu.memory_space<vmem>>, vector<32x484xbf16>
    tpu.vector_store %arg10[%c0_71, %c0_72], %371 {strides = array<i32>} : memref<1568x484xbf16, #tpu.memory_space<vmem>>, vector<32x484xbf16>,
    %373 = vector.extract_strided_slice %371 {offsets = [0, 1], sizes = [32, 483], strides = [1, 1]} : vector<32x484xbf16> to vector<32x483xbf16>
    %c32_73 = arith.constant 32 : index
    %c0_74 = arith.constant 0 : index
    %374 = vector.load %arg10[%c32_73, %c0_74] : memref<1568x484xbf16, #tpu.memory_space<vmem>>, vector<32x483xbf16>
    tpu.vector_store %arg10[%c32_73, %c0_74], %373 {strides = array<i32>} : memref<1568x484xbf16, #tpu.memory_space<vmem>>, vector<32x483xbf16>,
    %375 = vector.extract_strided_slice %371 {offsets = [0, 2], sizes = [32, 482], strides = [1, 1]} : vector<32x484xbf16> to vector<32x482xbf16>
    %c64 = arith.constant 64 : index
    %c0_75 = arith.constant 0 : index
    %376 = vector.load %arg10[%c64, %c0_75] : memref<1568x484xbf16, #tpu.memory_space<vmem>>, vector<32x482xbf16>
    tpu.vector_store %arg10[%c64, %c0_75], %375 {strides = array<i32>} : memref<1568x484xbf16, #tpu.memory_space<vmem>>, vector<32x482xbf16>,
    %377 = vector.extract_strided_slice %371 {offsets = [0, 3], sizes = [32, 481], strides = [1, 1]} : vector<32x484xbf16> to vector<32x481xbf16>
    %c96 = arith.constant 96 : index
    %c0_76 = arith.constant 0 : index
    %378 = vector.load %arg10[%c96, %c0_76] : memref<1568x484xbf16, #tpu.memory_space<vmem>>, vector<32x481xbf16>
    tpu.vector_store %arg10[%c96, %c0_76], %377 {strides = array<i32>} : memref<1568x484xbf16, #tpu.memory_space<vmem>>, vector<32x481xbf16>,
    %379 = vector.extract_strided_slice %371 {offsets = [0, 4], sizes = [32, 480], strides = [1, 1]} : vector<32x484xbf16> to vector<32x480xbf16>
    %c128 = arith.constant 128 : index
    %c0_77 = arith.constant 0 : index
    %380 = vector.load %arg10[%c128, %c0_77] : memref<1568x484xbf16, #tpu.memory_space<vmem>>, vector<32x480xbf16>
    tpu.vector_store %arg10[%c128, %c0_77], %379 {strides = array<i32>} : memref<1568x484xbf16, #tpu.memory_space<vmem>>, vector<32x480xbf16>,
    %381 = vector.extract_strided_slice %371 {offsets = [0, 5], sizes = [32, 479], strides = [1, 1]} : vector<32x484xbf16> to vector<32x479xbf16>
    %c160 = arith.constant 160 : index
    %c0_78 = arith.constant 0 : index
    %382 = vector.load %arg10[%c160, %c0_78] : memref<1568x484xbf16, #tpu.memory_space<vmem>>, vector<32x479xbf16>
    tpu.vector_store %arg10[%c160, %c0_78], %381 {strides = array<i32>} : memref<1568x484xbf16, #tpu.memory_space<vmem>>, vector<32x479xbf16>,
    %383 = vector.extract_strided_slice %371 {offsets = [0, 6], sizes = [32, 478], strides = [1, 1]} : vector<32x484xbf16> to vector<32x478xbf16>
    %c192 = arith.constant 192 : index
    %c0_79 = arith.constant 0 : index
    %384 = vector.load %arg10[%c192, %c0_79] : memref<1568x484xbf16, #tpu.memory_space<vmem>>, vector<32x478xbf16>
    tpu.vector_store %arg10[%c192, %c0_79], %383 {strides = array<i32>} : memref<1568x484xbf16, #tpu.memory_space<vmem>>, vector<32x478xbf16>,
    %385 = vector.extract_strided_slice %371 {offsets = [0, 22], sizes = [32, 462], strides = [1, 1]} : vector<32x484xbf16> to vector<32x462xbf16>
    %c224 = arith.constant 224 : index
    %c0_80 = arith.constant 0 : index
    %386 = vector.load %arg10[%c224, %c0_80] : memref<1568x484xbf16, #tpu.memory_space<vmem>>, vector<32x462xbf16>
    tpu.vector_store %arg10[%c224, %c0_80], %385 {strides = array<i32>} : memref<1568x484xbf16, #tpu.memory_space<vmem>>, vector<32x462xbf16>,
    %387 = vector.extract_strided_slice %371 {offsets = [0, 23], sizes = [32, 461], strides = [1, 1]} : vector<32x484xbf16> to vector<32x461xbf16>
    %c256 = arith.constant 256 : index
    %c0_81 = arith.constant 0 : index
    %388 = vector.load %arg10[%c256, %c0_81] : memref<1568x484xbf16, #tpu.memory_space<vmem>>, vector<32x461xbf16>
    tpu.vector_store %arg10[%c256, %c0_81], %387 {strides = array<i32>} : memref<1568x484xbf16, #tpu.memory_space<vmem>>, vector<32x461xbf16>,
    %389 = vector.extract_strided_slice %371 {offsets = [0, 24], sizes = [32, 460], strides = [1, 1]} : vector<32x484xbf16> to vector<32x460xbf16>
    %c288_82 = arith.constant 288 : index
    %c0_83 = arith.constant 0 : index
    %390 = vector.load %arg10[%c288_82, %c0_83] : memref<1568x484xbf16, #tpu.memory_space<vmem>>, vector<32x460xbf16>
    tpu.vector_store %arg10[%c288_82, %c0_83], %389 {strides = array<i32>} : memref<1568x484xbf16, #tpu.memory_space<vmem>>, vector<32x460xbf16>,
    %391 = vector.extract_strided_slice %371 {offsets = [0, 25], sizes = [32, 459], strides = [1, 1]} : vector<32x484xbf16> to vector<32x459xbf16>
    %c320 = arith.constant 320 : index
    %c0_84 = arith.constant 0 : index
    %392 = vector.load %arg10[%c320, %c0_84] : memref<1568x484xbf16, #tpu.memory_space<vmem>>, vector<32x459xbf16>
    tpu.vector_store %arg10[%c320, %c0_84], %391 {strides = array<i32>} : memref<1568x484xbf16, #tpu.memory_space<vmem>>, vector<32x459xbf16>,
    %393 = vector.extract_strided_slice %371 {offsets = [0, 26], sizes = [32, 458], strides = [1, 1]} : vector<32x484xbf16> to vector<32x458xbf16>
    %c352_85 = arith.constant 352 : index
    %c0_86 = arith.constant 0 : index
    %394 = vector.load %arg10[%c352_85, %c0_86] : memref<1568x484xbf16, #tpu.memory_space<vmem>>, vector<32x458xbf16>
    tpu.vector_store %arg10[%c352_85, %c0_86], %393 {strides = array<i32>} : memref<1568x484xbf16, #tpu.memory_space<vmem>>, vector<32x458xbf16>,
    %395 = vector.extract_strided_slice %371 {offsets = [0, 27], sizes = [32, 457], strides = [1, 1]} : vector<32x484xbf16> to vector<32x457xbf16>
    %c384 = arith.constant 384 : index
    %c0_87 = arith.constant 0 : index
    %396 = vector.load %arg10[%c384, %c0_87] : memref<1568x484xbf16, #tpu.memory_space<vmem>>, vector<32x457xbf16>
    tpu.vector_store %arg10[%c384, %c0_87], %395 {strides = array<i32>} : memref<1568x484xbf16, #tpu.memory_space<vmem>>, vector<32x457xbf16>,
    %397 = vector.extract_strided_slice %371 {offsets = [0, 28], sizes = [32, 456], strides = [1, 1]} : vector<32x484xbf16> to vector<32x456xbf16>
    %c416 = arith.constant 416 : index
    %c0_88 = arith.constant 0 : index
    %398 = vector.load %arg10[%c416, %c0_88] : memref<1568x484xbf16, #tpu.memory_space<vmem>>, vector<32x456xbf16>
    tpu.vector_store %arg10[%c416, %c0_88], %397 {strides = array<i32>} : memref<1568x484xbf16, #tpu.memory_space<vmem>>, vector<32x456xbf16>,
    %399 = vector.extract_strided_slice %371 {offsets = [0, 44], sizes = [32, 440], strides = [1, 1]} : vector<32x484xbf16> to vector<32x440xbf16>
    %c448 = arith.constant 448 : index
    %c0_89 = arith.constant 0 : index
    %400 = vector.load %arg10[%c448, %c0_89] : memref<1568x484xbf16, #tpu.memory_space<vmem>>, vector<32x440xbf16>
    tpu.vector_store %arg10[%c448, %c0_89], %399 {strides = array<i32>} : memref<1568x484xbf16, #tpu.memory_space<vmem>>, vector<32x440xbf16>,
    %401 = vector.extract_strided_slice %371 {offsets = [0, 45], sizes = [32, 439], strides = [1, 1]} : vector<32x484xbf16> to vector<32x439xbf16>
    %c480 = arith.constant 480 : index
    %c0_90 = arith.constant 0 : index
    %402 = vector.load %arg10[%c480, %c0_90] : memref<1568x484xbf16, #tpu.memory_space<vmem>>, vector<32x439xbf16>
    tpu.vector_store %arg10[%c480, %c0_90], %401 {strides = array<i32>} : memref<1568x484xbf16, #tpu.memory_space<vmem>>, vector<32x439xbf16>,
    %403 = vector.extract_strided_slice %371 {offsets = [0, 46], sizes = [32, 438], strides = [1, 1]} : vector<32x484xbf16> to vector<32x438xbf16>
    %c512 = arith.constant 512 : index
    %c0_91 = arith.constant 0 : index
    %404 = vector.load %arg10[%c512, %c0_91] : memref<1568x484xbf16, #tpu.memory_space<vmem>>, vector<32x438xbf16>
    tpu.vector_store %arg10[%c512, %c0_91], %403 {strides = array<i32>} : memref<1568x484xbf16, #tpu.memory_space<vmem>>, vector<32x438xbf16>,
    %405 = vector.extract_strided_slice %371 {offsets = [0, 47], sizes = [32, 437], strides = [1, 1]} : vector<32x484xbf16> to vector<32x437xbf16>
    %c544 = arith.constant 544 : index
    %c0_92 = arith.constant 0 : index
    %406 = vector.load %arg10[%c544, %c0_92] : memref<1568x484xbf16, #tpu.memory_space<vmem>>, vector<32x437xbf16>
    tpu.vector_store %arg10[%c544, %c0_92], %405 {strides = array<i32>} : memref<1568x484xbf16, #tpu.memory_space<vmem>>, vector<32x437xbf16>,
    %407 = vector.extract_strided_slice %371 {offsets = [0, 48], sizes = [32, 436], strides = [1, 1]} : vector<32x484xbf16> to vector<32x436xbf16>
    %c576 = arith.constant 576 : index
    %c0_93 = arith.constant 0 : index
    %408 = vector.load %arg10[%c576, %c0_93] : memref<1568x484xbf16, #tpu.memory_space<vmem>>, vector<32x436xbf16>
    tpu.vector_store %arg10[%c576, %c0_93], %407 {strides = array<i32>} : memref<1568x484xbf16, #tpu.memory_space<vmem>>, vector<32x436xbf16>,
    %409 = vector.extract_strided_slice %371 {offsets = [0, 49], sizes = [32, 435], strides = [1, 1]} : vector<32x484xbf16> to vector<32x435xbf16>
    %c608 = arith.constant 608 : index
    %c0_94 = arith.constant 0 : index
    %410 = vector.load %arg10[%c608, %c0_94] : memref<1568x484xbf16, #tpu.memory_space<vmem>>, vector<32x435xbf16>
    tpu.vector_store %arg10[%c608, %c0_94], %409 {strides = array<i32>} : memref<1568x484xbf16, #tpu.memory_space<vmem>>, vector<32x435xbf16>,
    %411 = vector.extract_strided_slice %371 {offsets = [0, 50], sizes = [32, 434], strides = [1, 1]} : vector<32x484xbf16> to vector<32x434xbf16>
    %c640 = arith.constant 640 : index
    %c0_95 = arith.constant 0 : index
    %412 = vector.load %arg10[%c640, %c0_95] : memref<1568x484xbf16, #tpu.memory_space<vmem>>, vector<32x434xbf16>
    tpu.vector_store %arg10[%c640, %c0_95], %411 {strides = array<i32>} : memref<1568x484xbf16, #tpu.memory_space<vmem>>, vector<32x434xbf16>,
    %413 = vector.extract_strided_slice %371 {offsets = [0, 66], sizes = [32, 418], strides = [1, 1]} : vector<32x484xbf16> to vector<32x418xbf16>
    %c672 = arith.constant 672 : index
    %c0_96 = arith.constant 0 : index
    %414 = vector.load %arg10[%c672, %c0_96] : memref<1568x484xbf16, #tpu.memory_space<vmem>>, vector<32x418xbf16>
    tpu.vector_store %arg10[%c672, %c0_96], %413 {strides = array<i32>} : memref<1568x484xbf16, #tpu.memory_space<vmem>>, vector<32x418xbf16>,
    %415 = vector.extract_strided_slice %371 {offsets = [0, 67], sizes = [32, 417], strides = [1, 1]} : vector<32x484xbf16> to vector<32x417xbf16>
    %c704 = arith.constant 704 : index
    %c0_97 = arith.constant 0 : index
    %416 = vector.load %arg10[%c704, %c0_97] : memref<1568x484xbf16, #tpu.memory_space<vmem>>, vector<32x417xbf16>
    tpu.vector_store %arg10[%c704, %c0_97], %415 {strides = array<i32>} : memref<1568x484xbf16, #tpu.memory_space<vmem>>, vector<32x417xbf16>,
    %417 = vector.extract_strided_slice %371 {offsets = [0, 68], sizes = [32, 416], strides = [1, 1]} : vector<32x484xbf16> to vector<32x416xbf16>
    %c736 = arith.constant 736 : index
    %c0_98 = arith.constant 0 : index
    %418 = vector.load %arg10[%c736, %c0_98] : memref<1568x484xbf16, #tpu.memory_space<vmem>>, vector<32x416xbf16>
    tpu.vector_store %arg10[%c736, %c0_98], %417 {strides = array<i32>} : memref<1568x484xbf16, #tpu.memory_space<vmem>>, vector<32x416xbf16>,
    %419 = vector.extract_strided_slice %371 {offsets = [0, 69], sizes = [32, 415], strides = [1, 1]} : vector<32x484xbf16> to vector<32x415xbf16>
    %c768 = arith.constant 768 : index
    %c0_99 = arith.constant 0 : index
    %420 = vector.load %arg10[%c768, %c0_99] : memref<1568x484xbf16, #tpu.memory_space<vmem>>, vector<32x415xbf16>
    tpu.vector_store %arg10[%c768, %c0_99], %419 {strides = array<i32>} : memref<1568x484xbf16, #tpu.memory_space<vmem>>, vector<32x415xbf16>,
    %421 = vector.extract_strided_slice %371 {offsets = [0, 70], sizes = [32, 414], strides = [1, 1]} : vector<32x484xbf16> to vector<32x414xbf16>
    %c800 = arith.constant 800 : index
    %c0_100 = arith.constant 0 : index
    %422 = vector.load %arg10[%c800, %c0_100] : memref<1568x484xbf16, #tpu.memory_space<vmem>>, vector<32x414xbf16>
    tpu.vector_store %arg10[%c800, %c0_100], %421 {strides = array<i32>} : memref<1568x484xbf16, #tpu.memory_space<vmem>>, vector<32x414xbf16>,
    %423 = vector.extract_strided_slice %371 {offsets = [0, 71], sizes = [32, 413], strides = [1, 1]} : vector<32x484xbf16> to vector<32x413xbf16>
    %c832 = arith.constant 832 : index
    %c0_101 = arith.constant 0 : index
    %424 = vector.load %arg10[%c832, %c0_101] : memref<1568x484xbf16, #tpu.memory_space<vmem>>, vector<32x413xbf16>
    tpu.vector_store %arg10[%c832, %c0_101], %423 {strides = array<i32>} : memref<1568x484xbf16, #tpu.memory_space<vmem>>, vector<32x413xbf16>,
    %425 = vector.extract_strided_slice %371 {offsets = [0, 72], sizes = [32, 412], strides = [1, 1]} : vector<32x484xbf16> to vector<32x412xbf16>
    %c864 = arith.constant 864 : index
    %c0_102 = arith.constant 0 : index
    %426 = vector.load %arg10[%c864, %c0_102] : memref<1568x484xbf16, #tpu.memory_space<vmem>>, vector<32x412xbf16>
    tpu.vector_store %arg10[%c864, %c0_102], %425 {strides = array<i32>} : memref<1568x484xbf16, #tpu.memory_space<vmem>>, vector<32x412xbf16>,
    %427 = vector.extract_strided_slice %371 {offsets = [0, 88], sizes = [32, 396], strides = [1, 1]} : vector<32x484xbf16> to vector<32x396xbf16>
    %c896 = arith.constant 896 : index
    %c0_103 = arith.constant 0 : index
    %428 = vector.load %arg10[%c896, %c0_103] : memref<1568x484xbf16, #tpu.memory_space<vmem>>, vector<32x396xbf16>
    tpu.vector_store %arg10[%c896, %c0_103], %427 {strides = array<i32>} : memref<1568x484xbf16, #tpu.memory_space<vmem>>, vector<32x396xbf16>,
    %429 = vector.extract_strided_slice %371 {offsets = [0, 89], sizes = [32, 395], strides = [1, 1]} : vector<32x484xbf16> to vector<32x395xbf16>
    %c928 = arith.constant 928 : index
    %c0_104 = arith.constant 0 : index
    %430 = vector.load %arg10[%c928, %c0_104] : memref<1568x484xbf16, #tpu.memory_space<vmem>>, vector<32x395xbf16>
    tpu.vector_store %arg10[%c928, %c0_104], %429 {strides = array<i32>} : memref<1568x484xbf16, #tpu.memory_space<vmem>>, vector<32x395xbf16>,
    %431 = vector.extract_strided_slice %371 {offsets = [0, 90], sizes = [32, 394], strides = [1, 1]} : vector<32x484xbf16> to vector<32x394xbf16>
    %c960 = arith.constant 960 : index
    %c0_105 = arith.constant 0 : index
    %432 = vector.load %arg10[%c960, %c0_105] : memref<1568x484xbf16, #tpu.memory_space<vmem>>, vector<32x394xbf16>
    tpu.vector_store %arg10[%c960, %c0_105], %431 {strides = array<i32>} : memref<1568x484xbf16, #tpu.memory_space<vmem>>, vector<32x394xbf16>,
    %433 = vector.extract_strided_slice %371 {offsets = [0, 91], sizes = [32, 393], strides = [1, 1]} : vector<32x484xbf16> to vector<32x393xbf16>
    %c992 = arith.constant 992 : index
    %c0_106 = arith.constant 0 : index
    %434 = vector.load %arg10[%c992, %c0_106] : memref<1568x484xbf16, #tpu.memory_space<vmem>>, vector<32x393xbf16>
    tpu.vector_store %arg10[%c992, %c0_106], %433 {strides = array<i32>} : memref<1568x484xbf16, #tpu.memory_space<vmem>>, vector<32x393xbf16>,
    %435 = vector.extract_strided_slice %371 {offsets = [0, 92], sizes = [32, 392], strides = [1, 1]} : vector<32x484xbf16> to vector<32x392xbf16>
    %c1024 = arith.constant 1024 : index
    %c0_107 = arith.constant 0 : index
    %436 = vector.load %arg10[%c1024, %c0_107] : memref<1568x484xbf16, #tpu.memory_space<vmem>>, vector<32x392xbf16>
    tpu.vector_store %arg10[%c1024, %c0_107], %435 {strides = array<i32>} : memref<1568x484xbf16, #tpu.memory_space<vmem>>, vector<32x392xbf16>,
    %437 = vector.extract_strided_slice %371 {offsets = [0, 93], sizes = [32, 391], strides = [1, 1]} : vector<32x484xbf16> to vector<32x391xbf16>
    %c1056 = arith.constant 1056 : index
    %c0_108 = arith.constant 0 : index
    %438 = vector.load %arg10[%c1056, %c0_108] : memref<1568x484xbf16, #tpu.memory_space<vmem>>, vector<32x391xbf16>
    tpu.vector_store %arg10[%c1056, %c0_108], %437 {strides = array<i32>} : memref<1568x484xbf16, #tpu.memory_space<vmem>>, vector<32x391xbf16>,
    %439 = vector.extract_strided_slice %371 {offsets = [0, 94], sizes = [32, 390], strides = [1, 1]} : vector<32x484xbf16> to vector<32x390xbf16>
    %c1088 = arith.constant 1088 : index
    %c0_109 = arith.constant 0 : index
    %440 = vector.load %arg10[%c1088, %c0_109] : memref<1568x484xbf16, #tpu.memory_space<vmem>>, vector<32x390xbf16>
    tpu.vector_store %arg10[%c1088, %c0_109], %439 {strides = array<i32>} : memref<1568x484xbf16, #tpu.memory_space<vmem>>, vector<32x390xbf16>,
    %441 = vector.extract_strided_slice %371 {offsets = [0, 110], sizes = [32, 374], strides = [1, 1]} : vector<32x484xbf16> to vector<32x374xbf16>
    %c1120 = arith.constant 1120 : index
    %c0_110 = arith.constant 0 : index
    %442 = vector.load %arg10[%c1120, %c0_110] : memref<1568x484xbf16, #tpu.memory_space<vmem>>, vector<32x374xbf16>
    tpu.vector_store %arg10[%c1120, %c0_110], %441 {strides = array<i32>} : memref<1568x484xbf16, #tpu.memory_space<vmem>>, vector<32x374xbf16>,
    %443 = vector.extract_strided_slice %371 {offsets = [0, 111], sizes = [32, 373], strides = [1, 1]} : vector<32x484xbf16> to vector<32x373xbf16>
    %c1152 = arith.constant 1152 : index
    %c0_111 = arith.constant 0 : index
    %444 = vector.load %arg10[%c1152, %c0_111] : memref<1568x484xbf16, #tpu.memory_space<vmem>>, vector<32x373xbf16>
    tpu.vector_store %arg10[%c1152, %c0_111], %443 {strides = array<i32>} : memref<1568x484xbf16, #tpu.memory_space<vmem>>, vector<32x373xbf16>,
    %445 = vector.extract_strided_slice %371 {offsets = [0, 112], sizes = [32, 372], strides = [1, 1]} : vector<32x484xbf16> to vector<32x372xbf16>
    %c1184 = arith.constant 1184 : index
    %c0_112 = arith.constant 0 : index
    %446 = vector.load %arg10[%c1184, %c0_112] : memref<1568x484xbf16, #tpu.memory_space<vmem>>, vector<32x372xbf16>
    tpu.vector_store %arg10[%c1184, %c0_112], %445 {strides = array<i32>} : memref<1568x484xbf16, #tpu.memory_space<vmem>>, vector<32x372xbf16>,
    %447 = vector.extract_strided_slice %371 {offsets = [0, 113], sizes = [32, 371], strides = [1, 1]} : vector<32x484xbf16> to vector<32x371xbf16>
    %c1216 = arith.constant 1216 : index
    %c0_113 = arith.constant 0 : index
    %448 = vector.load %arg10[%c1216, %c0_113] : memref<1568x484xbf16, #tpu.memory_space<vmem>>, vector<32x371xbf16>
    tpu.vector_store %arg10[%c1216, %c0_113], %447 {strides = array<i32>} : memref<1568x484xbf16, #tpu.memory_space<vmem>>, vector<32x371xbf16>,
    %449 = vector.extract_strided_slice %371 {offsets = [0, 114], sizes = [32, 370], strides = [1, 1]} : vector<32x484xbf16> to vector<32x370xbf16>
    %c1248 = arith.constant 1248 : index
    %c0_114 = arith.constant 0 : index
    %450 = vector.load %arg10[%c1248, %c0_114] : memref<1568x484xbf16, #tpu.memory_space<vmem>>, vector<32x370xbf16>
    tpu.vector_store %arg10[%c1248, %c0_114], %449 {strides = array<i32>} : memref<1568x484xbf16, #tpu.memory_space<vmem>>, vector<32x370xbf16>,
    %451 = vector.extract_strided_slice %371 {offsets = [0, 115], sizes = [32, 369], strides = [1, 1]} : vector<32x484xbf16> to vector<32x369xbf16>
    %c1280 = arith.constant 1280 : index
    %c0_115 = arith.constant 0 : index
    %452 = vector.load %arg10[%c1280, %c0_115] : memref<1568x484xbf16, #tpu.memory_space<vmem>>, vector<32x369xbf16>
    tpu.vector_store %arg10[%c1280, %c0_115], %451 {strides = array<i32>} : memref<1568x484xbf16, #tpu.memory_space<vmem>>, vector<32x369xbf16>,
    %453 = vector.extract_strided_slice %371 {offsets = [0, 116], sizes = [32, 368], strides = [1, 1]} : vector<32x484xbf16> to vector<32x368xbf16>
    %c1312 = arith.constant 1312 : index
    %c0_116 = arith.constant 0 : index
    %454 = vector.load %arg10[%c1312, %c0_116] : memref<1568x484xbf16, #tpu.memory_space<vmem>>, vector<32x368xbf16>
    tpu.vector_store %arg10[%c1312, %c0_116], %453 {strides = array<i32>} : memref<1568x484xbf16, #tpu.memory_space<vmem>>, vector<32x368xbf16>,
    %455 = vector.extract_strided_slice %371 {offsets = [0, 132], sizes = [32, 352], strides = [1, 1]} : vector<32x484xbf16> to vector<32x352xbf16>
    %c1344 = arith.constant 1344 : index
    %c0_117 = arith.constant 0 : index
    %456 = vector.load %arg10[%c1344, %c0_117] : memref<1568x484xbf16, #tpu.memory_space<vmem>>, vector<32x352xbf16>
    tpu.vector_store %arg10[%c1344, %c0_117], %455 {strides = array<i32>} : memref<1568x484xbf16, #tpu.memory_space<vmem>>, vector<32x352xbf16>,
    %457 = vector.extract_strided_slice %371 {offsets = [0, 133], sizes = [32, 351], strides = [1, 1]} : vector<32x484xbf16> to vector<32x351xbf16>
    %c1376 = arith.constant 1376 : index
    %c0_118 = arith.constant 0 : index
    %458 = vector.load %arg10[%c1376, %c0_118] : memref<1568x484xbf16, #tpu.memory_space<vmem>>, vector<32x351xbf16>
    tpu.vector_store %arg10[%c1376, %c0_118], %457 {strides = array<i32>} : memref<1568x484xbf16, #tpu.memory_space<vmem>>, vector<32x351xbf16>,
    %459 = vector.extract_strided_slice %371 {offsets = [0, 134], sizes = [32, 350], strides = [1, 1]} : vector<32x484xbf16> to vector<32x350xbf16>
    %c1408 = arith.constant 1408 : index
    %c0_119 = arith.constant 0 : index
    %460 = vector.load %arg10[%c1408, %c0_119] : memref<1568x484xbf16, #tpu.memory_space<vmem>>, vector<32x350xbf16>
    tpu.vector_store %arg10[%c1408, %c0_119], %459 {strides = array<i32>} : memref<1568x484xbf16, #tpu.memory_space<vmem>>, vector<32x350xbf16>,
    %461 = vector.extract_strided_slice %371 {offsets = [0, 135], sizes = [32, 349], strides = [1, 1]} : vector<32x484xbf16> to vector<32x349xbf16>
    %c1440 = arith.constant 1440 : index
    %c0_120 = arith.constant 0 : index
    %462 = vector.load %arg10[%c1440, %c0_120] : memref<1568x484xbf16, #tpu.memory_space<vmem>>, vector<32x349xbf16>
    tpu.vector_store %arg10[%c1440, %c0_120], %461 {strides = array<i32>} : memref<1568x484xbf16, #tpu.memory_space<vmem>>, vector<32x349xbf16>,
    %463 = vector.extract_strided_slice %371 {offsets = [0, 136], sizes = [32, 348], strides = [1, 1]} : vector<32x484xbf16> to vector<32x348xbf16>
    %c1472 = arith.constant 1472 : index
    %c0_121 = arith.constant 0 : index
    %464 = vector.load %arg10[%c1472, %c0_121] : memref<1568x484xbf16, #tpu.memory_space<vmem>>, vector<32x348xbf16>
    tpu.vector_store %arg10[%c1472, %c0_121], %463 {strides = array<i32>} : memref<1568x484xbf16, #tpu.memory_space<vmem>>, vector<32x348xbf16>,
    %465 = vector.extract_strided_slice %371 {offsets = [0, 137], sizes = [32, 347], strides = [1, 1]} : vector<32x484xbf16> to vector<32x347xbf16>
    %c1504 = arith.constant 1504 : index
    %c0_122 = arith.constant 0 : index
    %466 = vector.load %arg10[%c1504, %c0_122] : memref<1568x484xbf16, #tpu.memory_space<vmem>>, vector<32x347xbf16>
    tpu.vector_store %arg10[%c1504, %c0_122], %465 {strides = array<i32>} : memref<1568x484xbf16, #tpu.memory_space<vmem>>, vector<32x347xbf16>,
    %467 = vector.extract_strided_slice %371 {offsets = [0, 138], sizes = [32, 346], strides = [1, 1]} : vector<32x484xbf16> to vector<32x346xbf16>
    %c1536 = arith.constant 1536 : index
    %c0_123 = arith.constant 0 : index
    %468 = vector.load %arg10[%c1536, %c0_123] : memref<1568x484xbf16, #tpu.memory_space<vmem>>, vector<32x346xbf16>
    tpu.vector_store %arg10[%c1536, %c0_123], %467 {strides = array<i32>} : memref<1568x484xbf16, #tpu.memory_space<vmem>>, vector<32x346xbf16>,
    %c0_124 = arith.constant 0 : index
    %c0_125 = arith.constant 0 : index
    %469 = vector.load %arg4[%c0_124, %c0_125] : memref<3x1568xbf16, #tpu.memory_space<vmem>>, vector<3x1568xbf16>
    %c0_126 = arith.constant 0 : index
    %c0_127 = arith.constant 0 : index
    %470 = vector.load %arg10[%c0_126, %c0_127] : memref<1568x484xbf16, #tpu.memory_space<vmem>>, vector<1568x484xbf16>
    %cst_128 = arith.constant dense<0.000000e+00> : vector<3x484xf32>
    %471 = tpu.matmul %469, %470, %cst_128 {dimension_numbers = #tpu.dot_dimension_numbers<[1], [0], [0], [1], [0, 0, 1, 1], [], []>} : vector<3x1568xbf16>, vector<1568x484xbf16>, vector<3x484xf32> -> vector<3x484xf32>
    %c0_129 = arith.constant 0 : index
    %c0_130 = arith.constant 0 : index
    %472 = vector.load %arg5[%c0_129, %c0_130] : memref<3x1xf32, #tpu.memory_space<vmem>>, vector<3x1xf32>
    %473 = vector.broadcast %472 : vector<3x1xf32> to vector<3x484xf32>
    %474 = arith.addf %471, %473 : vector<3x484xf32>
    %475 = vector.extract_strided_slice %474 {offsets = [0, 0], sizes = [3, 16], strides = [1, 1]} : vector<3x484xf32> to vector<3x16xf32>
    %476 = vector.extract_strided_slice %474 {offsets = [0, 22], sizes = [3, 16], strides = [1, 1]} : vector<3x484xf32> to vector<3x16xf32>
    %477 = vector.extract_strided_slice %474 {offsets = [0, 44], sizes = [3, 16], strides = [1, 1]} : vector<3x484xf32> to vector<3x16xf32>
    %478 = vector.extract_strided_slice %474 {offsets = [0, 66], sizes = [3, 16], strides = [1, 1]} : vector<3x484xf32> to vector<3x16xf32>
    %479 = vector.extract_strided_slice %474 {offsets = [0, 88], sizes = [3, 16], strides = [1, 1]} : vector<3x484xf32> to vector<3x16xf32>
    %480 = vector.extract_strided_slice %474 {offsets = [0, 110], sizes = [3, 16], strides = [1, 1]} : vector<3x484xf32> to vector<3x16xf32>
    %481 = vector.extract_strided_slice %474 {offsets = [0, 132], sizes = [3, 16], strides = [1, 1]} : vector<3x484xf32> to vector<3x16xf32>
    %482 = vector.extract_strided_slice %474 {offsets = [0, 154], sizes = [3, 16], strides = [1, 1]} : vector<3x484xf32> to vector<3x16xf32>
    %483 = vector.extract_strided_slice %474 {offsets = [0, 176], sizes = [3, 16], strides = [1, 1]} : vector<3x484xf32> to vector<3x16xf32>
    %484 = vector.extract_strided_slice %474 {offsets = [0, 198], sizes = [3, 16], strides = [1, 1]} : vector<3x484xf32> to vector<3x16xf32>
    %485 = vector.extract_strided_slice %474 {offsets = [0, 220], sizes = [3, 16], strides = [1, 1]} : vector<3x484xf32> to vector<3x16xf32>
    %486 = vector.extract_strided_slice %474 {offsets = [0, 242], sizes = [3, 16], strides = [1, 1]} : vector<3x484xf32> to vector<3x16xf32>
    %487 = vector.extract_strided_slice %474 {offsets = [0, 264], sizes = [3, 16], strides = [1, 1]} : vector<3x484xf32> to vector<3x16xf32>
    %488 = vector.extract_strided_slice %474 {offsets = [0, 286], sizes = [3, 16], strides = [1, 1]} : vector<3x484xf32> to vector<3x16xf32>
    %489 = vector.extract_strided_slice %474 {offsets = [0, 308], sizes = [3, 16], strides = [1, 1]} : vector<3x484xf32> to vector<3x16xf32>
    %490 = vector.extract_strided_slice %474 {offsets = [0, 330], sizes = [3, 16], strides = [1, 1]} : vector<3x484xf32> to vector<3x16xf32>
    %491 = tpu.concatenate %475, %476, %477, %478, %479, %480, %481, %482, %483, %484, %485, %486, %487, %488, %489, %490 in 1 : vector<3x16xf32>, vector<3x16xf32>, vector<3x16xf32>, vector<3x16xf32>, vector<3x16xf32>, vector<3x16xf32>, vector<3x16xf32>, vector<3x16xf32>, vector<3x16xf32>, vector<3x16xf32>, vector<3x16xf32>, vector<3x16xf32>, vector<3x16xf32>, vector<3x16xf32>, vector<3x16xf32>, vector<3x16xf32> -> vector<3x256xf32>
    %492 = math.tanh %491 : vector<3x256xf32>
    %c0_131 = arith.constant 0 : index
    %c0_132 = arith.constant 0 : index
    %c0_133 = arith.constant 0 : index
    %493 = vector.load %arg6[%c0_131, %c0_132, %c0_133] : memref<1x3x256xf32, #tpu.memory_space<vmem>>, vector<1x3x256xf32>
    %494 = vector.shape_cast %493 : vector<1x3x256xf32> to vector<3x256xf32>
    %495 = vector.shape_cast %492 : vector<3x256xf32> to vector<1x3x256xf32>
    tpu.vector_store %arg6[%c0_131, %c0_132, %c0_133], %495 {strides = array<i32>} : memref<1x3x256xf32, #tpu.memory_space<vmem>>, vector<1x3x256xf32>,
    return
  }
  func.func @transform_0(%arg0: i32) -> (i32, i32, i32) {
    %c0_i32 = arith.constant 0 : i32
    %c0_i32_0 = arith.constant 0 : i32
    %c0_i32_1 = arith.constant 0 : i32
    return %arg0, %c0_i32, %c0_i32_0 : i32, i32, i32
  }
  func.func @transform_1(%arg0: i32) -> (i32, i32) {
    %c0_i32 = arith.constant 0 : i32
    %c0_i32_0 = arith.constant 0 : i32
    %c0_i32_1 = arith.constant 0 : i32
    return %c0_i32, %c0_i32_0 : i32, i32
  }
  func.func @transform_2(%arg0: i32) -> (i32, i32) {
    %c0_i32 = arith.constant 0 : i32
    %c0_i32_0 = arith.constant 0 : i32
    %c0_i32_1 = arith.constant 0 : i32
    return %c0_i32, %c0_i32_0 : i32, i32
  }
  func.func @transform_3(%arg0: i32) -> (i32, i32) {
    %c0_i32 = arith.constant 0 : i32
    %c0_i32_0 = arith.constant 0 : i32
    %c0_i32_1 = arith.constant 0 : i32
    return %c0_i32, %c0_i32_0 : i32, i32
  }
  func.func @transform_4(%arg0: i32) -> (i32, i32) {
    %c0_i32 = arith.constant 0 : i32
    %c0_i32_0 = arith.constant 0 : i32
    %c0_i32_1 = arith.constant 0 : i32
    return %c0_i32, %c0_i32_0 : i32, i32
  }
  func.func @transform_5(%arg0: i32) -> (i32, i32, i32) {
    %c0_i32 = arith.constant 0 : i32
    %c0_i32_0 = arith.constant 0 : i32
    %c0_i32_1 = arith.constant 0 : i32
    return %arg0, %c0_i32, %c0_i32_0 : i32, i32, i32
  }
}

</mosaic_0001>

<llo_original>
// kernel: image_generator_forward.1
$region0: #{image_generator_forward.1}
  #allocation0 [shape = 'u32[]', space=smem, size = 0x4, offset = 0x4, fixed_abs, tag = 'smem constant byte address 0x4 - core index']
  #allocation1 [shape = 'u32[144,128]{1,0:T(1,128)}', space=vmem, size = 0x12000, scoped, tag = 'internal scratch']
  #allocation2 [shape = 'f32[4,324]{1,0:T(4,128)}', space=vmem, size = 0x1800, scoped, tag = 'scratch operand']
  #allocation3 [shape = 'f32[36,324]{1,0:T(8,128)}', space=vmem, size = 0xf000, scoped, tag = 'scratch operand']
  #allocation4 [shape = 'bf16[32,484]{1,0:T(16,128)(2,1)}', space=vmem, size = 0x8000, scoped, tag = 'scratch operand']
  #allocation5 [shape = 'bf16[1568,484]{1,0:T(16,128)(2,1)}', space=vmem, size = 0x188000, scoped, tag = 'scratch operand']
  %s0 = inlined_call_operand.vmem [shape: f32[2,4,256], index: 0, kind: input, shape index: {}]
  %s1 = inlined_call_operand.vmem [shape: f32[32,36], index: 1, kind: input, shape index: {}]
  %s2 = inlined_call_operand.vmem [shape: f32[32,1], index: 2, kind: input, shape index: {}]
  %s3 = inlined_call_operand.vmem [shape: bf16[3,1568], index: 3, kind: input, shape index: {}]
  %s4 = inlined_call_operand.vmem [shape: f32[3,1], index: 4, kind: input, shape index: {}]
  %s5 = inlined_call_operand.vmem [shape: f32[2,3,256], index: 5, kind: output, shape index: {}]
  %s6 = sld [smem:[#allocation0]]
  $region53: #{image_generator_forward.1} parent=0
    _
  %s8 = ssub.s32 1, %s6
  %s9 = scalar_select 0, %s8, %s6
  loop: start=0, step=1, limit=4
  $region2: #{image_generator_forward.1} parent=0 // loop_pre_header
    _
  $region3: #{image_generator_forward.1} parent=0 // loop_header
    %s11 = sphi 0, %s15
    %p12 = scmp.ge.s32.totalorder %s11, 4
    %s21 = sphi 0, %s23
    %s24 = sphi 0, %s21
    %s25 = sphi 0, %s24
    %s41 = sphi 0, %s25
    %s45 = sphi 0, %s45
    %s47 = sphi 0, %s45
    %s48 = sphi 0, %s47
    %s62 = sphi 0, %s48
    %s66 = sphi 0, %s66
    %s68 = sphi 0, %s66
    %s69 = sphi 0, %s68
    %s83 = sphi 0, %s69
    %s87 = sphi 0, %s87
    %s89 = sphi 0, %s87
    %s90 = sphi 0, %s89
    %s104 = sphi 0, %s90
    %s108 = sphi 0, %s108
    %s110 = sphi 0, %s108
    %s111 = sphi 0, %s110
    %s125 = sphi 0, %s111
    %s131 = sphi 0, %s133
    %s134 = sphi 0, %s131
    %s135 = sphi 0, %s134
    %s151 = sphi 0, %s135
  $region4: #{image_generator_forward.1} parent=0 // loop_header_branch
    %14 = sbr.rel (%p12) target = $region8
  $region5: #{image_generator_forward.1} parent=0 // loop_body
    %s16 = ssub.s32 %s11, 1
    %s17 = ssub.s32 %s11, 2
    %s18 = sadd.s32 %s11, 1
    %s19 = ssub.s32 %s11, %s18
    %p20 = scmp.eq.s32.totalorder %s19, 0
    %s22 = sadd.s32 %s21, 1
    %s23 = scalar_select %p20, %s21, %s22
    %p26 = pneg %p20
    %p27 = scmp.eq.s32.totalorder %s11, 1
    %p28 = por %p26, %p27
    %p29 = scmp.ne.s32.totalorder %s21, %s24
    %p30 = scmp.eq.s32.totalorder %s11, 0
    %p31 = por %p29, %p30
    %p32 = scmp.ne.s32.totalorder %s21, %s24
    %p33 = scmp.eq.s32.totalorder %s16, 1
    %p34 = por %p32, %p33
    %p35 = scmp.ne.s32.totalorder %s24, %s25
    %p36 = scmp.eq.s32.totalorder %s16, 0
    %p37 = por %p35, %p36
    %p38 = scmp.ne.s32.totalorder %s24, %s25
    %p39 = scmp.eq.s32.totalorder %s17, 1
    %p40 = por %p38, %p39
    %p42 = scmp.ne.s32.totalorder %s25, %s41
    %p43 = scmp.eq.s32.totalorder %s17, 0
    %p44 = por %p42, %p43
    %s46 = sadd.s32 %s45, 1
    %p49 = scmp.eq.s32.totalorder %s11, 1
    %p50 = scmp.ne.s32.totalorder %s45, %s47
    %p51 = scmp.eq.s32.totalorder %s11, 0
    %p52 = por %p50, %p51
    %p53 = scmp.ne.s32.totalorder %s45, %s47
    %p54 = scmp.eq.s32.totalorder %s16, 1
    %p55 = por %p53, %p54
    %p56 = scmp.ne.s32.totalorder %s47, %s48
    %p57 = scmp.eq.s32.totalorder %s16, 0
    %p58 = por %p56, %p57
    %p59 = scmp.ne.s32.totalorder %s47, %s48
    %p60 = scmp.eq.s32.totalorder %s17, 1
    %p61 = por %p59, %p60
    %p63 = scmp.ne.s32.totalorder %s48, %s62
    %p64 = scmp.eq.s32.totalorder %s17, 0
    %p65 = por %p63, %p64
    %s67 = sadd.s32 %s66, 1
    %p70 = scmp.eq.s32.totalorder %s11, 1
    %p71 = scmp.ne.s32.totalorder %s66, %s68
    %p72 = scmp.eq.s32.totalorder %s11, 0
    %p73 = por %p71, %p72
    %p74 = scmp.ne.s32.totalorder %s66, %s68
    %p75 = scmp.eq.s32.totalorder %s16, 1
    %p76 = por %p74, %p75
    %p77 = scmp.ne.s32.totalorder %s68, %s69
    %p78 = scmp.eq.s32.totalorder %s16, 0
    %p79 = por %p77, %p78
    %p80 = scmp.ne.s32.totalorder %s68, %s69
    %p81 = scmp.eq.s32.totalorder %s17, 1
    %p82 = por %p80, %p81
    %p84 = scmp.ne.s32.totalorder %s69, %s83
    %p85 = scmp.eq.s32.totalorder %s17, 0
    %p86 = por %p84, %p85
    %s88 = sadd.s32 %s87, 1
    %p91 = scmp.eq.s32.totalorder %s11, 1
    %p92 = scmp.ne.s32.totalorder %s87, %s89
    %p93 = scmp.eq.s32.totalorder %s11, 0
    %p94 = por %p92, %p93
    %p95 = scmp.ne.s32.totalorder %s87, %s89
    %p96 = scmp.eq.s32.totalorder %s16, 1
    %p97 = por %p95, %p96
    %p98 = scmp.ne.s32.totalorder %s89, %s90
    %p99 = scmp.eq.s32.totalorder %s16, 0
    %p100 = por %p98, %p99
    %p101 = scmp.ne.s32.totalorder %s89, %s90
    %p102 = scmp.eq.s32.totalorder %s17, 1
    %p103 = por %p101, %p102
    %p105 = scmp.ne.s32.totalorder %s90, %s104
    %p106 = scmp.eq.s32.totalorder %s17, 0
    %p107 = por %p105, %p106
    %s109 = sadd.s32 %s108, 1
    %p112 = scmp.eq.s32.totalorder %s11, 1
    %p113 = scmp.ne.s32.totalorder %s108, %s110
    %p114 = scmp.eq.s32.totalorder %s11, 0
    %p115 = por %p113, %p114
    %p116 = scmp.ne.s32.totalorder %s108, %s110
    %p117 = scmp.eq.s32.totalorder %s16, 1
    %p118 = por %p116, %p117
    %p119 = scmp.ne.s32.totalorder %s110, %s111
    %p120 = scmp.eq.s32.totalorder %s16, 0
    %p121 = por %p119, %p120
    %p122 = scmp.ne.s32.totalorder %s110, %s111
    %p123 = scmp.eq.s32.totalorder %s17, 1
    %p124 = por %p122, %p123
    %p126 = scmp.ne.s32.totalorder %s111, %s125
    %p127 = scmp.eq.s32.totalorder %s17, 0
    %p128 = por %p126, %p127
    %s129 = ssub.s32 %s11, %s18
    %p130 = scmp.eq.s32.totalorder %s129, 0
    %s132 = sadd.s32 %s131, 1
    %s133 = scalar_select %p130, %s131, %s132
    %p136 = pneg %p130
    %p137 = scmp.eq.s32.totalorder %s11, 1
    %p138 = por %p136, %p137
    %p139 = scmp.ne.s32.totalorder %s131, %s134
    %p140 = scmp.eq.s32.totalorder %s11, 0
    %p141 = por %p139, %p140
    %p142 = scmp.ne.s32.totalorder %s131, %s134
    %p143 = scmp.eq.s32.totalorder %s16, 1
    %p144 = por %p142, %p143
    %p145 = scmp.ne.s32.totalorder %s134, %s135
    %p146 = scmp.eq.s32.totalorder %s16, 0
    %p147 = por %p145, %p146
    %p148 = scmp.ne.s32.totalorder %s134, %s135
    %p149 = scmp.eq.s32.totalorder %s17, 1
    %p150 = por %p148, %p149
    %p152 = scmp.ne.s32.totalorder %s135, %s151
    %p153 = scmp.eq.s32.totalorder %s17, 0
    %p154 = por %p152, %p153
    %p155 = scmp.le.s32.totalorder 1, %s11
    %p156 = scmp.lt.s32.totalorder %s11, 3
    %p157 = pnand %p155, %p156
    %p158 = pneg %p157
    // Predicated region
    $region9: #{image_generator_forward.1} parent=5 // pred_check
      _
    $region10: #{image_generator_forward.1} parent=5 // pred_check_branch
      %160 = sbr.rel (%p157) target = $region12
    $region11: #{image_generator_forward.1} parent=5 // pred_region
      %s161 = ssub.s32 %s11, 1
      // Predicated region
      $region13: #{image_generator_forward.1} parent=11 // pred_check
        %p162 = pneg %p58
      $region14: #{image_generator_forward.1} parent=11 // pred_check_branch
        %164 = sbr.rel (%p162) target = $region16
      $region15: #{image_generator_forward.1} parent=11 // pred_region
        _
      $region16: #{image_generator_forward.1} parent=11 // pred_fallthru
        _
      // Predicated region
      $region17: #{image_generator_forward.1} parent=11 // pred_check
        %p165 = pneg %p79
      $region18: #{image_generator_forward.1} parent=11 // pred_check_branch
        %167 = sbr.rel (%p165) target = $region20
      $region19: #{image_generator_forward.1} parent=11 // pred_region
        _
      $region20: #{image_generator_forward.1} parent=11 // pred_fallthru
        _
      // Predicated region
      $region21: #{image_generator_forward.1} parent=11 // pred_check
        %p168 = pneg %p100
      $region22: #{image_generator_forward.1} parent=11 // pred_check_branch
        %170 = sbr.rel (%p168) target = $region24
      $region23: #{image_generator_forward.1} parent=11 // pred_region
        _
      $region24: #{image_generator_forward.1} parent=11 // pred_fallthru
        _
      // Predicated region
      $region25: #{image_generator_forward.1} parent=11 // pred_check
        %p171 = pneg %p121
      $region26: #{image_generator_forward.1} parent=11 // pred_check_branch
        %173 = sbr.rel (%p171) target = $region28
      $region27: #{image_generator_forward.1} parent=11 // pred_region
        _
      $region28: #{image_generator_forward.1} parent=11 // pred_fallthru
        _
    $region12: #{image_generator_forward.1} parent=5 // pred_fallthru
      _
    %p174 = scmp.lt.s32.totalorder %s11, 2
    // Predicated region
    $region29: #{image_generator_forward.1} parent=5 // pred_check
      %p175 = pneg %p174
    $region30: #{image_generator_forward.1} parent=5 // pred_check_branch
      %177 = sbr.rel (%p175) target = $region32
    $region31: #{image_generator_forward.1} parent=5 // pred_region
      // Predicated region
      $region33: #{image_generator_forward.1} parent=31 // pred_check
        %p178 = pneg %p31
      $region34: #{image_generator_forward.1} parent=31 // pred_check_branch
        %180 = sbr.rel (%p178) target = $region36
      $region35: #{image_generator_forward.1} parent=31 // pred_region
        %p181 = scmp.lt.s32.totalorder %s11, 1
        %s182 = scalar_select %p181, %s11, 1
        %s183 = smul.addr %s182, 2
        %s184 = smul.addr %s183, 4
        %s185 = scalar_lea.vmem %s0, %s184
      $region36: #{image_generator_forward.1} parent=31 // pred_fallthru
        _
    $region32: #{image_generator_forward.1} parent=5 // pred_fallthru
      _
    %p186 = scmp.le.s32.totalorder 1, %s11
    %p187 = scmp.lt.s32.totalorder %s11, 3
    %p188 = pnand %p186, %p187
    %p189 = pneg %p188
    // Predicated region
    $region37: #{image_generator_forward.1} parent=5 // pred_check
      _
    $region38: #{image_generator_forward.1} parent=5 // pred_check_branch
      %191 = sbr.rel (%p188) target = $region40
    $region39: #{image_generator_forward.1} parent=5 // pred_region
      %s192 = ssub.s32 %s11, 1
      %p193 = scmp.lt.s32.totalorder %s16, 1
      %s194 = scalar_select %p193, %s16, 1
      %s195 = smul.addr %s194, 2
      %s196 = smul.addr %s195, 4
      %s197 = scalar_lea.vmem %s0, %s196
      %p198 = pneg %p37
      %p199 = pneg %p34
      %p200 = pneg %p58
      %p201 = pneg %p55
      %p202 = pneg %p79
      %p203 = pneg %p76
      %p204 = pneg %p100
      %p205 = pneg %p97
      %p206 = pneg %p121
      %p207 = pneg %p118
      %p208 = pneg %p147
      %p209 = pneg %p144
      %p210 = scmp.lt.s32.totalorder %s16, 1
      %s211 = scalar_select %p210, %s16, 1
      %s212 = smul.addr %s211, 2
      %s213 = smul.addr %s212, 4
      %s214 = scalar_lea.vmem %s5, %s213
      %p215 = scmp.lt.s32.totalorder %s16, 1
      %s216 = scalar_select %p215, %s16, 1
      %s217 = smul.addr %s216, 2
      %s218 = smul.addr %s217, 4
      %s219 = scalar_lea.vmem %s0, %s218
      %p220 = scmp.lt.s32.totalorder %s16, 1
      %s221 = scalar_select %p220, %s16, 1
      %s222 = smul.addr %s221, 2
      %s223 = smul.addr %s222, 4
      %s224 = scalar_lea.vmem %s5, %s223
      %v226 = vld [vmem:[%s219] sm:$0xff]
      %228 = vrot.lane.b32.xlu0 %v226, 111
      %v229 = vpop.permute.xlu0 %228
      %231 = vrot.lane.b32.xlu0 %v226, 113
      %v232 = vpop.permute.xlu0 %231
      %234 = vrot.lane.b32.xlu0 %v226, 115
      %v235 = vpop.permute.xlu0 %234
      %vm237 = vcmask 7168
      %v238 = vsel %vm237, %v229, %v232
      %vm239 = vcmask 138240
      %v240 = vsel %vm239, %v238, %v235
      %vm241 = vcmask 142336
      %242 = vst.msk [vmem:[#allocation2] sm:$0xf] %vm241, %v240
      %243 = vrot.lane.b32.xlu0 %v226, 127
      %v244 = vpop.permute.xlu0 %243
      %246 = vrot.lane.b32.xlu0 %v226, 1
      %v247 = vpop.permute.xlu0 %246
      %249 = vrot.lane.b32.xlu0 %v226, 3
      %v250 = vpop.permute.xlu0 %249
      %v252 = vsel %vm237, %v244, %v247
      %v253 = vsel %vm239, %v252, %v250
      %255 = vrot.lane.b32.xlu0 %v253, 18
      %v256 = vpop.permute.xlu0 %255
      %vm258 = vcmask 289936
      %259 = vst.msk [vmem:[#allocation2] sm:$0xf] %vm258, %v256
      %261 = vrot.lane.b32.xlu0 %v240, 36
      %v262 = vpop.permute.xlu0 %261
      %vm264 = vcmask 437536
      %265 = vst.msk [vmem:[#allocation2] sm:$0xf] %vm264, %v262
      %266 = vrot.lane.b32.xlu0 %v226, 95
      %v267 = vpop.permute.xlu0 %266
      %269 = vrot.lane.b32.xlu0 %v226, 97
      %v270 = vpop.permute.xlu0 %269
      %272 = vrot.lane.b32.xlu0 %v226, 99
      %v273 = vpop.permute.xlu0 %272
      %v275 = vsel %vm237, %v267, %v270
      %v276 = vsel %vm239, %v275, %v273
      %278 = vrot.lane.b32.xlu0 %v276, 54
      %v279 = vpop.permute.xlu0 %278
      %vm281 = vcmask 585136
      %282 = vst.msk [vmem:[#allocation2] sm:$0xf] %vm281, %v279
      %283 = vrot.lane.b32.xlu0 %v226, 79
      %v284 = vpop.permute.xlu0 %283
      %286 = vrot.lane.b32.xlu0 %v226, 81
      %v287 = vpop.permute.xlu0 %286
      %289 = vrot.lane.b32.xlu0 %v226, 83
      %v290 = vpop.permute.xlu0 %289
      %v292 = vsel %vm237, %v284, %v287
      %v293 = vsel %vm239, %v292, %v290
      %295 = vrot.lane.b32.xlu0 %v293, 72
      %v296 = vpop.permute.xlu0 %295
      %vm298 = vcmask 732736
      %299 = vst.msk [vmem:[#allocation2] sm:$0xf] %vm298, %v296
      %300 = vrot.lane.b32.xlu0 %v226, 63
      %v301 = vpop.permute.xlu0 %300
      %303 = vrot.lane.b32.xlu0 %v226, 65
      %v304 = vpop.permute.xlu0 %303
      %306 = vrot.lane.b32.xlu0 %v226, 67
      %v307 = vpop.permute.xlu0 %306
      %v309 = vsel %vm237, %v301, %v304
      %v310 = vsel %vm239, %v309, %v307
      %312 = vrot.lane.b32.xlu0 %v310, 90
      %v313 = vpop.permute.xlu0 %312
      %vm315 = vcmask 880336
      %316 = vst.msk [vmem:[#allocation2] sm:$0xf] %vm315, %v313
      %317 = vrot.lane.b32.xlu0 %v226, 47
      %v318 = vpop.permute.xlu0 %317
      %320 = vrot.lane.b32.xlu0 %v226, 49
      %v321 = vpop.permute.xlu0 %320
      %323 = vrot.lane.b32.xlu0 %v226, 51
      %v324 = vpop.permute.xlu0 %323
      %v326 = vsel %vm237, %v318, %v321
      %v327 = vsel %vm239, %v326, %v324
      %329 = vrot.lane.b32.xlu0 %v327, 108
      %v330 = vpop.permute.xlu0 %329
      %vm332 = vcmask 1027936
      %333 = vst.msk [vmem:[#allocation2] sm:$0xf] %vm332, %v330
      %334 = vrot.lane.b32.xlu0 %v226, 31
      %v335 = vpop.permute.xlu0 %334
      %337 = vrot.lane.b32.xlu0 %v226, 33
      %v338 = vpop.permute.xlu0 %337
      %340 = vrot.lane.b32.xlu0 %v226, 35
      %v341 = vpop.permute.xlu0 %340
      %v343 = vsel %vm237, %v335, %v338
      %v344 = vsel %vm239, %v343, %v341
      %346 = vrot.lane.b32.xlu0 %v344, 126
      %v347 = vpop.permute.xlu0 %346
      %v348 = vrot.slane %v347, 4
      %vm349 = vcmask 1031168
      %v350 = vsel %vm349, %v348, %v347
      %vm352 = vcmask 1044464
      %vm353 = vcmask 130052
      %vm354 = vmor %vm353, %vm352
      %355 = vst.msk [vmem:[#allocation2] sm:$0xff] %vm354, %v350
      %356 = vrot.lane.b32.xlu0 %v226, 15
      %v357 = vpop.permute.xlu0 %356
      %359 = vrot.lane.b32.xlu0 %v226, 17
      %v360 = vpop.permute.xlu0 %359
      %362 = vrot.lane.b32.xlu0 %v226, 19
      %v363 = vpop.permute.xlu0 %362
      %v365 = vsel %vm237, %v357, %v360
      %v366 = vsel %vm239, %v365, %v363
      %368 = vrot.lane.b32.xlu0 %v366, 16
      %v369 = vpop.permute.xlu0 %368
      %vm371 = vcmask 273536
      %372 = vst.msk [vmem:[#allocation2 + $0x4] sm:$0xf] %vm371, %v369
      %v373 = vcombine.high %v226, %v226
      %374 = vrot.lane.b32.xlu0 %v373, 127
      %v375 = vpop.permute.xlu0 %374
      %377 = vrot.lane.b32.xlu0 %v373, 1
      %v378 = vpop.permute.xlu0 %377
      %380 = vrot.lane.b32.xlu0 %v373, 3
      %v381 = vpop.permute.xlu0 %380
      %v383 = vsel %vm237, %v375, %v378
      %v384 = vsel %vm239, %v383, %v381
      %386 = vrot.lane.b32.xlu0 %v384, 34
      %v387 = vpop.permute.xlu0 %386
      %vm389 = vcmask 421136
      %390 = vst.msk [vmem:[#allocation2 + $0x4] sm:$0xf] %vm389, %v387
      %391 = vrot.lane.b32.xlu0 %v373, 111
      %v392 = vpop.permute.xlu0 %391
      %394 = vrot.lane.b32.xlu0 %v373, 113
      %v395 = vpop.permute.xlu0 %394
      %397 = vrot.lane.b32.xlu0 %v373, 115
      %v398 = vpop.permute.xlu0 %397
      %v400 = vsel %vm237, %v392, %v395
      %v401 = vsel %vm239, %v400, %v398
      %403 = vrot.lane.b32.xlu0 %v401, 52
      %v404 = vpop.permute.xlu0 %403
      %vm406 = vcmask 568736
      %407 = vst.msk [vmem:[#allocation2 + $0x4] sm:$0xf] %vm406, %v404
      %408 = vrot.lane.b32.xlu0 %v373, 95
      %v409 = vpop.permute.xlu0 %408
      %411 = vrot.lane.b32.xlu0 %v373, 97
      %v412 = vpop.permute.xlu0 %411
      %414 = vrot.lane.b32.xlu0 %v373, 99
      %v415 = vpop.permute.xlu0 %414
      %v417 = vsel %vm237, %v409, %v412
      %v418 = vsel %vm239, %v417, %v415
      %420 = vrot.lane.b32.xlu0 %v418, 70
      %v421 = vpop.permute.xlu0 %420
      %vm423 = vcmask 716336
      %424 = vst.msk [vmem:[#allocation2 + $0x4] sm:$0xf] %vm423, %v421
      %425 = vrot.lane.b32.xlu0 %v373, 79
      %v426 = vpop.permute.xlu0 %425
      %428 = vrot.lane.b32.xlu0 %v373, 81
      %v429 = vpop.permute.xlu0 %428
      %431 = vrot.lane.b32.xlu0 %v373, 83
      %v432 = vpop.permute.xlu0 %431
      %v434 = vsel %vm237, %v426, %v429
      %v435 = vsel %vm239, %v434, %v432
      %437 = vrot.lane.b32.xlu0 %v435, 88
      %v438 = vpop.permute.xlu0 %437
      %vm440 = vcmask 863936
      %441 = vst.msk [vmem:[#allocation2 + $0x4] sm:$0xf] %vm440, %v438
      %442 = vrot.lane.b32.xlu0 %v373, 63
      %v443 = vpop.permute.xlu0 %442
      %445 = vrot.lane.b32.xlu0 %v373, 65
      %v446 = vpop.permute.xlu0 %445
      %448 = vrot.lane.b32.xlu0 %v373, 67
      %v449 = vpop.permute.xlu0 %448
      %v451 = vsel %vm237, %v443, %v446
      %v452 = vsel %vm239, %v451, %v449
      %454 = vrot.lane.b32.xlu0 %v452, 106
      %v455 = vpop.permute.xlu0 %454
      %vm457 = vcmask 1011536
      %458 = vst.msk [vmem:[#allocation2 + $0x4] sm:$0xf] %vm457, %v455
      %459 = vrot.lane.b32.xlu0 %v373, 47
      %v460 = vpop.permute.xlu0 %459
      %462 = vrot.lane.b32.xlu0 %v373, 49
      %v463 = vpop.permute.xlu0 %462
      %465 = vrot.lane.b32.xlu0 %v373, 51
      %v466 = vpop.permute.xlu0 %465
      %v468 = vsel %vm237, %v460, %v463
      %v469 = vsel %vm239, %v468, %v466
      %471 = vrot.lane.b32.xlu0 %v469, 124
      %v472 = vpop.permute.xlu0 %471
      %v473 = vrot.slane %v472, 4
      %vm474 = vcmask 1014784
      %v475 = vsel %vm474, %v473, %v472
      %vm477 = vcmask 1044448
      %vm478 = vcmask 113668
      %vm479 = vmor %vm478, %vm477
      %480 = vst.msk [vmem:[#allocation2 + $0x4] sm:$0xff] %vm479, %v475
      %481 = vrot.lane.b32.xlu0 %v373, 31
      %v482 = vpop.permute.xlu0 %481
      %484 = vrot.lane.b32.xlu0 %v373, 33
      %v485 = vpop.permute.xlu0 %484
      %487 = vrot.lane.b32.xlu0 %v373, 35
      %v488 = vpop.permute.xlu0 %487
      %v490 = vsel %vm237, %v482, %v485
      %v491 = vsel %vm239, %v490, %v488
      %493 = vrot.lane.b32.xlu0 %v491, 14
      %v494 = vpop.permute.xlu0 %493
      %vm496 = vcmask 257136
      %497 = vst.msk [vmem:[#allocation2 + $0x8] sm:$0xf] %vm496, %v494
      %498 = vrot.lane.b32.xlu0 %v373, 15
      %v499 = vpop.permute.xlu0 %498
      %501 = vrot.lane.b32.xlu0 %v373, 17
      %v502 = vpop.permute.xlu0 %501
      %504 = vrot.lane.b32.xlu0 %v373, 19
      %v505 = vpop.permute.xlu0 %504
      %v507 = vsel %vm237, %v499, %v502
      %v508 = vsel %vm239, %v507, %v505
      %510 = vrot.lane.b32.xlu0 %v508, 32
      %v511 = vpop.permute.xlu0 %510
      %vm513 = vcmask 404736
      %514 = vst.msk [vmem:[#allocation2 + $0x8] sm:$0xf] %vm513, %v511
      %515 = vrot.lane.b32.xlu0 %v491, 50
      %v516 = vpop.permute.xlu0 %515
      %vm518 = vcmask 552336
      %519 = vst.msk [vmem:[#allocation2 + $0x8] sm:$0xf] %vm518, %v516
      %v520 = vld [vmem:[#allocation2] sm:$0xff]
      %v521 = vld [vmem:[#allocation2 + $0x8] sm:$0xf]
      %v524 = vcombine.high %v520, %v520
      %526 = vst [vmem:[#allocation3] sm:$0xf] %v520
      %527 = vst [vmem:[#allocation3 + $0x8] sm:$0xf] %v524
      %vm528 = vcmask 551936
      %529 = vst.msk [vmem:[#allocation3 + $0x10] sm:$0xf] %vm528, %v521
      %v530 = vcombine.low %v520, %v520
      %v531 = vcombine.low %v521, %v521
      %532 = vrot.lane.b32.xlu0 %v530, 127
      %v533 = vpop.permute.xlu0 %532
      %534 = vrot.lane.b32.xlu0 %v520, 127
      %v535 = vpop.permute.xlu0 %534
      %536 = vrot.lane.b32.xlu0 %v531, 127
      %v537 = vpop.permute.xlu0 %536
      %vm538 = vcmask 1039360
      %v539 = vsel %vm538, %v533, %v535
      %v540 = vsel %vm538, %v535, %v537
      %544 = vst [vmem:[#allocation3] sm:$0xf0] %v539
      %545 = vst [vmem:[#allocation3 + $0x8] sm:$0xf0] %v540
      %vm546 = vcmask 547844
      %547 = vst.msk [vmem:[#allocation3 + $0x10] sm:$0xf0] %vm546, %v537
      %548 = vrot.lane.b32.xlu0 %v520, 126
      %v549 = vpop.permute.xlu0 %548
      %550 = vrot.lane.b32.xlu0 %v524, 126
      %v551 = vpop.permute.xlu0 %550
      %552 = vrot.lane.b32.xlu0 %v521, 126
      %v553 = vpop.permute.xlu0 %552
      %v554 = vsel %vm349, %v549, %v551
      %v555 = vsel %vm349, %v551, %v553
      %559 = vst [vmem:[#allocation3 + $0x18] sm:$0xf] %v554
      %560 = vst [vmem:[#allocation3 + $0x20] sm:$0xf] %v555
      %vm561 = vcmask 535552
      %562 = vst.msk [vmem:[#allocation3 + $0x28] sm:$0xf] %vm561, %v553
      %563 = vrot.lane.b32.xlu0 %v530, 110
      %v564 = vpop.permute.xlu0 %563
      %565 = vrot.lane.b32.xlu0 %v520, 110
      %v566 = vpop.permute.xlu0 %565
      %567 = vrot.lane.b32.xlu0 %v531, 110
      %v568 = vpop.permute.xlu0 %567
      %vm569 = vcmask 900096
      %v570 = vsel %vm569, %v564, %v566
      %v571 = vsel %vm569, %v566, %v568
      %575 = vst [vmem:[#allocation3 + $0x18] sm:$0xf0] %v570
      %576 = vst [vmem:[#allocation3 + $0x20] sm:$0xf0] %v571
      %vm577 = vcmask 408580
      %578 = vst.msk [vmem:[#allocation3 + $0x28] sm:$0xf0] %vm577, %v568
      %579 = vrot.lane.b32.xlu0 %v520, 109
      %v580 = vpop.permute.xlu0 %579
      %581 = vrot.lane.b32.xlu0 %v524, 109
      %v582 = vpop.permute.xlu0 %581
      %583 = vrot.lane.b32.xlu0 %v521, 109
      %v584 = vpop.permute.xlu0 %583
      %vm585 = vcmask 891904
      %v586 = vsel %vm585, %v580, %v582
      %v587 = vsel %vm585, %v582, %v584
      %591 = vst [vmem:[#allocation3 + $0x30] sm:$0xf] %v586
      %592 = vst [vmem:[#allocation3 + $0x38] sm:$0xf] %v587
      %vm593 = vcmask 396288
      %594 = vst.msk [vmem:[#allocation3 + $0x40] sm:$0xf] %vm593, %v584
      %595 = vrot.lane.b32.xlu0 %v530, 108
      %v596 = vpop.permute.xlu0 %595
      %597 = vrot.lane.b32.xlu0 %v520, 108
      %v598 = vpop.permute.xlu0 %597
      %599 = vrot.lane.b32.xlu0 %v531, 108
      %v600 = vpop.permute.xlu0 %599
      %vm601 = vcmask 883712
      %v602 = vsel %vm601, %v596, %v598
      %v603 = vsel %vm601, %v598, %v600
      %607 = vst [vmem:[#allocation3 + $0x30] sm:$0xf0] %v602
      %608 = vst [vmem:[#allocation3 + $0x38] sm:$0xf0] %v603
      %vm609 = vcmask 392196
      %610 = vst.msk [vmem:[#allocation3 + $0x40] sm:$0xf0] %vm609, %v600
      %611 = vrot.lane.b32.xlu0 %v520, 92
      %v612 = vpop.permute.xlu0 %611
      %613 = vrot.lane.b32.xlu0 %v524, 92
      %v614 = vpop.permute.xlu0 %613
      %615 = vrot.lane.b32.xlu0 %v521, 92
      %v616 = vpop.permute.xlu0 %615
      %vm617 = vcmask 752640
      %v618 = vsel %vm617, %v612, %v614
      %v619 = vsel %vm617, %v614, %v616
      %623 = vst [vmem:[#allocation3 + $0x48] sm:$0xf] %v618
      %624 = vst [vmem:[#allocation3 + $0x50] sm:$0xf] %v619
      %vm625 = vcmask 257024
      %626 = vst.msk [vmem:[#allocation3 + $0x58] sm:$0xf] %vm625, %v616
      %627 = vrot.lane.b32.xlu0 %v530, 91
      %v628 = vpop.permute.xlu0 %627
      %629 = vrot.lane.b32.xlu0 %v520, 91
      %v630 = vpop.permute.xlu0 %629
      %631 = vrot.lane.b32.xlu0 %v531, 91
      %v632 = vpop.permute.xlu0 %631
      %vm633 = vcmask 744448
      %v634 = vsel %vm633, %v628, %v630
      %v635 = vsel %vm633, %v630, %v632
      %639 = vst [vmem:[#allocation3 + $0x48] sm:$0xf0] %v634
      %640 = vst [vmem:[#allocation3 + $0x50] sm:$0xf0] %v635
      %vm641 = vcmask 252932
      %642 = vst.msk [vmem:[#allocation3 + $0x58] sm:$0xf0] %vm641, %v632
      %643 = vrot.lane.b32.xlu0 %v520, 90
      %v644 = vpop.permute.xlu0 %643
      %645 = vrot.lane.b32.xlu0 %v524, 90
      %v646 = vpop.permute.xlu0 %645
      %647 = vrot.lane.b32.xlu0 %v521, 90
      %v648 = vpop.permute.xlu0 %647
      %vm649 = vcmask 736256
      %v650 = vsel %vm649, %v644, %v646
      %v651 = vsel %vm649, %v646, %v648
      %655 = vst [vmem:[#allocation3 + $0x60] sm:$0xf] %v650
      %656 = vst [vmem:[#allocation3 + $0x68] sm:$0xf] %v651
      %vm657 = vcmask 240640
      %658 = vst.msk [vmem:[#allocation3 + $0x70] sm:$0xf] %vm657, %v648
      %v659 = vld [vmem:[%s1] sm:$0xff]
      %v660 = vld [vmem:[%s1 + $0x8] sm:$0xff]
      %v661 = vld [vmem:[%s1 + $0x10] sm:$0xff]
      %v662 = vld [vmem:[%s1 + $0x18] sm:$0xff]
      %v663 = vld [vmem:[#allocation3] sm:$0xff]
      %v664 = vld [vmem:[#allocation3 + $0x8] sm:$0xff]
      %v665 = vld [vmem:[#allocation3 + $0x10] sm:$0xff]
      %v666 = vld [vmem:[#allocation3 + $0x18] sm:$0xff]
      %v667 = vld [vmem:[#allocation3 + $0x20] sm:$0xff]
      %v668 = vld [vmem:[#allocation3 + $0x28] sm:$0xff]
      %v669 = vld [vmem:[#allocation3 + $0x30] sm:$0xff]
      %v670 = vld [vmem:[#allocation3 + $0x38] sm:$0xff]
      %v671 = vld [vmem:[#allocation3 + $0x40] sm:$0xff]
      %v672 = vld [vmem:[#allocation3 + $0x48] sm:$0xff]
      %v673 = vld [vmem:[#allocation3 + $0x50] sm:$0xff]
      %v674 = vld [vmem:[#allocation3 + $0x58] sm:$0xff]
      %v675 = vld [vmem:[#allocation3 + $0x60] sm:$0xf]
      %v676 = vld [vmem:[#allocation3 + $0x68] sm:$0xf]
      %v677 = vld [vmem:[#allocation3 + $0x70] sm:$0xf]
      %v678 = vld [vmem:[%s2] sm:$0xff]
      %v679 = vld [vmem:[%s2 + $0x8] sm:$0xff]
      %v680 = vld [vmem:[%s2 + $0x10] sm:$0xff]
      %v681 = vld [vmem:[%s2 + $0x18] sm:$0xff]
      %683 = vset.pattern.permute.xlu0 0
      %684 = vperm.xlu0 %683, %v678
      %v685 = vpop.permute.xlu0 %684
      %688 = vset.pattern.permute.xlu0 0
      %689 = vperm.xlu0 %688, %v679
      %v690 = vpop.permute.xlu0 %689
      %693 = vset.pattern.permute.xlu0 0
      %694 = vperm.xlu0 %693, %v680
      %v695 = vpop.permute.xlu0 %694
      %698 = vset.pattern.permute.xlu0 0
      %699 = vperm.xlu0 %698, %v681
      %v700 = vpop.permute.xlu0 %699
      %vm702 = vcmask 293888
      %v704 = vsel %vm702, %v659, 0
      %v707 = vsel %vm702, %v660, 0
      %v710 = vsel %vm702, %v661, 0
      %v713 = vsel %vm702, %v662, 0
      %vm715 = vcmask 1043456
      %v717 = vsel %vm715, %v675, 0
      %v720 = vsel %vm715, %v676, 0
      %v723 = vsel %vm715, %v677, 0
      %725 = vmatprep.subr.mxu0 %v664
      %726 = vmatpush1.msra.mxu0 %v663
      %727 = vmatprep.subr.mxu0 %v667
      %728 = vmatpush1.msra.mxu0 %v666
      %729 = vmatprep.subr.mxu0 %v670
      %730 = vmatpush1.msra.mxu0 %v669
      %731 = vmatprep.subr.mxu0 %v673
      %732 = vmatpush1.msra.mxu0 %v672
      %733 = vmatprep.subr.mxu0 %v720
      %734 = vmatpush1.msra.mxu0 %v717
      %735 = vmatprep.subr.mxu0 0.0
      %736 = vmatpush1.msra.mxu0 0.0
      %737 = vmatprep.subr.mxu0 0.0
      %738 = vmatpush1.msra.mxu0 0.0
      %739 = vmatprep.subr.mxu0 0.0
      %740 = vmatpush1.msra.mxu0 0.0
      %741 = vmatprep.subr.mxu0 0.0
      %742 = vmatpush1.msra.mxu0 0.0
      %743 = vmatprep.subr.mxu0 0.0
      %744 = vmatpush1.msra.mxu0 0.0
      %745 = vmatprep.subr.mxu0 0.0
      %746 = vmatpush1.msra.mxu0 0.0
      %747 = vmatprep.subr.mxu0 0.0
      %748 = vmatpush1.msra.mxu0 0.0
      %749 = vmatprep.subr.mxu0 0.0
      %750 = vmatpush1.msra.mxu0 0.0
      %751 = vmatprep.subr.mxu0 0.0
      %752 = vmatpush1.msra.mxu0 0.0
      %753 = vmatprep.subr.mxu0 0.0
      %754 = vmatpush1.msra.mxu0 0.0
      %755 = vmatprep.subr.mxu0 0.0
      %756 = vmatpush1.msra.mxu0 0.0
      %757 = vmatprep.subr.mxu0 0.0
      %758 = vmatpush1.msra.mxu0 0.0
      %759 = vmatprep.subr.mxu0 0.0
      %760 = vmatpush1.msra.mxu0 0.0
      %761 = vmatprep.subr.mxu0 0.0
      %762 = vmatpush1.msra.mxu0 0.0
      %763 = vmatprep.subr.mxu0 0.0
      %764 = vmatpush1.msra.mxu0 0.0
      %765 = vmatprep.subr.mxu0 0.0
      %766 = vmatpush1.msra.mxu0 0.0
      %767 = vmatprep.subr.mxu0 0.0
      %768 = vmatpush1.msra.mxu0 0.0
      %769 = vmatprep.subr.mxu0 0.0
      %770 = vmatpush1.msra.mxu0 0.0
      %771 = vmatprep.subr.mxu0 0.0
      %772 = vmatpush1.msra.mxu0 0.0
      %773 = vmatprep.subr.mxu0 0.0
      %774 = vmatpush1.msra.mxu0 0.0
      %775 = vmatprep.subr.mxu0 0.0
      %776 = vmatpush1.msra.mxu0 0.0
      %777 = vmatprep.subr.mxu0 0.0
      %778 = vmatpush1.msra.mxu0 0.0
      %779 = vmatprep.subr.mxu0 0.0
      %780 = vmatpush1.msra.mxu0 0.0
      %781 = vmatprep.subr.mxu0 0.0
      %782 = vmatpush1.msra.mxu0 0.0
      %783 = vmatprep.subr.mxu0 0.0
      %784 = vmatpush1.msra.mxu0 0.0
      %785 = vmatprep.subr.mxu0 0.0
      %786 = vmatpush1.msra.mxu0 0.0
      %787 = vmatprep.subr.mxu0 0.0
      %788 = vmatpush1.msra.mxu0 0.0
      %789 = vmatprep.mubr.f32.mxu0 0.0
      %790 = vmatmul.mubr.f32.gmra.mrb[0].mxu0 %v704
      %v791 = vpop.f32.mrb[0].mxu0
      %v792 = vadd.f32 %v685, %v791
      %v793 = vpop.f32.mrb[0].mxu0
      %v794 = vadd.f32 %v685, %v793
      %795 = vmatprep.mubr.f32.mxu0 0.0
      %796 = vmatmul.mubr.f32.gmra.mrb[0].mxu0 %v707
      %v797 = vpop.f32.mrb[0].mxu0
      %v798 = vadd.f32 %v690, %v797
      %v799 = vpop.f32.mrb[0].mxu0
      %v800 = vadd.f32 %v690, %v799
      %801 = vmatprep.mubr.f32.mxu0 0.0
      %802 = vmatmul.mubr.f32.gmra.mrb[0].mxu0 %v710
      %v803 = vpop.f32.mrb[0].mxu0
      %v804 = vadd.f32 %v695, %v803
      %v805 = vpop.f32.mrb[0].mxu0
      %v806 = vadd.f32 %v695, %v805
      %807 = vmatprep.mubr.f32.mxu0 0.0
      %808 = vmatmul.mubr.f32.gmra.mrb[0].mxu0 %v713
      %v809 = vpop.f32.mrb[0].mxu0
      %v810 = vadd.f32 %v700, %v809
      %v811 = vpop.f32.mrb[0].mxu0
      %v812 = vadd.f32 %v700, %v811
      %813 = vdwg.mxu0
      %814 = vmatprep.subr.mxu0 0.0
      %815 = vmatpush1.msra.mxu0 %v665
      %816 = vmatprep.subr.mxu0 0.0
      %817 = vmatpush1.msra.mxu0 %v668
      %818 = vmatprep.subr.mxu0 0.0
      %819 = vmatpush1.msra.mxu0 %v671
      %820 = vmatprep.subr.mxu0 0.0
      %821 = vmatpush1.msra.mxu0 %v674
      %822 = vmatprep.subr.mxu0 0.0
      %823 = vmatpush1.msra.mxu0 %v723
      %824 = vmatprep.subr.mxu0 0.0
      %825 = vmatpush1.msra.mxu0 0.0
      %826 = vmatprep.subr.mxu0 0.0
      %827 = vmatpush1.msra.mxu0 0.0
      %828 = vmatprep.subr.mxu0 0.0
      %829 = vmatpush1.msra.mxu0 0.0
      %830 = vmatprep.subr.mxu0 0.0
      %831 = vmatpush1.msra.mxu0 0.0
      %832 = vmatprep.subr.mxu0 0.0
      %833 = vmatpush1.msra.mxu0 0.0
      %834 = vmatprep.subr.mxu0 0.0
      %835 = vmatpush1.msra.mxu0 0.0
      %836 = vmatprep.subr.mxu0 0.0
      %837 = vmatpush1.msra.mxu0 0.0
      %838 = vmatprep.subr.mxu0 0.0
      %839 = vmatpush1.msra.mxu0 0.0
      %840 = vmatprep.subr.mxu0 0.0
      %841 = vmatpush1.msra.mxu0 0.0
      %842 = vmatprep.subr.mxu0 0.0
      %843 = vmatpush1.msra.mxu0 0.0
      %844 = vmatprep.subr.mxu0 0.0
      %845 = vmatpush1.msra.mxu0 0.0
      %846 = vmatprep.subr.mxu0 0.0
      %847 = vmatpush1.msra.mxu0 0.0
      %848 = vmatprep.subr.mxu0 0.0
      %849 = vmatpush1.msra.mxu0 0.0
      %850 = vmatprep.subr.mxu0 0.0
      %851 = vmatpush1.msra.mxu0 0.0
      %852 = vmatprep.subr.mxu0 0.0
      %853 = vmatpush1.msra.mxu0 0.0
      %854 = vmatprep.subr.mxu0 0.0
      %855 = vmatpush1.msra.mxu0 0.0
      %856 = vmatprep.subr.mxu0 0.0
      %857 = vmatpush1.msra.mxu0 0.0
      %858 = vmatprep.subr.mxu0 0.0
      %859 = vmatpush1.msra.mxu0 0.0
      %860 = vmatprep.subr.mxu0 0.0
      %861 = vmatpush1.msra.mxu0 0.0
      %862 = vmatprep.subr.mxu0 0.0
      %863 = vmatpush1.msra.mxu0 0.0
      %864 = vmatprep.subr.mxu0 0.0
      %865 = vmatpush1.msra.mxu0 0.0
      %866 = vmatprep.subr.mxu0 0.0
      %867 = vmatpush1.msra.mxu0 0.0
      %868 = vmatprep.subr.mxu0 0.0
      %869 = vmatpush1.msra.mxu0 0.0
      %870 = vmatprep.subr.mxu0 0.0
      %871 = vmatpush1.msra.mxu0 0.0
      %872 = vmatprep.subr.mxu0 0.0
      %873 = vmatpush1.msra.mxu0 0.0
      %874 = vmatprep.subr.mxu0 0.0
      %875 = vmatpush1.msra.mxu0 0.0
      %876 = vmatprep.subr.mxu0 0.0
      %877 = vmatpush1.msra.mxu0 0.0
      %878 = vmatprep.mubr.f32.mxu0 0.0
      %879 = vmatmul.mubr.f32.gmra.mrb[0].mxu0 %v704
      %v880 = vpop.f32.mrb[0].mxu0
      %v881 = vadd.f32 %v685, %v880
      %v882 = vpop.f32.mrb[0].mxu0
      %883 = vmatprep.mubr.f32.mxu0 0.0
      %884 = vmatmul.mubr.f32.gmra.mrb[0].mxu0 %v707
      %v885 = vpop.f32.mrb[0].mxu0
      %v886 = vadd.f32 %v690, %v885
      %v887 = vpop.f32.mrb[0].mxu0
      %888 = vmatprep.mubr.f32.mxu0 0.0
      %889 = vmatmul.mubr.f32.gmra.mrb[0].mxu0 %v710
      %v890 = vpop.f32.mrb[0].mxu0
      %v891 = vadd.f32 %v695, %v890
      %v892 = vpop.f32.mrb[0].mxu0
      %893 = vmatprep.mubr.f32.mxu0 0.0
      %894 = vmatmul.mubr.f32.gmra.mrb[0].mxu0 %v713
      %v895 = vpop.f32.mrb[0].mxu0
      %v896 = vadd.f32 %v700, %v895
      %v897 = vpop.f32.mrb[0].mxu0
      %898 = vdwg.mxu0
      %903 = vrot.lane.b32.xlu0 %v792, 126
      %v904 = vpop.permute.xlu0 %903
      %905 = vrot.lane.b32.xlu0 %v798, 126
      %v906 = vpop.permute.xlu0 %905
      %907 = vrot.lane.b32.xlu0 %v804, 126
      %v908 = vpop.permute.xlu0 %907
      %909 = vrot.lane.b32.xlu0 %v810, 126
      %v910 = vpop.permute.xlu0 %909
      %915 = vrot.lane.b32.xlu0 %v792, 124
      %v916 = vpop.permute.xlu0 %915
      %917 = vrot.lane.b32.xlu0 %v798, 124
      %v918 = vpop.permute.xlu0 %917
      %919 = vrot.lane.b32.xlu0 %v804, 124
      %v920 = vpop.permute.xlu0 %919
      %921 = vrot.lane.b32.xlu0 %v810, 124
      %v922 = vpop.permute.xlu0 %921
      %927 = vrot.lane.b32.xlu0 %v792, 122
      %v928 = vpop.permute.xlu0 %927
      %929 = vrot.lane.b32.xlu0 %v798, 122
      %v930 = vpop.permute.xlu0 %929
      %931 = vrot.lane.b32.xlu0 %v804, 122
      %v932 = vpop.permute.xlu0 %931
      %933 = vrot.lane.b32.xlu0 %v810, 122
      %v934 = vpop.permute.xlu0 %933
      %939 = vrot.lane.b32.xlu0 %v792, 120
      %v940 = vpop.permute.xlu0 %939
      %941 = vrot.lane.b32.xlu0 %v798, 120
      %v942 = vpop.permute.xlu0 %941
      %943 = vrot.lane.b32.xlu0 %v804, 120
      %v944 = vpop.permute.xlu0 %943
      %945 = vrot.lane.b32.xlu0 %v810, 120
      %v946 = vpop.permute.xlu0 %945
      %951 = vrot.lane.b32.xlu0 %v792, 118
      %v952 = vpop.permute.xlu0 %951
      %953 = vrot.lane.b32.xlu0 %v798, 118
      %v954 = vpop.permute.xlu0 %953
      %955 = vrot.lane.b32.xlu0 %v804, 118
      %v956 = vpop.permute.xlu0 %955
      %957 = vrot.lane.b32.xlu0 %v810, 118
      %v958 = vpop.permute.xlu0 %957
      %963 = vrot.lane.b32.xlu0 %v792, 116
      %v964 = vpop.permute.xlu0 %963
      %965 = vrot.lane.b32.xlu0 %v798, 116
      %v966 = vpop.permute.xlu0 %965
      %967 = vrot.lane.b32.xlu0 %v804, 116
      %v968 = vpop.permute.xlu0 %967
      %969 = vrot.lane.b32.xlu0 %v810, 116
      %v970 = vpop.permute.xlu0 %969
      %979 = vrot.lane.b32.xlu0 %v792, 114
      %v980 = vpop.permute.xlu0 %979
      %981 = vrot.lane.b32.xlu0 %v794, 114
      %v982 = vpop.permute.xlu0 %981
      %983 = vrot.lane.b32.xlu0 %v798, 114
      %v984 = vpop.permute.xlu0 %983
      %985 = vrot.lane.b32.xlu0 %v800, 114
      %v986 = vpop.permute.xlu0 %985
      %987 = vrot.lane.b32.xlu0 %v804, 114
      %v988 = vpop.permute.xlu0 %987
      %989 = vrot.lane.b32.xlu0 %v806, 114
      %v990 = vpop.permute.xlu0 %989
      %991 = vrot.lane.b32.xlu0 %v810, 114
      %v992 = vpop.permute.xlu0 %991
      %993 = vrot.lane.b32.xlu0 %v812, 114
      %v994 = vpop.permute.xlu0 %993
      %vm995 = vcmask 932864
      %v996 = vsel %vm995, %v980, %v982
      %v997 = vsel %vm995, %v984, %v986
      %v998 = vsel %vm995, %v988, %v990
      %v999 = vsel %vm995, %v992, %v994
      %1004 = vrot.lane.b32.xlu0 %v794, 112
      %v1005 = vpop.permute.xlu0 %1004
      %1006 = vrot.lane.b32.xlu0 %v800, 112
      %v1007 = vpop.permute.xlu0 %1006
      %1008 = vrot.lane.b32.xlu0 %v806, 112
      %v1009 = vpop.permute.xlu0 %1008
      %1010 = vrot.lane.b32.xlu0 %v812, 112
      %v1011 = vpop.permute.xlu0 %1010
      %1016 = vrot.lane.b32.xlu0 %v794, 110
      %v1017 = vpop.permute.xlu0 %1016
      %1018 = vrot.lane.b32.xlu0 %v800, 110
      %v1019 = vpop.permute.xlu0 %1018
      %1020 = vrot.lane.b32.xlu0 %v806, 110
      %v1021 = vpop.permute.xlu0 %1020
      %1022 = vrot.lane.b32.xlu0 %v812, 110
      %v1023 = vpop.permute.xlu0 %1022
      %1028 = vrot.lane.b32.xlu0 %v794, 108
      %v1029 = vpop.permute.xlu0 %1028
      %1030 = vrot.lane.b32.xlu0 %v800, 108
      %v1031 = vpop.permute.xlu0 %1030
      %1032 = vrot.lane.b32.xlu0 %v806, 108
      %v1033 = vpop.permute.xlu0 %1032
      %1034 = vrot.lane.b32.xlu0 %v812, 108
      %v1035 = vpop.permute.xlu0 %1034
      %1040 = vrot.lane.b32.xlu0 %v794, 106
      %v1041 = vpop.permute.xlu0 %1040
      %1042 = vrot.lane.b32.xlu0 %v800, 106
      %v1043 = vpop.permute.xlu0 %1042
      %1044 = vrot.lane.b32.xlu0 %v806, 106
      %v1045 = vpop.permute.xlu0 %1044
      %1046 = vrot.lane.b32.xlu0 %v812, 106
      %v1047 = vpop.permute.xlu0 %1046
      %1052 = vrot.lane.b32.xlu0 %v794, 104
      %v1053 = vpop.permute.xlu0 %1052
      %1054 = vrot.lane.b32.xlu0 %v800, 104
      %v1055 = vpop.permute.xlu0 %1054
      %1056 = vrot.lane.b32.xlu0 %v806, 104
      %v1057 = vpop.permute.xlu0 %1056
      %1058 = vrot.lane.b32.xlu0 %v812, 104
      %v1059 = vpop.permute.xlu0 %1058
      %1064 = vrot.lane.b32.xlu0 %v794, 102
      %v1065 = vpop.permute.xlu0 %1064
      %1066 = vrot.lane.b32.xlu0 %v800, 102
      %v1067 = vpop.permute.xlu0 %1066
      %1068 = vrot.lane.b32.xlu0 %v806, 102
      %v1069 = vpop.permute.xlu0 %1068
      %1070 = vrot.lane.b32.xlu0 %v812, 102
      %v1071 = vpop.permute.xlu0 %1070
      %1080 = vrot.lane.b32.xlu0 %v794, 100
      %v1081 = vpop.permute.xlu0 %1080
      %1082 = vrot.lane.b32.xlu0 %v881, 100
      %v1083 = vpop.permute.xlu0 %1082
      %1084 = vrot.lane.b32.xlu0 %v800, 100
      %v1085 = vpop.permute.xlu0 %1084
      %1086 = vrot.lane.b32.xlu0 %v886, 100
      %v1087 = vpop.permute.xlu0 %1086
      %1088 = vrot.lane.b32.xlu0 %v806, 100
      %v1089 = vpop.permute.xlu0 %1088
      %1090 = vrot.lane.b32.xlu0 %v891, 100
      %v1091 = vpop.permute.xlu0 %1090
      %1092 = vrot.lane.b32.xlu0 %v812, 100
      %v1093 = vpop.permute.xlu0 %1092
      %1094 = vrot.lane.b32.xlu0 %v896, 100
      %v1095 = vpop.permute.xlu0 %1094
      %vm1096 = vcmask 818176
      %v1097 = vsel %vm1096, %v1081, %v1083
      %v1098 = vsel %vm1096, %v1085, %v1087
      %v1099 = vsel %vm1096, %v1089, %v1091
      %v1100 = vsel %vm1096, %v1093, %v1095
      %1105 = vrot.lane.b32.xlu0 %v881, 98
      %v1106 = vpop.permute.xlu0 %1105
      %1107 = vrot.lane.b32.xlu0 %v886, 98
      %v1108 = vpop.permute.xlu0 %1107
      %1109 = vrot.lane.b32.xlu0 %v891, 98
      %v1110 = vpop.permute.xlu0 %1109
      %1111 = vrot.lane.b32.xlu0 %v896, 98
      %v1112 = vpop.permute.xlu0 %1111
      %vm1117 = vcmask 130048
      %v1118 = vsel %vm1117, %v792, %v904
      %v1119 = vsel %vm1117, %v798, %v906
      %v1120 = vsel %vm1117, %v804, %v908
      %v1121 = vsel %vm1117, %v810, %v910
      %vm1122 = vcmask 261120
      %v1123 = vsel %vm1122, %v1118, %v916
      %v1124 = vsel %vm1122, %v1119, %v918
      %v1125 = vsel %vm1122, %v1120, %v920
      %v1126 = vsel %vm1122, %v1121, %v922
      %vm1127 = vcmask 392192
      %v1128 = vsel %vm1127, %v1123, %v928
      %v1129 = vsel %vm1127, %v1124, %v930
      %v1130 = vsel %vm1127, %v1125, %v932
      %v1131 = vsel %vm1127, %v1126, %v934
      %vm1132 = vcmask 523264
      %v1133 = vsel %vm1132, %v1128, %v940
      %v1134 = vsel %vm1132, %v1129, %v942
      %v1135 = vsel %vm1132, %v1130, %v944
      %v1136 = vsel %vm1132, %v1131, %v946
      %vm1137 = vcmask 654336
      %v1138 = vsel %vm1137, %v1133, %v952
      %v1139 = vsel %vm1137, %v1134, %v954
      %v1140 = vsel %vm1137, %v1135, %v956
      %v1141 = vsel %vm1137, %v1136, %v958
      %vm1142 = vcmask 785408
      %v1143 = vsel %vm1142, %v1138, %v964
      %v1144 = vsel %vm1142, %v1139, %v966
      %v1145 = vsel %vm1142, %v1140, %v968
      %v1146 = vsel %vm1142, %v1141, %v970
      %vm1147 = vcmask 916480
      %v1148 = vsel %vm1147, %v1143, %v996
      %v1149 = vsel %vm1147, %v1144, %v997
      %v1150 = vsel %vm1147, %v1145, %v998
      %v1151 = vsel %vm1147, %v1146, %v999
      %v1152 = vsel %vm1117, %v1005, %v1017
      %v1153 = vsel %vm1117, %v1007, %v1019
      %v1154 = vsel %vm1117, %v1009, %v1021
      %v1155 = vsel %vm1117, %v1011, %v1023
      %v1156 = vsel %vm1122, %v1152, %v1029
      %v1157 = vsel %vm1122, %v1153, %v1031
      %v1158 = vsel %vm1122, %v1154, %v1033
      %v1159 = vsel %vm1122, %v1155, %v1035
      %v1160 = vsel %vm1127, %v1156, %v1041
      %v1161 = vsel %vm1127, %v1157, %v1043
      %v1162 = vsel %vm1127, %v1158, %v1045
      %v1163 = vsel %vm1127, %v1159, %v1047
      %v1164 = vsel %vm1132, %v1160, %v1053
      %v1165 = vsel %vm1132, %v1161, %v1055
      %v1166 = vsel %vm1132, %v1162, %v1057
      %v1167 = vsel %vm1132, %v1163, %v1059
      %v1168 = vsel %vm1137, %v1164, %v1065
      %v1169 = vsel %vm1137, %v1165, %v1067
      %v1170 = vsel %vm1137, %v1166, %v1069
      %v1171 = vsel %vm1137, %v1167, %v1071
      %v1172 = vsel %vm1142, %v1168, %v1097
      %v1173 = vsel %vm1142, %v1169, %v1098
      %v1174 = vsel %vm1142, %v1170, %v1099
      %v1175 = vsel %vm1142, %v1171, %v1100
      %v1176 = vsel %vm1147, %v1172, %v1106
      %v1177 = vsel %vm1147, %v1173, %v1108
      %v1178 = vsel %vm1147, %v1174, %v1110
      %v1179 = vsel %vm1147, %v1175, %v1112
      %v1180 = vadd.f32 %v1148, %v1176
      %1181 = vadd.xlane.f32.xlu0 %v1180
      %v1182 = vpop.xlane.xlu0 %1181
      %v1183 = vadd.f32 %v1149, %v1177
      %1184 = vadd.xlane.f32.xlu0 %v1183
      %v1185 = vpop.xlane.xlu0 %1184
      %v1186 = vadd.f32 %v1150, %v1178
      %1187 = vadd.xlane.f32.xlu0 %v1186
      %v1188 = vpop.xlane.xlu0 %1187
      %v1189 = vadd.f32 %v1151, %v1179
      %1190 = vadd.xlane.f32.xlu0 %v1189
      %v1191 = vpop.xlane.xlu0 %1190
      %v1192 = vrcp.pop 256.0
      %v1193 = vmul.f32 %v1182, %v1192
      %v1194 = vmul.f32 %v1185, %v1192
      %v1195 = vmul.f32 %v1188, %v1192
      %v1196 = vmul.f32 %v1191, %v1192
      %v1197 = vsub.f32 %v1148, %v1193
      %v1198 = vsub.f32 %v1176, %v1193
      %v1199 = vsub.f32 %v1149, %v1194
      %v1200 = vsub.f32 %v1177, %v1194
      %v1201 = vsub.f32 %v1150, %v1195
      %v1202 = vsub.f32 %v1178, %v1195
      %v1203 = vsub.f32 %v1151, %v1196
      %v1204 = vsub.f32 %v1179, %v1196
      %v1205 = vmul.f32 %v1197, %v1197
      %v1206 = vmul.f32 %v1198, %v1198
      %v1207 = vmul.f32 %v1199, %v1199
      %v1208 = vmul.f32 %v1200, %v1200
      %v1209 = vmul.f32 %v1201, %v1201
      %v1210 = vmul.f32 %v1202, %v1202
      %v1211 = vmul.f32 %v1203, %v1203
      %v1212 = vmul.f32 %v1204, %v1204
      %v1213 = vadd.f32 %v1205, %v1206
      %1214 = vadd.xlane.f32.xlu0 %v1213
      %v1215 = vpop.xlane.xlu0 %1214
      %v1216 = vadd.f32 %v1207, %v1208
      %1217 = vadd.xlane.f32.xlu0 %v1216
      %v1218 = vpop.xlane.xlu0 %1217
      %v1219 = vadd.f32 %v1209, %v1210
      %1220 = vadd.xlane.f32.xlu0 %v1219
      %v1221 = vpop.xlane.xlu0 %1220
      %v1222 = vadd.f32 %v1211, %v1212
      %1223 = vadd.xlane.f32.xlu0 %v1222
      %v1224 = vpop.xlane.xlu0 %1223
      %v1225 = vmul.f32 %v1215, %v1192
      %v1226 = vmul.f32 %v1218, %v1192
      %v1227 = vmul.f32 %v1221, %v1192
      %v1228 = vmul.f32 %v1224, %v1192
      %v1229 = vadd.f32 %v1225, 1e-05
      %v1230 = vadd.f32 %v1226, 1e-05
      %v1231 = vadd.f32 %v1227, 1e-05
      %v1232 = vadd.f32 %v1228, 1e-05
      %v1233 = vrsqrt.pop %v1229
      %v1234 = vrsqrt.pop %v1230
      %v1235 = vrsqrt.pop %v1231
      %v1236 = vrsqrt.pop %v1232
      %v1237 = vmul.f32 %v1197, %v1233
      %v1238 = vmul.f32 %v1198, %v1233
      %v1239 = vmul.f32 %v1199, %v1234
      %v1240 = vmul.f32 %v1200, %v1234
      %v1241 = vmul.f32 %v1201, %v1235
      %v1242 = vmul.f32 %v1202, %v1235
      %v1243 = vmul.f32 %v1203, %v1236
      %v1244 = vmul.f32 %v1204, %v1236
      %v1245 = vmax.f32 %v1237, 0.0
      %v1246 = vmax.f32 %v1238, 0.0
      %v1247 = vmax.f32 %v1239, 0.0
      %v1248 = vmax.f32 %v1240, 0.0
      %v1249 = vmax.f32 %v1241, 0.0
      %v1250 = vmax.f32 %v1242, 0.0
      %v1251 = vmax.f32 %v1243, 0.0
      %v1252 = vmax.f32 %v1244, 0.0
      %1257 = vrot.lane.b32.xlu0 %v1245, 77
      %v1258 = vpop.permute.xlu0 %1257
      %1259 = vrot.lane.b32.xlu0 %v1247, 77
      %v1260 = vpop.permute.xlu0 %1259
      %1261 = vrot.lane.b32.xlu0 %v1249, 77
      %v1262 = vpop.permute.xlu0 %1261
      %1263 = vrot.lane.b32.xlu0 %v1251, 77
      %v1264 = vpop.permute.xlu0 %1263
      %1269 = vrot.lane.b32.xlu0 %v1245, 79
      %v1270 = vpop.permute.xlu0 %1269
      %1271 = vrot.lane.b32.xlu0 %v1247, 79
      %v1272 = vpop.permute.xlu0 %1271
      %1273 = vrot.lane.b32.xlu0 %v1249, 79
      %v1274 = vpop.permute.xlu0 %1273
      %1275 = vrot.lane.b32.xlu0 %v1251, 79
      %v1276 = vpop.permute.xlu0 %1275
      %1281 = vrot.lane.b32.xlu0 %v1245, 81
      %v1282 = vpop.permute.xlu0 %1281
      %1283 = vrot.lane.b32.xlu0 %v1247, 81
      %v1284 = vpop.permute.xlu0 %1283
      %1285 = vrot.lane.b32.xlu0 %v1249, 81
      %v1286 = vpop.permute.xlu0 %1285
      %1287 = vrot.lane.b32.xlu0 %v1251, 81
      %v1288 = vpop.permute.xlu0 %1287
      %1293 = vrot.lane.b32.xlu0 %v1245, 83
      %v1294 = vpop.permute.xlu0 %1293
      %1295 = vrot.lane.b32.xlu0 %v1247, 83
      %v1296 = vpop.permute.xlu0 %1295
      %1297 = vrot.lane.b32.xlu0 %v1249, 83
      %v1298 = vpop.permute.xlu0 %1297
      %1299 = vrot.lane.b32.xlu0 %v1251, 83
      %v1300 = vpop.permute.xlu0 %1299
      %1305 = vrot.lane.b32.xlu0 %v1245, 85
      %v1306 = vpop.permute.xlu0 %1305
      %1307 = vrot.lane.b32.xlu0 %v1247, 85
      %v1308 = vpop.permute.xlu0 %1307
      %1309 = vrot.lane.b32.xlu0 %v1249, 85
      %v1310 = vpop.permute.xlu0 %1309
      %1311 = vrot.lane.b32.xlu0 %v1251, 85
      %v1312 = vpop.permute.xlu0 %1311
      %1317 = vrot.lane.b32.xlu0 %v1245, 87
      %v1318 = vpop.permute.xlu0 %1317
      %1319 = vrot.lane.b32.xlu0 %v1247, 87
      %v1320 = vpop.permute.xlu0 %1319
      %1321 = vrot.lane.b32.xlu0 %v1249, 87
      %v1322 = vpop.permute.xlu0 %1321
      %1323 = vrot.lane.b32.xlu0 %v1251, 87
      %v1324 = vpop.permute.xlu0 %1323
      %1329 = vrot.lane.b32.xlu0 %v1245, 89
      %v1330 = vpop.permute.xlu0 %1329
      %1331 = vrot.lane.b32.xlu0 %v1247, 89
      %v1332 = vpop.permute.xlu0 %1331
      %1333 = vrot.lane.b32.xlu0 %v1249, 89
      %v1334 = vpop.permute.xlu0 %1333
      %1335 = vrot.lane.b32.xlu0 %v1251, 89
      %v1336 = vpop.permute.xlu0 %1335
      %v1341 = vsel %vm237, %v1258, %v1270
      %v1342 = vsel %vm237, %v1260, %v1272
      %v1343 = vsel %vm237, %v1262, %v1274
      %v1344 = vsel %vm237, %v1264, %v1276
      %vm1345 = vcmask 15360
      %v1346 = vsel %vm1345, %v1341, %v1282
      %v1347 = vsel %vm1345, %v1342, %v1284
      %v1348 = vsel %vm1345, %v1343, %v1286
      %v1349 = vsel %vm1345, %v1344, %v1288
      %vm1350 = vcmask 23552
      %v1351 = vsel %vm1350, %v1346, %v1294
      %v1352 = vsel %vm1350, %v1347, %v1296
      %v1353 = vsel %vm1350, %v1348, %v1298
      %v1354 = vsel %vm1350, %v1349, %v1300
      %vm1355 = vcmask 154624
      %v1356 = vsel %vm1355, %v1351, %v1306
      %v1357 = vsel %vm1355, %v1352, %v1308
      %v1358 = vsel %vm1355, %v1353, %v1310
      %v1359 = vsel %vm1355, %v1354, %v1312
      %vm1360 = vcmask 162816
      %v1361 = vsel %vm1360, %v1356, %v1318
      %v1362 = vsel %vm1360, %v1357, %v1320
      %v1363 = vsel %vm1360, %v1358, %v1322
      %v1364 = vsel %vm1360, %v1359, %v1324
      %vm1365 = vcmask 171008
      %v1366 = vsel %vm1365, %v1361, %v1330
      %v1367 = vsel %vm1365, %v1362, %v1332
      %v1368 = vsel %vm1365, %v1363, %v1334
      %v1369 = vsel %vm1365, %v1364, %v1336
      %v1370 = vpack.c.bf16 %v1367, %v1366
      %v1371 = vpack.c.bf16 %v1369, %v1368
      %vm1372 = vcmask 179200
      %1373 = vst.msk [vmem:[#allocation4] sm:$0xff] %vm1372, %v1370
      %1374 = vst.msk [vmem:[#allocation4 + $0x20] sm:$0xff] %vm1372, %v1371
      %1375 = vrot.lane.b32.xlu0 %v1245, 93
      %v1376 = vpop.permute.xlu0 %1375
      %1377 = vrot.lane.b32.xlu0 %v1247, 93
      %v1378 = vpop.permute.xlu0 %1377
      %1379 = vrot.lane.b32.xlu0 %v1249, 93
      %v1380 = vpop.permute.xlu0 %1379
      %1381 = vrot.lane.b32.xlu0 %v1251, 93
      %v1382 = vpop.permute.xlu0 %1381
      %1387 = vrot.lane.b32.xlu0 %v1245, 95
      %v1388 = vpop.permute.xlu0 %1387
      %1389 = vrot.lane.b32.xlu0 %v1247, 95
      %v1390 = vpop.permute.xlu0 %1389
      %1391 = vrot.lane.b32.xlu0 %v1249, 95
      %v1392 = vpop.permute.xlu0 %1391
      %1393 = vrot.lane.b32.xlu0 %v1251, 95
      %v1394 = vpop.permute.xlu0 %1393
      %1399 = vrot.lane.b32.xlu0 %v1245, 97
      %v1400 = vpop.permute.xlu0 %1399
      %1401 = vrot.lane.b32.xlu0 %v1247, 97
      %v1402 = vpop.permute.xlu0 %1401
      %1403 = vrot.lane.b32.xlu0 %v1249, 97
      %v1404 = vpop.permute.xlu0 %1403
      %1405 = vrot.lane.b32.xlu0 %v1251, 97
      %v1406 = vpop.permute.xlu0 %1405
      %1411 = vrot.lane.b32.xlu0 %v1245, 99
      %v1412 = vpop.permute.xlu0 %1411
      %1413 = vrot.lane.b32.xlu0 %v1247, 99
      %v1414 = vpop.permute.xlu0 %1413
      %1415 = vrot.lane.b32.xlu0 %v1249, 99
      %v1416 = vpop.permute.xlu0 %1415
      %1417 = vrot.lane.b32.xlu0 %v1251, 99
      %v1418 = vpop.permute.xlu0 %1417
      %1423 = vrot.lane.b32.xlu0 %v1245, 101
      %v1424 = vpop.permute.xlu0 %1423
      %1425 = vrot.lane.b32.xlu0 %v1247, 101
      %v1426 = vpop.permute.xlu0 %1425
      %1427 = vrot.lane.b32.xlu0 %v1249, 101
      %v1428 = vpop.permute.xlu0 %1427
      %1429 = vrot.lane.b32.xlu0 %v1251, 101
      %v1430 = vpop.permute.xlu0 %1429
      %1435 = vrot.lane.b32.xlu0 %v1245, 103
      %v1436 = vpop.permute.xlu0 %1435
      %1437 = vrot.lane.b32.xlu0 %v1247, 103
      %v1438 = vpop.permute.xlu0 %1437
      %1439 = vrot.lane.b32.xlu0 %v1249, 103
      %v1440 = vpop.permute.xlu0 %1439
      %1441 = vrot.lane.b32.xlu0 %v1251, 103
      %v1442 = vpop.permute.xlu0 %1441
      %1447 = vrot.lane.b32.xlu0 %v1245, 105
      %v1448 = vpop.permute.xlu0 %1447
      %1449 = vrot.lane.b32.xlu0 %v1247, 105
      %v1450 = vpop.permute.xlu0 %1449
      %1451 = vrot.lane.b32.xlu0 %v1249, 105
      %v1452 = vpop.permute.xlu0 %1451
      %1453 = vrot.lane.b32.xlu0 %v1251, 105
      %v1454 = vpop.permute.xlu0 %1453
      %v1459 = vsel %vm237, %v1376, %v1388
      %v1460 = vsel %vm237, %v1378, %v1390
      %v1461 = vsel %vm237, %v1380, %v1392
      %v1462 = vsel %vm237, %v1382, %v1394
      %v1463 = vsel %vm1345, %v1459, %v1400
      %v1464 = vsel %vm1345, %v1460, %v1402
      %v1465 = vsel %vm1345, %v1461, %v1404
      %v1466 = vsel %vm1345, %v1462, %v1406
      %v1467 = vsel %vm1350, %v1463, %v1412
      %v1468 = vsel %vm1350, %v1464, %v1414
      %v1469 = vsel %vm1350, %v1465, %v1416
      %v1470 = vsel %vm1350, %v1466, %v1418
      %v1471 = vsel %vm1355, %v1467, %v1424
      %v1472 = vsel %vm1355, %v1468, %v1426
      %v1473 = vsel %vm1355, %v1469, %v1428
      %v1474 = vsel %vm1355, %v1470, %v1430
      %v1475 = vsel %vm1360, %v1471, %v1436
      %v1476 = vsel %vm1360, %v1472, %v1438
      %v1477 = vsel %vm1360, %v1473, %v1440
      %v1478 = vsel %vm1360, %v1474, %v1442
      %v1479 = vsel %vm1365, %v1475, %v1448
      %v1480 = vsel %vm1365, %v1476, %v1450
      %v1481 = vsel %vm1365, %v1477, %v1452
      %v1482 = vsel %vm1365, %v1478, %v1454
      %v1483 = vpack.c.bf16 %v1480, %v1479
      %v1484 = vpack.c.bf16 %v1482, %v1481
      %1487 = vrot.lane.b32.xlu0 %v1483, 22
      %v1488 = vpop.permute.xlu0 %1487
      %1489 = vrot.lane.b32.xlu0 %v1484, 22
      %v1490 = vpop.permute.xlu0 %1489
      %vm1493 = vcmask 359600
      %1494 = vst.msk [vmem:[#allocation4] sm:$0xff] %vm1493, %v1488
      %1495 = vst.msk [vmem:[#allocation4 + $0x20] sm:$0xff] %vm1493, %v1490
      %1496 = vrot.lane.b32.xlu0 %v1245, 109
      %v1497 = vpop.permute.xlu0 %1496
      %1498 = vrot.lane.b32.xlu0 %v1247, 109
      %v1499 = vpop.permute.xlu0 %1498
      %1500 = vrot.lane.b32.xlu0 %v1249, 109
      %v1501 = vpop.permute.xlu0 %1500
      %1502 = vrot.lane.b32.xlu0 %v1251, 109
      %v1503 = vpop.permute.xlu0 %1502
      %1508 = vrot.lane.b32.xlu0 %v1245, 111
      %v1509 = vpop.permute.xlu0 %1508
      %1510 = vrot.lane.b32.xlu0 %v1247, 111
      %v1511 = vpop.permute.xlu0 %1510
      %1512 = vrot.lane.b32.xlu0 %v1249, 111
      %v1513 = vpop.permute.xlu0 %1512
      %1514 = vrot.lane.b32.xlu0 %v1251, 111
      %v1515 = vpop.permute.xlu0 %1514
      %1520 = vrot.lane.b32.xlu0 %v1245, 113
      %v1521 = vpop.permute.xlu0 %1520
      %1522 = vrot.lane.b32.xlu0 %v1247, 113
      %v1523 = vpop.permute.xlu0 %1522
      %1524 = vrot.lane.b32.xlu0 %v1249, 113
      %v1525 = vpop.permute.xlu0 %1524
      %1526 = vrot.lane.b32.xlu0 %v1251, 113
      %v1527 = vpop.permute.xlu0 %1526
      %1532 = vrot.lane.b32.xlu0 %v1245, 115
      %v1533 = vpop.permute.xlu0 %1532
      %1534 = vrot.lane.b32.xlu0 %v1247, 115
      %v1535 = vpop.permute.xlu0 %1534
      %1536 = vrot.lane.b32.xlu0 %v1249, 115
      %v1537 = vpop.permute.xlu0 %1536
      %1538 = vrot.lane.b32.xlu0 %v1251, 115
      %v1539 = vpop.permute.xlu0 %1538
      %1544 = vrot.lane.b32.xlu0 %v1245, 117
      %v1545 = vpop.permute.xlu0 %1544
      %1546 = vrot.lane.b32.xlu0 %v1247, 117
      %v1547 = vpop.permute.xlu0 %1546
      %1548 = vrot.lane.b32.xlu0 %v1249, 117
      %v1549 = vpop.permute.xlu0 %1548
      %1550 = vrot.lane.b32.xlu0 %v1251, 117
      %v1551 = vpop.permute.xlu0 %1550
      %1556 = vrot.lane.b32.xlu0 %v1245, 119
      %v1557 = vpop.permute.xlu0 %1556
      %1558 = vrot.lane.b32.xlu0 %v1247, 119
      %v1559 = vpop.permute.xlu0 %1558
      %1560 = vrot.lane.b32.xlu0 %v1249, 119
      %v1561 = vpop.permute.xlu0 %1560
      %1562 = vrot.lane.b32.xlu0 %v1251, 119
      %v1563 = vpop.permute.xlu0 %1562
      %1568 = vrot.lane.b32.xlu0 %v1245, 121
      %v1569 = vpop.permute.xlu0 %1568
      %1570 = vrot.lane.b32.xlu0 %v1247, 121
      %v1571 = vpop.permute.xlu0 %1570
      %1572 = vrot.lane.b32.xlu0 %v1249, 121
      %v1573 = vpop.permute.xlu0 %1572
      %1574 = vrot.lane.b32.xlu0 %v1251, 121
      %v1575 = vpop.permute.xlu0 %1574
      %v1580 = vsel %vm237, %v1497, %v1509
      %v1581 = vsel %vm237, %v1499, %v1511
      %v1582 = vsel %vm237, %v1501, %v1513
      %v1583 = vsel %vm237, %v1503, %v1515
      %v1584 = vsel %vm1345, %v1580, %v1521
      %v1585 = vsel %vm1345, %v1581, %v1523
      %v1586 = vsel %vm1345, %v1582, %v1525
      %v1587 = vsel %vm1345, %v1583, %v1527
      %v1588 = vsel %vm1350, %v1584, %v1533
      %v1589 = vsel %vm1350, %v1585, %v1535
      %v1590 = vsel %vm1350, %v1586, %v1537
      %v1591 = vsel %vm1350, %v1587, %v1539
      %v1592 = vsel %vm1355, %v1588, %v1545
      %v1593 = vsel %vm1355, %v1589, %v1547
      %v1594 = vsel %vm1355, %v1590, %v1549
      %v1595 = vsel %vm1355, %v1591, %v1551
      %v1596 = vsel %vm1360, %v1592, %v1557
      %v1597 = vsel %vm1360, %v1593, %v1559
      %v1598 = vsel %vm1360, %v1594, %v1561
      %v1599 = vsel %vm1360, %v1595, %v1563
      %v1600 = vsel %vm1365, %v1596, %v1569
      %v1601 = vsel %vm1365, %v1597, %v1571
      %v1602 = vsel %vm1365, %v1598, %v1573
      %v1603 = vsel %vm1365, %v1599, %v1575
      %v1604 = vpack.c.bf16 %v1601, %v1600
      %v1605 = vpack.c.bf16 %v1603, %v1602
      %1608 = vrot.lane.b32.xlu0 %v1604, 44
      %v1609 = vpop.permute.xlu0 %1608
      %1610 = vrot.lane.b32.xlu0 %v1605, 44
      %v1611 = vpop.permute.xlu0 %1610
      %vm1614 = vcmask 540000
      %1615 = vst.msk [vmem:[#allocation4] sm:$0xff] %vm1614, %v1609
      %1616 = vst.msk [vmem:[#allocation4 + $0x20] sm:$0xff] %vm1614, %v1611
      %1617 = vrot.lane.b32.xlu0 %v1245, 125
      %v1618 = vpop.permute.xlu0 %1617
      %1619 = vrot.lane.b32.xlu0 %v1247, 125
      %v1620 = vpop.permute.xlu0 %1619
      %1621 = vrot.lane.b32.xlu0 %v1249, 125
      %v1622 = vpop.permute.xlu0 %1621
      %1623 = vrot.lane.b32.xlu0 %v1251, 125
      %v1624 = vpop.permute.xlu0 %1623
      %1629 = vrot.lane.b32.xlu0 %v1245, 127
      %v1630 = vpop.permute.xlu0 %1629
      %1631 = vrot.lane.b32.xlu0 %v1247, 127
      %v1632 = vpop.permute.xlu0 %1631
      %1633 = vrot.lane.b32.xlu0 %v1249, 127
      %v1634 = vpop.permute.xlu0 %1633
      %1635 = vrot.lane.b32.xlu0 %v1251, 127
      %v1636 = vpop.permute.xlu0 %1635
      %1641 = vrot.lane.b32.xlu0 %v1245, 1
      %v1642 = vpop.permute.xlu0 %1641
      %1643 = vrot.lane.b32.xlu0 %v1247, 1
      %v1644 = vpop.permute.xlu0 %1643
      %1645 = vrot.lane.b32.xlu0 %v1249, 1
      %v1646 = vpop.permute.xlu0 %1645
      %1647 = vrot.lane.b32.xlu0 %v1251, 1
      %v1648 = vpop.permute.xlu0 %1647
      %1653 = vrot.lane.b32.xlu0 %v1245, 3
      %v1654 = vpop.permute.xlu0 %1653
      %1655 = vrot.lane.b32.xlu0 %v1247, 3
      %v1656 = vpop.permute.xlu0 %1655
      %1657 = vrot.lane.b32.xlu0 %v1249, 3
      %v1658 = vpop.permute.xlu0 %1657
      %1659 = vrot.lane.b32.xlu0 %v1251, 3
      %v1660 = vpop.permute.xlu0 %1659
      %1665 = vrot.lane.b32.xlu0 %v1245, 5
      %v1666 = vpop.permute.xlu0 %1665
      %1667 = vrot.lane.b32.xlu0 %v1247, 5
      %v1668 = vpop.permute.xlu0 %1667
      %1669 = vrot.lane.b32.xlu0 %v1249, 5
      %v1670 = vpop.permute.xlu0 %1669
      %1671 = vrot.lane.b32.xlu0 %v1251, 5
      %v1672 = vpop.permute.xlu0 %1671
      %1677 = vrot.lane.b32.xlu0 %v1245, 7
      %v1678 = vpop.permute.xlu0 %1677
      %1679 = vrot.lane.b32.xlu0 %v1247, 7
      %v1680 = vpop.permute.xlu0 %1679
      %1681 = vrot.lane.b32.xlu0 %v1249, 7
      %v1682 = vpop.permute.xlu0 %1681
      %1683 = vrot.lane.b32.xlu0 %v1251, 7
      %v1684 = vpop.permute.xlu0 %1683
      %1689 = vrot.lane.b32.xlu0 %v1245, 9
      %v1690 = vpop.permute.xlu0 %1689
      %1691 = vrot.lane.b32.xlu0 %v1247, 9
      %v1692 = vpop.permute.xlu0 %1691
      %1693 = vrot.lane.b32.xlu0 %v1249, 9
      %v1694 = vpop.permute.xlu0 %1693
      %1695 = vrot.lane.b32.xlu0 %v1251, 9
      %v1696 = vpop.permute.xlu0 %1695
      %v1701 = vsel %vm237, %v1618, %v1630
      %v1702 = vsel %vm237, %v1620, %v1632
      %v1703 = vsel %vm237, %v1622, %v1634
      %v1704 = vsel %vm237, %v1624, %v1636
      %v1705 = vsel %vm1345, %v1701, %v1642
      %v1706 = vsel %vm1345, %v1702, %v1644
      %v1707 = vsel %vm1345, %v1703, %v1646
      %v1708 = vsel %vm1345, %v1704, %v1648
      %v1709 = vsel %vm1350, %v1705, %v1654
      %v1710 = vsel %vm1350, %v1706, %v1656
      %v1711 = vsel %vm1350, %v1707, %v1658
      %v1712 = vsel %vm1350, %v1708, %v1660
      %v1713 = vsel %vm1355, %v1709, %v1666
      %v1714 = vsel %vm1355, %v1710, %v1668
      %v1715 = vsel %vm1355, %v1711, %v1670
      %v1716 = vsel %vm1355, %v1712, %v1672
      %v1717 = vsel %vm1360, %v1713, %v1678
      %v1718 = vsel %vm1360, %v1714, %v1680
      %v1719 = vsel %vm1360, %v1715, %v1682
      %v1720 = vsel %vm1360, %v1716, %v1684
      %v1721 = vsel %vm1365, %v1717, %v1690
      %v1722 = vsel %vm1365, %v1718, %v1692
      %v1723 = vsel %vm1365, %v1719, %v1694
      %v1724 = vsel %vm1365, %v1720, %v1696
      %v1725 = vpack.c.bf16 %v1722, %v1721
      %v1726 = vpack.c.bf16 %v1724, %v1723
      %1729 = vrot.lane.b32.xlu0 %v1725, 66
      %v1730 = vpop.permute.xlu0 %1729
      %1731 = vrot.lane.b32.xlu0 %v1726, 66
      %v1732 = vpop.permute.xlu0 %1731
      %vm1735 = vcmask 720400
      %1736 = vst.msk [vmem:[#allocation4] sm:$0xff] %vm1735, %v1730
      %1737 = vst.msk [vmem:[#allocation4 + $0x20] sm:$0xff] %vm1735, %v1732
      %1738 = vrot.lane.b32.xlu0 %v1604, 88
      %v1739 = vpop.permute.xlu0 %1738
      %1740 = vrot.lane.b32.xlu0 %v1605, 88
      %v1741 = vpop.permute.xlu0 %1740
      %vm1744 = vcmask 900800
      %1745 = vst.msk [vmem:[#allocation4] sm:$0xff] %vm1744, %v1739
      %1746 = vst.msk [vmem:[#allocation4 + $0x20] sm:$0xff] %vm1744, %v1741
      %1747 = vrot.lane.b32.xlu0 %v1483, 110
      %v1748 = vpop.permute.xlu0 %1747
      %1749 = vrot.lane.b32.xlu0 %v1484, 110
      %v1750 = vpop.permute.xlu0 %1749
      %vm1753 = vcmask 1048432
      %1754 = vst.msk [vmem:[#allocation4] sm:$0xff] %vm1753, %v1748
      %vm1755 = vcmask 31744
      %1756 = vst.msk [vmem:[#allocation4 + $0x8] sm:$0xff] %vm1755, %v1748
      %1757 = vst.msk [vmem:[#allocation4 + $0x20] sm:$0xff] %vm1753, %v1750
      %1758 = vst.msk [vmem:[#allocation4 + $0x28] sm:$0xff] %vm1755, %v1750
      %1761 = vrot.lane.b32.xlu0 %v1370, 4
      %v1762 = vpop.permute.xlu0 %1761
      %1763 = vrot.lane.b32.xlu0 %v1371, 4
      %v1764 = vpop.permute.xlu0 %1763
      %vm1767 = vcmask 212000
      %1768 = vst.msk [vmem:[#allocation4 + $0x8] sm:$0xff] %vm1767, %v1762
      %1769 = vst.msk [vmem:[#allocation4 + $0x28] sm:$0xff] %vm1767, %v1764
      %1770 = vrot.lane.b32.xlu0 %v1245, 61
      %v1771 = vpop.permute.xlu0 %1770
      %1772 = vrot.lane.b32.xlu0 %v1247, 61
      %v1773 = vpop.permute.xlu0 %1772
      %1774 = vrot.lane.b32.xlu0 %v1249, 61
      %v1775 = vpop.permute.xlu0 %1774
      %1776 = vrot.lane.b32.xlu0 %v1251, 61
      %v1777 = vpop.permute.xlu0 %1776
      %1782 = vrot.lane.b32.xlu0 %v1245, 63
      %v1783 = vpop.permute.xlu0 %1782
      %1784 = vrot.lane.b32.xlu0 %v1247, 63
      %v1785 = vpop.permute.xlu0 %1784
      %1786 = vrot.lane.b32.xlu0 %v1249, 63
      %v1787 = vpop.permute.xlu0 %1786
      %1788 = vrot.lane.b32.xlu0 %v1251, 63
      %v1789 = vpop.permute.xlu0 %1788
      %1794 = vrot.lane.b32.xlu0 %v1245, 65
      %v1795 = vpop.permute.xlu0 %1794
      %1796 = vrot.lane.b32.xlu0 %v1247, 65
      %v1797 = vpop.permute.xlu0 %1796
      %1798 = vrot.lane.b32.xlu0 %v1249, 65
      %v1799 = vpop.permute.xlu0 %1798
      %1800 = vrot.lane.b32.xlu0 %v1251, 65
      %v1801 = vpop.permute.xlu0 %1800
      %1806 = vrot.lane.b32.xlu0 %v1245, 67
      %v1807 = vpop.permute.xlu0 %1806
      %1808 = vrot.lane.b32.xlu0 %v1247, 67
      %v1809 = vpop.permute.xlu0 %1808
      %1810 = vrot.lane.b32.xlu0 %v1249, 67
      %v1811 = vpop.permute.xlu0 %1810
      %1812 = vrot.lane.b32.xlu0 %v1251, 67
      %v1813 = vpop.permute.xlu0 %1812
      %1818 = vrot.lane.b32.xlu0 %v1245, 69
      %v1819 = vpop.permute.xlu0 %1818
      %1820 = vrot.lane.b32.xlu0 %v1247, 69
      %v1821 = vpop.permute.xlu0 %1820
      %1822 = vrot.lane.b32.xlu0 %v1249, 69
      %v1823 = vpop.permute.xlu0 %1822
      %1824 = vrot.lane.b32.xlu0 %v1251, 69
      %v1825 = vpop.permute.xlu0 %1824
      %1830 = vrot.lane.b32.xlu0 %v1245, 71
      %v1831 = vpop.permute.xlu0 %1830
      %1832 = vrot.lane.b32.xlu0 %v1247, 71
      %v1833 = vpop.permute.xlu0 %1832
      %1834 = vrot.lane.b32.xlu0 %v1249, 71
      %v1835 = vpop.permute.xlu0 %1834
      %1836 = vrot.lane.b32.xlu0 %v1251, 71
      %v1837 = vpop.permute.xlu0 %1836
      %1842 = vrot.lane.b32.xlu0 %v1245, 73
      %v1843 = vpop.permute.xlu0 %1842
      %1844 = vrot.lane.b32.xlu0 %v1247, 73
      %v1845 = vpop.permute.xlu0 %1844
      %1846 = vrot.lane.b32.xlu0 %v1249, 73
      %v1847 = vpop.permute.xlu0 %1846
      %1848 = vrot.lane.b32.xlu0 %v1251, 73
      %v1849 = vpop.permute.xlu0 %1848
      %v1854 = vsel %vm237, %v1771, %v1783
      %v1855 = vsel %vm237, %v1773, %v1785
      %v1856 = vsel %vm237, %v1775, %v1787
      %v1857 = vsel %vm237, %v1777, %v1789
      %v1858 = vsel %vm1345, %v1854, %v1795
      %v1859 = vsel %vm1345, %v1855, %v1797
      %v1860 = vsel %vm1345, %v1856, %v1799
      %v1861 = vsel %vm1345, %v1857, %v1801
      %v1862 = vsel %vm1350, %v1858, %v1807
      %v1863 = vsel %vm1350, %v1859, %v1809
      %v1864 = vsel %vm1350, %v1860, %v1811
      %v1865 = vsel %vm1350, %v1861, %v1813
      %v1866 = vsel %vm1355, %v1862, %v1819
      %v1867 = vsel %vm1355, %v1863, %v1821
      %v1868 = vsel %vm1355, %v1864, %v1823
      %v1869 = vsel %vm1355, %v1865, %v1825
      %v1870 = vsel %vm1360, %v1866, %v1831
      %v1871 = vsel %vm1360, %v1867, %v1833
      %v1872 = vsel %vm1360, %v1868, %v1835
      %v1873 = vsel %vm1360, %v1869, %v1837
      %v1874 = vsel %vm1365, %v1870, %v1843
      %v1875 = vsel %vm1365, %v1871, %v1845
      %v1876 = vsel %vm1365, %v1872, %v1847
      %v1877 = vsel %vm1365, %v1873, %v1849
      %v1878 = vpack.c.bf16 %v1875, %v1874
      %v1879 = vpack.c.bf16 %v1877, %v1876
      %1882 = vrot.lane.b32.xlu0 %v1878, 26
      %v1883 = vpop.permute.xlu0 %1882
      %1884 = vrot.lane.b32.xlu0 %v1879, 26
      %v1885 = vpop.permute.xlu0 %1884
      %vm1888 = vcmask 392400
      %1889 = vst.msk [vmem:[#allocation4 + $0x8] sm:$0xff] %vm1888, %v1883
      %1890 = vst.msk [vmem:[#allocation4 + $0x28] sm:$0xff] %vm1888, %v1885
      %1891 = vrot.lane.b32.xlu0 %v1245, 45
      %v1892 = vpop.permute.xlu0 %1891
      %1893 = vrot.lane.b32.xlu0 %v1247, 45
      %v1894 = vpop.permute.xlu0 %1893
      %1895 = vrot.lane.b32.xlu0 %v1249, 45
      %v1896 = vpop.permute.xlu0 %1895
      %1897 = vrot.lane.b32.xlu0 %v1251, 45
      %v1898 = vpop.permute.xlu0 %1897
      %1903 = vrot.lane.b32.xlu0 %v1245, 47
      %v1904 = vpop.permute.xlu0 %1903
      %1905 = vrot.lane.b32.xlu0 %v1247, 47
      %v1906 = vpop.permute.xlu0 %1905
      %1907 = vrot.lane.b32.xlu0 %v1249, 47
      %v1908 = vpop.permute.xlu0 %1907
      %1909 = vrot.lane.b32.xlu0 %v1251, 47
      %v1910 = vpop.permute.xlu0 %1909
      %1915 = vrot.lane.b32.xlu0 %v1245, 49
      %v1916 = vpop.permute.xlu0 %1915
      %1917 = vrot.lane.b32.xlu0 %v1247, 49
      %v1918 = vpop.permute.xlu0 %1917
      %1919 = vrot.lane.b32.xlu0 %v1249, 49
      %v1920 = vpop.permute.xlu0 %1919
      %1921 = vrot.lane.b32.xlu0 %v1251, 49
      %v1922 = vpop.permute.xlu0 %1921
      %1927 = vrot.lane.b32.xlu0 %v1245, 51
      %v1928 = vpop.permute.xlu0 %1927
      %1929 = vrot.lane.b32.xlu0 %v1247, 51
      %v1930 = vpop.permute.xlu0 %1929
      %1931 = vrot.lane.b32.xlu0 %v1249, 51
      %v1932 = vpop.permute.xlu0 %1931
      %1933 = vrot.lane.b32.xlu0 %v1251, 51
      %v1934 = vpop.permute.xlu0 %1933
      %1939 = vrot.lane.b32.xlu0 %v1245, 53
      %v1940 = vpop.permute.xlu0 %1939
      %1941 = vrot.lane.b32.xlu0 %v1247, 53
      %v1942 = vpop.permute.xlu0 %1941
      %1943 = vrot.lane.b32.xlu0 %v1249, 53
      %v1944 = vpop.permute.xlu0 %1943
      %1945 = vrot.lane.b32.xlu0 %v1251, 53
      %v1946 = vpop.permute.xlu0 %1945
      %1951 = vrot.lane.b32.xlu0 %v1245, 55
      %v1952 = vpop.permute.xlu0 %1951
      %1953 = vrot.lane.b32.xlu0 %v1247, 55
      %v1954 = vpop.permute.xlu0 %1953
      %1955 = vrot.lane.b32.xlu0 %v1249, 55
      %v1956 = vpop.permute.xlu0 %1955
      %1957 = vrot.lane.b32.xlu0 %v1251, 55
      %v1958 = vpop.permute.xlu0 %1957
      %1963 = vrot.lane.b32.xlu0 %v1245, 57
      %v1964 = vpop.permute.xlu0 %1963
      %1965 = vrot.lane.b32.xlu0 %v1247, 57
      %v1966 = vpop.permute.xlu0 %1965
      %1967 = vrot.lane.b32.xlu0 %v1249, 57
      %v1968 = vpop.permute.xlu0 %1967
      %1969 = vrot.lane.b32.xlu0 %v1251, 57
      %v1970 = vpop.permute.xlu0 %1969
      %v1975 = vsel %vm237, %v1892, %v1904
      %v1976 = vsel %vm237, %v1894, %v1906
      %v1977 = vsel %vm237, %v1896, %v1908
      %v1978 = vsel %vm237, %v1898, %v1910
      %v1979 = vsel %vm1345, %v1975, %v1916
      %v1980 = vsel %vm1345, %v1976, %v1918
      %v1981 = vsel %vm1345, %v1977, %v1920
      %v1982 = vsel %vm1345, %v1978, %v1922
      %v1983 = vsel %vm1350, %v1979, %v1928
      %v1984 = vsel %vm1350, %v1980, %v1930
      %v1985 = vsel %vm1350, %v1981, %v1932
      %v1986 = vsel %vm1350, %v1982, %v1934
      %v1987 = vsel %vm1355, %v1983, %v1940
      %v1988 = vsel %vm1355, %v1984, %v1942
      %v1989 = vsel %vm1355, %v1985, %v1944
      %v1990 = vsel %vm1355, %v1986, %v1946
      %v1991 = vsel %vm1360, %v1987, %v1952
      %v1992 = vsel %vm1360, %v1988, %v1954
      %v1993 = vsel %vm1360, %v1989, %v1956
      %v1994 = vsel %vm1360, %v1990, %v1958
      %v1995 = vsel %vm1365, %v1991, %v1964
      %v1996 = vsel %vm1365, %v1992, %v1966
      %v1997 = vsel %vm1365, %v1993, %v1968
      %v1998 = vsel %vm1365, %v1994, %v1970
      %v1999 = vpack.c.bf16 %v1996, %v1995
      %v2000 = vpack.c.bf16 %v1998, %v1997
      %2003 = vrot.lane.b32.xlu0 %v1999, 48
      %v2004 = vpop.permute.xlu0 %2003
      %2005 = vrot.lane.b32.xlu0 %v2000, 48
      %v2006 = vpop.permute.xlu0 %2005
      %vm2009 = vcmask 572800
      %2010 = vst.msk [vmem:[#allocation4 + $0x8] sm:$0xff] %vm2009, %v2004
      %2011 = vst.msk [vmem:[#allocation4 + $0x28] sm:$0xff] %vm2009, %v2006
      %2012 = vrot.lane.b32.xlu0 %v1245, 29
      %v2013 = vpop.permute.xlu0 %2012
      %2014 = vrot.lane.b32.xlu0 %v1247, 29
      %v2015 = vpop.permute.xlu0 %2014
      %2016 = vrot.lane.b32.xlu0 %v1249, 29
      %v2017 = vpop.permute.xlu0 %2016
      %2018 = vrot.lane.b32.xlu0 %v1251, 29
      %v2019 = vpop.permute.xlu0 %2018
      %2024 = vrot.lane.b32.xlu0 %v1245, 31
      %v2025 = vpop.permute.xlu0 %2024
      %2026 = vrot.lane.b32.xlu0 %v1247, 31
      %v2027 = vpop.permute.xlu0 %2026
      %2028 = vrot.lane.b32.xlu0 %v1249, 31
      %v2029 = vpop.permute.xlu0 %2028
      %2030 = vrot.lane.b32.xlu0 %v1251, 31
      %v2031 = vpop.permute.xlu0 %2030
      %2036 = vrot.lane.b32.xlu0 %v1245, 33
      %v2037 = vpop.permute.xlu0 %2036
      %2038 = vrot.lane.b32.xlu0 %v1247, 33
      %v2039 = vpop.permute.xlu0 %2038
      %2040 = vrot.lane.b32.xlu0 %v1249, 33
      %v2041 = vpop.permute.xlu0 %2040
      %2042 = vrot.lane.b32.xlu0 %v1251, 33
      %v2043 = vpop.permute.xlu0 %2042
      %2048 = vrot.lane.b32.xlu0 %v1245, 35
      %v2049 = vpop.permute.xlu0 %2048
      %2050 = vrot.lane.b32.xlu0 %v1247, 35
      %v2051 = vpop.permute.xlu0 %2050
      %2052 = vrot.lane.b32.xlu0 %v1249, 35
      %v2053 = vpop.permute.xlu0 %2052
      %2054 = vrot.lane.b32.xlu0 %v1251, 35
      %v2055 = vpop.permute.xlu0 %2054
      %2060 = vrot.lane.b32.xlu0 %v1245, 37
      %v2061 = vpop.permute.xlu0 %2060
      %2062 = vrot.lane.b32.xlu0 %v1247, 37
      %v2063 = vpop.permute.xlu0 %2062
      %2064 = vrot.lane.b32.xlu0 %v1249, 37
      %v2065 = vpop.permute.xlu0 %2064
      %2066 = vrot.lane.b32.xlu0 %v1251, 37
      %v2067 = vpop.permute.xlu0 %2066
      %2072 = vrot.lane.b32.xlu0 %v1245, 39
      %v2073 = vpop.permute.xlu0 %2072
      %2074 = vrot.lane.b32.xlu0 %v1247, 39
      %v2075 = vpop.permute.xlu0 %2074
      %2076 = vrot.lane.b32.xlu0 %v1249, 39
      %v2077 = vpop.permute.xlu0 %2076
      %2078 = vrot.lane.b32.xlu0 %v1251, 39
      %v2079 = vpop.permute.xlu0 %2078
      %2084 = vrot.lane.b32.xlu0 %v1245, 41
      %v2085 = vpop.permute.xlu0 %2084
      %2086 = vrot.lane.b32.xlu0 %v1247, 41
      %v2087 = vpop.permute.xlu0 %2086
      %2088 = vrot.lane.b32.xlu0 %v1249, 41
      %v2089 = vpop.permute.xlu0 %2088
      %2090 = vrot.lane.b32.xlu0 %v1251, 41
      %v2091 = vpop.permute.xlu0 %2090
      %v2096 = vsel %vm237, %v2013, %v2025
      %v2097 = vsel %vm237, %v2015, %v2027
      %v2098 = vsel %vm237, %v2017, %v2029
      %v2099 = vsel %vm237, %v2019, %v2031
      %v2100 = vsel %vm1345, %v2096, %v2037
      %v2101 = vsel %vm1345, %v2097, %v2039
      %v2102 = vsel %vm1345, %v2098, %v2041
      %v2103 = vsel %vm1345, %v2099, %v2043
      %v2104 = vsel %vm1350, %v2100, %v2049
      %v2105 = vsel %vm1350, %v2101, %v2051
      %v2106 = vsel %vm1350, %v2102, %v2053
      %v2107 = vsel %vm1350, %v2103, %v2055
      %v2108 = vsel %vm1355, %v2104, %v2061
      %v2109 = vsel %vm1355, %v2105, %v2063
      %v2110 = vsel %vm1355, %v2106, %v2065
      %v2111 = vsel %vm1355, %v2107, %v2067
      %v2112 = vsel %vm1360, %v2108, %v2073
      %v2113 = vsel %vm1360, %v2109, %v2075
      %v2114 = vsel %vm1360, %v2110, %v2077
      %v2115 = vsel %vm1360, %v2111, %v2079
      %v2116 = vsel %vm1365, %v2112, %v2085
      %v2117 = vsel %vm1365, %v2113, %v2087
      %v2118 = vsel %vm1365, %v2114, %v2089
      %v2119 = vsel %vm1365, %v2115, %v2091
      %v2120 = vpack.c.bf16 %v2117, %v2116
      %v2121 = vpack.c.bf16 %v2119, %v2118
      %2124 = vrot.lane.b32.xlu0 %v2120, 70
      %v2125 = vpop.permute.xlu0 %2124
      %2126 = vrot.lane.b32.xlu0 %v2121, 70
      %v2127 = vpop.permute.xlu0 %2126
      %vm2130 = vcmask 753200
      %2131 = vst.msk [vmem:[#allocation4 + $0x8] sm:$0xff] %vm2130, %v2125
      %2132 = vst.msk [vmem:[#allocation4 + $0x28] sm:$0xff] %vm2130, %v2127
      %2133 = vrot.lane.b32.xlu0 %v1245, 13
      %v2134 = vpop.permute.xlu0 %2133
      %2135 = vrot.lane.b32.xlu0 %v1247, 13
      %v2136 = vpop.permute.xlu0 %2135
      %2137 = vrot.lane.b32.xlu0 %v1249, 13
      %v2138 = vpop.permute.xlu0 %2137
      %2139 = vrot.lane.b32.xlu0 %v1251, 13
      %v2140 = vpop.permute.xlu0 %2139
      %2145 = vrot.lane.b32.xlu0 %v1245, 15
      %v2146 = vpop.permute.xlu0 %2145
      %2147 = vrot.lane.b32.xlu0 %v1247, 15
      %v2148 = vpop.permute.xlu0 %2147
      %2149 = vrot.lane.b32.xlu0 %v1249, 15
      %v2150 = vpop.permute.xlu0 %2149
      %2151 = vrot.lane.b32.xlu0 %v1251, 15
      %v2152 = vpop.permute.xlu0 %2151
      %2157 = vrot.lane.b32.xlu0 %v1245, 17
      %v2158 = vpop.permute.xlu0 %2157
      %2159 = vrot.lane.b32.xlu0 %v1247, 17
      %v2160 = vpop.permute.xlu0 %2159
      %2161 = vrot.lane.b32.xlu0 %v1249, 17
      %v2162 = vpop.permute.xlu0 %2161
      %2163 = vrot.lane.b32.xlu0 %v1251, 17
      %v2164 = vpop.permute.xlu0 %2163
      %2169 = vrot.lane.b32.xlu0 %v1245, 19
      %v2170 = vpop.permute.xlu0 %2169
      %2171 = vrot.lane.b32.xlu0 %v1247, 19
      %v2172 = vpop.permute.xlu0 %2171
      %2173 = vrot.lane.b32.xlu0 %v1249, 19
      %v2174 = vpop.permute.xlu0 %2173
      %2175 = vrot.lane.b32.xlu0 %v1251, 19
      %v2176 = vpop.permute.xlu0 %2175
      %2181 = vrot.lane.b32.xlu0 %v1245, 21
      %v2182 = vpop.permute.xlu0 %2181
      %2183 = vrot.lane.b32.xlu0 %v1247, 21
      %v2184 = vpop.permute.xlu0 %2183
      %2185 = vrot.lane.b32.xlu0 %v1249, 21
      %v2186 = vpop.permute.xlu0 %2185
      %2187 = vrot.lane.b32.xlu0 %v1251, 21
      %v2188 = vpop.permute.xlu0 %2187
      %2193 = vrot.lane.b32.xlu0 %v1245, 23
      %v2194 = vpop.permute.xlu0 %2193
      %2195 = vrot.lane.b32.xlu0 %v1247, 23
      %v2196 = vpop.permute.xlu0 %2195
      %2197 = vrot.lane.b32.xlu0 %v1249, 23
      %v2198 = vpop.permute.xlu0 %2197
      %2199 = vrot.lane.b32.xlu0 %v1251, 23
      %v2200 = vpop.permute.xlu0 %2199
      %2205 = vrot.lane.b32.xlu0 %v1245, 25
      %v2206 = vpop.permute.xlu0 %2205
      %2207 = vrot.lane.b32.xlu0 %v1247, 25
      %v2208 = vpop.permute.xlu0 %2207
      %2209 = vrot.lane.b32.xlu0 %v1249, 25
      %v2210 = vpop.permute.xlu0 %2209
      %2211 = vrot.lane.b32.xlu0 %v1251, 25
      %v2212 = vpop.permute.xlu0 %2211
      %v2217 = vsel %vm237, %v2134, %v2146
      %v2218 = vsel %vm237, %v2136, %v2148
      %v2219 = vsel %vm237, %v2138, %v2150
      %v2220 = vsel %vm237, %v2140, %v2152
      %v2221 = vsel %vm1345, %v2217, %v2158
      %v2222 = vsel %vm1345, %v2218, %v2160
      %v2223 = vsel %vm1345, %v2219, %v2162
      %v2224 = vsel %vm1345, %v2220, %v2164
      %v2225 = vsel %vm1350, %v2221, %v2170
      %v2226 = vsel %vm1350, %v2222, %v2172
      %v2227 = vsel %vm1350, %v2223, %v2174
      %v2228 = vsel %vm1350, %v2224, %v2176
      %v2229 = vsel %vm1355, %v2225, %v2182
      %v2230 = vsel %vm1355, %v2226, %v2184
      %v2231 = vsel %vm1355, %v2227, %v2186
      %v2232 = vsel %vm1355, %v2228, %v2188
      %v2233 = vsel %vm1360, %v2229, %v2194
      %v2234 = vsel %vm1360, %v2230, %v2196
      %v2235 = vsel %vm1360, %v2231, %v2198
      %v2236 = vsel %vm1360, %v2232, %v2200
      %v2237 = vsel %vm1365, %v2233, %v2206
      %v2238 = vsel %vm1365, %v2234, %v2208
      %v2239 = vsel %vm1365, %v2235, %v2210
      %v2240 = vsel %vm1365, %v2236, %v2212
      %v2241 = vpack.c.bf16 %v2238, %v2237
      %v2242 = vpack.c.bf16 %v2240, %v2239
      %2245 = vrot.lane.b32.xlu0 %v2241, 92
      %v2246 = vpop.permute.xlu0 %2245
      %2247 = vrot.lane.b32.xlu0 %v2242, 92
      %v2248 = vpop.permute.xlu0 %2247
      %vm2251 = vcmask 933600
      %2252 = vst.msk [vmem:[#allocation4 + $0x8] sm:$0xff] %vm2251, %v2246
      %2253 = vst.msk [vmem:[#allocation4 + $0x28] sm:$0xff] %vm2251, %v2248
      %2258 = vrot.lane.b32.xlu0 %v1246, 125
      %v2259 = vpop.permute.xlu0 %2258
      %2260 = vrot.lane.b32.xlu0 %v1248, 125
      %v2261 = vpop.permute.xlu0 %2260
      %2262 = vrot.lane.b32.xlu0 %v1250, 125
      %v2263 = vpop.permute.xlu0 %2262
      %2264 = vrot.lane.b32.xlu0 %v1252, 125
      %v2265 = vpop.permute.xlu0 %2264
      %2270 = vrot.lane.b32.xlu0 %v1246, 127
      %v2271 = vpop.permute.xlu0 %2270
      %2272 = vrot.lane.b32.xlu0 %v1248, 127
      %v2273 = vpop.permute.xlu0 %2272
      %2274 = vrot.lane.b32.xlu0 %v1250, 127
      %v2275 = vpop.permute.xlu0 %2274
      %2276 = vrot.lane.b32.xlu0 %v1252, 127
      %v2277 = vpop.permute.xlu0 %2276
      %2282 = vrot.lane.b32.xlu0 %v1246, 1
      %v2283 = vpop.permute.xlu0 %2282
      %2284 = vrot.lane.b32.xlu0 %v1248, 1
      %v2285 = vpop.permute.xlu0 %2284
      %2286 = vrot.lane.b32.xlu0 %v1250, 1
      %v2287 = vpop.permute.xlu0 %2286
      %2288 = vrot.lane.b32.xlu0 %v1252, 1
      %v2289 = vpop.permute.xlu0 %2288
      %2294 = vrot.lane.b32.xlu0 %v1246, 3
      %v2295 = vpop.permute.xlu0 %2294
      %2296 = vrot.lane.b32.xlu0 %v1248, 3
      %v2297 = vpop.permute.xlu0 %2296
      %2298 = vrot.lane.b32.xlu0 %v1250, 3
      %v2299 = vpop.permute.xlu0 %2298
      %2300 = vrot.lane.b32.xlu0 %v1252, 3
      %v2301 = vpop.permute.xlu0 %2300
      %2306 = vrot.lane.b32.xlu0 %v1246, 5
      %v2307 = vpop.permute.xlu0 %2306
      %2308 = vrot.lane.b32.xlu0 %v1248, 5
      %v2309 = vpop.permute.xlu0 %2308
      %2310 = vrot.lane.b32.xlu0 %v1250, 5
      %v2311 = vpop.permute.xlu0 %2310
      %2312 = vrot.lane.b32.xlu0 %v1252, 5
      %v2313 = vpop.permute.xlu0 %2312
      %2318 = vrot.lane.b32.xlu0 %v1246, 7
      %v2319 = vpop.permute.xlu0 %2318
      %2320 = vrot.lane.b32.xlu0 %v1248, 7
      %v2321 = vpop.permute.xlu0 %2320
      %2322 = vrot.lane.b32.xlu0 %v1250, 7
      %v2323 = vpop.permute.xlu0 %2322
      %2324 = vrot.lane.b32.xlu0 %v1252, 7
      %v2325 = vpop.permute.xlu0 %2324
      %2330 = vrot.lane.b32.xlu0 %v1246, 9
      %v2331 = vpop.permute.xlu0 %2330
      %2332 = vrot.lane.b32.xlu0 %v1248, 9
      %v2333 = vpop.permute.xlu0 %2332
      %2334 = vrot.lane.b32.xlu0 %v1250, 9
      %v2335 = vpop.permute.xlu0 %2334
      %2336 = vrot.lane.b32.xlu0 %v1252, 9
      %v2337 = vpop.permute.xlu0 %2336
      %v2342 = vsel %vm237, %v2259, %v2271
      %v2343 = vsel %vm237, %v2261, %v2273
      %v2344 = vsel %vm237, %v2263, %v2275
      %v2345 = vsel %vm237, %v2265, %v2277
      %v2346 = vsel %vm1345, %v2342, %v2283
      %v2347 = vsel %vm1345, %v2343, %v2285
      %v2348 = vsel %vm1345, %v2344, %v2287
      %v2349 = vsel %vm1345, %v2345, %v2289
      %v2350 = vsel %vm1350, %v2346, %v2295
      %v2351 = vsel %vm1350, %v2347, %v2297
      %v2352 = vsel %vm1350, %v2348, %v2299
      %v2353 = vsel %vm1350, %v2349, %v2301
      %v2354 = vsel %vm1355, %v2350, %v2307
      %v2355 = vsel %vm1355, %v2351, %v2309
      %v2356 = vsel %vm1355, %v2352, %v2311
      %v2357 = vsel %vm1355, %v2353, %v2313
      %v2358 = vsel %vm1360, %v2354, %v2319
      %v2359 = vsel %vm1360, %v2355, %v2321
      %v2360 = vsel %vm1360, %v2356, %v2323
      %v2361 = vsel %vm1360, %v2357, %v2325
      %v2362 = vsel %vm1365, %v2358, %v2331
      %v2363 = vsel %vm1365, %v2359, %v2333
      %v2364 = vsel %vm1365, %v2360, %v2335
      %v2365 = vsel %vm1365, %v2361, %v2337
      %v2366 = vpack.c.bf16 %v2363, %v2362
      %v2367 = vpack.c.bf16 %v2365, %v2364
      %2370 = vrot.lane.b32.xlu0 %v2366, 114
      %v2371 = vpop.permute.xlu0 %2370
      %2372 = vrot.lane.b32.xlu0 %v2367, 114
      %v2373 = vpop.permute.xlu0 %2372
      %vm2376 = vcmask 1048464
      %2377 = vst.msk [vmem:[#allocation4 + $0x8] sm:$0xff] %vm2376, %v2371
      %vm2378 = vcmask 64512
      %2379 = vst.msk [vmem:[#allocation4 + $0x10] sm:$0xff] %vm2378, %v2371
      %2380 = vst.msk [vmem:[#allocation4 + $0x28] sm:$0xff] %vm2376, %v2373
      %2381 = vst.msk [vmem:[#allocation4 + $0x30] sm:$0xff] %vm2378, %v2373
      %2382 = vrot.lane.b32.xlu0 %v1246, 109
      %v2383 = vpop.permute.xlu0 %2382
      %2384 = vrot.lane.b32.xlu0 %v1248, 109
      %v2385 = vpop.permute.xlu0 %2384
      %2386 = vrot.lane.b32.xlu0 %v1250, 109
      %v2387 = vpop.permute.xlu0 %2386
      %2388 = vrot.lane.b32.xlu0 %v1252, 109
      %v2389 = vpop.permute.xlu0 %2388
      %2394 = vrot.lane.b32.xlu0 %v1246, 111
      %v2395 = vpop.permute.xlu0 %2394
      %2396 = vrot.lane.b32.xlu0 %v1248, 111
      %v2397 = vpop.permute.xlu0 %2396
      %2398 = vrot.lane.b32.xlu0 %v1250, 111
      %v2399 = vpop.permute.xlu0 %2398
      %2400 = vrot.lane.b32.xlu0 %v1252, 111
      %v2401 = vpop.permute.xlu0 %2400
      %2406 = vrot.lane.b32.xlu0 %v1246, 113
      %v2407 = vpop.permute.xlu0 %2406
      %2408 = vrot.lane.b32.xlu0 %v1248, 113
      %v2409 = vpop.permute.xlu0 %2408
      %2410 = vrot.lane.b32.xlu0 %v1250, 113
      %v2411 = vpop.permute.xlu0 %2410
      %2412 = vrot.lane.b32.xlu0 %v1252, 113
      %v2413 = vpop.permute.xlu0 %2412
      %2418 = vrot.lane.b32.xlu0 %v1246, 115
      %v2419 = vpop.permute.xlu0 %2418
      %2420 = vrot.lane.b32.xlu0 %v1248, 115
      %v2421 = vpop.permute.xlu0 %2420
      %2422 = vrot.lane.b32.xlu0 %v1250, 115
      %v2423 = vpop.permute.xlu0 %2422
      %2424 = vrot.lane.b32.xlu0 %v1252, 115
      %v2425 = vpop.permute.xlu0 %2424
      %2430 = vrot.lane.b32.xlu0 %v1246, 117
      %v2431 = vpop.permute.xlu0 %2430
      %2432 = vrot.lane.b32.xlu0 %v1248, 117
      %v2433 = vpop.permute.xlu0 %2432
      %2434 = vrot.lane.b32.xlu0 %v1250, 117
      %v2435 = vpop.permute.xlu0 %2434
      %2436 = vrot.lane.b32.xlu0 %v1252, 117
      %v2437 = vpop.permute.xlu0 %2436
      %2442 = vrot.lane.b32.xlu0 %v1246, 119
      %v2443 = vpop.permute.xlu0 %2442
      %2444 = vrot.lane.b32.xlu0 %v1248, 119
      %v2445 = vpop.permute.xlu0 %2444
      %2446 = vrot.lane.b32.xlu0 %v1250, 119
      %v2447 = vpop.permute.xlu0 %2446
      %2448 = vrot.lane.b32.xlu0 %v1252, 119
      %v2449 = vpop.permute.xlu0 %2448
      %2454 = vrot.lane.b32.xlu0 %v1246, 121
      %v2455 = vpop.permute.xlu0 %2454
      %2456 = vrot.lane.b32.xlu0 %v1248, 121
      %v2457 = vpop.permute.xlu0 %2456
      %2458 = vrot.lane.b32.xlu0 %v1250, 121
      %v2459 = vpop.permute.xlu0 %2458
      %2460 = vrot.lane.b32.xlu0 %v1252, 121
      %v2461 = vpop.permute.xlu0 %2460
      %v2466 = vsel %vm237, %v2383, %v2395
      %v2467 = vsel %vm237, %v2385, %v2397
      %v2468 = vsel %vm237, %v2387, %v2399
      %v2469 = vsel %vm237, %v2389, %v2401
      %v2470 = vsel %vm1345, %v2466, %v2407
      %v2471 = vsel %vm1345, %v2467, %v2409
      %v2472 = vsel %vm1345, %v2468, %v2411
      %v2473 = vsel %vm1345, %v2469, %v2413
      %v2474 = vsel %vm1350, %v2470, %v2419
      %v2475 = vsel %vm1350, %v2471, %v2421
      %v2476 = vsel %vm1350, %v2472, %v2423
      %v2477 = vsel %vm1350, %v2473, %v2425
      %v2478 = vsel %vm1355, %v2474, %v2431
      %v2479 = vsel %vm1355, %v2475, %v2433
      %v2480 = vsel %vm1355, %v2476, %v2435
      %v2481 = vsel %vm1355, %v2477, %v2437
      %v2482 = vsel %vm1360, %v2478, %v2443
      %v2483 = vsel %vm1360, %v2479, %v2445
      %v2484 = vsel %vm1360, %v2480, %v2447
      %v2485 = vsel %vm1360, %v2481, %v2449
      %v2486 = vsel %vm1365, %v2482, %v2455
      %v2487 = vsel %vm1365, %v2483, %v2457
      %v2488 = vsel %vm1365, %v2484, %v2459
      %v2489 = vsel %vm1365, %v2485, %v2461
      %v2490 = vpack.c.bf16 %v2487, %v2486
      %v2491 = vpack.c.bf16 %v2489, %v2488
      %2494 = vrot.lane.b32.xlu0 %v2490, 8
      %v2495 = vpop.permute.xlu0 %2494
      %2496 = vrot.lane.b32.xlu0 %v2491, 8
      %v2497 = vpop.permute.xlu0 %2496
      %vm2500 = vcmask 244800
      %2501 = vst.msk [vmem:[#allocation4 + $0x10] sm:$0xff] %vm2500, %v2495
      %2502 = vst.msk [vmem:[#allocation4 + $0x30] sm:$0xff] %vm2500, %v2497
      %2503 = vrot.lane.b32.xlu0 %v1246, 93
      %v2504 = vpop.permute.xlu0 %2503
      %2505 = vrot.lane.b32.xlu0 %v1248, 93
      %v2506 = vpop.permute.xlu0 %2505
      %2507 = vrot.lane.b32.xlu0 %v1250, 93
      %v2508 = vpop.permute.xlu0 %2507
      %2509 = vrot.lane.b32.xlu0 %v1252, 93
      %v2510 = vpop.permute.xlu0 %2509
      %2515 = vrot.lane.b32.xlu0 %v1246, 95
      %v2516 = vpop.permute.xlu0 %2515
      %2517 = vrot.lane.b32.xlu0 %v1248, 95
      %v2518 = vpop.permute.xlu0 %2517
      %2519 = vrot.lane.b32.xlu0 %v1250, 95
      %v2520 = vpop.permute.xlu0 %2519
      %2521 = vrot.lane.b32.xlu0 %v1252, 95
      %v2522 = vpop.permute.xlu0 %2521
      %2527 = vrot.lane.b32.xlu0 %v1246, 97
      %v2528 = vpop.permute.xlu0 %2527
      %2529 = vrot.lane.b32.xlu0 %v1248, 97
      %v2530 = vpop.permute.xlu0 %2529
      %2531 = vrot.lane.b32.xlu0 %v1250, 97
      %v2532 = vpop.permute.xlu0 %2531
      %2533 = vrot.lane.b32.xlu0 %v1252, 97
      %v2534 = vpop.permute.xlu0 %2533
      %2539 = vrot.lane.b32.xlu0 %v1246, 99
      %v2540 = vpop.permute.xlu0 %2539
      %2541 = vrot.lane.b32.xlu0 %v1248, 99
      %v2542 = vpop.permute.xlu0 %2541
      %2543 = vrot.lane.b32.xlu0 %v1250, 99
      %v2544 = vpop.permute.xlu0 %2543
      %2545 = vrot.lane.b32.xlu0 %v1252, 99
      %v2546 = vpop.permute.xlu0 %2545
      %2551 = vrot.lane.b32.xlu0 %v1246, 101
      %v2552 = vpop.permute.xlu0 %2551
      %2553 = vrot.lane.b32.xlu0 %v1248, 101
      %v2554 = vpop.permute.xlu0 %2553
      %2555 = vrot.lane.b32.xlu0 %v1250, 101
      %v2556 = vpop.permute.xlu0 %2555
      %2557 = vrot.lane.b32.xlu0 %v1252, 101
      %v2558 = vpop.permute.xlu0 %2557
      %2563 = vrot.lane.b32.xlu0 %v1246, 103
      %v2564 = vpop.permute.xlu0 %2563
      %2565 = vrot.lane.b32.xlu0 %v1248, 103
      %v2566 = vpop.permute.xlu0 %2565
      %2567 = vrot.lane.b32.xlu0 %v1250, 103
      %v2568 = vpop.permute.xlu0 %2567
      %2569 = vrot.lane.b32.xlu0 %v1252, 103
      %v2570 = vpop.permute.xlu0 %2569
      %2575 = vrot.lane.b32.xlu0 %v1246, 105
      %v2576 = vpop.permute.xlu0 %2575
      %2577 = vrot.lane.b32.xlu0 %v1248, 105
      %v2578 = vpop.permute.xlu0 %2577
      %2579 = vrot.lane.b32.xlu0 %v1250, 105
      %v2580 = vpop.permute.xlu0 %2579
      %2581 = vrot.lane.b32.xlu0 %v1252, 105
      %v2582 = vpop.permute.xlu0 %2581
      %v2587 = vsel %vm237, %v2504, %v2516
      %v2588 = vsel %vm237, %v2506, %v2518
      %v2589 = vsel %vm237, %v2508, %v2520
      %v2590 = vsel %vm237, %v2510, %v2522
      %v2591 = vsel %vm1345, %v2587, %v2528
      %v2592 = vsel %vm1345, %v2588, %v2530
      %v2593 = vsel %vm1345, %v2589, %v2532
      %v2594 = vsel %vm1345, %v2590, %v2534
      %v2595 = vsel %vm1350, %v2591, %v2540
      %v2596 = vsel %vm1350, %v2592, %v2542
      %v2597 = vsel %vm1350, %v2593, %v2544
      %v2598 = vsel %vm1350, %v2594, %v2546
      %v2599 = vsel %vm1355, %v2595, %v2552
      %v2600 = vsel %vm1355, %v2596, %v2554
      %v2601 = vsel %vm1355, %v2597, %v2556
      %v2602 = vsel %vm1355, %v2598, %v2558
      %v2603 = vsel %vm1360, %v2599, %v2564
      %v2604 = vsel %vm1360, %v2600, %v2566
      %v2605 = vsel %vm1360, %v2601, %v2568
      %v2606 = vsel %vm1360, %v2602, %v2570
      %v2607 = vsel %vm1365, %v2603, %v2576
      %v2608 = vsel %vm1365, %v2604, %v2578
      %v2609 = vsel %vm1365, %v2605, %v2580
      %v2610 = vsel %vm1365, %v2606, %v2582
      %v2611 = vpack.c.bf16 %v2608, %v2607
      %v2612 = vpack.c.bf16 %v2610, %v2609
      %2615 = vrot.lane.b32.xlu0 %v2611, 30
      %v2616 = vpop.permute.xlu0 %2615
      %2617 = vrot.lane.b32.xlu0 %v2612, 30
      %v2618 = vpop.permute.xlu0 %2617
      %vm2621 = vcmask 425200
      %2622 = vst.msk [vmem:[#allocation4 + $0x10] sm:$0xff] %vm2621, %v2616
      %2623 = vst.msk [vmem:[#allocation4 + $0x30] sm:$0xff] %vm2621, %v2618
      %2624 = vrot.lane.b32.xlu0 %v1246, 77
      %v2625 = vpop.permute.xlu0 %2624
      %2626 = vrot.lane.b32.xlu0 %v1248, 77
      %v2627 = vpop.permute.xlu0 %2626
      %2628 = vrot.lane.b32.xlu0 %v1250, 77
      %v2629 = vpop.permute.xlu0 %2628
      %2630 = vrot.lane.b32.xlu0 %v1252, 77
      %v2631 = vpop.permute.xlu0 %2630
      %2636 = vrot.lane.b32.xlu0 %v1246, 79
      %v2637 = vpop.permute.xlu0 %2636
      %2638 = vrot.lane.b32.xlu0 %v1248, 79
      %v2639 = vpop.permute.xlu0 %2638
      %2640 = vrot.lane.b32.xlu0 %v1250, 79
      %v2641 = vpop.permute.xlu0 %2640
      %2642 = vrot.lane.b32.xlu0 %v1252, 79
      %v2643 = vpop.permute.xlu0 %2642
      %2648 = vrot.lane.b32.xlu0 %v1246, 81
      %v2649 = vpop.permute.xlu0 %2648
      %2650 = vrot.lane.b32.xlu0 %v1248, 81
      %v2651 = vpop.permute.xlu0 %2650
      %2652 = vrot.lane.b32.xlu0 %v1250, 81
      %v2653 = vpop.permute.xlu0 %2652
      %2654 = vrot.lane.b32.xlu0 %v1252, 81
      %v2655 = vpop.permute.xlu0 %2654
      %2660 = vrot.lane.b32.xlu0 %v1246, 83
      %v2661 = vpop.permute.xlu0 %2660
      %2662 = vrot.lane.b32.xlu0 %v1248, 83
      %v2663 = vpop.permute.xlu0 %2662
      %2664 = vrot.lane.b32.xlu0 %v1250, 83
      %v2665 = vpop.permute.xlu0 %2664
      %2666 = vrot.lane.b32.xlu0 %v1252, 83
      %v2667 = vpop.permute.xlu0 %2666
      %2672 = vrot.lane.b32.xlu0 %v1246, 85
      %v2673 = vpop.permute.xlu0 %2672
      %2674 = vrot.lane.b32.xlu0 %v1248, 85
      %v2675 = vpop.permute.xlu0 %2674
      %2676 = vrot.lane.b32.xlu0 %v1250, 85
      %v2677 = vpop.permute.xlu0 %2676
      %2678 = vrot.lane.b32.xlu0 %v1252, 85
      %v2679 = vpop.permute.xlu0 %2678
      %2684 = vrot.lane.b32.xlu0 %v1246, 87
      %v2685 = vpop.permute.xlu0 %2684
      %2686 = vrot.lane.b32.xlu0 %v1248, 87
      %v2687 = vpop.permute.xlu0 %2686
      %2688 = vrot.lane.b32.xlu0 %v1250, 87
      %v2689 = vpop.permute.xlu0 %2688
      %2690 = vrot.lane.b32.xlu0 %v1252, 87
      %v2691 = vpop.permute.xlu0 %2690
      %2696 = vrot.lane.b32.xlu0 %v1246, 89
      %v2697 = vpop.permute.xlu0 %2696
      %2698 = vrot.lane.b32.xlu0 %v1248, 89
      %v2699 = vpop.permute.xlu0 %2698
      %2700 = vrot.lane.b32.xlu0 %v1250, 89
      %v2701 = vpop.permute.xlu0 %2700
      %2702 = vrot.lane.b32.xlu0 %v1252, 89
      %v2703 = vpop.permute.xlu0 %2702
      %v2708 = vsel %vm237, %v2625, %v2637
      %v2709 = vsel %vm237, %v2627, %v2639
      %v2710 = vsel %vm237, %v2629, %v2641
      %v2711 = vsel %vm237, %v2631, %v2643
      %v2712 = vsel %vm1345, %v2708, %v2649
      %v2713 = vsel %vm1345, %v2709, %v2651
      %v2714 = vsel %vm1345, %v2710, %v2653
      %v2715 = vsel %vm1345, %v2711, %v2655
      %v2716 = vsel %vm1350, %v2712, %v2661
      %v2717 = vsel %vm1350, %v2713, %v2663
      %v2718 = vsel %vm1350, %v2714, %v2665
      %v2719 = vsel %vm1350, %v2715, %v2667
      %v2720 = vsel %vm1355, %v2716, %v2673
      %v2721 = vsel %vm1355, %v2717, %v2675
      %v2722 = vsel %vm1355, %v2718, %v2677
      %v2723 = vsel %vm1355, %v2719, %v2679
      %v2724 = vsel %vm1360, %v2720, %v2685
      %v2725 = vsel %vm1360, %v2721, %v2687
      %v2726 = vsel %vm1360, %v2722, %v2689
      %v2727 = vsel %vm1360, %v2723, %v2691
      %v2728 = vsel %vm1365, %v2724, %v2697
      %v2729 = vsel %vm1365, %v2725, %v2699
      %v2730 = vsel %vm1365, %v2726, %v2701
      %v2731 = vsel %vm1365, %v2727, %v2703
      %v2732 = vpack.c.bf16 %v2729, %v2728
      %v2733 = vpack.c.bf16 %v2731, %v2730
      %2736 = vrot.lane.b32.xlu0 %v2732, 52
      %v2737 = vpop.permute.xlu0 %2736
      %2738 = vrot.lane.b32.xlu0 %v2733, 52
      %v2739 = vpop.permute.xlu0 %2738
      %vm2742 = vcmask 605600
      %2743 = vst.msk [vmem:[#allocation4 + $0x10] sm:$0xff] %vm2742, %v2737
      %2744 = vst.msk [vmem:[#allocation4 + $0x30] sm:$0xff] %vm2742, %v2739
      %2745 = vrot.lane.b32.xlu0 %v1246, 61
      %v2746 = vpop.permute.xlu0 %2745
      %2747 = vrot.lane.b32.xlu0 %v1248, 61
      %v2748 = vpop.permute.xlu0 %2747
      %2749 = vrot.lane.b32.xlu0 %v1250, 61
      %v2750 = vpop.permute.xlu0 %2749
      %2751 = vrot.lane.b32.xlu0 %v1252, 61
      %v2752 = vpop.permute.xlu0 %2751
      %2757 = vrot.lane.b32.xlu0 %v1246, 63
      %v2758 = vpop.permute.xlu0 %2757
      %2759 = vrot.lane.b32.xlu0 %v1248, 63
      %v2760 = vpop.permute.xlu0 %2759
      %2761 = vrot.lane.b32.xlu0 %v1250, 63
      %v2762 = vpop.permute.xlu0 %2761
      %2763 = vrot.lane.b32.xlu0 %v1252, 63
      %v2764 = vpop.permute.xlu0 %2763
      %2769 = vrot.lane.b32.xlu0 %v1246, 65
      %v2770 = vpop.permute.xlu0 %2769
      %2771 = vrot.lane.b32.xlu0 %v1248, 65
      %v2772 = vpop.permute.xlu0 %2771
      %2773 = vrot.lane.b32.xlu0 %v1250, 65
      %v2774 = vpop.permute.xlu0 %2773
      %2775 = vrot.lane.b32.xlu0 %v1252, 65
      %v2776 = vpop.permute.xlu0 %2775
      %2781 = vrot.lane.b32.xlu0 %v1246, 67
      %v2782 = vpop.permute.xlu0 %2781
      %2783 = vrot.lane.b32.xlu0 %v1248, 67
      %v2784 = vpop.permute.xlu0 %2783
      %2785 = vrot.lane.b32.xlu0 %v1250, 67
      %v2786 = vpop.permute.xlu0 %2785
      %2787 = vrot.lane.b32.xlu0 %v1252, 67
      %v2788 = vpop.permute.xlu0 %2787
      %2793 = vrot.lane.b32.xlu0 %v1246, 69
      %v2794 = vpop.permute.xlu0 %2793
      %2795 = vrot.lane.b32.xlu0 %v1248, 69
      %v2796 = vpop.permute.xlu0 %2795
      %2797 = vrot.lane.b32.xlu0 %v1250, 69
      %v2798 = vpop.permute.xlu0 %2797
      %2799 = vrot.lane.b32.xlu0 %v1252, 69
      %v2800 = vpop.permute.xlu0 %2799
      %2805 = vrot.lane.b32.xlu0 %v1246, 71
      %v2806 = vpop.permute.xlu0 %2805
      %2807 = vrot.lane.b32.xlu0 %v1248, 71
      %v2808 = vpop.permute.xlu0 %2807
      %2809 = vrot.lane.b32.xlu0 %v1250, 71
      %v2810 = vpop.permute.xlu0 %2809
      %2811 = vrot.lane.b32.xlu0 %v1252, 71
      %v2812 = vpop.permute.xlu0 %2811
      %2817 = vrot.lane.b32.xlu0 %v1246, 73
      %v2818 = vpop.permute.xlu0 %2817
      %2819 = vrot.lane.b32.xlu0 %v1248, 73
      %v2820 = vpop.permute.xlu0 %2819
      %2821 = vrot.lane.b32.xlu0 %v1250, 73
      %v2822 = vpop.permute.xlu0 %2821
      %2823 = vrot.lane.b32.xlu0 %v1252, 73
      %v2824 = vpop.permute.xlu0 %2823
      %v2829 = vsel %vm237, %v2746, %v2758
      %v2830 = vsel %vm237, %v2748, %v2760
      %v2831 = vsel %vm237, %v2750, %v2762
      %v2832 = vsel %vm237, %v2752, %v2764
      %v2833 = vsel %vm1345, %v2829, %v2770
      %v2834 = vsel %vm1345, %v2830, %v2772
      %v2835 = vsel %vm1345, %v2831, %v2774
      %v2836 = vsel %vm1345, %v2832, %v2776
      %v2837 = vsel %vm1350, %v2833, %v2782
      %v2838 = vsel %vm1350, %v2834, %v2784
      %v2839 = vsel %vm1350, %v2835, %v2786
      %v2840 = vsel %vm1350, %v2836, %v2788
      %v2841 = vsel %vm1355, %v2837, %v2794
      %v2842 = vsel %vm1355, %v2838, %v2796
      %v2843 = vsel %vm1355, %v2839, %v2798
      %v2844 = vsel %vm1355, %v2840, %v2800
      %v2845 = vsel %vm1360, %v2841, %v2806
      %v2846 = vsel %vm1360, %v2842, %v2808
      %v2847 = vsel %vm1360, %v2843, %v2810
      %v2848 = vsel %vm1360, %v2844, %v2812
      %v2849 = vsel %vm1365, %v2845, %v2818
      %v2850 = vsel %vm1365, %v2846, %v2820
      %v2851 = vsel %vm1365, %v2847, %v2822
      %v2852 = vsel %vm1365, %v2848, %v2824
      %v2853 = vpack.c.bf16 %v2850, %v2849
      %v2854 = vpack.c.bf16 %v2852, %v2851
      %2857 = vrot.lane.b32.xlu0 %v2853, 74
      %v2858 = vpop.permute.xlu0 %2857
      %2859 = vrot.lane.b32.xlu0 %v2854, 74
      %v2860 = vpop.permute.xlu0 %2859
      %vm2863 = vcmask 786000
      %2864 = vst.msk [vmem:[#allocation4 + $0x10] sm:$0xff] %vm2863, %v2858
      %2865 = vst.msk [vmem:[#allocation4 + $0x30] sm:$0xff] %vm2863, %v2860
      %2866 = vrot.lane.b32.xlu0 %v1246, 45
      %v2867 = vpop.permute.xlu0 %2866
      %2868 = vrot.lane.b32.xlu0 %v1248, 45
      %v2869 = vpop.permute.xlu0 %2868
      %2870 = vrot.lane.b32.xlu0 %v1250, 45
      %v2871 = vpop.permute.xlu0 %2870
      %2872 = vrot.lane.b32.xlu0 %v1252, 45
      %v2873 = vpop.permute.xlu0 %2872
      %2878 = vrot.lane.b32.xlu0 %v1246, 47
      %v2879 = vpop.permute.xlu0 %2878
      %2880 = vrot.lane.b32.xlu0 %v1248, 47
      %v2881 = vpop.permute.xlu0 %2880
      %2882 = vrot.lane.b32.xlu0 %v1250, 47
      %v2883 = vpop.permute.xlu0 %2882
      %2884 = vrot.lane.b32.xlu0 %v1252, 47
      %v2885 = vpop.permute.xlu0 %2884
      %2890 = vrot.lane.b32.xlu0 %v1246, 49
      %v2891 = vpop.permute.xlu0 %2890
      %2892 = vrot.lane.b32.xlu0 %v1248, 49
      %v2893 = vpop.permute.xlu0 %2892
      %2894 = vrot.lane.b32.xlu0 %v1250, 49
      %v2895 = vpop.permute.xlu0 %2894
      %2896 = vrot.lane.b32.xlu0 %v1252, 49
      %v2897 = vpop.permute.xlu0 %2896
      %2902 = vrot.lane.b32.xlu0 %v1246, 51
      %v2903 = vpop.permute.xlu0 %2902
      %2904 = vrot.lane.b32.xlu0 %v1248, 51
      %v2905 = vpop.permute.xlu0 %2904
      %2906 = vrot.lane.b32.xlu0 %v1250, 51
      %v2907 = vpop.permute.xlu0 %2906
      %2908 = vrot.lane.b32.xlu0 %v1252, 51
      %v2909 = vpop.permute.xlu0 %2908
      %2914 = vrot.lane.b32.xlu0 %v1246, 53
      %v2915 = vpop.permute.xlu0 %2914
      %2916 = vrot.lane.b32.xlu0 %v1248, 53
      %v2917 = vpop.permute.xlu0 %2916
      %2918 = vrot.lane.b32.xlu0 %v1250, 53
      %v2919 = vpop.permute.xlu0 %2918
      %2920 = vrot.lane.b32.xlu0 %v1252, 53
      %v2921 = vpop.permute.xlu0 %2920
      %2926 = vrot.lane.b32.xlu0 %v1246, 55
      %v2927 = vpop.permute.xlu0 %2926
      %2928 = vrot.lane.b32.xlu0 %v1248, 55
      %v2929 = vpop.permute.xlu0 %2928
      %2930 = vrot.lane.b32.xlu0 %v1250, 55
      %v2931 = vpop.permute.xlu0 %2930
      %2932 = vrot.lane.b32.xlu0 %v1252, 55
      %v2933 = vpop.permute.xlu0 %2932
      %2938 = vrot.lane.b32.xlu0 %v1246, 57
      %v2939 = vpop.permute.xlu0 %2938
      %2940 = vrot.lane.b32.xlu0 %v1248, 57
      %v2941 = vpop.permute.xlu0 %2940
      %2942 = vrot.lane.b32.xlu0 %v1250, 57
      %v2943 = vpop.permute.xlu0 %2942
      %2944 = vrot.lane.b32.xlu0 %v1252, 57
      %v2945 = vpop.permute.xlu0 %2944
      %v2950 = vsel %vm237, %v2867, %v2879
      %v2951 = vsel %vm237, %v2869, %v2881
      %v2952 = vsel %vm237, %v2871, %v2883
      %v2953 = vsel %vm237, %v2873, %v2885
      %v2954 = vsel %vm1345, %v2950, %v2891
      %v2955 = vsel %vm1345, %v2951, %v2893
      %v2956 = vsel %vm1345, %v2952, %v2895
      %v2957 = vsel %vm1345, %v2953, %v2897
      %v2958 = vsel %vm1350, %v2954, %v2903
      %v2959 = vsel %vm1350, %v2955, %v2905
      %v2960 = vsel %vm1350, %v2956, %v2907
      %v2961 = vsel %vm1350, %v2957, %v2909
      %v2962 = vsel %vm1355, %v2958, %v2915
      %v2963 = vsel %vm1355, %v2959, %v2917
      %v2964 = vsel %vm1355, %v2960, %v2919
      %v2965 = vsel %vm1355, %v2961, %v2921
      %v2966 = vsel %vm1360, %v2962, %v2927
      %v2967 = vsel %vm1360, %v2963, %v2929
      %v2968 = vsel %vm1360, %v2964, %v2931
      %v2969 = vsel %vm1360, %v2965, %v2933
      %v2970 = vsel %vm1365, %v2966, %v2939
      %v2971 = vsel %vm1365, %v2967, %v2941
      %v2972 = vsel %vm1365, %v2968, %v2943
      %v2973 = vsel %vm1365, %v2969, %v2945
      %v2974 = vpack.c.bf16 %v2971, %v2970
      %v2975 = vpack.c.bf16 %v2973, %v2972
      %2978 = vrot.lane.b32.xlu0 %v2974, 96
      %v2979 = vpop.permute.xlu0 %2978
      %2980 = vrot.lane.b32.xlu0 %v2975, 96
      %v2981 = vpop.permute.xlu0 %2980
      %vm2984 = vcmask 966400
      %2985 = vst.msk [vmem:[#allocation4 + $0x10] sm:$0xff] %vm2984, %v2979
      %2986 = vst.msk [vmem:[#allocation4 + $0x30] sm:$0xff] %vm2984, %v2981
      %2987 = vrot.lane.b32.xlu0 %v1246, 29
      %v2988 = vpop.permute.xlu0 %2987
      %2989 = vrot.lane.b32.xlu0 %v1248, 29
      %v2990 = vpop.permute.xlu0 %2989
      %2991 = vrot.lane.b32.xlu0 %v1250, 29
      %v2992 = vpop.permute.xlu0 %2991
      %2993 = vrot.lane.b32.xlu0 %v1252, 29
      %v2994 = vpop.permute.xlu0 %2993
      %2999 = vrot.lane.b32.xlu0 %v1246, 31
      %v3000 = vpop.permute.xlu0 %2999
      %3001 = vrot.lane.b32.xlu0 %v1248, 31
      %v3002 = vpop.permute.xlu0 %3001
      %3003 = vrot.lane.b32.xlu0 %v1250, 31
      %v3004 = vpop.permute.xlu0 %3003
      %3005 = vrot.lane.b32.xlu0 %v1252, 31
      %v3006 = vpop.permute.xlu0 %3005
      %3011 = vrot.lane.b32.xlu0 %v1246, 33
      %v3012 = vpop.permute.xlu0 %3011
      %3013 = vrot.lane.b32.xlu0 %v1248, 33
      %v3014 = vpop.permute.xlu0 %3013
      %3015 = vrot.lane.b32.xlu0 %v1250, 33
      %v3016 = vpop.permute.xlu0 %3015
      %3017 = vrot.lane.b32.xlu0 %v1252, 33
      %v3018 = vpop.permute.xlu0 %3017
      %3023 = vrot.lane.b32.xlu0 %v1246, 35
      %v3024 = vpop.permute.xlu0 %3023
      %3025 = vrot.lane.b32.xlu0 %v1248, 35
      %v3026 = vpop.permute.xlu0 %3025
      %3027 = vrot.lane.b32.xlu0 %v1250, 35
      %v3028 = vpop.permute.xlu0 %3027
      %3029 = vrot.lane.b32.xlu0 %v1252, 35
      %v3030 = vpop.permute.xlu0 %3029
      %3035 = vrot.lane.b32.xlu0 %v1246, 37
      %v3036 = vpop.permute.xlu0 %3035
      %3037 = vrot.lane.b32.xlu0 %v1248, 37
      %v3038 = vpop.permute.xlu0 %3037
      %3039 = vrot.lane.b32.xlu0 %v1250, 37
      %v3040 = vpop.permute.xlu0 %3039
      %3041 = vrot.lane.b32.xlu0 %v1252, 37
      %v3042 = vpop.permute.xlu0 %3041
      %3047 = vrot.lane.b32.xlu0 %v1246, 39
      %v3048 = vpop.permute.xlu0 %3047
      %3049 = vrot.lane.b32.xlu0 %v1248, 39
      %v3050 = vpop.permute.xlu0 %3049
      %3051 = vrot.lane.b32.xlu0 %v1250, 39
      %v3052 = vpop.permute.xlu0 %3051
      %3053 = vrot.lane.b32.xlu0 %v1252, 39
      %v3054 = vpop.permute.xlu0 %3053
      %3059 = vrot.lane.b32.xlu0 %v1246, 41
      %v3060 = vpop.permute.xlu0 %3059
      %3061 = vrot.lane.b32.xlu0 %v1248, 41
      %v3062 = vpop.permute.xlu0 %3061
      %3063 = vrot.lane.b32.xlu0 %v1250, 41
      %v3064 = vpop.permute.xlu0 %3063
      %3065 = vrot.lane.b32.xlu0 %v1252, 41
      %v3066 = vpop.permute.xlu0 %3065
      %v3071 = vsel %vm237, %v2988, %v3000
      %v3072 = vsel %vm237, %v2990, %v3002
      %v3073 = vsel %vm237, %v2992, %v3004
      %v3074 = vsel %vm237, %v2994, %v3006
      %v3075 = vsel %vm1345, %v3071, %v3012
      %v3076 = vsel %vm1345, %v3072, %v3014
      %v3077 = vsel %vm1345, %v3073, %v3016
      %v3078 = vsel %vm1345, %v3074, %v3018
      %v3079 = vsel %vm1350, %v3075, %v3024
      %v3080 = vsel %vm1350, %v3076, %v3026
      %v3081 = vsel %vm1350, %v3077, %v3028
      %v3082 = vsel %vm1350, %v3078, %v3030
      %v3083 = vsel %vm1355, %v3079, %v3036
      %v3084 = vsel %vm1355, %v3080, %v3038
      %v3085 = vsel %vm1355, %v3081, %v3040
      %v3086 = vsel %vm1355, %v3082, %v3042
      %v3087 = vsel %vm1360, %v3083, %v3048
      %v3088 = vsel %vm1360, %v3084, %v3050
      %v3089 = vsel %vm1360, %v3085, %v3052
      %v3090 = vsel %vm1360, %v3086, %v3054
      %v3091 = vsel %vm1365, %v3087, %v3060
      %v3092 = vsel %vm1365, %v3088, %v3062
      %v3093 = vsel %vm1365, %v3089, %v3064
      %v3094 = vsel %vm1365, %v3090, %v3066
      %v3095 = vpack.c.bf16 %v3092, %v3091
      %v3096 = vpack.c.bf16 %v3094, %v3093
      %3099 = vrot.lane.b32.xlu0 %v3095, 118
      %v3100 = vpop.permute.xlu0 %3099
      %3101 = vrot.lane.b32.xlu0 %v3096, 118
      %v3102 = vpop.permute.xlu0 %3101
      %vm3105 = vcmask 1048496
      %3106 = vst.msk [vmem:[#allocation4 + $0x10] sm:$0xff] %vm3105, %v3100
      %vm3107 = vcmask 97280
      %3108 = vst.msk [vmem:[#allocation4 + $0x18] sm:$0xff] %vm3107, %v3100
      %3109 = vst.msk [vmem:[#allocation4 + $0x30] sm:$0xff] %vm3105, %v3102
      %3110 = vst.msk [vmem:[#allocation4 + $0x38] sm:$0xff] %vm3107, %v3102
      %3111 = vrot.lane.b32.xlu0 %v1246, 13
      %v3112 = vpop.permute.xlu0 %3111
      %3113 = vrot.lane.b32.xlu0 %v1248, 13
      %v3114 = vpop.permute.xlu0 %3113
      %3115 = vrot.lane.b32.xlu0 %v1250, 13
      %v3116 = vpop.permute.xlu0 %3115
      %3117 = vrot.lane.b32.xlu0 %v1252, 13
      %v3118 = vpop.permute.xlu0 %3117
      %3123 = vrot.lane.b32.xlu0 %v1246, 15
      %v3124 = vpop.permute.xlu0 %3123
      %3125 = vrot.lane.b32.xlu0 %v1248, 15
      %v3126 = vpop.permute.xlu0 %3125
      %3127 = vrot.lane.b32.xlu0 %v1250, 15
      %v3128 = vpop.permute.xlu0 %3127
      %3129 = vrot.lane.b32.xlu0 %v1252, 15
      %v3130 = vpop.permute.xlu0 %3129
      %3135 = vrot.lane.b32.xlu0 %v1246, 17
      %v3136 = vpop.permute.xlu0 %3135
      %3137 = vrot.lane.b32.xlu0 %v1248, 17
      %v3138 = vpop.permute.xlu0 %3137
      %3139 = vrot.lane.b32.xlu0 %v1250, 17
      %v3140 = vpop.permute.xlu0 %3139
      %3141 = vrot.lane.b32.xlu0 %v1252, 17
      %v3142 = vpop.permute.xlu0 %3141
      %3147 = vrot.lane.b32.xlu0 %v1246, 19
      %v3148 = vpop.permute.xlu0 %3147
      %3149 = vrot.lane.b32.xlu0 %v1248, 19
      %v3150 = vpop.permute.xlu0 %3149
      %3151 = vrot.lane.b32.xlu0 %v1250, 19
      %v3152 = vpop.permute.xlu0 %3151
      %3153 = vrot.lane.b32.xlu0 %v1252, 19
      %v3154 = vpop.permute.xlu0 %3153
      %3159 = vrot.lane.b32.xlu0 %v1246, 21
      %v3160 = vpop.permute.xlu0 %3159
      %3161 = vrot.lane.b32.xlu0 %v1248, 21
      %v3162 = vpop.permute.xlu0 %3161
      %3163 = vrot.lane.b32.xlu0 %v1250, 21
      %v3164 = vpop.permute.xlu0 %3163
      %3165 = vrot.lane.b32.xlu0 %v1252, 21
      %v3166 = vpop.permute.xlu0 %3165
      %3171 = vrot.lane.b32.xlu0 %v1246, 23
      %v3172 = vpop.permute.xlu0 %3171
      %3173 = vrot.lane.b32.xlu0 %v1248, 23
      %v3174 = vpop.permute.xlu0 %3173
      %3175 = vrot.lane.b32.xlu0 %v1250, 23
      %v3176 = vpop.permute.xlu0 %3175
      %3177 = vrot.lane.b32.xlu0 %v1252, 23
      %v3178 = vpop.permute.xlu0 %3177
      %3183 = vrot.lane.b32.xlu0 %v1246, 25
      %v3184 = vpop.permute.xlu0 %3183
      %3185 = vrot.lane.b32.xlu0 %v1248, 25
      %v3186 = vpop.permute.xlu0 %3185
      %3187 = vrot.lane.b32.xlu0 %v1250, 25
      %v3188 = vpop.permute.xlu0 %3187
      %3189 = vrot.lane.b32.xlu0 %v1252, 25
      %v3190 = vpop.permute.xlu0 %3189
      %v3195 = vsel %vm237, %v3112, %v3124
      %v3196 = vsel %vm237, %v3114, %v3126
      %v3197 = vsel %vm237, %v3116, %v3128
      %v3198 = vsel %vm237, %v3118, %v3130
      %v3199 = vsel %vm1345, %v3195, %v3136
      %v3200 = vsel %vm1345, %v3196, %v3138
      %v3201 = vsel %vm1345, %v3197, %v3140
      %v3202 = vsel %vm1345, %v3198, %v3142
      %v3203 = vsel %vm1350, %v3199, %v3148
      %v3204 = vsel %vm1350, %v3200, %v3150
      %v3205 = vsel %vm1350, %v3201, %v3152
      %v3206 = vsel %vm1350, %v3202, %v3154
      %v3207 = vsel %vm1355, %v3203, %v3160
      %v3208 = vsel %vm1355, %v3204, %v3162
      %v3209 = vsel %vm1355, %v3205, %v3164
      %v3210 = vsel %vm1355, %v3206, %v3166
      %v3211 = vsel %vm1360, %v3207, %v3172
      %v3212 = vsel %vm1360, %v3208, %v3174
      %v3213 = vsel %vm1360, %v3209, %v3176
      %v3214 = vsel %vm1360, %v3210, %v3178
      %v3215 = vsel %vm1365, %v3211, %v3184
      %v3216 = vsel %vm1365, %v3212, %v3186
      %v3217 = vsel %vm1365, %v3213, %v3188
      %v3218 = vsel %vm1365, %v3214, %v3190
      %v3219 = vpack.c.bf16 %v3216, %v3215
      %v3220 = vpack.c.bf16 %v3218, %v3217
      %3223 = vrot.lane.b32.xlu0 %v3219, 12
      %v3224 = vpop.permute.xlu0 %3223
      %3225 = vrot.lane.b32.xlu0 %v3220, 12
      %v3226 = vpop.permute.xlu0 %3225
      %vm3229 = vcmask 277600
      %3230 = vst.msk [vmem:[#allocation4 + $0x18] sm:$0xff] %vm3229, %v3224
      %3231 = vst.msk [vmem:[#allocation4 + $0x38] sm:$0xff] %vm3229, %v3226
      %3232 = vrot.lane.b32.xlu0 %v3095, 34
      %v3233 = vpop.permute.xlu0 %3232
      %3234 = vrot.lane.b32.xlu0 %v3096, 34
      %v3235 = vpop.permute.xlu0 %3234
      %vm3238 = vcmask 458000
      %3239 = vst.msk [vmem:[#allocation4 + $0x18] sm:$0xff] %vm3238, %v3233
      %3240 = vst.msk [vmem:[#allocation4 + $0x38] sm:$0xff] %vm3238, %v3235
      %3241 = vrot.lane.b32.xlu0 %v2974, 56
      %v3242 = vpop.permute.xlu0 %3241
      %3243 = vrot.lane.b32.xlu0 %v2975, 56
      %v3244 = vpop.permute.xlu0 %3243
      %vm3247 = vcmask 638400
      %3248 = vst.msk [vmem:[#allocation4 + $0x18] sm:$0xff] %vm3247, %v3242
      %3249 = vst.msk [vmem:[#allocation4 + $0x38] sm:$0xff] %vm3247, %v3244
      %3250 = vrot.lane.b32.xlu0 %v2853, 78
      %v3251 = vpop.permute.xlu0 %3250
      %3252 = vrot.lane.b32.xlu0 %v2854, 78
      %v3253 = vpop.permute.xlu0 %3252
      %vm3256 = vcmask 818800
      %3257 = vst.msk [vmem:[#allocation4 + $0x18] sm:$0xff] %vm3256, %v3251
      %3258 = vst.msk [vmem:[#allocation4 + $0x38] sm:$0xff] %vm3256, %v3253
      %v3259 = vld [vmem:[#allocation4] sm:$0xff]
      %v3260 = vld [vmem:[#allocation4 + $0x8] sm:$0xff]
      %v3261 = vld [vmem:[#allocation4 + $0x10] sm:$0xff]
      %v3262 = vld [vmem:[#allocation4 + $0x18] sm:$0xff]
      %v3263 = vld [vmem:[#allocation4 + $0x20] sm:$0xff]
      %v3264 = vld [vmem:[#allocation4 + $0x28] sm:$0xff]
      %v3265 = vld [vmem:[#allocation4 + $0x30] sm:$0xff]
      %v3266 = vld [vmem:[#allocation4 + $0x38] sm:$0xff]
      %3267 = vst [vmem:[#allocation5] sm:$0xff] %v3259
      %3268 = vst [vmem:[#allocation5 + $0x8] sm:$0xff] %v3260
      %3269 = vst [vmem:[#allocation5 + $0x10] sm:$0xff] %v3261
      %3270 = vst.msk [vmem:[#allocation5 + $0x18] sm:$0xff] %vm1096, %v3262
      %3271 = vst [vmem:[#allocation5 + $0x20] sm:$0xff] %v3263
      %3272 = vst [vmem:[#allocation5 + $0x28] sm:$0xff] %v3264
      %3273 = vst [vmem:[#allocation5 + $0x30] sm:$0xff] %v3265
      %3274 = vst.msk [vmem:[#allocation5 + $0x38] sm:$0xff] %vm1096, %v3266
      %3283 = vrot.lane.b32.xlu0 %v3259, 127
      %v3284 = vpop.permute.xlu0 %3283
      %3285 = vrot.lane.b32.xlu0 %v3260, 127
      %v3286 = vpop.permute.xlu0 %3285
      %3287 = vrot.lane.b32.xlu0 %v3261, 127
      %v3288 = vpop.permute.xlu0 %3287
      %3289 = vrot.lane.b32.xlu0 %v3262, 127
      %v3290 = vpop.permute.xlu0 %3289
      %3291 = vrot.lane.b32.xlu0 %v3263, 127
      %v3292 = vpop.permute.xlu0 %3291
      %3293 = vrot.lane.b32.xlu0 %v3264, 127
      %v3294 = vpop.permute.xlu0 %3293
      %3295 = vrot.lane.b32.xlu0 %v3265, 127
      %v3296 = vpop.permute.xlu0 %3295
      %3297 = vrot.lane.b32.xlu0 %v3266, 127
      %v3298 = vpop.permute.xlu0 %3297
      %vm3299 = vcmask 1039360
      %v3300 = vsel %vm3299, %v3284, %v3286
      %v3301 = vsel %vm3299, %v3286, %v3288
      %v3302 = vsel %vm3299, %v3288, %v3290
      %v3303 = vsel %vm3299, %v3292, %v3294
      %v3304 = vsel %vm3299, %v3294, %v3296
      %v3305 = vsel %vm3299, %v3296, %v3298
      %3314 = vst [vmem:[#allocation5 + $0x40] sm:$0xff] %v3300
      %3315 = vst [vmem:[#allocation5 + $0x48] sm:$0xff] %v3301
      %3316 = vst [vmem:[#allocation5 + $0x50] sm:$0xff] %v3302
      %vm3317 = vcmask 809984
      %3318 = vst.msk [vmem:[#allocation5 + $0x58] sm:$0xff] %vm3317, %v3290
      %3319 = vst [vmem:[#allocation5 + $0x60] sm:$0xff] %v3303
      %3320 = vst [vmem:[#allocation5 + $0x68] sm:$0xff] %v3304
      %3321 = vst [vmem:[#allocation5 + $0x70] sm:$0xff] %v3305
      %3322 = vst.msk [vmem:[#allocation5 + $0x78] sm:$0xff] %vm3317, %v3298
      %3323 = vrot.lane.b32.xlu0 %v3259, 126
      %v3324 = vpop.permute.xlu0 %3323
      %3325 = vrot.lane.b32.xlu0 %v3260, 126
      %v3326 = vpop.permute.xlu0 %3325
      %3327 = vrot.lane.b32.xlu0 %v3261, 126
      %v3328 = vpop.permute.xlu0 %3327
      %3329 = vrot.lane.b32.xlu0 %v3262, 126
      %v3330 = vpop.permute.xlu0 %3329
      %3331 = vrot.lane.b32.xlu0 %v3263, 126
      %v3332 = vpop.permute.xlu0 %3331
      %3333 = vrot.lane.b32.xlu0 %v3264, 126
      %v3334 = vpop.permute.xlu0 %3333
      %3335 = vrot.lane.b32.xlu0 %v3265, 126
      %v3336 = vpop.permute.xlu0 %3335
      %3337 = vrot.lane.b32.xlu0 %v3266, 126
      %v3338 = vpop.permute.xlu0 %3337
      %vm3339 = vcmask 1031168
      %v3340 = vsel %vm3339, %v3324, %v3326
      %v3341 = vsel %vm3339, %v3326, %v3328
      %v3342 = vsel %vm3339, %v3328, %v3330
      %v3343 = vsel %vm3339, %v3332, %v3334
      %v3344 = vsel %vm3339, %v3334, %v3336
      %v3345 = vsel %vm3339, %v3336, %v3338
      %3354 = vst [vmem:[#allocation5 + $0x80] sm:$0xff] %v3340
      %3355 = vst [vmem:[#allocation5 + $0x88] sm:$0xff] %v3341
      %3356 = vst [vmem:[#allocation5 + $0x90] sm:$0xff] %v3342
      %vm3357 = vcmask 801792
      %3358 = vst.msk [vmem:[#allocation5 + $0x98] sm:$0xff] %vm3357, %v3330
      %3359 = vst [vmem:[#allocation5 + $0xa0] sm:$0xff] %v3343
      %3360 = vst [vmem:[#allocation5 + $0xa8] sm:$0xff] %v3344
      %3361 = vst [vmem:[#allocation5 + $0xb0] sm:$0xff] %v3345
      %3362 = vst.msk [vmem:[#allocation5 + $0xb8] sm:$0xff] %vm3357, %v3338
      %3363 = vrot.lane.b32.xlu0 %v3259, 125
      %v3364 = vpop.permute.xlu0 %3363
      %3365 = vrot.lane.b32.xlu0 %v3260, 125
      %v3366 = vpop.permute.xlu0 %3365
      %3367 = vrot.lane.b32.xlu0 %v3261, 125
      %v3368 = vpop.permute.xlu0 %3367
      %3369 = vrot.lane.b32.xlu0 %v3262, 125
      %v3370 = vpop.permute.xlu0 %3369
      %3371 = vrot.lane.b32.xlu0 %v3263, 125
      %v3372 = vpop.permute.xlu0 %3371
      %3373 = vrot.lane.b32.xlu0 %v3264, 125
      %v3374 = vpop.permute.xlu0 %3373
      %3375 = vrot.lane.b32.xlu0 %v3265, 125
      %v3376 = vpop.permute.xlu0 %3375
      %3377 = vrot.lane.b32.xlu0 %v3266, 125
      %v3378 = vpop.permute.xlu0 %3377
      %vm3379 = vcmask 1022976
      %v3380 = vsel %vm3379, %v3364, %v3366
      %v3381 = vsel %vm3379, %v3366, %v3368
      %v3382 = vsel %vm3379, %v3368, %v3370
      %v3383 = vsel %vm3379, %v3372, %v3374
      %v3384 = vsel %vm3379, %v3374, %v3376
      %v3385 = vsel %vm3379, %v3376, %v3378
      %3394 = vst [vmem:[#allocation5 + $0xc0] sm:$0xff] %v3380
      %3395 = vst [vmem:[#allocation5 + $0xc8] sm:$0xff] %v3381
      %3396 = vst [vmem:[#allocation5 + $0xd0] sm:$0xff] %v3382
      %vm3397 = vcmask 793600
      %3398 = vst.msk [vmem:[#allocation5 + $0xd8] sm:$0xff] %vm3397, %v3370
      %3399 = vst [vmem:[#allocation5 + $0xe0] sm:$0xff] %v3383
      %3400 = vst [vmem:[#allocation5 + $0xe8] sm:$0xff] %v3384
      %3401 = vst [vmem:[#allocation5 + $0xf0] sm:$0xff] %v3385
      %3402 = vst.msk [vmem:[#allocation5 + $0xf8] sm:$0xff] %vm3397, %v3378
      %3403 = vrot.lane.b32.xlu0 %v3259, 124
      %v3404 = vpop.permute.xlu0 %3403
      %3405 = vrot.lane.b32.xlu0 %v3260, 124
      %v3406 = vpop.permute.xlu0 %3405
      %3407 = vrot.lane.b32.xlu0 %v3261, 124
      %v3408 = vpop.permute.xlu0 %3407
      %3409 = vrot.lane.b32.xlu0 %v3262, 124
      %v3410 = vpop.permute.xlu0 %3409
      %3411 = vrot.lane.b32.xlu0 %v3263, 124
      %v3412 = vpop.permute.xlu0 %3411
      %3413 = vrot.lane.b32.xlu0 %v3264, 124
      %v3414 = vpop.permute.xlu0 %3413
      %3415 = vrot.lane.b32.xlu0 %v3265, 124
      %v3416 = vpop.permute.xlu0 %3415
      %3417 = vrot.lane.b32.xlu0 %v3266, 124
      %v3418 = vpop.permute.xlu0 %3417
      %vm3419 = vcmask 1014784
      %v3420 = vsel %vm3419, %v3404, %v3406
      %v3421 = vsel %vm3419, %v3406, %v3408
      %v3422 = vsel %vm3419, %v3408, %v3410
      %v3423 = vsel %vm3419, %v3412, %v3414
      %v3424 = vsel %vm3419, %v3414, %v3416
      %v3425 = vsel %vm3419, %v3416, %v3418
      %3434 = vst [vmem:[#allocation5 + $0x100] sm:$0xff] %v3420
      %3435 = vst [vmem:[#allocation5 + $0x108] sm:$0xff] %v3421
      %3436 = vst [vmem:[#allocation5 + $0x110] sm:$0xff] %v3422
      %3437 = vst.msk [vmem:[#allocation5 + $0x118] sm:$0xff] %vm1142, %v3410
      %3438 = vst [vmem:[#allocation5 + $0x120] sm:$0xff] %v3423
      %3439 = vst [vmem:[#allocation5 + $0x128] sm:$0xff] %v3424
      %3440 = vst [vmem:[#allocation5 + $0x130] sm:$0xff] %v3425
      %3441 = vst.msk [vmem:[#allocation5 + $0x138] sm:$0xff] %vm1142, %v3418
      %3442 = vrot.lane.b32.xlu0 %v3259, 123
      %v3443 = vpop.permute.xlu0 %3442
      %3444 = vrot.lane.b32.xlu0 %v3260, 123
      %v3445 = vpop.permute.xlu0 %3444
      %3446 = vrot.lane.b32.xlu0 %v3261, 123
      %v3447 = vpop.permute.xlu0 %3446
      %3448 = vrot.lane.b32.xlu0 %v3262, 123
      %v3449 = vpop.permute.xlu0 %3448
      %3450 = vrot.lane.b32.xlu0 %v3263, 123
      %v3451 = vpop.permute.xlu0 %3450
      %3452 = vrot.lane.b32.xlu0 %v3264, 123
      %v3453 = vpop.permute.xlu0 %3452
      %3454 = vrot.lane.b32.xlu0 %v3265, 123
      %v3455 = vpop.permute.xlu0 %3454
      %3456 = vrot.lane.b32.xlu0 %v3266, 123
      %v3457 = vpop.permute.xlu0 %3456
      %vm3458 = vcmask 1006592
      %v3459 = vsel %vm3458, %v3443, %v3445
      %v3460 = vsel %vm3458, %v3445, %v3447
      %v3461 = vsel %vm3458, %v3447, %v3449
      %v3462 = vsel %vm3458, %v3451, %v3453
      %v3463 = vsel %vm3458, %v3453, %v3455
      %v3464 = vsel %vm3458, %v3455, %v3457
      %3473 = vst [vmem:[#allocation5 + $0x140] sm:$0xff] %v3459
      %3474 = vst [vmem:[#allocation5 + $0x148] sm:$0xff] %v3460
      %3475 = vst [vmem:[#allocation5 + $0x150] sm:$0xff] %v3461
      %vm3476 = vcmask 777216
      %3477 = vst.msk [vmem:[#allocation5 + $0x158] sm:$0xff] %vm3476, %v3449
      %3478 = vst [vmem:[#allocation5 + $0x160] sm:$0xff] %v3462
      %3479 = vst [vmem:[#allocation5 + $0x168] sm:$0xff] %v3463
      %3480 = vst [vmem:[#allocation5 + $0x170] sm:$0xff] %v3464
      %3481 = vst.msk [vmem:[#allocation5 + $0x178] sm:$0xff] %vm3476, %v3457
      %3482 = vrot.lane.b32.xlu0 %v3259, 122
      %v3483 = vpop.permute.xlu0 %3482
      %3484 = vrot.lane.b32.xlu0 %v3260, 122
      %v3485 = vpop.permute.xlu0 %3484
      %3486 = vrot.lane.b32.xlu0 %v3261, 122
      %v3487 = vpop.permute.xlu0 %3486
      %3488 = vrot.lane.b32.xlu0 %v3262, 122
      %v3489 = vpop.permute.xlu0 %3488
      %3490 = vrot.lane.b32.xlu0 %v3263, 122
      %v3491 = vpop.permute.xlu0 %3490
      %3492 = vrot.lane.b32.xlu0 %v3264, 122
      %v3493 = vpop.permute.xlu0 %3492
      %3494 = vrot.lane.b32.xlu0 %v3265, 122
      %v3495 = vpop.permute.xlu0 %3494
      %3496 = vrot.lane.b32.xlu0 %v3266, 122
      %v3497 = vpop.permute.xlu0 %3496
      %vm3498 = vcmask 998400
      %v3499 = vsel %vm3498, %v3483, %v3485
      %v3500 = vsel %vm3498, %v3485, %v3487
      %v3501 = vsel %vm3498, %v3487, %v3489
      %v3502 = vsel %vm3498, %v3491, %v3493
      %v3503 = vsel %vm3498, %v3493, %v3495
      %v3504 = vsel %vm3498, %v3495, %v3497
      %3513 = vst [vmem:[#allocation5 + $0x180] sm:$0xff] %v3499
      %3514 = vst [vmem:[#allocation5 + $0x188] sm:$0xff] %v3500
      %3515 = vst [vmem:[#allocation5 + $0x190] sm:$0xff] %v3501
      %vm3516 = vcmask 769024
      %3517 = vst.msk [vmem:[#allocation5 + $0x198] sm:$0xff] %vm3516, %v3489
      %3518 = vst [vmem:[#allocation5 + $0x1a0] sm:$0xff] %v3502
      %3519 = vst [vmem:[#allocation5 + $0x1a8] sm:$0xff] %v3503
      %3520 = vst [vmem:[#allocation5 + $0x1b0] sm:$0xff] %v3504
      %3521 = vst.msk [vmem:[#allocation5 + $0x1b8] sm:$0xff] %vm3516, %v3497
      %3522 = vrot.lane.b32.xlu0 %v3259, 106
      %v3523 = vpop.permute.xlu0 %3522
      %3524 = vrot.lane.b32.xlu0 %v3260, 106
      %v3525 = vpop.permute.xlu0 %3524
      %3526 = vrot.lane.b32.xlu0 %v3261, 106
      %v3527 = vpop.permute.xlu0 %3526
      %3528 = vrot.lane.b32.xlu0 %v3262, 106
      %v3529 = vpop.permute.xlu0 %3528
      %3530 = vrot.lane.b32.xlu0 %v3263, 106
      %v3531 = vpop.permute.xlu0 %3530
      %3532 = vrot.lane.b32.xlu0 %v3264, 106
      %v3533 = vpop.permute.xlu0 %3532
      %3534 = vrot.lane.b32.xlu0 %v3265, 106
      %v3535 = vpop.permute.xlu0 %3534
      %3536 = vrot.lane.b32.xlu0 %v3266, 106
      %v3537 = vpop.permute.xlu0 %3536
      %vm3538 = vcmask 867328
      %v3539 = vsel %vm3538, %v3523, %v3525
      %v3540 = vsel %vm3538, %v3525, %v3527
      %v3541 = vsel %vm3538, %v3527, %v3529
      %v3542 = vsel %vm3538, %v3531, %v3533
      %v3543 = vsel %vm3538, %v3533, %v3535
      %v3544 = vsel %vm3538, %v3535, %v3537
      %3553 = vst [vmem:[#allocation5 + $0x1c0] sm:$0xff] %v3539
      %3554 = vst [vmem:[#allocation5 + $0x1c8] sm:$0xff] %v3540
      %3555 = vst [vmem:[#allocation5 + $0x1d0] sm:$0xff] %v3541
      %vm3556 = vcmask 637952
      %3557 = vst.msk [vmem:[#allocation5 + $0x1d8] sm:$0xff] %vm3556, %v3529
      %3558 = vst [vmem:[#allocation5 + $0x1e0] sm:$0xff] %v3542
      %3559 = vst [vmem:[#allocation5 + $0x1e8] sm:$0xff] %v3543
      %3560 = vst [vmem:[#allocation5 + $0x1f0] sm:$0xff] %v3544
      %3561 = vst.msk [vmem:[#allocation5 + $0x1f8] sm:$0xff] %vm3556, %v3537
      %3562 = vrot.lane.b32.xlu0 %v3259, 105
      %v3563 = vpop.permute.xlu0 %3562
      %3564 = vrot.lane.b32.xlu0 %v3260, 105
      %v3565 = vpop.permute.xlu0 %3564
      %3566 = vrot.lane.b32.xlu0 %v3261, 105
      %v3567 = vpop.permute.xlu0 %3566
      %3568 = vrot.lane.b32.xlu0 %v3262, 105
      %v3569 = vpop.permute.xlu0 %3568
      %3570 = vrot.lane.b32.xlu0 %v3263, 105
      %v3571 = vpop.permute.xlu0 %3570
      %3572 = vrot.lane.b32.xlu0 %v3264, 105
      %v3573 = vpop.permute.xlu0 %3572
      %3574 = vrot.lane.b32.xlu0 %v3265, 105
      %v3575 = vpop.permute.xlu0 %3574
      %3576 = vrot.lane.b32.xlu0 %v3266, 105
      %v3577 = vpop.permute.xlu0 %3576
      %vm3578 = vcmask 859136
      %v3579 = vsel %vm3578, %v3563, %v3565
      %v3580 = vsel %vm3578, %v3565, %v3567
      %v3581 = vsel %vm3578, %v3567, %v3569
      %v3582 = vsel %vm3578, %v3571, %v3573
      %v3583 = vsel %vm3578, %v3573, %v3575
      %v3584 = vsel %vm3578, %v3575, %v3577
      %3593 = vst [vmem:[#allocation5 + $0x200] sm:$0xff] %v3579
      %3594 = vst [vmem:[#allocation5 + $0x208] sm:$0xff] %v3580
      %3595 = vst [vmem:[#allocation5 + $0x210] sm:$0xff] %v3581
      %vm3596 = vcmask 629760
      %3597 = vst.msk [vmem:[#allocation5 + $0x218] sm:$0xff] %vm3596, %v3569
      %3598 = vst [vmem:[#allocation5 + $0x220] sm:$0xff] %v3582
      %3599 = vst [vmem:[#allocation5 + $0x228] sm:$0xff] %v3583
      %3600 = vst [vmem:[#allocation5 + $0x230] sm:$0xff] %v3584
      %3601 = vst.msk [vmem:[#allocation5 + $0x238] sm:$0xff] %vm3596, %v3577
      %3602 = vrot.lane.b32.xlu0 %v3259, 104
      %v3603 = vpop.permute.xlu0 %3602
      %3604 = vrot.lane.b32.xlu0 %v3260, 104
      %v3605 = vpop.permute.xlu0 %3604
      %3606 = vrot.lane.b32.xlu0 %v3261, 104
      %v3607 = vpop.permute.xlu0 %3606
      %3608 = vrot.lane.b32.xlu0 %v3262, 104
      %v3609 = vpop.permute.xlu0 %3608
      %3610 = vrot.lane.b32.xlu0 %v3263, 104
      %v3611 = vpop.permute.xlu0 %3610
      %3612 = vrot.lane.b32.xlu0 %v3264, 104
      %v3613 = vpop.permute.xlu0 %3612
      %3614 = vrot.lane.b32.xlu0 %v3265, 104
      %v3615 = vpop.permute.xlu0 %3614
      %3616 = vrot.lane.b32.xlu0 %v3266, 104
      %v3617 = vpop.permute.xlu0 %3616
      %vm3618 = vcmask 850944
      %v3619 = vsel %vm3618, %v3603, %v3605
      %v3620 = vsel %vm3618, %v3605, %v3607
      %v3621 = vsel %vm3618, %v3607, %v3609
      %v3622 = vsel %vm3618, %v3611, %v3613
      %v3623 = vsel %vm3618, %v3613, %v3615
      %v3624 = vsel %vm3618, %v3615, %v3617
      %3633 = vst [vmem:[#allocation5 + $0x240] sm:$0xff] %v3619
      %3634 = vst [vmem:[#allocation5 + $0x248] sm:$0xff] %v3620
      %3635 = vst [vmem:[#allocation5 + $0x250] sm:$0xff] %v3621
      %vm3636 = vcmask 621568
      %3637 = vst.msk [vmem:[#allocation5 + $0x258] sm:$0xff] %vm3636, %v3609
      %3638 = vst [vmem:[#allocation5 + $0x260] sm:$0xff] %v3622
      %3639 = vst [vmem:[#allocation5 + $0x268] sm:$0xff] %v3623
      %3640 = vst [vmem:[#allocation5 + $0x270] sm:$0xff] %v3624
      %3641 = vst.msk [vmem:[#allocation5 + $0x278] sm:$0xff] %vm3636, %v3617
      %3642 = vrot.lane.b32.xlu0 %v3259, 103
      %v3643 = vpop.permute.xlu0 %3642
      %3644 = vrot.lane.b32.xlu0 %v3260, 103
      %v3645 = vpop.permute.xlu0 %3644
      %3646 = vrot.lane.b32.xlu0 %v3261, 103
      %v3647 = vpop.permute.xlu0 %3646
      %3648 = vrot.lane.b32.xlu0 %v3262, 103
      %v3649 = vpop.permute.xlu0 %3648
      %3650 = vrot.lane.b32.xlu0 %v3263, 103
      %v3651 = vpop.permute.xlu0 %3650
      %3652 = vrot.lane.b32.xlu0 %v3264, 103
      %v3653 = vpop.permute.xlu0 %3652
      %3654 = vrot.lane.b32.xlu0 %v3265, 103
      %v3655 = vpop.permute.xlu0 %3654
      %3656 = vrot.lane.b32.xlu0 %v3266, 103
      %v3657 = vpop.permute.xlu0 %3656
      %vm3658 = vcmask 842752
      %v3659 = vsel %vm3658, %v3643, %v3645
      %v3660 = vsel %vm3658, %v3645, %v3647
      %v3661 = vsel %vm3658, %v3647, %v3649
      %v3662 = vsel %vm3658, %v3651, %v3653
      %v3663 = vsel %vm3658, %v3653, %v3655
      %v3664 = vsel %vm3658, %v3655, %v3657
      %3673 = vst [vmem:[#allocation5 + $0x280] sm:$0xff] %v3659
      %3674 = vst [vmem:[#allocation5 + $0x288] sm:$0xff] %v3660
      %3675 = vst [vmem:[#allocation5 + $0x290] sm:$0xff] %v3661
      %vm3676 = vcmask 613376
      %3677 = vst.msk [vmem:[#allocation5 + $0x298] sm:$0xff] %vm3676, %v3649
      %3678 = vst [vmem:[#allocation5 + $0x2a0] sm:$0xff] %v3662
      %3679 = vst [vmem:[#allocation5 + $0x2a8] sm:$0xff] %v3663
      %3680 = vst [vmem:[#allocation5 + $0x2b0] sm:$0xff] %v3664
      %3681 = vst.msk [vmem:[#allocation5 + $0x2b8] sm:$0xff] %vm3676, %v3657
      %3682 = vrot.lane.b32.xlu0 %v3259, 102
      %v3683 = vpop.permute.xlu0 %3682
      %3684 = vrot.lane.b32.xlu0 %v3260, 102
      %v3685 = vpop.permute.xlu0 %3684
      %3686 = vrot.lane.b32.xlu0 %v3261, 102
      %v3687 = vpop.permute.xlu0 %3686
      %3688 = vrot.lane.b32.xlu0 %v3262, 102
      %v3689 = vpop.permute.xlu0 %3688
      %3690 = vrot.lane.b32.xlu0 %v3263, 102
      %v3691 = vpop.permute.xlu0 %3690
      %3692 = vrot.lane.b32.xlu0 %v3264, 102
      %v3693 = vpop.permute.xlu0 %3692
      %3694 = vrot.lane.b32.xlu0 %v3265, 102
      %v3695 = vpop.permute.xlu0 %3694
      %3696 = vrot.lane.b32.xlu0 %v3266, 102
      %v3697 = vpop.permute.xlu0 %3696
      %vm3698 = vcmask 834560
      %v3699 = vsel %vm3698, %v3683, %v3685
      %v3700 = vsel %vm3698, %v3685, %v3687
      %v3701 = vsel %vm3698, %v3687, %v3689
      %v3702 = vsel %vm3698, %v3691, %v3693
      %v3703 = vsel %vm3698, %v3693, %v3695
      %v3704 = vsel %vm3698, %v3695, %v3697
      %3713 = vst [vmem:[#allocation5 + $0x2c0] sm:$0xff] %v3699
      %3714 = vst [vmem:[#allocation5 + $0x2c8] sm:$0xff] %v3700
      %3715 = vst [vmem:[#allocation5 + $0x2d0] sm:$0xff] %v3701
      %vm3716 = vcmask 605184
      %3717 = vst.msk [vmem:[#allocation5 + $0x2d8] sm:$0xff] %vm3716, %v3689
      %3718 = vst [vmem:[#allocation5 + $0x2e0] sm:$0xff] %v3702
      %3719 = vst [vmem:[#allocation5 + $0x2e8] sm:$0xff] %v3703
      %3720 = vst [vmem:[#allocation5 + $0x2f0] sm:$0xff] %v3704
      %3721 = vst.msk [vmem:[#allocation5 + $0x2f8] sm:$0xff] %vm3716, %v3697
      %3722 = vrot.lane.b32.xlu0 %v3259, 101
      %v3723 = vpop.permute.xlu0 %3722
      %3724 = vrot.lane.b32.xlu0 %v3260, 101
      %v3725 = vpop.permute.xlu0 %3724
      %3726 = vrot.lane.b32.xlu0 %v3261, 101
      %v3727 = vpop.permute.xlu0 %3726
      %3728 = vrot.lane.b32.xlu0 %v3262, 101
      %v3729 = vpop.permute.xlu0 %3728
      %3730 = vrot.lane.b32.xlu0 %v3263, 101
      %v3731 = vpop.permute.xlu0 %3730
      %3732 = vrot.lane.b32.xlu0 %v3264, 101
      %v3733 = vpop.permute.xlu0 %3732
      %3734 = vrot.lane.b32.xlu0 %v3265, 101
      %v3735 = vpop.permute.xlu0 %3734
      %3736 = vrot.lane.b32.xlu0 %v3266, 101
      %v3737 = vpop.permute.xlu0 %3736
      %vm3738 = vcmask 826368
      %v3739 = vsel %vm3738, %v3723, %v3725
      %v3740 = vsel %vm3738, %v3725, %v3727
      %v3741 = vsel %vm3738, %v3727, %v3729
      %v3742 = vsel %vm3738, %v3731, %v3733
      %v3743 = vsel %vm3738, %v3733, %v3735
      %v3744 = vsel %vm3738, %v3735, %v3737
      %3753 = vst [vmem:[#allocation5 + $0x300] sm:$0xff] %v3739
      %3754 = vst [vmem:[#allocation5 + $0x308] sm:$0xff] %v3740
      %3755 = vst [vmem:[#allocation5 + $0x310] sm:$0xff] %v3741
      %vm3756 = vcmask 596992
      %3757 = vst.msk [vmem:[#allocation5 + $0x318] sm:$0xff] %vm3756, %v3729
      %3758 = vst [vmem:[#allocation5 + $0x320] sm:$0xff] %v3742
      %3759 = vst [vmem:[#allocation5 + $0x328] sm:$0xff] %v3743
      %3760 = vst [vmem:[#allocation5 + $0x330] sm:$0xff] %v3744
      %3761 = vst.msk [vmem:[#allocation5 + $0x338] sm:$0xff] %vm3756, %v3737
      %3762 = vrot.lane.b32.xlu0 %v3259, 100
      %v3763 = vpop.permute.xlu0 %3762
      %3764 = vrot.lane.b32.xlu0 %v3260, 100
      %v3765 = vpop.permute.xlu0 %3764
      %3766 = vrot.lane.b32.xlu0 %v3261, 100
      %v3767 = vpop.permute.xlu0 %3766
      %3768 = vrot.lane.b32.xlu0 %v3262, 100
      %v3769 = vpop.permute.xlu0 %3768
      %3770 = vrot.lane.b32.xlu0 %v3263, 100
      %v3771 = vpop.permute.xlu0 %3770
      %3772 = vrot.lane.b32.xlu0 %v3264, 100
      %v3773 = vpop.permute.xlu0 %3772
      %3774 = vrot.lane.b32.xlu0 %v3265, 100
      %v3775 = vpop.permute.xlu0 %3774
      %3776 = vrot.lane.b32.xlu0 %v3266, 100
      %v3777 = vpop.permute.xlu0 %3776
      %vm3778 = vcmask 818176
      %v3779 = vsel %vm3778, %v3763, %v3765
      %v3780 = vsel %vm3778, %v3765, %v3767
      %v3781 = vsel %vm3778, %v3767, %v3769
      %v3782 = vsel %vm3778, %v3771, %v3773
      %v3783 = vsel %vm3778, %v3773, %v3775
      %v3784 = vsel %vm3778, %v3775, %v3777
      %3793 = vst [vmem:[#allocation5 + $0x340] sm:$0xff] %v3779
      %3794 = vst [vmem:[#allocation5 + $0x348] sm:$0xff] %v3780
      %3795 = vst [vmem:[#allocation5 + $0x350] sm:$0xff] %v3781
      %vm3796 = vcmask 588800
      %3797 = vst.msk [vmem:[#allocation5 + $0x358] sm:$0xff] %vm3796, %v3769
      %3798 = vst [vmem:[#allocation5 + $0x360] sm:$0xff] %v3782
      %3799 = vst [vmem:[#allocation5 + $0x368] sm:$0xff] %v3783
      %3800 = vst [vmem:[#allocation5 + $0x370] sm:$0xff] %v3784
      %3801 = vst.msk [vmem:[#allocation5 + $0x378] sm:$0xff] %vm3796, %v3777
      %3802 = vrot.lane.b32.xlu0 %v3259, 84
      %v3803 = vpop.permute.xlu0 %3802
      %3804 = vrot.lane.b32.xlu0 %v3260, 84
      %v3805 = vpop.permute.xlu0 %3804
      %3806 = vrot.lane.b32.xlu0 %v3261, 84
      %v3807 = vpop.permute.xlu0 %3806
      %3808 = vrot.lane.b32.xlu0 %v3262, 84
      %v3809 = vpop.permute.xlu0 %3808
      %3810 = vrot.lane.b32.xlu0 %v3263, 84
      %v3811 = vpop.permute.xlu0 %3810
      %3812 = vrot.lane.b32.xlu0 %v3264, 84
      %v3813 = vpop.permute.xlu0 %3812
      %3814 = vrot.lane.b32.xlu0 %v3265, 84
      %v3815 = vpop.permute.xlu0 %3814
      %3816 = vrot.lane.b32.xlu0 %v3266, 84
      %v3817 = vpop.permute.xlu0 %3816
      %vm3818 = vcmask 687104
      %v3819 = vsel %vm3818, %v3803, %v3805
      %v3820 = vsel %vm3818, %v3805, %v3807
      %v3821 = vsel %vm3818, %v3807, %v3809
      %v3822 = vsel %vm3818, %v3811, %v3813
      %v3823 = vsel %vm3818, %v3813, %v3815
      %v3824 = vsel %vm3818, %v3815, %v3817
      %3833 = vst [vmem:[#allocation5 + $0x380] sm:$0xff] %v3819
      %3834 = vst [vmem:[#allocation5 + $0x388] sm:$0xff] %v3820
      %3835 = vst [vmem:[#allocation5 + $0x390] sm:$0xff] %v3821
      %vm3836 = vcmask 457728
      %3837 = vst.msk [vmem:[#allocation5 + $0x398] sm:$0xff] %vm3836, %v3809
      %3838 = vst [vmem:[#allocation5 + $0x3a0] sm:$0xff] %v3822
      %3839 = vst [vmem:[#allocation5 + $0x3a8] sm:$0xff] %v3823
      %3840 = vst [vmem:[#allocation5 + $0x3b0] sm:$0xff] %v3824
      %3841 = vst.msk [vmem:[#allocation5 + $0x3b8] sm:$0xff] %vm3836, %v3817
      %3842 = vrot.lane.b32.xlu0 %v3259, 83
      %v3843 = vpop.permute.xlu0 %3842
      %3844 = vrot.lane.b32.xlu0 %v3260, 83
      %v3845 = vpop.permute.xlu0 %3844
      %3846 = vrot.lane.b32.xlu0 %v3261, 83
      %v3847 = vpop.permute.xlu0 %3846
      %3848 = vrot.lane.b32.xlu0 %v3262, 83
      %v3849 = vpop.permute.xlu0 %3848
      %3850 = vrot.lane.b32.xlu0 %v3263, 83
      %v3851 = vpop.permute.xlu0 %3850
      %3852 = vrot.lane.b32.xlu0 %v3264, 83
      %v3853 = vpop.permute.xlu0 %3852
      %3854 = vrot.lane.b32.xlu0 %v3265, 83
      %v3855 = vpop.permute.xlu0 %3854
      %3856 = vrot.lane.b32.xlu0 %v3266, 83
      %v3857 = vpop.permute.xlu0 %3856
      %vm3858 = vcmask 678912
      %v3859 = vsel %vm3858, %v3843, %v3845
      %v3860 = vsel %vm3858, %v3845, %v3847
      %v3861 = vsel %vm3858, %v3847, %v3849
      %v3862 = vsel %vm3858, %v3851, %v3853
      %v3863 = vsel %vm3858, %v3853, %v3855
      %v3864 = vsel %vm3858, %v3855, %v3857
      %3873 = vst [vmem:[#allocation5 + $0x3c0] sm:$0xff] %v3859
      %3874 = vst [vmem:[#allocation5 + $0x3c8] sm:$0xff] %v3860
      %3875 = vst [vmem:[#allocation5 + $0x3d0] sm:$0xff] %v3861
      %vm3876 = vcmask 449536
      %3877 = vst.msk [vmem:[#allocation5 + $0x3d8] sm:$0xff] %vm3876, %v3849
      %3878 = vst [vmem:[#allocation5 + $0x3e0] sm:$0xff] %v3862
      %3879 = vst [vmem:[#allocation5 + $0x3e8] sm:$0xff] %v3863
      %3880 = vst [vmem:[#allocation5 + $0x3f0] sm:$0xff] %v3864
      %3881 = vst.msk [vmem:[#allocation5 + $0x3f8] sm:$0xff] %vm3876, %v3857
      %3882 = vrot.lane.b32.xlu0 %v3259, 82
      %v3883 = vpop.permute.xlu0 %3882
      %3884 = vrot.lane.b32.xlu0 %v3260, 82
      %v3885 = vpop.permute.xlu0 %3884
      %3886 = vrot.lane.b32.xlu0 %v3261, 82
      %v3887 = vpop.permute.xlu0 %3886
      %3888 = vrot.lane.b32.xlu0 %v3262, 82
      %v3889 = vpop.permute.xlu0 %3888
      %3890 = vrot.lane.b32.xlu0 %v3263, 82
      %v3891 = vpop.permute.xlu0 %3890
      %3892 = vrot.lane.b32.xlu0 %v3264, 82
      %v3893 = vpop.permute.xlu0 %3892
      %3894 = vrot.lane.b32.xlu0 %v3265, 82
      %v3895 = vpop.permute.xlu0 %3894
      %3896 = vrot.lane.b32.xlu0 %v3266, 82
      %v3897 = vpop.permute.xlu0 %3896
      %vm3898 = vcmask 670720
      %v3899 = vsel %vm3898, %v3883, %v3885
      %v3900 = vsel %vm3898, %v3885, %v3887
      %v3901 = vsel %vm3898, %v3887, %v3889
      %v3902 = vsel %vm3898, %v3891, %v3893
      %v3903 = vsel %vm3898, %v3893, %v3895
      %v3904 = vsel %vm3898, %v3895, %v3897
      %3913 = vst [vmem:[#allocation5 + $0x400] sm:$0xff] %v3899
      %3914 = vst [vmem:[#allocation5 + $0x408] sm:$0xff] %v3900
      %3915 = vst [vmem:[#allocation5 + $0x410] sm:$0xff] %v3901
      %vm3916 = vcmask 441344
      %3917 = vst.msk [vmem:[#allocation5 + $0x418] sm:$0xff] %vm3916, %v3889
      %3918 = vst [vmem:[#allocation5 + $0x420] sm:$0xff] %v3902
      %3919 = vst [vmem:[#allocation5 + $0x428] sm:$0xff] %v3903
      %3920 = vst [vmem:[#allocation5 + $0x430] sm:$0xff] %v3904
      %3921 = vst.msk [vmem:[#allocation5 + $0x438] sm:$0xff] %vm3916, %v3897
      %3922 = vrot.lane.b32.xlu0 %v3259, 81
      %v3923 = vpop.permute.xlu0 %3922
      %3924 = vrot.lane.b32.xlu0 %v3260, 81
      %v3925 = vpop.permute.xlu0 %3924
      %3926 = vrot.lane.b32.xlu0 %v3261, 81
      %v3927 = vpop.permute.xlu0 %3926
      %3928 = vrot.lane.b32.xlu0 %v3262, 81
      %v3929 = vpop.permute.xlu0 %3928
      %3930 = vrot.lane.b32.xlu0 %v3263, 81
      %v3931 = vpop.permute.xlu0 %3930
      %3932 = vrot.lane.b32.xlu0 %v3264, 81
      %v3933 = vpop.permute.xlu0 %3932
      %3934 = vrot.lane.b32.xlu0 %v3265, 81
      %v3935 = vpop.permute.xlu0 %3934
      %3936 = vrot.lane.b32.xlu0 %v3266, 81
      %v3937 = vpop.permute.xlu0 %3936
      %vm3938 = vcmask 662528
      %v3939 = vsel %vm3938, %v3923, %v3925
      %v3940 = vsel %vm3938, %v3925, %v3927
      %v3941 = vsel %vm3938, %v3927, %v3929
      %v3942 = vsel %vm3938, %v3931, %v3933
      %v3943 = vsel %vm3938, %v3933, %v3935
      %v3944 = vsel %vm3938, %v3935, %v3937
      %3953 = vst [vmem:[#allocation5 + $0x440] sm:$0xff] %v3939
      %3954 = vst [vmem:[#allocation5 + $0x448] sm:$0xff] %v3940
      %3955 = vst [vmem:[#allocation5 + $0x450] sm:$0xff] %v3941
      %vm3956 = vcmask 433152
      %3957 = vst.msk [vmem:[#allocation5 + $0x458] sm:$0xff] %vm3956, %v3929
      %3958 = vst [vmem:[#allocation5 + $0x460] sm:$0xff] %v3942
      %3959 = vst [vmem:[#allocation5 + $0x468] sm:$0xff] %v3943
      %3960 = vst [vmem:[#allocation5 + $0x470] sm:$0xff] %v3944
      %3961 = vst.msk [vmem:[#allocation5 + $0x478] sm:$0xff] %vm3956, %v3937
      %3962 = vrot.lane.b32.xlu0 %v3259, 80
      %v3963 = vpop.permute.xlu0 %3962
      %3964 = vrot.lane.b32.xlu0 %v3260, 80
      %v3965 = vpop.permute.xlu0 %3964
      %3966 = vrot.lane.b32.xlu0 %v3261, 80
      %v3967 = vpop.permute.xlu0 %3966
      %3968 = vrot.lane.b32.xlu0 %v3262, 80
      %v3969 = vpop.permute.xlu0 %3968
      %3970 = vrot.lane.b32.xlu0 %v3263, 80
      %v3971 = vpop.permute.xlu0 %3970
      %3972 = vrot.lane.b32.xlu0 %v3264, 80
      %v3973 = vpop.permute.xlu0 %3972
      %3974 = vrot.lane.b32.xlu0 %v3265, 80
      %v3975 = vpop.permute.xlu0 %3974
      %3976 = vrot.lane.b32.xlu0 %v3266, 80
      %v3977 = vpop.permute.xlu0 %3976
      %vm3978 = vcmask 654336
      %v3979 = vsel %vm3978, %v3963, %v3965
      %v3980 = vsel %vm3978, %v3965, %v3967
      %v3981 = vsel %vm3978, %v3967, %v3969
      %v3982 = vsel %vm3978, %v3971, %v3973
      %v3983 = vsel %vm3978, %v3973, %v3975
      %v3984 = vsel %vm3978, %v3975, %v3977
      %3993 = vst [vmem:[#allocation5 + $0x480] sm:$0xff] %v3979
      %3994 = vst [vmem:[#allocation5 + $0x488] sm:$0xff] %v3980
      %3995 = vst [vmem:[#allocation5 + $0x490] sm:$0xff] %v3981
      %vm3996 = vcmask 424960
      %3997 = vst.msk [vmem:[#allocation5 + $0x498] sm:$0xff] %vm3996, %v3969
      %3998 = vst [vmem:[#allocation5 + $0x4a0] sm:$0xff] %v3982
      %3999 = vst [vmem:[#allocation5 + $0x4a8] sm:$0xff] %v3983
      %4000 = vst [vmem:[#allocation5 + $0x4b0] sm:$0xff] %v3984
      %4001 = vst.msk [vmem:[#allocation5 + $0x4b8] sm:$0xff] %vm3996, %v3977
      %4002 = vrot.lane.b32.xlu0 %v3259, 79
      %v4003 = vpop.permute.xlu0 %4002
      %4004 = vrot.lane.b32.xlu0 %v3260, 79
      %v4005 = vpop.permute.xlu0 %4004
      %4006 = vrot.lane.b32.xlu0 %v3261, 79
      %v4007 = vpop.permute.xlu0 %4006
      %4008 = vrot.lane.b32.xlu0 %v3262, 79
      %v4009 = vpop.permute.xlu0 %4008
      %4010 = vrot.lane.b32.xlu0 %v3263, 79
      %v4011 = vpop.permute.xlu0 %4010
      %4012 = vrot.lane.b32.xlu0 %v3264, 79
      %v4013 = vpop.permute.xlu0 %4012
      %4014 = vrot.lane.b32.xlu0 %v3265, 79
      %v4015 = vpop.permute.xlu0 %4014
      %4016 = vrot.lane.b32.xlu0 %v3266, 79
      %v4017 = vpop.permute.xlu0 %4016
      %vm4018 = vcmask 646144
      %v4019 = vsel %vm4018, %v4003, %v4005
      %v4020 = vsel %vm4018, %v4005, %v4007
      %v4021 = vsel %vm4018, %v4007, %v4009
      %v4022 = vsel %vm4018, %v4011, %v4013
      %v4023 = vsel %vm4018, %v4013, %v4015
      %v4024 = vsel %vm4018, %v4015, %v4017
      %4033 = vst [vmem:[#allocation5 + $0x4c0] sm:$0xff] %v4019
      %4034 = vst [vmem:[#allocation5 + $0x4c8] sm:$0xff] %v4020
      %4035 = vst [vmem:[#allocation5 + $0x4d0] sm:$0xff] %v4021
      %vm4036 = vcmask 416768
      %4037 = vst.msk [vmem:[#allocation5 + $0x4d8] sm:$0xff] %vm4036, %v4009
      %4038 = vst [vmem:[#allocation5 + $0x4e0] sm:$0xff] %v4022
      %4039 = vst [vmem:[#allocation5 + $0x4e8] sm:$0xff] %v4023
      %4040 = vst [vmem:[#allocation5 + $0x4f0] sm:$0xff] %v4024
      %4041 = vst.msk [vmem:[#allocation5 + $0x4f8] sm:$0xff] %vm4036, %v4017
      %4042 = vrot.lane.b32.xlu0 %v3259, 78
      %v4043 = vpop.permute.xlu0 %4042
      %4044 = vrot.lane.b32.xlu0 %v3260, 78
      %v4045 = vpop.permute.xlu0 %4044
      %4046 = vrot.lane.b32.xlu0 %v3261, 78
      %v4047 = vpop.permute.xlu0 %4046
      %4048 = vrot.lane.b32.xlu0 %v3262, 78
      %v4049 = vpop.permute.xlu0 %4048
      %4050 = vrot.lane.b32.xlu0 %v3263, 78
      %v4051 = vpop.permute.xlu0 %4050
      %4052 = vrot.lane.b32.xlu0 %v3264, 78
      %v4053 = vpop.permute.xlu0 %4052
      %4054 = vrot.lane.b32.xlu0 %v3265, 78
      %v4055 = vpop.permute.xlu0 %4054
      %4056 = vrot.lane.b32.xlu0 %v3266, 78
      %v4057 = vpop.permute.xlu0 %4056
      %vm4058 = vcmask 637952
      %v4059 = vsel %vm4058, %v4043, %v4045
      %v4060 = vsel %vm4058, %v4045, %v4047
      %v4061 = vsel %vm4058, %v4047, %v4049
      %v4062 = vsel %vm4058, %v4051, %v4053
      %v4063 = vsel %vm4058, %v4053, %v4055
      %v4064 = vsel %vm4058, %v4055, %v4057
      %4073 = vst [vmem:[#allocation5 + $0x500] sm:$0xff] %v4059
      %4074 = vst [vmem:[#allocation5 + $0x508] sm:$0xff] %v4060
      %4075 = vst [vmem:[#allocation5 + $0x510] sm:$0xff] %v4061
      %vm4076 = vcmask 408576
      %4077 = vst.msk [vmem:[#allocation5 + $0x518] sm:$0xff] %vm4076, %v4049
      %4078 = vst [vmem:[#allocation5 + $0x520] sm:$0xff] %v4062
      %4079 = vst [vmem:[#allocation5 + $0x528] sm:$0xff] %v4063
      %4080 = vst [vmem:[#allocation5 + $0x530] sm:$0xff] %v4064
      %4081 = vst.msk [vmem:[#allocation5 + $0x538] sm:$0xff] %vm4076, %v4057
      %4082 = vrot.lane.b32.xlu0 %v3259, 62
      %v4083 = vpop.permute.xlu0 %4082
      %4084 = vrot.lane.b32.xlu0 %v3260, 62
      %v4085 = vpop.permute.xlu0 %4084
      %4086 = vrot.lane.b32.xlu0 %v3261, 62
      %v4087 = vpop.permute.xlu0 %4086
      %4088 = vrot.lane.b32.xlu0 %v3262, 62
      %v4089 = vpop.permute.xlu0 %4088
      %4090 = vrot.lane.b32.xlu0 %v3263, 62
      %v4091 = vpop.permute.xlu0 %4090
      %4092 = vrot.lane.b32.xlu0 %v3264, 62
      %v4093 = vpop.permute.xlu0 %4092
      %4094 = vrot.lane.b32.xlu0 %v3265, 62
      %v4095 = vpop.permute.xlu0 %4094
      %4096 = vrot.lane.b32.xlu0 %v3266, 62
      %v4097 = vpop.permute.xlu0 %4096
      %vm4098 = vcmask 506880
      %v4099 = vsel %vm4098, %v4083, %v4085
      %v4100 = vsel %vm4098, %v4085, %v4087
      %v4101 = vsel %vm4098, %v4087, %v4089
      %v4102 = vsel %vm4098, %v4091, %v4093
      %v4103 = vsel %vm4098, %v4093, %v4095
      %v4104 = vsel %vm4098, %v4095, %v4097
      %4113 = vst [vmem:[#allocation5 + $0x540] sm:$0xff] %v4099
      %4114 = vst [vmem:[#allocation5 + $0x548] sm:$0xff] %v4100
      %4115 = vst [vmem:[#allocation5 + $0x550] sm:$0xff] %v4101
      %vm4116 = vcmask 277504
      %4117 = vst.msk [vmem:[#allocation5 + $0x558] sm:$0xff] %vm4116, %v4089
      %4118 = vst [vmem:[#allocation5 + $0x560] sm:$0xff] %v4102
      %4119 = vst [vmem:[#allocation5 + $0x568] sm:$0xff] %v4103
      %4120 = vst [vmem:[#allocation5 + $0x570] sm:$0xff] %v4104
      %4121 = vst.msk [vmem:[#allocation5 + $0x578] sm:$0xff] %vm4116, %v4097
      %4122 = vrot.lane.b32.xlu0 %v3259, 61
      %v4123 = vpop.permute.xlu0 %4122
      %4124 = vrot.lane.b32.xlu0 %v3260, 61
      %v4125 = vpop.permute.xlu0 %4124
      %4126 = vrot.lane.b32.xlu0 %v3261, 61
      %v4127 = vpop.permute.xlu0 %4126
      %4128 = vrot.lane.b32.xlu0 %v3262, 61
      %v4129 = vpop.permute.xlu0 %4128
      %4130 = vrot.lane.b32.xlu0 %v3263, 61
      %v4131 = vpop.permute.xlu0 %4130
      %4132 = vrot.lane.b32.xlu0 %v3264, 61
      %v4133 = vpop.permute.xlu0 %4132
      %4134 = vrot.lane.b32.xlu0 %v3265, 61
      %v4135 = vpop.permute.xlu0 %4134
      %4136 = vrot.lane.b32.xlu0 %v3266, 61
      %v4137 = vpop.permute.xlu0 %4136
      %vm4138 = vcmask 498688
      %v4139 = vsel %vm4138, %v4123, %v4125
      %v4140 = vsel %vm4138, %v4125, %v4127
      %v4141 = vsel %vm4138, %v4127, %v4129
      %v4142 = vsel %vm4138, %v4131, %v4133
      %v4143 = vsel %vm4138, %v4133, %v4135
      %v4144 = vsel %vm4138, %v4135, %v4137
      %4153 = vst [vmem:[#allocation5 + $0x580] sm:$0xff] %v4139
      %4154 = vst [vmem:[#allocation5 + $0x588] sm:$0xff] %v4140
      %4155 = vst [vmem:[#allocation5 + $0x590] sm:$0xff] %v4141
      %vm4156 = vcmask 269312
      %4157 = vst.msk [vmem:[#allocation5 + $0x598] sm:$0xff] %vm4156, %v4129
      %4158 = vst [vmem:[#allocation5 + $0x5a0] sm:$0xff] %v4142
      %4159 = vst [vmem:[#allocation5 + $0x5a8] sm:$0xff] %v4143
      %4160 = vst [vmem:[#allocation5 + $0x5b0] sm:$0xff] %v4144
      %4161 = vst.msk [vmem:[#allocation5 + $0x5b8] sm:$0xff] %vm4156, %v4137
      %4162 = vrot.lane.b32.xlu0 %v3259, 60
      %v4163 = vpop.permute.xlu0 %4162
      %4164 = vrot.lane.b32.xlu0 %v3260, 60
      %v4165 = vpop.permute.xlu0 %4164
      %4166 = vrot.lane.b32.xlu0 %v3261, 60
      %v4167 = vpop.permute.xlu0 %4166
      %4168 = vrot.lane.b32.xlu0 %v3262, 60
      %v4169 = vpop.permute.xlu0 %4168
      %4170 = vrot.lane.b32.xlu0 %v3263, 60
      %v4171 = vpop.permute.xlu0 %4170
      %4172 = vrot.lane.b32.xlu0 %v3264, 60
      %v4173 = vpop.permute.xlu0 %4172
      %4174 = vrot.lane.b32.xlu0 %v3265, 60
      %v4175 = vpop.permute.xlu0 %4174
      %4176 = vrot.lane.b32.xlu0 %v3266, 60
      %v4177 = vpop.permute.xlu0 %4176
      %vm4178 = vcmask 490496
      %v4179 = vsel %vm4178, %v4163, %v4165
      %v4180 = vsel %vm4178, %v4165, %v4167
      %v4181 = vsel %vm4178, %v4167, %v4169
      %v4182 = vsel %vm4178, %v4171, %v4173
      %v4183 = vsel %vm4178, %v4173, %v4175
      %v4184 = vsel %vm4178, %v4175, %v4177
      %4193 = vst [vmem:[#allocation5 + $0x5c0] sm:$0xff] %v4179
      %4194 = vst [vmem:[#allocation5 + $0x5c8] sm:$0xff] %v4180
      %4195 = vst [vmem:[#allocation5 + $0x5d0] sm:$0xff] %v4181
      %4196 = vst.msk [vmem:[#allocation5 + $0x5d8] sm:$0xff] %vm1122, %v4169
      %4197 = vst [vmem:[#allocation5 + $0x5e0] sm:$0xff] %v4182
      %4198 = vst [vmem:[#allocation5 + $0x5e8] sm:$0xff] %v4183
      %4199 = vst [vmem:[#allocation5 + $0x5f0] sm:$0xff] %v4184
      %4200 = vst.msk [vmem:[#allocation5 + $0x5f8] sm:$0xff] %vm1122, %v4177
      %4201 = vrot.lane.b32.xlu0 %v3259, 59
      %v4202 = vpop.permute.xlu0 %4201
      %4203 = vrot.lane.b32.xlu0 %v3260, 59
      %v4204 = vpop.permute.xlu0 %4203
      %4205 = vrot.lane.b32.xlu0 %v3261, 59
      %v4206 = vpop.permute.xlu0 %4205
      %4207 = vrot.lane.b32.xlu0 %v3262, 59
      %v4208 = vpop.permute.xlu0 %4207
      %4209 = vrot.lane.b32.xlu0 %v3263, 59
      %v4210 = vpop.permute.xlu0 %4209
      %4211 = vrot.lane.b32.xlu0 %v3264, 59
      %v4212 = vpop.permute.xlu0 %4211
      %4213 = vrot.lane.b32.xlu0 %v3265, 59
      %v4214 = vpop.permute.xlu0 %4213
      %4215 = vrot.lane.b32.xlu0 %v3266, 59
      %v4216 = vpop.permute.xlu0 %4215
      %vm4217 = vcmask 482304
      %v4218 = vsel %vm4217, %v4202, %v4204
      %v4219 = vsel %vm4217, %v4204, %v4206
      %v4220 = vsel %vm4217, %v4206, %v4208
      %v4221 = vsel %vm4217, %v4210, %v4212
      %v4222 = vsel %vm4217, %v4212, %v4214
      %v4223 = vsel %vm4217, %v4214, %v4216
      %4232 = vst [vmem:[#allocation5 + $0x600] sm:$0xff] %v4218
      %4233 = vst [vmem:[#allocation5 + $0x608] sm:$0xff] %v4219
      %4234 = vst [vmem:[#allocation5 + $0x610] sm:$0xff] %v4220
      %vm4235 = vcmask 252928
      %4236 = vst.msk [vmem:[#allocation5 + $0x618] sm:$0xff] %vm4235, %v4208
      %4237 = vst [vmem:[#allocation5 + $0x620] sm:$0xff] %v4221
      %4238 = vst [vmem:[#allocation5 + $0x628] sm:$0xff] %v4222
      %4239 = vst [vmem:[#allocation5 + $0x630] sm:$0xff] %v4223
      %4240 = vst.msk [vmem:[#allocation5 + $0x638] sm:$0xff] %vm4235, %v4216
      %4241 = vrot.lane.b32.xlu0 %v3259, 58
      %v4242 = vpop.permute.xlu0 %4241
      %4243 = vrot.lane.b32.xlu0 %v3260, 58
      %v4244 = vpop.permute.xlu0 %4243
      %4245 = vrot.lane.b32.xlu0 %v3261, 58
      %v4246 = vpop.permute.xlu0 %4245
      %4247 = vrot.lane.b32.xlu0 %v3262, 58
      %v4248 = vpop.permute.xlu0 %4247
      %4249 = vrot.lane.b32.xlu0 %v3263, 58
      %v4250 = vpop.permute.xlu0 %4249
      %4251 = vrot.lane.b32.xlu0 %v3264, 58
      %v4252 = vpop.permute.xlu0 %4251
      %4253 = vrot.lane.b32.xlu0 %v3265, 58
      %v4254 = vpop.permute.xlu0 %4253
      %4255 = vrot.lane.b32.xlu0 %v3266, 58
      %v4256 = vpop.permute.xlu0 %4255
      %vm4257 = vcmask 474112
      %v4258 = vsel %vm4257, %v4242, %v4244
      %v4259 = vsel %vm4257, %v4244, %v4246
      %v4260 = vsel %vm4257, %v4246, %v4248
      %v4261 = vsel %vm4257, %v4250, %v4252
      %v4262 = vsel %vm4257, %v4252, %v4254
      %v4263 = vsel %vm4257, %v4254, %v4256
      %4272 = vst [vmem:[#allocation5 + $0x640] sm:$0xff] %v4258
      %4273 = vst [vmem:[#allocation5 + $0x648] sm:$0xff] %v4259
      %4274 = vst [vmem:[#allocation5 + $0x650] sm:$0xff] %v4260
      %vm4275 = vcmask 244736
      %4276 = vst.msk [vmem:[#allocation5 + $0x658] sm:$0xff] %vm4275, %v4248
      %4277 = vst [vmem:[#allocation5 + $0x660] sm:$0xff] %v4261
      %4278 = vst [vmem:[#allocation5 + $0x668] sm:$0xff] %v4262
      %4279 = vst [vmem:[#allocation5 + $0x670] sm:$0xff] %v4263
      %4280 = vst.msk [vmem:[#allocation5 + $0x678] sm:$0xff] %vm4275, %v4256
      %4281 = vrot.lane.b32.xlu0 %v3259, 57
      %v4282 = vpop.permute.xlu0 %4281
      %4283 = vrot.lane.b32.xlu0 %v3260, 57
      %v4284 = vpop.permute.xlu0 %4283
      %4285 = vrot.lane.b32.xlu0 %v3261, 57
      %v4286 = vpop.permute.xlu0 %4285
      %4287 = vrot.lane.b32.xlu0 %v3262, 57
      %v4288 = vpop.permute.xlu0 %4287
      %4289 = vrot.lane.b32.xlu0 %v3263, 57
      %v4290 = vpop.permute.xlu0 %4289
      %4291 = vrot.lane.b32.xlu0 %v3264, 57
      %v4292 = vpop.permute.xlu0 %4291
      %4293 = vrot.lane.b32.xlu0 %v3265, 57
      %v4294 = vpop.permute.xlu0 %4293
      %4295 = vrot.lane.b32.xlu0 %v3266, 57
      %v4296 = vpop.permute.xlu0 %4295
      %vm4297 = vcmask 465920
      %v4298 = vsel %vm4297, %v4282, %v4284
      %v4299 = vsel %vm4297, %v4284, %v4286
      %v4300 = vsel %vm4297, %v4286, %v4288
      %v4301 = vsel %vm4297, %v4290, %v4292
      %v4302 = vsel %vm4297, %v4292, %v4294
      %v4303 = vsel %vm4297, %v4294, %v4296
      %4312 = vst [vmem:[#allocation5 + $0x680] sm:$0xff] %v4298
      %4313 = vst [vmem:[#allocation5 + $0x688] sm:$0xff] %v4299
      %4314 = vst [vmem:[#allocation5 + $0x690] sm:$0xff] %v4300
      %vm4315 = vcmask 236544
      %4316 = vst.msk [vmem:[#allocation5 + $0x698] sm:$0xff] %vm4315, %v4288
      %4317 = vst [vmem:[#allocation5 + $0x6a0] sm:$0xff] %v4301
      %4318 = vst [vmem:[#allocation5 + $0x6a8] sm:$0xff] %v4302
      %4319 = vst [vmem:[#allocation5 + $0x6b0] sm:$0xff] %v4303
      %4320 = vst.msk [vmem:[#allocation5 + $0x6b8] sm:$0xff] %vm4315, %v4296
      %4321 = vrot.lane.b32.xlu0 %v3259, 56
      %v4322 = vpop.permute.xlu0 %4321
      %4323 = vrot.lane.b32.xlu0 %v3260, 56
      %v4324 = vpop.permute.xlu0 %4323
      %4325 = vrot.lane.b32.xlu0 %v3261, 56
      %v4326 = vpop.permute.xlu0 %4325
      %4327 = vrot.lane.b32.xlu0 %v3262, 56
      %v4328 = vpop.permute.xlu0 %4327
      %4329 = vrot.lane.b32.xlu0 %v3263, 56
      %v4330 = vpop.permute.xlu0 %4329
      %4331 = vrot.lane.b32.xlu0 %v3264, 56
      %v4332 = vpop.permute.xlu0 %4331
      %4333 = vrot.lane.b32.xlu0 %v3265, 56
      %v4334 = vpop.permute.xlu0 %4333
      %4335 = vrot.lane.b32.xlu0 %v3266, 56
      %v4336 = vpop.permute.xlu0 %4335
      %vm4337 = vcmask 457728
      %v4338 = vsel %vm4337, %v4322, %v4324
      %v4339 = vsel %vm4337, %v4324, %v4326
      %v4340 = vsel %vm4337, %v4326, %v4328
      %v4341 = vsel %vm4337, %v4330, %v4332
      %v4342 = vsel %vm4337, %v4332, %v4334
      %v4343 = vsel %vm4337, %v4334, %v4336
      %4352 = vst [vmem:[#allocation5 + $0x6c0] sm:$0xff] %v4338
      %4353 = vst [vmem:[#allocation5 + $0x6c8] sm:$0xff] %v4339
      %4354 = vst [vmem:[#allocation5 + $0x6d0] sm:$0xff] %v4340
      %vm4355 = vcmask 228352
      %4356 = vst.msk [vmem:[#allocation5 + $0x6d8] sm:$0xff] %vm4355, %v4328
      %4357 = vst [vmem:[#allocation5 + $0x6e0] sm:$0xff] %v4341
      %4358 = vst [vmem:[#allocation5 + $0x6e8] sm:$0xff] %v4342
      %4359 = vst [vmem:[#allocation5 + $0x6f0] sm:$0xff] %v4343
      %4360 = vst.msk [vmem:[#allocation5 + $0x6f8] sm:$0xff] %vm4355, %v4336
      %4361 = vrot.lane.b32.xlu0 %v3259, 40
      %v4362 = vpop.permute.xlu0 %4361
      %4363 = vrot.lane.b32.xlu0 %v3260, 40
      %v4364 = vpop.permute.xlu0 %4363
      %4365 = vrot.lane.b32.xlu0 %v3261, 40
      %v4366 = vpop.permute.xlu0 %4365
      %4367 = vrot.lane.b32.xlu0 %v3262, 40
      %v4368 = vpop.permute.xlu0 %4367
      %4369 = vrot.lane.b32.xlu0 %v3263, 40
      %v4370 = vpop.permute.xlu0 %4369
      %4371 = vrot.lane.b32.xlu0 %v3264, 40
      %v4372 = vpop.permute.xlu0 %4371
      %4373 = vrot.lane.b32.xlu0 %v3265, 40
      %v4374 = vpop.permute.xlu0 %4373
      %4375 = vrot.lane.b32.xlu0 %v3266, 40
      %v4376 = vpop.permute.xlu0 %4375
      %vm4377 = vcmask 326656
      %v4378 = vsel %vm4377, %v4362, %v4364
      %v4379 = vsel %vm4377, %v4364, %v4366
      %v4380 = vsel %vm4377, %v4366, %v4368
      %v4381 = vsel %vm4377, %v4370, %v4372
      %v4382 = vsel %vm4377, %v4372, %v4374
      %v4383 = vsel %vm4377, %v4374, %v4376
      %4392 = vst [vmem:[#allocation5 + $0x700] sm:$0xff] %v4378
      %4393 = vst [vmem:[#allocation5 + $0x708] sm:$0xff] %v4379
      %4394 = vst [vmem:[#allocation5 + $0x710] sm:$0xff] %v4380
      %4395 = vst.msk [vmem:[#allocation5 + $0x718] sm:$0xff] %vm3107, %v4368
      %4396 = vst [vmem:[#allocation5 + $0x720] sm:$0xff] %v4381
      %4397 = vst [vmem:[#allocation5 + $0x728] sm:$0xff] %v4382
      %4398 = vst [vmem:[#allocation5 + $0x730] sm:$0xff] %v4383
      %4399 = vst.msk [vmem:[#allocation5 + $0x738] sm:$0xff] %vm3107, %v4376
      %4400 = vrot.lane.b32.xlu0 %v3259, 39
      %v4401 = vpop.permute.xlu0 %4400
      %4402 = vrot.lane.b32.xlu0 %v3260, 39
      %v4403 = vpop.permute.xlu0 %4402
      %4404 = vrot.lane.b32.xlu0 %v3261, 39
      %v4405 = vpop.permute.xlu0 %4404
      %4406 = vrot.lane.b32.xlu0 %v3262, 39
      %v4407 = vpop.permute.xlu0 %4406
      %4408 = vrot.lane.b32.xlu0 %v3263, 39
      %v4409 = vpop.permute.xlu0 %4408
      %4410 = vrot.lane.b32.xlu0 %v3264, 39
      %v4411 = vpop.permute.xlu0 %4410
      %4412 = vrot.lane.b32.xlu0 %v3265, 39
      %v4413 = vpop.permute.xlu0 %4412
      %4414 = vrot.lane.b32.xlu0 %v3266, 39
      %v4415 = vpop.permute.xlu0 %4414
      %vm4416 = vcmask 318464
      %v4417 = vsel %vm4416, %v4401, %v4403
      %v4418 = vsel %vm4416, %v4403, %v4405
      %v4419 = vsel %vm4416, %v4405, %v4407
      %v4420 = vsel %vm4416, %v4409, %v4411
      %v4421 = vsel %vm4416, %v4411, %v4413
      %v4422 = vsel %vm4416, %v4413, %v4415
      %4431 = vst [vmem:[#allocation5 + $0x740] sm:$0xff] %v4417
      %4432 = vst [vmem:[#allocation5 + $0x748] sm:$0xff] %v4418
      %4433 = vst [vmem:[#allocation5 + $0x750] sm:$0xff] %v4419
      %vm4434 = vcmask 89088
      %4435 = vst.msk [vmem:[#allocation5 + $0x758] sm:$0xff] %vm4434, %v4407
      %4436 = vst [vmem:[#allocation5 + $0x760] sm:$0xff] %v4420
      %4437 = vst [vmem:[#allocation5 + $0x768] sm:$0xff] %v4421
      %4438 = vst [vmem:[#allocation5 + $0x770] sm:$0xff] %v4422
      %4439 = vst.msk [vmem:[#allocation5 + $0x778] sm:$0xff] %vm4434, %v4415
      %4440 = vrot.lane.b32.xlu0 %v3259, 38
      %v4441 = vpop.permute.xlu0 %4440
      %4442 = vrot.lane.b32.xlu0 %v3260, 38
      %v4443 = vpop.permute.xlu0 %4442
      %4444 = vrot.lane.b32.xlu0 %v3261, 38
      %v4445 = vpop.permute.xlu0 %4444
      %4446 = vrot.lane.b32.xlu0 %v3262, 38
      %v4447 = vpop.permute.xlu0 %4446
      %4448 = vrot.lane.b32.xlu0 %v3263, 38
      %v4449 = vpop.permute.xlu0 %4448
      %4450 = vrot.lane.b32.xlu0 %v3264, 38
      %v4451 = vpop.permute.xlu0 %4450
      %4452 = vrot.lane.b32.xlu0 %v3265, 38
      %v4453 = vpop.permute.xlu0 %4452
      %4454 = vrot.lane.b32.xlu0 %v3266, 38
      %v4455 = vpop.permute.xlu0 %4454
      %vm4456 = vcmask 310272
      %v4457 = vsel %vm4456, %v4441, %v4443
      %v4458 = vsel %vm4456, %v4443, %v4445
      %v4459 = vsel %vm4456, %v4445, %v4447
      %v4460 = vsel %vm4456, %v4449, %v4451
      %v4461 = vsel %vm4456, %v4451, %v4453
      %v4462 = vsel %vm4456, %v4453, %v4455
      %4471 = vst [vmem:[#allocation5 + $0x780] sm:$0xff] %v4457
      %4472 = vst [vmem:[#allocation5 + $0x788] sm:$0xff] %v4458
      %4473 = vst [vmem:[#allocation5 + $0x790] sm:$0xff] %v4459
      %vm4474 = vcmask 80896
      %4475 = vst.msk [vmem:[#allocation5 + $0x798] sm:$0xff] %vm4474, %v4447
      %4476 = vst [vmem:[#allocation5 + $0x7a0] sm:$0xff] %v4460
      %4477 = vst [vmem:[#allocation5 + $0x7a8] sm:$0xff] %v4461
      %4478 = vst [vmem:[#allocation5 + $0x7b0] sm:$0xff] %v4462
      %4479 = vst.msk [vmem:[#allocation5 + $0x7b8] sm:$0xff] %vm4474, %v4455
      %4480 = vrot.lane.b32.xlu0 %v3259, 37
      %v4481 = vpop.permute.xlu0 %4480
      %4482 = vrot.lane.b32.xlu0 %v3260, 37
      %v4483 = vpop.permute.xlu0 %4482
      %4484 = vrot.lane.b32.xlu0 %v3261, 37
      %v4485 = vpop.permute.xlu0 %4484
      %4486 = vrot.lane.b32.xlu0 %v3262, 37
      %v4487 = vpop.permute.xlu0 %4486
      %4488 = vrot.lane.b32.xlu0 %v3263, 37
      %v4489 = vpop.permute.xlu0 %4488
      %4490 = vrot.lane.b32.xlu0 %v3264, 37
      %v4491 = vpop.permute.xlu0 %4490
      %4492 = vrot.lane.b32.xlu0 %v3265, 37
      %v4493 = vpop.permute.xlu0 %4492
      %4494 = vrot.lane.b32.xlu0 %v3266, 37
      %v4495 = vpop.permute.xlu0 %4494
      %vm4496 = vcmask 302080
      %v4497 = vsel %vm4496, %v4481, %v4483
      %v4498 = vsel %vm4496, %v4483, %v4485
      %v4499 = vsel %vm4496, %v4485, %v4487
      %v4500 = vsel %vm4496, %v4489, %v4491
      %v4501 = vsel %vm4496, %v4491, %v4493
      %v4502 = vsel %vm4496, %v4493, %v4495
      %4511 = vst [vmem:[#allocation5 + $0x7c0] sm:$0xff] %v4497
      %4512 = vst [vmem:[#allocation5 + $0x7c8] sm:$0xff] %v4498
      %4513 = vst [vmem:[#allocation5 + $0x7d0] sm:$0xff] %v4499
      %vm4514 = vcmask 72704
      %4515 = vst.msk [vmem:[#allocation5 + $0x7d8] sm:$0xff] %vm4514, %v4487
      %4516 = vst [vmem:[#allocation5 + $0x7e0] sm:$0xff] %v4500
      %4517 = vst [vmem:[#allocation5 + $0x7e8] sm:$0xff] %v4501
      %4518 = vst [vmem:[#allocation5 + $0x7f0] sm:$0xff] %v4502
      %4519 = vst.msk [vmem:[#allocation5 + $0x7f8] sm:$0xff] %vm4514, %v4495
      %4520 = vrot.lane.b32.xlu0 %v3259, 36
      %v4521 = vpop.permute.xlu0 %4520
      %4522 = vrot.lane.b32.xlu0 %v3260, 36
      %v4523 = vpop.permute.xlu0 %4522
      %4524 = vrot.lane.b32.xlu0 %v3261, 36
      %v4525 = vpop.permute.xlu0 %4524
      %4526 = vrot.lane.b32.xlu0 %v3262, 36
      %v4527 = vpop.permute.xlu0 %4526
      %4528 = vrot.lane.b32.xlu0 %v3263, 36
      %v4529 = vpop.permute.xlu0 %4528
      %4530 = vrot.lane.b32.xlu0 %v3264, 36
      %v4531 = vpop.permute.xlu0 %4530
      %4532 = vrot.lane.b32.xlu0 %v3265, 36
      %v4533 = vpop.permute.xlu0 %4532
      %4534 = vrot.lane.b32.xlu0 %v3266, 36
      %v4535 = vpop.permute.xlu0 %4534
      %vm4536 = vcmask 293888
      %v4537 = vsel %vm4536, %v4521, %v4523
      %v4538 = vsel %vm4536, %v4523, %v4525
      %v4539 = vsel %vm4536, %v4525, %v4527
      %v4540 = vsel %vm4536, %v4529, %v4531
      %v4541 = vsel %vm4536, %v4531, %v4533
      %v4542 = vsel %vm4536, %v4533, %v4535
      %4551 = vst [vmem:[#allocation5 + $0x800] sm:$0xff] %v4537
      %4552 = vst [vmem:[#allocation5 + $0x808] sm:$0xff] %v4538
      %4553 = vst [vmem:[#allocation5 + $0x810] sm:$0xff] %v4539
      %4554 = vst.msk [vmem:[#allocation5 + $0x818] sm:$0xff] %vm2378, %v4527
      %4555 = vst [vmem:[#allocation5 + $0x820] sm:$0xff] %v4540
      %4556 = vst [vmem:[#allocation5 + $0x828] sm:$0xff] %v4541
      %4557 = vst [vmem:[#allocation5 + $0x830] sm:$0xff] %v4542
      %4558 = vst.msk [vmem:[#allocation5 + $0x838] sm:$0xff] %vm2378, %v4535
      %4559 = vrot.lane.b32.xlu0 %v3259, 35
      %v4560 = vpop.permute.xlu0 %4559
      %4561 = vrot.lane.b32.xlu0 %v3260, 35
      %v4562 = vpop.permute.xlu0 %4561
      %4563 = vrot.lane.b32.xlu0 %v3261, 35
      %v4564 = vpop.permute.xlu0 %4563
      %4565 = vrot.lane.b32.xlu0 %v3262, 35
      %v4566 = vpop.permute.xlu0 %4565
      %4567 = vrot.lane.b32.xlu0 %v3263, 35
      %v4568 = vpop.permute.xlu0 %4567
      %4569 = vrot.lane.b32.xlu0 %v3264, 35
      %v4570 = vpop.permute.xlu0 %4569
      %4571 = vrot.lane.b32.xlu0 %v3265, 35
      %v4572 = vpop.permute.xlu0 %4571
      %4573 = vrot.lane.b32.xlu0 %v3266, 35
      %v4574 = vpop.permute.xlu0 %4573
      %vm4575 = vcmask 285696
      %v4576 = vsel %vm4575, %v4560, %v4562
      %v4577 = vsel %vm4575, %v4562, %v4564
      %v4578 = vsel %vm4575, %v4564, %v4566
      %v4579 = vsel %vm4575, %v4568, %v4570
      %v4580 = vsel %vm4575, %v4570, %v4572
      %v4581 = vsel %vm4575, %v4572, %v4574
      %4590 = vst [vmem:[#allocation5 + $0x840] sm:$0xff] %v4576
      %4591 = vst [vmem:[#allocation5 + $0x848] sm:$0xff] %v4577
      %4592 = vst [vmem:[#allocation5 + $0x850] sm:$0xff] %v4578
      %vm4593 = vcmask 56320
      %4594 = vst.msk [vmem:[#allocation5 + $0x858] sm:$0xff] %vm4593, %v4566
      %4595 = vst [vmem:[#allocation5 + $0x860] sm:$0xff] %v4579
      %4596 = vst [vmem:[#allocation5 + $0x868] sm:$0xff] %v4580
      %4597 = vst [vmem:[#allocation5 + $0x870] sm:$0xff] %v4581
      %4598 = vst.msk [vmem:[#allocation5 + $0x878] sm:$0xff] %vm4593, %v4574
      %4599 = vrot.lane.b32.xlu0 %v3259, 34
      %v4600 = vpop.permute.xlu0 %4599
      %4601 = vrot.lane.b32.xlu0 %v3260, 34
      %v4602 = vpop.permute.xlu0 %4601
      %4603 = vrot.lane.b32.xlu0 %v3261, 34
      %v4604 = vpop.permute.xlu0 %4603
      %4605 = vrot.lane.b32.xlu0 %v3262, 34
      %v4606 = vpop.permute.xlu0 %4605
      %4607 = vrot.lane.b32.xlu0 %v3263, 34
      %v4608 = vpop.permute.xlu0 %4607
      %4609 = vrot.lane.b32.xlu0 %v3264, 34
      %v4610 = vpop.permute.xlu0 %4609
      %4611 = vrot.lane.b32.xlu0 %v3265, 34
      %v4612 = vpop.permute.xlu0 %4611
      %4613 = vrot.lane.b32.xlu0 %v3266, 34
      %v4614 = vpop.permute.xlu0 %4613
      %vm4615 = vcmask 277504
      %v4616 = vsel %vm4615, %v4600, %v4602
      %v4617 = vsel %vm4615, %v4602, %v4604
      %v4618 = vsel %vm4615, %v4604, %v4606
      %v4619 = vsel %vm4615, %v4608, %v4610
      %v4620 = vsel %vm4615, %v4610, %v4612
      %v4621 = vsel %vm4615, %v4612, %v4614
      %4630 = vst [vmem:[#allocation5 + $0x880] sm:$0xff] %v4616
      %4631 = vst [vmem:[#allocation5 + $0x888] sm:$0xff] %v4617
      %4632 = vst [vmem:[#allocation5 + $0x890] sm:$0xff] %v4618
      %vm4633 = vcmask 48128
      %4634 = vst.msk [vmem:[#allocation5 + $0x898] sm:$0xff] %vm4633, %v4606
      %4635 = vst [vmem:[#allocation5 + $0x8a0] sm:$0xff] %v4619
      %4636 = vst [vmem:[#allocation5 + $0x8a8] sm:$0xff] %v4620
      %4637 = vst [vmem:[#allocation5 + $0x8b0] sm:$0xff] %v4621
      %4638 = vst.msk [vmem:[#allocation5 + $0x8b8] sm:$0xff] %vm4633, %v4614
      %4639 = vrot.lane.b32.xlu0 %v3259, 18
      %v4640 = vpop.permute.xlu0 %4639
      %4641 = vrot.lane.b32.xlu0 %v3260, 18
      %v4642 = vpop.permute.xlu0 %4641
      %4643 = vrot.lane.b32.xlu0 %v3261, 18
      %v4644 = vpop.permute.xlu0 %4643
      %4645 = vrot.lane.b32.xlu0 %v3262, 18
      %v4646 = vpop.permute.xlu0 %4645
      %4647 = vrot.lane.b32.xlu0 %v3263, 18
      %v4648 = vpop.permute.xlu0 %4647
      %4649 = vrot.lane.b32.xlu0 %v3264, 18
      %v4650 = vpop.permute.xlu0 %4649
      %4651 = vrot.lane.b32.xlu0 %v3265, 18
      %v4652 = vpop.permute.xlu0 %4651
      %4653 = vrot.lane.b32.xlu0 %v3266, 18
      %v4654 = vpop.permute.xlu0 %4653
      %vm4655 = vcmask 146432
      %v4656 = vsel %vm4655, %v4640, %v4642
      %v4657 = vsel %vm4655, %v4642, %v4644
      %v4658 = vsel %vm4655, %v4644, %v4646
      %v4659 = vsel %vm4655, %v4648, %v4650
      %v4660 = vsel %vm4655, %v4650, %v4652
      %v4661 = vsel %vm4655, %v4652, %v4654
      %4668 = vst [vmem:[#allocation5 + $0x8c0] sm:$0xff] %v4656
      %4669 = vst [vmem:[#allocation5 + $0x8c8] sm:$0xff] %v4657
      %vm4670 = vcmask 965632
      %4671 = vst.msk [vmem:[#allocation5 + $0x8d0] sm:$0xff] %vm4670, %v4658
      %4672 = vst [vmem:[#allocation5 + $0x8e0] sm:$0xff] %v4659
      %4673 = vst [vmem:[#allocation5 + $0x8e8] sm:$0xff] %v4660
      %4674 = vst.msk [vmem:[#allocation5 + $0x8f0] sm:$0xff] %vm4670, %v4661
      %4675 = vrot.lane.b32.xlu0 %v3259, 17
      %v4676 = vpop.permute.xlu0 %4675
      %4677 = vrot.lane.b32.xlu0 %v3260, 17
      %v4678 = vpop.permute.xlu0 %4677
      %4679 = vrot.lane.b32.xlu0 %v3261, 17
      %v4680 = vpop.permute.xlu0 %4679
      %4681 = vrot.lane.b32.xlu0 %v3262, 17
      %v4682 = vpop.permute.xlu0 %4681
      %4683 = vrot.lane.b32.xlu0 %v3263, 17
      %v4684 = vpop.permute.xlu0 %4683
      %4685 = vrot.lane.b32.xlu0 %v3264, 17
      %v4686 = vpop.permute.xlu0 %4685
      %4687 = vrot.lane.b32.xlu0 %v3265, 17
      %v4688 = vpop.permute.xlu0 %4687
      %4689 = vrot.lane.b32.xlu0 %v3266, 17
      %v4690 = vpop.permute.xlu0 %4689
      %vm4691 = vcmask 138240
      %v4692 = vsel %vm4691, %v4676, %v4678
      %v4693 = vsel %vm4691, %v4678, %v4680
      %v4694 = vsel %vm4691, %v4680, %v4682
      %v4695 = vsel %vm4691, %v4684, %v4686
      %v4696 = vsel %vm4691, %v4686, %v4688
      %v4697 = vsel %vm4691, %v4688, %v4690
      %4704 = vst [vmem:[#allocation5 + $0x900] sm:$0xff] %v4692
      %4705 = vst [vmem:[#allocation5 + $0x908] sm:$0xff] %v4693
      %vm4706 = vcmask 957440
      %4707 = vst.msk [vmem:[#allocation5 + $0x910] sm:$0xff] %vm4706, %v4694
      %4708 = vst [vmem:[#allocation5 + $0x920] sm:$0xff] %v4695
      %4709 = vst [vmem:[#allocation5 + $0x928] sm:$0xff] %v4696
      %4710 = vst.msk [vmem:[#allocation5 + $0x930] sm:$0xff] %vm4706, %v4697
      %4711 = vrot.lane.b32.xlu0 %v3259, 16
      %v4712 = vpop.permute.xlu0 %4711
      %4713 = vrot.lane.b32.xlu0 %v3260, 16
      %v4714 = vpop.permute.xlu0 %4713
      %4715 = vrot.lane.b32.xlu0 %v3261, 16
      %v4716 = vpop.permute.xlu0 %4715
      %4717 = vrot.lane.b32.xlu0 %v3262, 16
      %v4718 = vpop.permute.xlu0 %4717
      %4719 = vrot.lane.b32.xlu0 %v3263, 16
      %v4720 = vpop.permute.xlu0 %4719
      %4721 = vrot.lane.b32.xlu0 %v3264, 16
      %v4722 = vpop.permute.xlu0 %4721
      %4723 = vrot.lane.b32.xlu0 %v3265, 16
      %v4724 = vpop.permute.xlu0 %4723
      %4725 = vrot.lane.b32.xlu0 %v3266, 16
      %v4726 = vpop.permute.xlu0 %4725
      %vm4727 = vcmask 130048
      %v4728 = vsel %vm4727, %v4712, %v4714
      %v4729 = vsel %vm4727, %v4714, %v4716
      %v4730 = vsel %vm4727, %v4716, %v4718
      %v4731 = vsel %vm4727, %v4720, %v4722
      %v4732 = vsel %vm4727, %v4722, %v4724
      %v4733 = vsel %vm4727, %v4724, %v4726
      %4740 = vst [vmem:[#allocation5 + $0x940] sm:$0xff] %v4728
      %4741 = vst [vmem:[#allocation5 + $0x948] sm:$0xff] %v4729
      %vm4742 = vcmask 949248
      %4743 = vst.msk [vmem:[#allocation5 + $0x950] sm:$0xff] %vm4742, %v4730
      %4744 = vst [vmem:[#allocation5 + $0x960] sm:$0xff] %v4731
      %4745 = vst [vmem:[#allocation5 + $0x968] sm:$0xff] %v4732
      %4746 = vst.msk [vmem:[#allocation5 + $0x970] sm:$0xff] %vm4742, %v4733
      %4747 = vrot.lane.b32.xlu0 %v3259, 15
      %v4748 = vpop.permute.xlu0 %4747
      %4749 = vrot.lane.b32.xlu0 %v3260, 15
      %v4750 = vpop.permute.xlu0 %4749
      %4751 = vrot.lane.b32.xlu0 %v3261, 15
      %v4752 = vpop.permute.xlu0 %4751
      %4753 = vrot.lane.b32.xlu0 %v3262, 15
      %v4754 = vpop.permute.xlu0 %4753
      %4755 = vrot.lane.b32.xlu0 %v3263, 15
      %v4756 = vpop.permute.xlu0 %4755
      %4757 = vrot.lane.b32.xlu0 %v3264, 15
      %v4758 = vpop.permute.xlu0 %4757
      %4759 = vrot.lane.b32.xlu0 %v3265, 15
      %v4760 = vpop.permute.xlu0 %4759
      %4761 = vrot.lane.b32.xlu0 %v3266, 15
      %v4762 = vpop.permute.xlu0 %4761
      %vm4763 = vcmask 121856
      %v4764 = vsel %vm4763, %v4748, %v4750
      %v4765 = vsel %vm4763, %v4750, %v4752
      %v4766 = vsel %vm4763, %v4752, %v4754
      %v4767 = vsel %vm4763, %v4756, %v4758
      %v4768 = vsel %vm4763, %v4758, %v4760
      %v4769 = vsel %vm4763, %v4760, %v4762
      %4776 = vst [vmem:[#allocation5 + $0x980] sm:$0xff] %v4764
      %4777 = vst [vmem:[#allocation5 + $0x988] sm:$0xff] %v4765
      %vm4778 = vcmask 941056
      %4779 = vst.msk [vmem:[#allocation5 + $0x990] sm:$0xff] %vm4778, %v4766
      %4780 = vst [vmem:[#allocation5 + $0x9a0] sm:$0xff] %v4767
      %4781 = vst [vmem:[#allocation5 + $0x9a8] sm:$0xff] %v4768
      %4782 = vst.msk [vmem:[#allocation5 + $0x9b0] sm:$0xff] %vm4778, %v4769
      %4783 = vrot.lane.b32.xlu0 %v3259, 14
      %v4784 = vpop.permute.xlu0 %4783
      %4785 = vrot.lane.b32.xlu0 %v3260, 14
      %v4786 = vpop.permute.xlu0 %4785
      %4787 = vrot.lane.b32.xlu0 %v3261, 14
      %v4788 = vpop.permute.xlu0 %4787
      %4789 = vrot.lane.b32.xlu0 %v3262, 14
      %v4790 = vpop.permute.xlu0 %4789
      %4791 = vrot.lane.b32.xlu0 %v3263, 14
      %v4792 = vpop.permute.xlu0 %4791
      %4793 = vrot.lane.b32.xlu0 %v3264, 14
      %v4794 = vpop.permute.xlu0 %4793
      %4795 = vrot.lane.b32.xlu0 %v3265, 14
      %v4796 = vpop.permute.xlu0 %4795
      %4797 = vrot.lane.b32.xlu0 %v3266, 14
      %v4798 = vpop.permute.xlu0 %4797
      %vm4799 = vcmask 113664
      %v4800 = vsel %vm4799, %v4784, %v4786
      %v4801 = vsel %vm4799, %v4786, %v4788
      %v4802 = vsel %vm4799, %v4788, %v4790
      %v4803 = vsel %vm4799, %v4792, %v4794
      %v4804 = vsel %vm4799, %v4794, %v4796
      %v4805 = vsel %vm4799, %v4796, %v4798
      %4812 = vst [vmem:[#allocation5 + $0x9c0] sm:$0xff] %v4800
      %4813 = vst [vmem:[#allocation5 + $0x9c8] sm:$0xff] %v4801
      %4814 = vst.msk [vmem:[#allocation5 + $0x9d0] sm:$0xff] %vm995, %v4802
      %4815 = vst [vmem:[#allocation5 + $0x9e0] sm:$0xff] %v4803
      %4816 = vst [vmem:[#allocation5 + $0x9e8] sm:$0xff] %v4804
      %4817 = vst.msk [vmem:[#allocation5 + $0x9f0] sm:$0xff] %vm995, %v4805
      %4818 = vrot.lane.b32.xlu0 %v3259, 13
      %v4819 = vpop.permute.xlu0 %4818
      %4820 = vrot.lane.b32.xlu0 %v3260, 13
      %v4821 = vpop.permute.xlu0 %4820
      %4822 = vrot.lane.b32.xlu0 %v3261, 13
      %v4823 = vpop.permute.xlu0 %4822
      %4824 = vrot.lane.b32.xlu0 %v3262, 13
      %v4825 = vpop.permute.xlu0 %4824
      %4826 = vrot.lane.b32.xlu0 %v3263, 13
      %v4827 = vpop.permute.xlu0 %4826
      %4828 = vrot.lane.b32.xlu0 %v3264, 13
      %v4829 = vpop.permute.xlu0 %4828
      %4830 = vrot.lane.b32.xlu0 %v3265, 13
      %v4831 = vpop.permute.xlu0 %4830
      %4832 = vrot.lane.b32.xlu0 %v3266, 13
      %v4833 = vpop.permute.xlu0 %4832
      %vm4834 = vcmask 105472
      %v4835 = vsel %vm4834, %v4819, %v4821
      %v4836 = vsel %vm4834, %v4821, %v4823
      %v4837 = vsel %vm4834, %v4823, %v4825
      %v4838 = vsel %vm4834, %v4827, %v4829
      %v4839 = vsel %vm4834, %v4829, %v4831
      %v4840 = vsel %vm4834, %v4831, %v4833
      %4847 = vst [vmem:[#allocation5 + $0xa00] sm:$0xff] %v4835
      %4848 = vst [vmem:[#allocation5 + $0xa08] sm:$0xff] %v4836
      %vm4849 = vcmask 924672
      %4850 = vst.msk [vmem:[#allocation5 + $0xa10] sm:$0xff] %vm4849, %v4837
      %4851 = vst [vmem:[#allocation5 + $0xa20] sm:$0xff] %v4838
      %4852 = vst [vmem:[#allocation5 + $0xa28] sm:$0xff] %v4839
      %4853 = vst.msk [vmem:[#allocation5 + $0xa30] sm:$0xff] %vm4849, %v4840
      %4854 = vrot.lane.b32.xlu0 %v3259, 12
      %v4855 = vpop.permute.xlu0 %4854
      %4856 = vrot.lane.b32.xlu0 %v3260, 12
      %v4857 = vpop.permute.xlu0 %4856
      %4858 = vrot.lane.b32.xlu0 %v3261, 12
      %v4859 = vpop.permute.xlu0 %4858
      %4860 = vrot.lane.b32.xlu0 %v3262, 12
      %v4861 = vpop.permute.xlu0 %4860
      %4862 = vrot.lane.b32.xlu0 %v3263, 12
      %v4863 = vpop.permute.xlu0 %4862
      %4864 = vrot.lane.b32.xlu0 %v3264, 12
      %v4865 = vpop.permute.xlu0 %4864
      %4866 = vrot.lane.b32.xlu0 %v3265, 12
      %v4867 = vpop.permute.xlu0 %4866
      %4868 = vrot.lane.b32.xlu0 %v3266, 12
      %v4869 = vpop.permute.xlu0 %4868
      %vm4870 = vcmask 97280
      %v4871 = vsel %vm4870, %v4855, %v4857
      %v4872 = vsel %vm4870, %v4857, %v4859
      %v4873 = vsel %vm4870, %v4859, %v4861
      %v4874 = vsel %vm4870, %v4863, %v4865
      %v4875 = vsel %vm4870, %v4865, %v4867
      %v4876 = vsel %vm4870, %v4867, %v4869
      %4883 = vst [vmem:[#allocation5 + $0xa40] sm:$0xff] %v4871
      %4884 = vst [vmem:[#allocation5 + $0xa48] sm:$0xff] %v4872
      %4885 = vst.msk [vmem:[#allocation5 + $0xa50] sm:$0xff] %vm1147, %v4873
      %4886 = vst [vmem:[#allocation5 + $0xa60] sm:$0xff] %v4874
      %4887 = vst [vmem:[#allocation5 + $0xa68] sm:$0xff] %v4875
      %4888 = vst.msk [vmem:[#allocation5 + $0xa70] sm:$0xff] %vm1147, %v4876
      %4889 = vst [vmem:[#allocation5 + $0xa80] sm:$0xff] %v3421
      %4890 = vst [vmem:[#allocation5 + $0xa88] sm:$0xff] %v3422
      %4891 = vst.msk [vmem:[#allocation5 + $0xa90] sm:$0xff] %vm1142, %v3410
      %4892 = vst [vmem:[#allocation5 + $0xaa0] sm:$0xff] %v3424
      %4893 = vst [vmem:[#allocation5 + $0xaa8] sm:$0xff] %v3425
      %4894 = vst.msk [vmem:[#allocation5 + $0xab0] sm:$0xff] %vm1142, %v3418
      %4895 = vst [vmem:[#allocation5 + $0xac0] sm:$0xff] %v3460
      %4896 = vst [vmem:[#allocation5 + $0xac8] sm:$0xff] %v3461
      %4897 = vst.msk [vmem:[#allocation5 + $0xad0] sm:$0xff] %vm3476, %v3449
      %4898 = vst [vmem:[#allocation5 + $0xae0] sm:$0xff] %v3463
      %4899 = vst [vmem:[#allocation5 + $0xae8] sm:$0xff] %v3464
      %4900 = vst.msk [vmem:[#allocation5 + $0xaf0] sm:$0xff] %vm3476, %v3457
      %4901 = vst [vmem:[#allocation5 + $0xb00] sm:$0xff] %v3500
      %4902 = vst [vmem:[#allocation5 + $0xb08] sm:$0xff] %v3501
      %4903 = vst.msk [vmem:[#allocation5 + $0xb10] sm:$0xff] %vm3516, %v3489
      %4904 = vst [vmem:[#allocation5 + $0xb20] sm:$0xff] %v3503
      %4905 = vst [vmem:[#allocation5 + $0xb28] sm:$0xff] %v3504
      %4906 = vst.msk [vmem:[#allocation5 + $0xb30] sm:$0xff] %vm3516, %v3497
      %4907 = vrot.lane.b32.xlu0 %v3260, 121
      %v4908 = vpop.permute.xlu0 %4907
      %4909 = vrot.lane.b32.xlu0 %v3261, 121
      %v4910 = vpop.permute.xlu0 %4909
      %4911 = vrot.lane.b32.xlu0 %v3262, 121
      %v4912 = vpop.permute.xlu0 %4911
      %4913 = vrot.lane.b32.xlu0 %v3264, 121
      %v4914 = vpop.permute.xlu0 %4913
      %4915 = vrot.lane.b32.xlu0 %v3265, 121
      %v4916 = vpop.permute.xlu0 %4915
      %4917 = vrot.lane.b32.xlu0 %v3266, 121
      %v4918 = vpop.permute.xlu0 %4917
      %vm4919 = vcmask 990208
      %v4920 = vsel %vm4919, %v4908, %v4910
      %v4921 = vsel %vm4919, %v4910, %v4912
      %v4922 = vsel %vm4919, %v4914, %v4916
      %v4923 = vsel %vm4919, %v4916, %v4918
      %4930 = vst [vmem:[#allocation5 + $0xb40] sm:$0xff] %v4920
      %4931 = vst [vmem:[#allocation5 + $0xb48] sm:$0xff] %v4921
      %vm4932 = vcmask 760832
      %4933 = vst.msk [vmem:[#allocation5 + $0xb50] sm:$0xff] %vm4932, %v4912
      %4934 = vst [vmem:[#allocation5 + $0xb60] sm:$0xff] %v4922
      %4935 = vst [vmem:[#allocation5 + $0xb68] sm:$0xff] %v4923
      %4936 = vst.msk [vmem:[#allocation5 + $0xb70] sm:$0xff] %vm4932, %v4918
      %4937 = vrot.lane.b32.xlu0 %v3260, 120
      %v4938 = vpop.permute.xlu0 %4937
      %4939 = vrot.lane.b32.xlu0 %v3261, 120
      %v4940 = vpop.permute.xlu0 %4939
      %4941 = vrot.lane.b32.xlu0 %v3262, 120
      %v4942 = vpop.permute.xlu0 %4941
      %4943 = vrot.lane.b32.xlu0 %v3264, 120
      %v4944 = vpop.permute.xlu0 %4943
      %4945 = vrot.lane.b32.xlu0 %v3265, 120
      %v4946 = vpop.permute.xlu0 %4945
      %4947 = vrot.lane.b32.xlu0 %v3266, 120
      %v4948 = vpop.permute.xlu0 %4947
      %vm4949 = vcmask 982016
      %v4950 = vsel %vm4949, %v4938, %v4940
      %v4951 = vsel %vm4949, %v4940, %v4942
      %v4952 = vsel %vm4949, %v4944, %v4946
      %v4953 = vsel %vm4949, %v4946, %v4948
      %4960 = vst [vmem:[#allocation5 + $0xb80] sm:$0xff] %v4950
      %4961 = vst [vmem:[#allocation5 + $0xb88] sm:$0xff] %v4951
      %4962 = vst.msk [vmem:[#allocation5 + $0xb90] sm:$0xff] %vm617, %v4942
      %4963 = vst [vmem:[#allocation5 + $0xba0] sm:$0xff] %v4952
      %4964 = vst [vmem:[#allocation5 + $0xba8] sm:$0xff] %v4953
      %4965 = vst.msk [vmem:[#allocation5 + $0xbb0] sm:$0xff] %vm617, %v4948
      %4966 = vrot.lane.b32.xlu0 %v3260, 119
      %v4967 = vpop.permute.xlu0 %4966
      %4968 = vrot.lane.b32.xlu0 %v3261, 119
      %v4969 = vpop.permute.xlu0 %4968
      %4970 = vrot.lane.b32.xlu0 %v3262, 119
      %v4971 = vpop.permute.xlu0 %4970
      %4972 = vrot.lane.b32.xlu0 %v3264, 119
      %v4973 = vpop.permute.xlu0 %4972
      %4974 = vrot.lane.b32.xlu0 %v3265, 119
      %v4975 = vpop.permute.xlu0 %4974
      %4976 = vrot.lane.b32.xlu0 %v3266, 119
      %v4977 = vpop.permute.xlu0 %4976
      %vm4978 = vcmask 973824
      %v4979 = vsel %vm4978, %v4967, %v4969
      %v4980 = vsel %vm4978, %v4969, %v4971
      %v4981 = vsel %vm4978, %v4973, %v4975
      %v4982 = vsel %vm4978, %v4975, %v4977
      %4989 = vst [vmem:[#allocation5 + $0xbc0] sm:$0xff] %v4979
      %4990 = vst [vmem:[#allocation5 + $0xbc8] sm:$0xff] %v4980
      %4991 = vst.msk [vmem:[#allocation5 + $0xbd0] sm:$0xff] %vm633, %v4971
      %4992 = vst [vmem:[#allocation5 + $0xbe0] sm:$0xff] %v4981
      %4993 = vst [vmem:[#allocation5 + $0xbe8] sm:$0xff] %v4982
      %4994 = vst.msk [vmem:[#allocation5 + $0xbf0] sm:$0xff] %vm633, %v4977
      %4995 = vrot.lane.b32.xlu0 %v3260, 118
      %v4996 = vpop.permute.xlu0 %4995
      %4997 = vrot.lane.b32.xlu0 %v3261, 118
      %v4998 = vpop.permute.xlu0 %4997
      %4999 = vrot.lane.b32.xlu0 %v3262, 118
      %v5000 = vpop.permute.xlu0 %4999
      %5001 = vrot.lane.b32.xlu0 %v3264, 118
      %v5002 = vpop.permute.xlu0 %5001
      %5003 = vrot.lane.b32.xlu0 %v3265, 118
      %v5004 = vpop.permute.xlu0 %5003
      %5005 = vrot.lane.b32.xlu0 %v3266, 118
      %v5006 = vpop.permute.xlu0 %5005
      %vm5007 = vcmask 965632
      %v5008 = vsel %vm5007, %v4996, %v4998
      %v5009 = vsel %vm5007, %v4998, %v5000
      %v5010 = vsel %vm5007, %v5002, %v5004
      %v5011 = vsel %vm5007, %v5004, %v5006
      %5018 = vst [vmem:[#allocation5 + $0xc00] sm:$0xff] %v5008
      %5019 = vst [vmem:[#allocation5 + $0xc08] sm:$0xff] %v5009
      %5020 = vst.msk [vmem:[#allocation5 + $0xc10] sm:$0xff] %vm649, %v5000
      %5021 = vst [vmem:[#allocation5 + $0xc20] sm:$0xff] %v5010
      %5022 = vst [vmem:[#allocation5 + $0xc28] sm:$0xff] %v5011
      %5023 = vst.msk [vmem:[#allocation5 + $0xc30] sm:$0xff] %vm649, %v5006
      %v5024 = vld [vmem:[%s3] sm:$0xff]
      %v5025 = vld [vmem:[%s3 + $0x8] sm:$0xff]
      %v5026 = vld [vmem:[%s3 + $0x10] sm:$0xff]
      %v5027 = vld [vmem:[%s3 + $0x18] sm:$0x3]
      %v5028 = vld [vmem:[#allocation5] sm:$0xff]
      %v5029 = vld [vmem:[#allocation5 + $0x8] sm:$0xff]
      %v5030 = vld [vmem:[#allocation5 + $0x10] sm:$0xff]
      %v5031 = vld [vmem:[#allocation5 + $0x18] sm:$0xff]
      %v5032 = vld [vmem:[#allocation5 + $0x20] sm:$0xff]
      %v5033 = vld [vmem:[#allocation5 + $0x28] sm:$0xff]
      %v5034 = vld [vmem:[#allocation5 + $0x30] sm:$0xff]
      %v5035 = vld [vmem:[#allocation5 + $0x38] sm:$0xff]
      %v5036 = vld [vmem:[#allocation5 + $0x40] sm:$0xff]
      %v5037 = vld [vmem:[#allocation5 + $0x48] sm:$0xff]
      %v5038 = vld [vmem:[#allocation5 + $0x50] sm:$0xff]
      %v5039 = vld [vmem:[#allocation5 + $0x58] sm:$0xff]
      %v5040 = vld [vmem:[#allocation5 + $0x60] sm:$0xff]
      %v5041 = vld [vmem:[#allocation5 + $0x68] sm:$0xff]
      %v5042 = vld [vmem:[#allocation5 + $0x70] sm:$0xff]
      %v5043 = vld [vmem:[#allocation5 + $0x78] sm:$0xff]
      %v5044 = vld [vmem:[#allocation5 + $0x80] sm:$0xff]
      %v5045 = vld [vmem:[#allocation5 + $0x88] sm:$0xff]
      %v5046 = vld [vmem:[#allocation5 + $0x90] sm:$0xff]
      %v5047 = vld [vmem:[#allocation5 + $0x98] sm:$0xff]
      %v5048 = vld [vmem:[#allocation5 + $0xa0] sm:$0xff]
      %v5049 = vld [vmem:[#allocation5 + $0xa8] sm:$0xff]
      %v5050 = vld [vmem:[#allocation5 + $0xb0] sm:$0xff]
      %v5051 = vld [vmem:[#allocation5 + $0xb8] sm:$0xff]
      %v5052 = vld [vmem:[#allocation5 + $0xc0] sm:$0xff]
      %v5053 = vld [vmem:[#allocation5 + $0xc8] sm:$0xff]
      %v5054 = vld [vmem:[#allocation5 + $0xd0] sm:$0xff]
      %v5055 = vld [vmem:[#allocation5 + $0xd8] sm:$0xff]
      %v5056 = vld [vmem:[#allocation5 + $0xe0] sm:$0xff]
      %v5057 = vld [vmem:[#allocation5 + $0xe8] sm:$0xff]
      %v5058 = vld [vmem:[#allocation5 + $0xf0] sm:$0xff]
      %v5059 = vld [vmem:[#allocation5 + $0xf8] sm:$0xff]
      %v5060 = vld [vmem:[#allocation5 + $0x100] sm:$0xff]
      %v5061 = vld [vmem:[#allocation5 + $0x108] sm:$0xff]
      %v5062 = vld [vmem:[#allocation5 + $0x110] sm:$0xff]
      %v5063 = vld [vmem:[#allocation5 + $0x118] sm:$0xff]
      %v5064 = vld [vmem:[#allocation5 + $0x120] sm:$0xff]
      %v5065 = vld [vmem:[#allocation5 + $0x128] sm:$0xff]
      %v5066 = vld [vmem:[#allocation5 + $0x130] sm:$0xff]
      %v5067 = vld [vmem:[#allocation5 + $0x138] sm:$0xff]
      %v5068 = vld [vmem:[#allocation5 + $0x140] sm:$0xff]
      %v5069 = vld [vmem:[#allocation5 + $0x148] sm:$0xff]
      %v5070 = vld [vmem:[#allocation5 + $0x150] sm:$0xff]
      %v5071 = vld [vmem:[#allocation5 + $0x158] sm:$0xff]
      %v5072 = vld [vmem:[#allocation5 + $0x160] sm:$0xff]
      %v5073 = vld [vmem:[#allocation5 + $0x168] sm:$0xff]
      %v5074 = vld [vmem:[#allocation5 + $0x170] sm:$0xff]
      %v5075 = vld [vmem:[#allocation5 + $0x178] sm:$0xff]
      %v5076 = vld [vmem:[#allocation5 + $0x180] sm:$0xff]
      %v5077 = vld [vmem:[#allocation5 + $0x188] sm:$0xff]
      %v5078 = vld [vmem:[#allocation5 + $0x190] sm:$0xff]
      %v5079 = vld [vmem:[#allocation5 + $0x198] sm:$0xff]
      %v5080 = vld [vmem:[#allocation5 + $0x1a0] sm:$0xff]
      %v5081 = vld [vmem:[#allocation5 + $0x1a8] sm:$0xff]
      %v5082 = vld [vmem:[#allocation5 + $0x1b0] sm:$0xff]
      %v5083 = vld [vmem:[#allocation5 + $0x1b8] sm:$0xff]
      %v5084 = vld [vmem:[#allocation5 + $0x1c0] sm:$0xff]
      %v5085 = vld [vmem:[#allocation5 + $0x1c8] sm:$0xff]
      %v5086 = vld [vmem:[#allocation5 + $0x1d0] sm:$0xff]
      %v5087 = vld [vmem:[#allocation5 + $0x1d8] sm:$0xff]
      %v5088 = vld [vmem:[#allocation5 + $0x1e0] sm:$0xff]
      %v5089 = vld [vmem:[#allocation5 + $0x1e8] sm:$0xff]
      %v5090 = vld [vmem:[#allocation5 + $0x1f0] sm:$0xff]
      %v5091 = vld [vmem:[#allocation5 + $0x1f8] sm:$0xff]
      %v5092 = vld [vmem:[#allocation5 + $0x200] sm:$0xff]
      %v5093 = vld [vmem:[#allocation5 + $0x208] sm:$0xff]
      %v5094 = vld [vmem:[#allocation5 + $0x210] sm:$0xff]
      %v5095 = vld [vmem:[#allocation5 + $0x218] sm:$0xff]
      %v5096 = vld [vmem:[#allocation5 + $0x220] sm:$0xff]
      %v5097 = vld [vmem:[#allocation5 + $0x228] sm:$0xff]
      %v5098 = vld [vmem:[#allocation5 + $0x230] sm:$0xff]
      %v5099 = vld [vmem:[#allocation5 + $0x238] sm:$0xff]
      %v5100 = vld [vmem:[#allocation5 + $0x240] sm:$0xff]
      %v5101 = vld [vmem:[#allocation5 + $0x248] sm:$0xff]
      %v5102 = vld [vmem:[#allocation5 + $0x250] sm:$0xff]
      %v5103 = vld [vmem:[#allocation5 + $0x258] sm:$0xff]
      %v5104 = vld [vmem:[#allocation5 + $0x260] sm:$0xff]
      %v5105 = vld [vmem:[#allocation5 + $0x268] sm:$0xff]
      %v5106 = vld [vmem:[#allocation5 + $0x270] sm:$0xff]
      %v5107 = vld [vmem:[#allocation5 + $0x278] sm:$0xff]
      %v5108 = vld [vmem:[#allocation5 + $0x280] sm:$0xff]
      %v5109 = vld [vmem:[#allocation5 + $0x288] sm:$0xff]
      %v5110 = vld [vmem:[#allocation5 + $0x290] sm:$0xff]
      %v5111 = vld [vmem:[#allocation5 + $0x298] sm:$0xff]
      %v5112 = vld [vmem:[#allocation5 + $0x2a0] sm:$0xff]
      %v5113 = vld [vmem:[#allocation5 + $0x2a8] sm:$0xff]
      %v5114 = vld [vmem:[#allocation5 + $0x2b0] sm:$0xff]
      %v5115 = vld [vmem:[#allocation5 + $0x2b8] sm:$0xff]
      %v5116 = vld [vmem:[#allocation5 + $0x2c0] sm:$0xff]
      %v5117 = vld [vmem:[#allocation5 + $0x2c8] sm:$0xff]
      %v5118 = vld [vmem:[#allocation5 + $0x2d0] sm:$0xff]
      %v5119 = vld [vmem:[#allocation5 + $0x2d8] sm:$0xff]
      %v5120 = vld [vmem:[#allocation5 + $0x2e0] sm:$0xff]
      %v5121 = vld [vmem:[#allocation5 + $0x2e8] sm:$0xff]
      %v5122 = vld [vmem:[#allocation5 + $0x2f0] sm:$0xff]
      %v5123 = vld [vmem:[#allocation5 + $0x2f8] sm:$0xff]
      %v5124 = vld [vmem:[#allocation5 + $0x300] sm:$0xff]
      %v5125 = vld [vmem:[#allocation5 + $0x308] sm:$0xff]
      %v5126 = vld [vmem:[#allocation5 + $0x310] sm:$0xff]
      %v5127 = vld [vmem:[#allocation5 + $0x318] sm:$0xff]
      %v5128 = vld [vmem:[#allocation5 + $0x320] sm:$0xff]
      %v5129 = vld [vmem:[#allocation5 + $0x328] sm:$0xff]
      %v5130 = vld [vmem:[#allocation5 + $0x330] sm:$0xff]
      %v5131 = vld [vmem:[#allocation5 + $0x338] sm:$0xff]
      %v5132 = vld [vmem:[#allocation5 + $0x340] sm:$0xff]
      %v5133 = vld [vmem:[#allocation5 + $0x348] sm:$0xff]
      %v5134 = vld [vmem:[#allocation5 + $0x350] sm:$0xff]
      %v5135 = vld [vmem:[#allocation5 + $0x358] sm:$0xff]
      %v5136 = vld [vmem:[#allocation5 + $0x360] sm:$0xff]
      %v5137 = vld [vmem:[#allocation5 + $0x368] sm:$0xff]
      %v5138 = vld [vmem:[#allocation5 + $0x370] sm:$0xff]
      %v5139 = vld [vmem:[#allocation5 + $0x378] sm:$0xff]
      %v5140 = vld [vmem:[#allocation5 + $0x380] sm:$0xff]
      %v5141 = vld [vmem:[#allocation5 + $0x388] sm:$0xff]
      %v5142 = vld [vmem:[#allocation5 + $0x390] sm:$0xff]
      %v5143 = vld [vmem:[#allocation5 + $0x398] sm:$0xff]
      %v5144 = vld [vmem:[#allocation5 + $0x3a0] sm:$0xff]
      %v5145 = vld [vmem:[#allocation5 + $0x3a8] sm:$0xff]
      %v5146 = vld [vmem:[#allocation5 + $0x3b0] sm:$0xff]
      %v5147 = vld [vmem:[#allocation5 + $0x3b8] sm:$0xff]
      %v5148 = vld [vmem:[#allocation5 + $0x3c0] sm:$0xff]
      %v5149 = vld [vmem:[#allocation5 + $0x3c8] sm:$0xff]
      %v5150 = vld [vmem:[#allocation5 + $0x3d0] sm:$0xff]
      %v5151 = vld [vmem:[#allocation5 + $0x3d8] sm:$0xff]
      %v5152 = vld [vmem:[#allocation5 + $0x3e0] sm:$0xff]
      %v5153 = vld [vmem:[#allocation5 + $0x3e8] sm:$0xff]
      %v5154 = vld [vmem:[#allocation5 + $0x3f0] sm:$0xff]
      %v5155 = vld [vmem:[#allocation5 + $0x3f8] sm:$0xff]
      %v5156 = vld [vmem:[#allocation5 + $0x400] sm:$0xff]
      %v5157 = vld [vmem:[#allocation5 + $0x408] sm:$0xff]
      %v5158 = vld [vmem:[#allocation5 + $0x410] sm:$0xff]
      %v5159 = vld [vmem:[#allocation5 + $0x418] sm:$0xff]
      %v5160 = vld [vmem:[#allocation5 + $0x420] sm:$0xff]
      %v5161 = vld [vmem:[#allocation5 + $0x428] sm:$0xff]
      %v5162 = vld [vmem:[#allocation5 + $0x430] sm:$0xff]
      %v5163 = vld [vmem:[#allocation5 + $0x438] sm:$0xff]
      %v5164 = vld [vmem:[#allocation5 + $0x440] sm:$0xff]
      %v5165 = vld [vmem:[#allocation5 + $0x448] sm:$0xff]
      %v5166 = vld [vmem:[#allocation5 + $0x450] sm:$0xff]
      %v5167 = vld [vmem:[#allocation5 + $0x458] sm:$0xff]
      %v5168 = vld [vmem:[#allocation5 + $0x460] sm:$0xff]
      %v5169 = vld [vmem:[#allocation5 + $0x468] sm:$0xff]
      %v5170 = vld [vmem:[#allocation5 + $0x470] sm:$0xff]
      %v5171 = vld [vmem:[#allocation5 + $0x478] sm:$0xff]
      %v5172 = vld [vmem:[#allocation5 + $0x480] sm:$0xff]
      %v5173 = vld [vmem:[#allocation5 + $0x488] sm:$0xff]
      %v5174 = vld [vmem:[#allocation5 + $0x490] sm:$0xff]
      %v5175 = vld [vmem:[#allocation5 + $0x498] sm:$0xff]
      %v5176 = vld [vmem:[#allocation5 + $0x4a0] sm:$0xff]
      %v5177 = vld [vmem:[#allocation5 + $0x4a8] sm:$0xff]
      %v5178 = vld [vmem:[#allocation5 + $0x4b0] sm:$0xff]
      %v5179 = vld [vmem:[#allocation5 + $0x4b8] sm:$0xff]
      %v5180 = vld [vmem:[#allocation5 + $0x4c0] sm:$0xff]
      %v5181 = vld [vmem:[#allocation5 + $0x4c8] sm:$0xff]
      %v5182 = vld [vmem:[#allocation5 + $0x4d0] sm:$0xff]
      %v5183 = vld [vmem:[#allocation5 + $0x4d8] sm:$0xff]
      %v5184 = vld [vmem:[#allocation5 + $0x4e0] sm:$0xff]
      %v5185 = vld [vmem:[#allocation5 + $0x4e8] sm:$0xff]
      %v5186 = vld [vmem:[#allocation5 + $0x4f0] sm:$0xff]
      %v5187 = vld [vmem:[#allocation5 + $0x4f8] sm:$0xff]
      %v5188 = vld [vmem:[#allocation5 + $0x500] sm:$0xff]
      %v5189 = vld [vmem:[#allocation5 + $0x508] sm:$0xff]
      %v5190 = vld [vmem:[#allocation5 + $0x510] sm:$0xff]
      %v5191 = vld [vmem:[#allocation5 + $0x518] sm:$0xff]
      %v5192 = vld [vmem:[#allocation5 + $0x520] sm:$0xff]
      %v5193 = vld [vmem:[#allocation5 + $0x528] sm:$0xff]
      %v5194 = vld [vmem:[#allocation5 + $0x530] sm:$0xff]
      %v5195 = vld [vmem:[#allocation5 + $0x538] sm:$0xff]
      %v5196 = vld [vmem:[#allocation5 + $0x540] sm:$0xff]
      %v5197 = vld [vmem:[#allocation5 + $0x548] sm:$0xff]
      %v5198 = vld [vmem:[#allocation5 + $0x550] sm:$0xff]
      %v5199 = vld [vmem:[#allocation5 + $0x558] sm:$0xff]
      %v5200 = vld [vmem:[#allocation5 + $0x560] sm:$0xff]
      %v5201 = vld [vmem:[#allocation5 + $0x568] sm:$0xff]
      %v5202 = vld [vmem:[#allocation5 + $0x570] sm:$0xff]
      %v5203 = vld [vmem:[#allocation5 + $0x578] sm:$0xff]
      %v5204 = vld [vmem:[#allocation5 + $0x580] sm:$0xff]
      %v5205 = vld [vmem:[#allocation5 + $0x588] sm:$0xff]
      %v5206 = vld [vmem:[#allocation5 + $0x590] sm:$0xff]
      %v5207 = vld [vmem:[#allocation5 + $0x598] sm:$0xff]
      %v5208 = vld [vmem:[#allocation5 + $0x5a0] sm:$0xff]
      %v5209 = vld [vmem:[#allocation5 + $0x5a8] sm:$0xff]
      %v5210 = vld [vmem:[#allocation5 + $0x5b0] sm:$0xff]
      %v5211 = vld [vmem:[#allocation5 + $0x5b8] sm:$0xff]
      %v5212 = vld [vmem:[#allocation5 + $0x5c0] sm:$0xff]
      %v5213 = vld [vmem:[#allocation5 + $0x5c8] sm:$0xff]
      %v5214 = vld [vmem:[#allocation5 + $0x5d0] sm:$0xff]
      %v5215 = vld [vmem:[#allocation5 + $0x5d8] sm:$0xff]
      %v5216 = vld [vmem:[#allocation5 + $0x5e0] sm:$0xff]
      %v5217 = vld [vmem:[#allocation5 + $0x5e8] sm:$0xff]
      %v5218 = vld [vmem:[#allocation5 + $0x5f0] sm:$0xff]
      %v5219 = vld [vmem:[#allocation5 + $0x5f8] sm:$0xff]
      %v5220 = vld [vmem:[#allocation5 + $0x600] sm:$0xff]
      %v5221 = vld [vmem:[#allocation5 + $0x608] sm:$0xff]
      %v5222 = vld [vmem:[#allocation5 + $0x610] sm:$0xff]
      %v5223 = vld [vmem:[#allocation5 + $0x618] sm:$0xff]
      %v5224 = vld [vmem:[#allocation5 + $0x620] sm:$0xff]
      %v5225 = vld [vmem:[#allocation5 + $0x628] sm:$0xff]
      %v5226 = vld [vmem:[#allocation5 + $0x630] sm:$0xff]
      %v5227 = vld [vmem:[#allocation5 + $0x638] sm:$0xff]
      %v5228 = vld [vmem:[#allocation5 + $0x640] sm:$0xff]
      %v5229 = vld [vmem:[#allocation5 + $0x648] sm:$0xff]
      %v5230 = vld [vmem:[#allocation5 + $0x650] sm:$0xff]
      %v5231 = vld [vmem:[#allocation5 + $0x658] sm:$0xff]
      %v5232 = vld [vmem:[#allocation5 + $0x660] sm:$0xff]
      %v5233 = vld [vmem:[#allocation5 + $0x668] sm:$0xff]
      %v5234 = vld [vmem:[#allocation5 + $0x670] sm:$0xff]
      %v5235 = vld [vmem:[#allocation5 + $0x678] sm:$0xff]
      %v5236 = vld [vmem:[#allocation5 + $0x680] sm:$0xff]
      %v5237 = vld [vmem:[#allocation5 + $0x688] sm:$0xff]
      %v5238 = vld [vmem:[#allocation5 + $0x690] sm:$0xff]
      %v5239 = vld [vmem:[#allocation5 + $0x698] sm:$0xff]
      %v5240 = vld [vmem:[#allocation5 + $0x6a0] sm:$0xff]
      %v5241 = vld [vmem:[#allocation5 + $0x6a8] sm:$0xff]
      %v5242 = vld [vmem:[#allocation5 + $0x6b0] sm:$0xff]
      %v5243 = vld [vmem:[#allocation5 + $0x6b8] sm:$0xff]
      %v5244 = vld [vmem:[#allocation5 + $0x6c0] sm:$0xff]
      %v5245 = vld [vmem:[#allocation5 + $0x6c8] sm:$0xff]
      %v5246 = vld [vmem:[#allocation5 + $0x6d0] sm:$0xff]
      %v5247 = vld [vmem:[#allocation5 + $0x6d8] sm:$0xff]
      %v5248 = vld [vmem:[#allocation5 + $0x6e0] sm:$0xff]
      %v5249 = vld [vmem:[#allocation5 + $0x6e8] sm:$0xff]
      %v5250 = vld [vmem:[#allocation5 + $0x6f0] sm:$0xff]
      %v5251 = vld [vmem:[#allocation5 + $0x6f8] sm:$0xff]
      %v5252 = vld [vmem:[#allocation5 + $0x700] sm:$0xff]
      %v5253 = vld [vmem:[#allocation5 + $0x708] sm:$0xff]
      %v5254 = vld [vmem:[#allocation5 + $0x710] sm:$0xff]
      %v5255 = vld [vmem:[#allocation5 + $0x718] sm:$0xff]
      %v5256 = vld [vmem:[#allocation5 + $0x720] sm:$0xff]
      %v5257 = vld [vmem:[#allocation5 + $0x728] sm:$0xff]
      %v5258 = vld [vmem:[#allocation5 + $0x730] sm:$0xff]
      %v5259 = vld [vmem:[#allocation5 + $0x738] sm:$0xff]
      %v5260 = vld [vmem:[#allocation5 + $0x740] sm:$0xff]
      %v5261 = vld [vmem:[#allocation5 + $0x748] sm:$0xff]
      %v5262 = vld [vmem:[#allocation5 + $0x750] sm:$0xff]
      %v5263 = vld [vmem:[#allocation5 + $0x758] sm:$0xff]
      %v5264 = vld [vmem:[#allocation5 + $0x760] sm:$0xff]
      %v5265 = vld [vmem:[#allocation5 + $0x768] sm:$0xff]
      %v5266 = vld [vmem:[#allocation5 + $0x770] sm:$0xff]
      %v5267 = vld [vmem:[#allocation5 + $0x778] sm:$0xff]
      %v5268 = vld [vmem:[#allocation5 + $0x780] sm:$0xff]
      %v5269 = vld [vmem:[#allocation5 + $0x788] sm:$0xff]
      %v5270 = vld [vmem:[#allocation5 + $0x790] sm:$0xff]
      %v5271 = vld [vmem:[#allocation5 + $0x798] sm:$0xff]
      %v5272 = vld [vmem:[#allocation5 + $0x7a0] sm:$0xff]
      %v5273 = vld [vmem:[#allocation5 + $0x7a8] sm:$0xff]
      %v5274 = vld [vmem:[#allocation5 + $0x7b0] sm:$0xff]
      %v5275 = vld [vmem:[#allocation5 + $0x7b8] sm:$0xff]
      %v5276 = vld [vmem:[#allocation5 + $0x7c0] sm:$0xff]
      %v5277 = vld [vmem:[#allocation5 + $0x7c8] sm:$0xff]
      %v5278 = vld [vmem:[#allocation5 + $0x7d0] sm:$0xff]
      %v5279 = vld [vmem:[#allocation5 + $0x7d8] sm:$0xff]
      %v5280 = vld [vmem:[#allocation5 + $0x7e0] sm:$0xff]
      %v5281 = vld [vmem:[#allocation5 + $0x7e8] sm:$0xff]
      %v5282 = vld [vmem:[#allocation5 + $0x7f0] sm:$0xff]
      %v5283 = vld [vmem:[#allocation5 + $0x7f8] sm:$0xff]
      %v5284 = vld [vmem:[#allocation5 + $0x800] sm:$0xff]
      %v5285 = vld [vmem:[#allocation5 + $0x808] sm:$0xff]
      %v5286 = vld [vmem:[#allocation5 + $0x810] sm:$0xff]
      %v5287 = vld [vmem:[#allocation5 + $0x818] sm:$0xff]
      %v5288 = vld [vmem:[#allocation5 + $0x820] sm:$0xff]
      %v5289 = vld [vmem:[#allocation5 + $0x828] sm:$0xff]
      %v5290 = vld [vmem:[#allocation5 + $0x830] sm:$0xff]
      %v5291 = vld [vmem:[#allocation5 + $0x838] sm:$0xff]
      %v5292 = vld [vmem:[#allocation5 + $0x840] sm:$0xff]
      %v5293 = vld [vmem:[#allocation5 + $0x848] sm:$0xff]
      %v5294 = vld [vmem:[#allocation5 + $0x850] sm:$0xff]
      %v5295 = vld [vmem:[#allocation5 + $0x858] sm:$0xff]
      %v5296 = vld [vmem:[#allocation5 + $0x860] sm:$0xff]
      %v5297 = vld [vmem:[#allocation5 + $0x868] sm:$0xff]
      %v5298 = vld [vmem:[#allocation5 + $0x870] sm:$0xff]
      %v5299 = vld [vmem:[#allocation5 + $0x878] sm:$0xff]
      %v5300 = vld [vmem:[#allocation5 + $0x880] sm:$0xff]
      %v5301 = vld [vmem:[#allocation5 + $0x888] sm:$0xff]
      %v5302 = vld [vmem:[#allocation5 + $0x890] sm:$0xff]
      %v5303 = vld [vmem:[#allocation5 + $0x898] sm:$0xff]
      %v5304 = vld [vmem:[#allocation5 + $0x8a0] sm:$0xff]
      %v5305 = vld [vmem:[#allocation5 + $0x8a8] sm:$0xff]
      %v5306 = vld [vmem:[#allocation5 + $0x8b0] sm:$0xff]
      %v5307 = vld [vmem:[#allocation5 + $0x8b8] sm:$0xff]
      %v5308 = vld [vmem:[#allocation5 + $0x8c0] sm:$0xff]
      %v5309 = vld [vmem:[#allocation5 + $0x8c8] sm:$0xff]
      %v5310 = vld [vmem:[#allocation5 + $0x8d0] sm:$0xff]
      %v5311 = vld [vmem:[#allocation5 + $0x8d8] sm:$0xff]
      %v5312 = vld [vmem:[#allocation5 + $0x8e0] sm:$0xff]
      %v5313 = vld [vmem:[#allocation5 + $0x8e8] sm:$0xff]
      %v5314 = vld [vmem:[#allocation5 + $0x8f0] sm:$0xff]
      %v5315 = vld [vmem:[#allocation5 + $0x8f8] sm:$0xff]
      %v5316 = vld [vmem:[#allocation5 + $0x900] sm:$0xff]
      %v5317 = vld [vmem:[#allocation5 + $0x908] sm:$0xff]
      %v5318 = vld [vmem:[#allocation5 + $0x910] sm:$0xff]
      %v5319 = vld [vmem:[#allocation5 + $0x918] sm:$0xff]
      %v5320 = vld [vmem:[#allocation5 + $0x920] sm:$0xff]
      %v5321 = vld [vmem:[#allocation5 + $0x928] sm:$0xff]
      %v5322 = vld [vmem:[#allocation5 + $0x930] sm:$0xff]
      %v5323 = vld [vmem:[#allocation5 + $0x938] sm:$0xff]
      %v5324 = vld [vmem:[#allocation5 + $0x940] sm:$0xff]
      %v5325 = vld [vmem:[#allocation5 + $0x948] sm:$0xff]
      %v5326 = vld [vmem:[#allocation5 + $0x950] sm:$0xff]
      %v5327 = vld [vmem:[#allocation5 + $0x958] sm:$0xff]
      %v5328 = vld [vmem:[#allocation5 + $0x960] sm:$0xff]
      %v5329 = vld [vmem:[#allocation5 + $0x968] sm:$0xff]
      %v5330 = vld [vmem:[#allocation5 + $0x970] sm:$0xff]
      %v5331 = vld [vmem:[#allocation5 + $0x978] sm:$0xff]
      %v5332 = vld [vmem:[#allocation5 + $0x980] sm:$0xff]
      %v5333 = vld [vmem:[#allocation5 + $0x988] sm:$0xff]
      %v5334 = vld [vmem:[#allocation5 + $0x990] sm:$0xff]
      %v5335 = vld [vmem:[#allocation5 + $0x998] sm:$0xff]
      %v5336 = vld [vmem:[#allocation5 + $0x9a0] sm:$0xff]
      %v5337 = vld [vmem:[#allocation5 + $0x9a8] sm:$0xff]
      %v5338 = vld [vmem:[#allocation5 + $0x9b0] sm:$0xff]
      %v5339 = vld [vmem:[#allocation5 + $0x9b8] sm:$0xff]
      %v5340 = vld [vmem:[#allocation5 + $0x9c0] sm:$0xff]
      %v5341 = vld [vmem:[#allocation5 + $0x9c8] sm:$0xff]
      %v5342 = vld [vmem:[#allocation5 + $0x9d0] sm:$0xff]
      %v5343 = vld [vmem:[#allocation5 + $0x9d8] sm:$0xff]
      %v5344 = vld [vmem:[#allocation5 + $0x9e0] sm:$0xff]
      %v5345 = vld [vmem:[#allocation5 + $0x9e8] sm:$0xff]
      %v5346 = vld [vmem:[#allocation5 + $0x9f0] sm:$0xff]
      %v5347 = vld [vmem:[#allocation5 + $0x9f8] sm:$0xff]
      %v5348 = vld [vmem:[#allocation5 + $0xa00] sm:$0xff]
      %v5349 = vld [vmem:[#allocation5 + $0xa08] sm:$0xff]
      %v5350 = vld [vmem:[#allocation5 + $0xa10] sm:$0xff]
      %v5351 = vld [vmem:[#allocation5 + $0xa18] sm:$0xff]
      %v5352 = vld [vmem:[#allocation5 + $0xa20] sm:$0xff]
      %v5353 = vld [vmem:[#allocation5 + $0xa28] sm:$0xff]
      %v5354 = vld [vmem:[#allocation5 + $0xa30] sm:$0xff]
      %v5355 = vld [vmem:[#allocation5 + $0xa38] sm:$0xff]
      %v5356 = vld [vmem:[#allocation5 + $0xa40] sm:$0xff]
      %v5357 = vld [vmem:[#allocation5 + $0xa48] sm:$0xff]
      %v5358 = vld [vmem:[#allocation5 + $0xa50] sm:$0xff]
      %v5359 = vld [vmem:[#allocation5 + $0xa58] sm:$0xff]
      %v5360 = vld [vmem:[#allocation5 + $0xa60] sm:$0xff]
      %v5361 = vld [vmem:[#allocation5 + $0xa68] sm:$0xff]
      %v5362 = vld [vmem:[#allocation5 + $0xa70] sm:$0xff]
      %v5363 = vld [vmem:[#allocation5 + $0xa78] sm:$0xff]
      %v5364 = vld [vmem:[#allocation5 + $0xa80] sm:$0xff]
      %v5365 = vld [vmem:[#allocation5 + $0xa88] sm:$0xff]
      %v5366 = vld [vmem:[#allocation5 + $0xa90] sm:$0xff]
      %v5367 = vld [vmem:[#allocation5 + $0xa98] sm:$0xff]
      %v5368 = vld [vmem:[#allocation5 + $0xaa0] sm:$0xff]
      %v5369 = vld [vmem:[#allocation5 + $0xaa8] sm:$0xff]
      %v5370 = vld [vmem:[#allocation5 + $0xab0] sm:$0xff]
      %v5371 = vld [vmem:[#allocation5 + $0xab8] sm:$0xff]
      %v5372 = vld [vmem:[#allocation5 + $0xac0] sm:$0xff]
      %v5373 = vld [vmem:[#allocation5 + $0xac8] sm:$0xff]
      %v5374 = vld [vmem:[#allocation5 + $0xad0] sm:$0xff]
      %v5375 = vld [vmem:[#allocation5 + $0xad8] sm:$0xff]
      %v5376 = vld [vmem:[#allocation5 + $0xae0] sm:$0xff]
      %v5377 = vld [vmem:[#allocation5 + $0xae8] sm:$0xff]
      %v5378 = vld [vmem:[#allocation5 + $0xaf0] sm:$0xff]
      %v5379 = vld [vmem:[#allocation5 + $0xaf8] sm:$0xff]
      %v5380 = vld [vmem:[#allocation5 + $0xb00] sm:$0xff]
      %v5381 = vld [vmem:[#allocation5 + $0xb08] sm:$0xff]
      %v5382 = vld [vmem:[#allocation5 + $0xb10] sm:$0xff]
      %v5383 = vld [vmem:[#allocation5 + $0xb18] sm:$0xff]
      %v5384 = vld [vmem:[#allocation5 + $0xb20] sm:$0xff]
      %v5385 = vld [vmem:[#allocation5 + $0xb28] sm:$0xff]
      %v5386 = vld [vmem:[#allocation5 + $0xb30] sm:$0xff]
      %v5387 = vld [vmem:[#allocation5 + $0xb38] sm:$0xff]
      %v5388 = vld [vmem:[#allocation5 + $0xb40] sm:$0xff]
      %v5389 = vld [vmem:[#allocation5 + $0xb48] sm:$0xff]
      %v5390 = vld [vmem:[#allocation5 + $0xb50] sm:$0xff]
      %v5391 = vld [vmem:[#allocation5 + $0xb58] sm:$0xff]
      %v5392 = vld [vmem:[#allocation5 + $0xb60] sm:$0xff]
      %v5393 = vld [vmem:[#allocation5 + $0xb68] sm:$0xff]
      %v5394 = vld [vmem:[#allocation5 + $0xb70] sm:$0xff]
      %v5395 = vld [vmem:[#allocation5 + $0xb78] sm:$0xff]
      %v5396 = vld [vmem:[#allocation5 + $0xb80] sm:$0xff]
      %v5397 = vld [vmem:[#allocation5 + $0xb88] sm:$0xff]
      %v5398 = vld [vmem:[#allocation5 + $0xb90] sm:$0xff]
      %v5399 = vld [vmem:[#allocation5 + $0xb98] sm:$0xff]
      %v5400 = vld [vmem:[#allocation5 + $0xba0] sm:$0xff]
      %v5401 = vld [vmem:[#allocation5 + $0xba8] sm:$0xff]
      %v5402 = vld [vmem:[#allocation5 + $0xbb0] sm:$0xff]
      %v5403 = vld [vmem:[#allocation5 + $0xbb8] sm:$0xff]
      %v5404 = vld [vmem:[#allocation5 + $0xbc0] sm:$0xff]
      %v5405 = vld [vmem:[#allocation5 + $0xbc8] sm:$0xff]
      %v5406 = vld [vmem:[#allocation5 + $0xbd0] sm:$0xff]
      %v5407 = vld [vmem:[#allocation5 + $0xbd8] sm:$0xff]
      %v5408 = vld [vmem:[#allocation5 + $0xbe0] sm:$0xff]
      %v5409 = vld [vmem:[#allocation5 + $0xbe8] sm:$0xff]
      %v5410 = vld [vmem:[#allocation5 + $0xbf0] sm:$0xff]
      %v5411 = vld [vmem:[#allocation5 + $0xbf8] sm:$0xff]
      %v5412 = vld [vmem:[#allocation5 + $0xc00] sm:$0xff]
      %v5413 = vld [vmem:[#allocation5 + $0xc08] sm:$0xff]
      %v5414 = vld [vmem:[#allocation5 + $0xc10] sm:$0xff]
      %v5415 = vld [vmem:[#allocation5 + $0xc18] sm:$0xff]
      %v5416 = vld [vmem:[#allocation5 + $0xc20] sm:$0xff]
      %v5417 = vld [vmem:[#allocation5 + $0xc28] sm:$0xff]
      %v5418 = vld [vmem:[#allocation5 + $0xc30] sm:$0xff]
      %v5419 = vld [vmem:[#allocation5 + $0xc38] sm:$0xff]
      %v5420 = vld [vmem:[%s4] sm:$0x7]
      %5422 = vset.pattern.permute.xlu0 0
      %5423 = vperm.xlu0 %5422, %v5420
      %v5424 = vpop.permute.xlu0 %5423
      %v5430 = vcombine.high %v5024, %v5024
      %v5432 = vunpack.c.l.s4 1983009808
      %v5433 = vunpack.c.0.s8 %v5432
      %v5434 = vlaneseq
      %v5435 = vshrl.u32 %v5434, 7
      %v5436 = vsub.s32 %v5433, %v5435
      %v5437 = vrot.slane %v5024, %v5436
      %v5439 = vunpack.c.l.s4 1983009808
      %v5440 = vunpack.c.0.s8 %v5439
      %v5441 = vlaneseq
      %v5442 = vshrl.u32 %v5441, 7
      %v5443 = vsub.s32 %v5440, %v5442
      %v5444 = vrot.slane %v5430, %v5443
      %v5445 = vcombine.high %v5437, %v5437
      %v5446 = vcombine.high %v5444, %v5444
      %v5447 = vcombine.high %v5025, %v5025
      %v5449 = vunpack.c.l.s4 1983009808
      %v5450 = vunpack.c.0.s8 %v5449
      %v5451 = vlaneseq
      %v5452 = vshrl.u32 %v5451, 7
      %v5453 = vsub.s32 %v5450, %v5452
      %v5454 = vrot.slane %v5025, %v5453
      %v5456 = vunpack.c.l.s4 1983009808
      %v5457 = vunpack.c.0.s8 %v5456
      %v5458 = vlaneseq
      %v5459 = vshrl.u32 %v5458, 7
      %v5460 = vsub.s32 %v5457, %v5459
      %v5461 = vrot.slane %v5447, %v5460
      %v5462 = vcombine.high %v5454, %v5454
      %v5463 = vcombine.high %v5461, %v5461
      %v5464 = vcombine.high %v5026, %v5026
      %v5466 = vunpack.c.l.s4 1983009808
      %v5467 = vunpack.c.0.s8 %v5466
      %v5468 = vlaneseq
      %v5469 = vshrl.u32 %v5468, 7
      %v5470 = vsub.s32 %v5467, %v5469
      %v5471 = vrot.slane %v5026, %v5470
      %v5473 = vunpack.c.l.s4 1983009808
      %v5474 = vunpack.c.0.s8 %v5473
      %v5475 = vlaneseq
      %v5476 = vshrl.u32 %v5475, 7
      %v5477 = vsub.s32 %v5474, %v5476
      %v5478 = vrot.slane %v5464, %v5477
      %v5479 = vcombine.high %v5471, %v5471
      %v5480 = vcombine.high %v5478, %v5478
      %v5482 = vunpack.c.l.s4 1983009808
      %v5483 = vunpack.c.0.s8 %v5482
      %v5484 = vlaneseq
      %v5485 = vshrl.u32 %v5484, 7
      %v5486 = vsub.s32 %v5483, %v5485
      %v5487 = vrot.slane %v5027, %v5486
      %v5501 = vsel %vm1122, %v5487, 0
      %5503 = vmatprep.subr.bf16.mxu0 %v5029
      %5504 = vmatpush1.bf16.msra.mxu0 %v5028
      %5505 = vmatprep.subr.bf16.mxu0 %v5033
      %5506 = vmatpush1.bf16.msra.mxu0 %v5032
      %5507 = vmatprep.subr.bf16.mxu0 %v5037
      %5508 = vmatpush1.bf16.msra.mxu0 %v5036
      %5509 = vmatprep.subr.bf16.mxu0 %v5041
      %5510 = vmatpush1.bf16.msra.mxu0 %v5040
      %5511 = vmatprep.subr.bf16.mxu0 %v5045
      %5512 = vmatpush1.bf16.msra.mxu0 %v5044
      %5513 = vmatprep.subr.bf16.mxu0 %v5049
      %5514 = vmatpush1.bf16.msra.mxu0 %v5048
      %5515 = vmatprep.subr.bf16.mxu0 %v5053
      %5516 = vmatpush1.bf16.msra.mxu0 %v5052
      %5517 = vmatprep.subr.bf16.mxu0 %v5057
      %5518 = vmatpush1.bf16.msra.mxu0 %v5056
      %5519 = vmatprep.subr.bf16.mxu0 %v5061
      %5520 = vmatpush1.bf16.msra.mxu0 %v5060
      %5521 = vmatprep.subr.bf16.mxu0 %v5065
      %5522 = vmatpush1.bf16.msra.mxu0 %v5064
      %5523 = vmatprep.subr.bf16.mxu0 %v5069
      %5524 = vmatpush1.bf16.msra.mxu0 %v5068
      %5525 = vmatprep.subr.bf16.mxu0 %v5073
      %5526 = vmatpush1.bf16.msra.mxu0 %v5072
      %5527 = vmatprep.subr.bf16.mxu0 %v5077
      %5528 = vmatpush1.bf16.msra.mxu0 %v5076
      %5529 = vmatprep.subr.bf16.mxu0 %v5081
      %5530 = vmatpush1.bf16.msra.mxu0 %v5080
      %5531 = vmatprep.subr.bf16.mxu0 %v5085
      %5532 = vmatpush1.bf16.msra.mxu0 %v5084
      %5533 = vmatprep.subr.bf16.mxu0 %v5089
      %5534 = vmatpush1.bf16.msra.mxu0 %v5088
      %5535 = vmatprep.mubr.bf16.mxu0 %v5445
      %5536 = vmatmul.mubr.bf16.gmra.mrb[0].mxu0 %v5437
      %v5537 = vpop.f32.mrb[0].mxu0
      %v5538 = vadd.f32 %v5424, %v5537
      %v5539 = vpop.f32.mrb[0].mxu0
      %v5540 = vadd.f32 %v5424, %v5539
      %v5541 = vpop.f32.mrb[0].mxu0
      %v5542 = vpop.f32.mrb[0].mxu0
      %5543 = vdwg.mxu0
      %5544 = vmatprep.subr.bf16.mxu0 %v5093
      %5545 = vmatpush1.bf16.msra.mxu0 %v5092
      %5546 = vmatprep.subr.bf16.mxu0 %v5097
      %5547 = vmatpush1.bf16.msra.mxu0 %v5096
      %5548 = vmatprep.subr.bf16.mxu0 %v5101
      %5549 = vmatpush1.bf16.msra.mxu0 %v5100
      %5550 = vmatprep.subr.bf16.mxu0 %v5105
      %5551 = vmatpush1.bf16.msra.mxu0 %v5104
      %5552 = vmatprep.subr.bf16.mxu0 %v5109
      %5553 = vmatpush1.bf16.msra.mxu0 %v5108
      %5554 = vmatprep.subr.bf16.mxu0 %v5113
      %5555 = vmatpush1.bf16.msra.mxu0 %v5112
      %5556 = vmatprep.subr.bf16.mxu0 %v5117
      %5557 = vmatpush1.bf16.msra.mxu0 %v5116
      %5558 = vmatprep.subr.bf16.mxu0 %v5121
      %5559 = vmatpush1.bf16.msra.mxu0 %v5120
      %5560 = vmatprep.subr.bf16.mxu0 %v5125
      %5561 = vmatpush1.bf16.msra.mxu0 %v5124
      %5562 = vmatprep.subr.bf16.mxu0 %v5129
      %5563 = vmatpush1.bf16.msra.mxu0 %v5128
      %5564 = vmatprep.subr.bf16.mxu0 %v5133
      %5565 = vmatpush1.bf16.msra.mxu0 %v5132
      %5566 = vmatprep.subr.bf16.mxu0 %v5137
      %5567 = vmatpush1.bf16.msra.mxu0 %v5136
      %5568 = vmatprep.subr.bf16.mxu0 %v5141
      %5569 = vmatpush1.bf16.msra.mxu0 %v5140
      %5570 = vmatprep.subr.bf16.mxu0 %v5145
      %5571 = vmatpush1.bf16.msra.mxu0 %v5144
      %5572 = vmatprep.subr.bf16.mxu0 %v5149
      %5573 = vmatpush1.bf16.msra.mxu0 %v5148
      %5574 = vmatprep.subr.bf16.mxu0 %v5153
      %5575 = vmatpush1.bf16.msra.mxu0 %v5152
      %5576 = vmatprep.mubr.bf16.mxu0 %v5446
      %5577 = vmatmul.mubr.bf16.gmra.mrb[0].mxu0 %v5444
      %v5578 = vpop.f32.mrb[0].mxu0
      %v5579 = vadd.f32 %v5538, %v5578
      %v5580 = vpop.f32.mrb[0].mxu0
      %v5581 = vadd.f32 %v5540, %v5580
      %v5582 = vpop.f32.mrb[0].mxu0
      %v5583 = vpop.f32.mrb[0].mxu0
      %5584 = vdwg.mxu0
      %5585 = vmatprep.subr.bf16.mxu0 %v5157
      %5586 = vmatpush1.bf16.msra.mxu0 %v5156
      %5587 = vmatprep.subr.bf16.mxu0 %v5161
      %5588 = vmatpush1.bf16.msra.mxu0 %v5160
      %5589 = vmatprep.subr.bf16.mxu0 %v5165
      %5590 = vmatpush1.bf16.msra.mxu0 %v5164
      %5591 = vmatprep.subr.bf16.mxu0 %v5169
      %5592 = vmatpush1.bf16.msra.mxu0 %v5168
      %5593 = vmatprep.subr.bf16.mxu0 %v5173
      %5594 = vmatpush1.bf16.msra.mxu0 %v5172
      %5595 = vmatprep.subr.bf16.mxu0 %v5177
      %5596 = vmatpush1.bf16.msra.mxu0 %v5176
      %5597 = vmatprep.subr.bf16.mxu0 %v5181
      %5598 = vmatpush1.bf16.msra.mxu0 %v5180
      %5599 = vmatprep.subr.bf16.mxu0 %v5185
      %5600 = vmatpush1.bf16.msra.mxu0 %v5184
      %5601 = vmatprep.subr.bf16.mxu0 %v5189
      %5602 = vmatpush1.bf16.msra.mxu0 %v5188
      %5603 = vmatprep.subr.bf16.mxu0 %v5193
      %5604 = vmatpush1.bf16.msra.mxu0 %v5192
      %5605 = vmatprep.subr.bf16.mxu0 %v5197
      %5606 = vmatpush1.bf16.msra.mxu0 %v5196
      %5607 = vmatprep.subr.bf16.mxu0 %v5201
      %5608 = vmatpush1.bf16.msra.mxu0 %v5200
      %5609 = vmatprep.subr.bf16.mxu0 %v5205
      %5610 = vmatpush1.bf16.msra.mxu0 %v5204
      %5611 = vmatprep.subr.bf16.mxu0 %v5209
      %5612 = vmatpush1.bf16.msra.mxu0 %v5208
      %5613 = vmatprep.subr.bf16.mxu0 %v5213
      %5614 = vmatpush1.bf16.msra.mxu0 %v5212
      %5615 = vmatprep.subr.bf16.mxu0 %v5217
      %5616 = vmatpush1.bf16.msra.mxu0 %v5216
      %5617 = vmatprep.mubr.bf16.mxu0 %v5462
      %5618 = vmatmul.mubr.bf16.gmra.mrb[0].mxu0 %v5454
      %v5619 = vpop.f32.mrb[0].mxu0
      %v5620 = vadd.f32 %v5579, %v5619
      %v5621 = vpop.f32.mrb[0].mxu0
      %v5622 = vadd.f32 %v5581, %v5621
      %v5623 = vpop.f32.mrb[0].mxu0
      %v5624 = vpop.f32.mrb[0].mxu0
      %5625 = vdwg.mxu0
      %5626 = vmatprep.subr.bf16.mxu0 %v5221
      %5627 = vmatpush1.bf16.msra.mxu0 %v5220
      %5628 = vmatprep.subr.bf16.mxu0 %v5225
      %5629 = vmatpush1.bf16.msra.mxu0 %v5224
      %5630 = vmatprep.subr.bf16.mxu0 %v5229
      %5631 = vmatpush1.bf16.msra.mxu0 %v5228
      %5632 = vmatprep.subr.bf16.mxu0 %v5233
      %5633 = vmatpush1.bf16.msra.mxu0 %v5232
      %5634 = vmatprep.subr.bf16.mxu0 %v5237
      %5635 = vmatpush1.bf16.msra.mxu0 %v5236
      %5636 = vmatprep.subr.bf16.mxu0 %v5241
      %5637 = vmatpush1.bf16.msra.mxu0 %v5240
      %5638 = vmatprep.subr.bf16.mxu0 %v5245
      %5639 = vmatpush1.bf16.msra.mxu0 %v5244
      %5640 = vmatprep.subr.bf16.mxu0 %v5249
      %5641 = vmatpush1.bf16.msra.mxu0 %v5248
      %5642 = vmatprep.subr.bf16.mxu0 %v5253
      %5643 = vmatpush1.bf16.msra.mxu0 %v5252
      %5644 = vmatprep.subr.bf16.mxu0 %v5257
      %5645 = vmatpush1.bf16.msra.mxu0 %v5256
      %5646 = vmatprep.subr.bf16.mxu0 %v5261
      %5647 = vmatpush1.bf16.msra.mxu0 %v5260
      %5648 = vmatprep.subr.bf16.mxu0 %v5265
      %5649 = vmatpush1.bf16.msra.mxu0 %v5264
      %5650 = vmatprep.subr.bf16.mxu0 %v5269
      %5651 = vmatpush1.bf16.msra.mxu0 %v5268
      %5652 = vmatprep.subr.bf16.mxu0 %v5273
      %5653 = vmatpush1.bf16.msra.mxu0 %v5272
      %5654 = vmatprep.subr.bf16.mxu0 %v5277
      %5655 = vmatpush1.bf16.msra.mxu0 %v5276
      %5656 = vmatprep.subr.bf16.mxu0 %v5281
      %5657 = vmatpush1.bf16.msra.mxu0 %v5280
      %5658 = vmatprep.mubr.bf16.mxu0 %v5463
      %5659 = vmatmul.mubr.bf16.gmra.mrb[0].mxu0 %v5461
      %v5660 = vpop.f32.mrb[0].mxu0
      %v5661 = vadd.f32 %v5620, %v5660
      %v5662 = vpop.f32.mrb[0].mxu0
      %v5663 = vadd.f32 %v5622, %v5662
      %v5664 = vpop.f32.mrb[0].mxu0
      %v5665 = vpop.f32.mrb[0].mxu0
      %5666 = vdwg.mxu0
      %5667 = vmatprep.subr.bf16.mxu0 %v5285
      %5668 = vmatpush1.bf16.msra.mxu0 %v5284
      %5669 = vmatprep.subr.bf16.mxu0 %v5289
      %5670 = vmatpush1.bf16.msra.mxu0 %v5288
      %5671 = vmatprep.subr.bf16.mxu0 %v5293
      %5672 = vmatpush1.bf16.msra.mxu0 %v5292
      %5673 = vmatprep.subr.bf16.mxu0 %v5297
      %5674 = vmatpush1.bf16.msra.mxu0 %v5296
      %5675 = vmatprep.subr.bf16.mxu0 %v5301
      %5676 = vmatpush1.bf16.msra.mxu0 %v5300
      %5677 = vmatprep.subr.bf16.mxu0 %v5305
      %5678 = vmatpush1.bf16.msra.mxu0 %v5304
      %5679 = vmatprep.subr.bf16.mxu0 %v5309
      %5680 = vmatpush1.bf16.msra.mxu0 %v5308
      %5681 = vmatprep.subr.bf16.mxu0 %v5313
      %5682 = vmatpush1.bf16.msra.mxu0 %v5312
      %5683 = vmatprep.subr.bf16.mxu0 %v5317
      %5684 = vmatpush1.bf16.msra.mxu0 %v5316
      %5685 = vmatprep.subr.bf16.mxu0 %v5321
      %5686 = vmatpush1.bf16.msra.mxu0 %v5320
      %5687 = vmatprep.subr.bf16.mxu0 %v5325
      %5688 = vmatpush1.bf16.msra.mxu0 %v5324
      %5689 = vmatprep.subr.bf16.mxu0 %v5329
      %5690 = vmatpush1.bf16.msra.mxu0 %v5328
      %5691 = vmatprep.subr.bf16.mxu0 %v5333
      %5692 = vmatpush1.bf16.msra.mxu0 %v5332
      %5693 = vmatprep.subr.bf16.mxu0 %v5337
      %5694 = vmatpush1.bf16.msra.mxu0 %v5336
      %5695 = vmatprep.subr.bf16.mxu0 %v5341
      %5696 = vmatpush1.bf16.msra.mxu0 %v5340
      %5697 = vmatprep.subr.bf16.mxu0 %v5345
      %5698 = vmatpush1.bf16.msra.mxu0 %v5344
      %5699 = vmatprep.mubr.bf16.mxu0 %v5479
      %5700 = vmatmul.mubr.bf16.gmra.mrb[0].mxu0 %v5471
      %v5701 = vpop.f32.mrb[0].mxu0
      %v5702 = vadd.f32 %v5661, %v5701
      %v5703 = vpop.f32.mrb[0].mxu0
      %v5704 = vadd.f32 %v5663, %v5703
      %v5705 = vpop.f32.mrb[0].mxu0
      %v5706 = vpop.f32.mrb[0].mxu0
      %5707 = vdwg.mxu0
      %5708 = vmatprep.subr.bf16.mxu0 %v5349
      %5709 = vmatpush1.bf16.msra.mxu0 %v5348
      %5710 = vmatprep.subr.bf16.mxu0 %v5353
      %5711 = vmatpush1.bf16.msra.mxu0 %v5352
      %5712 = vmatprep.subr.bf16.mxu0 %v5357
      %5713 = vmatpush1.bf16.msra.mxu0 %v5356
      %5714 = vmatprep.subr.bf16.mxu0 %v5361
      %5715 = vmatpush1.bf16.msra.mxu0 %v5360
      %5716 = vmatprep.subr.bf16.mxu0 %v5365
      %5717 = vmatpush1.bf16.msra.mxu0 %v5364
      %5718 = vmatprep.subr.bf16.mxu0 %v5369
      %5719 = vmatpush1.bf16.msra.mxu0 %v5368
      %5720 = vmatprep.subr.bf16.mxu0 %v5373
      %5721 = vmatpush1.bf16.msra.mxu0 %v5372
      %5722 = vmatprep.subr.bf16.mxu0 %v5377
      %5723 = vmatpush1.bf16.msra.mxu0 %v5376
      %5724 = vmatprep.subr.bf16.mxu0 %v5381
      %5725 = vmatpush1.bf16.msra.mxu0 %v5380
      %5726 = vmatprep.subr.bf16.mxu0 %v5385
      %5727 = vmatpush1.bf16.msra.mxu0 %v5384
      %5728 = vmatprep.subr.bf16.mxu0 %v5389
      %5729 = vmatpush1.bf16.msra.mxu0 %v5388
      %5730 = vmatprep.subr.bf16.mxu0 %v5393
      %5731 = vmatpush1.bf16.msra.mxu0 %v5392
      %5732 = vmatprep.subr.bf16.mxu0 %v5397
      %5733 = vmatpush1.bf16.msra.mxu0 %v5396
      %5734 = vmatprep.subr.bf16.mxu0 %v5401
      %5735 = vmatpush1.bf16.msra.mxu0 %v5400
      %5736 = vmatprep.subr.bf16.mxu0 %v5405
      %5737 = vmatpush1.bf16.msra.mxu0 %v5404
      %5738 = vmatprep.subr.bf16.mxu0 %v5409
      %5739 = vmatpush1.bf16.msra.mxu0 %v5408
      %5740 = vmatprep.mubr.bf16.mxu0 %v5480
      %5741 = vmatmul.mubr.bf16.gmra.mrb[0].mxu0 %v5478
      %v5742 = vpop.f32.mrb[0].mxu0
      %v5743 = vadd.f32 %v5702, %v5742
      %v5744 = vpop.f32.mrb[0].mxu0
      %v5745 = vadd.f32 %v5704, %v5744
      %v5746 = vpop.f32.mrb[0].mxu0
      %v5747 = vpop.f32.mrb[0].mxu0
      %5748 = vdwg.mxu0
      %5749 = vmatprep.subr.bf16.mxu0 %v5413
      %5750 = vmatpush1.bf16.msra.mxu0 %v5412
      %5751 = vmatprep.subr.bf16.mxu0 %v5417
      %5752 = vmatpush1.bf16.msra.mxu0 %v5416
      %5753 = vmatprep.subr.bf16.mxu0 0
      %5754 = vmatpush1.bf16.msra.mxu0 0
      %5755 = vmatprep.subr.bf16.mxu0 0
      %5756 = vmatpush1.bf16.msra.mxu0 0
      %5757 = vmatprep.subr.bf16.mxu0 0
      %5758 = vmatpush1.bf16.msra.mxu0 0
      %5759 = vmatprep.subr.bf16.mxu0 0
      %5760 = vmatpush1.bf16.msra.mxu0 0
      %5761 = vmatprep.subr.bf16.mxu0 0
      %5762 = vmatpush1.bf16.msra.mxu0 0
      %5763 = vmatprep.subr.bf16.mxu0 0
      %5764 = vmatpush1.bf16.msra.mxu0 0
      %5765 = vmatprep.subr.bf16.mxu0 0
      %5766 = vmatpush1.bf16.msra.mxu0 0
      %5767 = vmatprep.subr.bf16.mxu0 0
      %5768 = vmatpush1.bf16.msra.mxu0 0
      %5769 = vmatprep.subr.bf16.mxu0 0
      %5770 = vmatpush1.bf16.msra.mxu0 0
      %5771 = vmatprep.subr.bf16.mxu0 0
      %5772 = vmatpush1.bf16.msra.mxu0 0
      %5773 = vmatprep.subr.bf16.mxu0 0
      %5774 = vmatpush1.bf16.msra.mxu0 0
      %5775 = vmatprep.subr.bf16.mxu0 0
      %5776 = vmatpush1.bf16.msra.mxu0 0
      %5777 = vmatprep.subr.bf16.mxu0 0
      %5778 = vmatpush1.bf16.msra.mxu0 0
      %5779 = vmatprep.subr.bf16.mxu0 0
      %5780 = vmatpush1.bf16.msra.mxu0 0
      %5781 = vmatprep.mubr.bf16.mxu0 0
      %5782 = vmatmul.mubr.bf16.gmra.mrb[0].mxu0 %v5501
      %v5783 = vpop.f32.mrb[0].mxu0
      %v5784 = vadd.f32 %v5743, %v5783
      %v5785 = vpop.f32.mrb[0].mxu0
      %v5786 = vadd.f32 %v5745, %v5785
      %v5787 = vpop.f32.mrb[0].mxu0
      %v5788 = vpop.f32.mrb[0].mxu0
      %5789 = vdwg.mxu0
      %5790 = vmatprep.subr.bf16.mxu0 %v5031
      %5791 = vmatpush1.bf16.msra.mxu0 %v5030
      %5792 = vmatprep.subr.bf16.mxu0 %v5035
      %5793 = vmatpush1.bf16.msra.mxu0 %v5034
      %5794 = vmatprep.subr.bf16.mxu0 %v5039
      %5795 = vmatpush1.bf16.msra.mxu0 %v5038
      %5796 = vmatprep.subr.bf16.mxu0 %v5043
      %5797 = vmatpush1.bf16.msra.mxu0 %v5042
      %5798 = vmatprep.subr.bf16.mxu0 %v5047
      %5799 = vmatpush1.bf16.msra.mxu0 %v5046
      %5800 = vmatprep.subr.bf16.mxu0 %v5051
      %5801 = vmatpush1.bf16.msra.mxu0 %v5050
      %5802 = vmatprep.subr.bf16.mxu0 %v5055
      %5803 = vmatpush1.bf16.msra.mxu0 %v5054
      %5804 = vmatprep.subr.bf16.mxu0 %v5059
      %5805 = vmatpush1.bf16.msra.mxu0 %v5058
      %5806 = vmatprep.subr.bf16.mxu0 %v5063
      %5807 = vmatpush1.bf16.msra.mxu0 %v5062
      %5808 = vmatprep.subr.bf16.mxu0 %v5067
      %5809 = vmatpush1.bf16.msra.mxu0 %v5066
      %5810 = vmatprep.subr.bf16.mxu0 %v5071
      %5811 = vmatpush1.bf16.msra.mxu0 %v5070
      %5812 = vmatprep.subr.bf16.mxu0 %v5075
      %5813 = vmatpush1.bf16.msra.mxu0 %v5074
      %5814 = vmatprep.subr.bf16.mxu0 %v5079
      %5815 = vmatpush1.bf16.msra.mxu0 %v5078
      %5816 = vmatprep.subr.bf16.mxu0 %v5083
      %5817 = vmatpush1.bf16.msra.mxu0 %v5082
      %5818 = vmatprep.subr.bf16.mxu0 %v5087
      %5819 = vmatpush1.bf16.msra.mxu0 %v5086
      %5820 = vmatprep.subr.bf16.mxu0 %v5091
      %5821 = vmatpush1.bf16.msra.mxu0 %v5090
      %5822 = vmatprep.mubr.bf16.mxu0 %v5445
      %5823 = vmatmul.mubr.bf16.gmra.mrb[0].mxu0 %v5437
      %v5824 = vpop.f32.mrb[0].mxu0
      %v5825 = vadd.f32 %v5424, %v5824
      %v5826 = vpop.f32.mrb[0].mxu0
      %v5827 = vpop.f32.mrb[0].mxu0
      %v5828 = vpop.f32.mrb[0].mxu0
      %5829 = vdwg.mxu0
      %5830 = vmatprep.subr.bf16.mxu0 %v5095
      %5831 = vmatpush1.bf16.msra.mxu0 %v5094
      %5832 = vmatprep.subr.bf16.mxu0 %v5099
      %5833 = vmatpush1.bf16.msra.mxu0 %v5098
      %5834 = vmatprep.subr.bf16.mxu0 %v5103
      %5835 = vmatpush1.bf16.msra.mxu0 %v5102
      %5836 = vmatprep.subr.bf16.mxu0 %v5107
      %5837 = vmatpush1.bf16.msra.mxu0 %v5106
      %5838 = vmatprep.subr.bf16.mxu0 %v5111
      %5839 = vmatpush1.bf16.msra.mxu0 %v5110
      %5840 = vmatprep.subr.bf16.mxu0 %v5115
      %5841 = vmatpush1.bf16.msra.mxu0 %v5114
      %5842 = vmatprep.subr.bf16.mxu0 %v5119
      %5843 = vmatpush1.bf16.msra.mxu0 %v5118
      %5844 = vmatprep.subr.bf16.mxu0 %v5123
      %5845 = vmatpush1.bf16.msra.mxu0 %v5122
      %5846 = vmatprep.subr.bf16.mxu0 %v5127
      %5847 = vmatpush1.bf16.msra.mxu0 %v5126
      %5848 = vmatprep.subr.bf16.mxu0 %v5131
      %5849 = vmatpush1.bf16.msra.mxu0 %v5130
      %5850 = vmatprep.subr.bf16.mxu0 %v5135
      %5851 = vmatpush1.bf16.msra.mxu0 %v5134
      %5852 = vmatprep.subr.bf16.mxu0 %v5139
      %5853 = vmatpush1.bf16.msra.mxu0 %v5138
      %5854 = vmatprep.subr.bf16.mxu0 %v5143
      %5855 = vmatpush1.bf16.msra.mxu0 %v5142
      %5856 = vmatprep.subr.bf16.mxu0 %v5147
      %5857 = vmatpush1.bf16.msra.mxu0 %v5146
      %5858 = vmatprep.subr.bf16.mxu0 %v5151
      %5859 = vmatpush1.bf16.msra.mxu0 %v5150
      %5860 = vmatprep.subr.bf16.mxu0 %v5155
      %5861 = vmatpush1.bf16.msra.mxu0 %v5154
      %5862 = vmatprep.mubr.bf16.mxu0 %v5446
      %5863 = vmatmul.mubr.bf16.gmra.mrb[0].mxu0 %v5444
      %v5864 = vpop.f32.mrb[0].mxu0
      %v5865 = vadd.f32 %v5825, %v5864
      %v5866 = vpop.f32.mrb[0].mxu0
      %v5867 = vpop.f32.mrb[0].mxu0
      %v5868 = vpop.f32.mrb[0].mxu0
      %5869 = vdwg.mxu0
      %5870 = vmatprep.subr.bf16.mxu0 %v5159
      %5871 = vmatpush1.bf16.msra.mxu0 %v5158
      %5872 = vmatprep.subr.bf16.mxu0 %v5163
      %5873 = vmatpush1.bf16.msra.mxu0 %v5162
      %5874 = vmatprep.subr.bf16.mxu0 %v5167
      %5875 = vmatpush1.bf16.msra.mxu0 %v5166
      %5876 = vmatprep.subr.bf16.mxu0 %v5171
      %5877 = vmatpush1.bf16.msra.mxu0 %v5170
      %5878 = vmatprep.subr.bf16.mxu0 %v5175
      %5879 = vmatpush1.bf16.msra.mxu0 %v5174
      %5880 = vmatprep.subr.bf16.mxu0 %v5179
      %5881 = vmatpush1.bf16.msra.mxu0 %v5178
      %5882 = vmatprep.subr.bf16.mxu0 %v5183
      %5883 = vmatpush1.bf16.msra.mxu0 %v5182
      %5884 = vmatprep.subr.bf16.mxu0 %v5187
      %5885 = vmatpush1.bf16.msra.mxu0 %v5186
      %5886 = vmatprep.subr.bf16.mxu0 %v5191
      %5887 = vmatpush1.bf16.msra.mxu0 %v5190
      %5888 = vmatprep.subr.bf16.mxu0 %v5195
      %5889 = vmatpush1.bf16.msra.mxu0 %v5194
      %5890 = vmatprep.subr.bf16.mxu0 %v5199
      %5891 = vmatpush1.bf16.msra.mxu0 %v5198
      %5892 = vmatprep.subr.bf16.mxu0 %v5203
      %5893 = vmatpush1.bf16.msra.mxu0 %v5202
      %5894 = vmatprep.subr.bf16.mxu0 %v5207
      %5895 = vmatpush1.bf16.msra.mxu0 %v5206
      %5896 = vmatprep.subr.bf16.mxu0 %v5211
      %5897 = vmatpush1.bf16.msra.mxu0 %v5210
      %5898 = vmatprep.subr.bf16.mxu0 %v5215
      %5899 = vmatpush1.bf16.msra.mxu0 %v5214
      %5900 = vmatprep.subr.bf16.mxu0 %v5219
      %5901 = vmatpush1.bf16.msra.mxu0 %v5218
      %5902 = vmatprep.mubr.bf16.mxu0 %v5462
      %5903 = vmatmul.mubr.bf16.gmra.mrb[0].mxu0 %v5454
      %v5904 = vpop.f32.mrb[0].mxu0
      %v5905 = vadd.f32 %v5865, %v5904
      %v5906 = vpop.f32.mrb[0].mxu0
      %v5907 = vpop.f32.mrb[0].mxu0
      %v5908 = vpop.f32.mrb[0].mxu0
      %5909 = vdwg.mxu0
      %5910 = vmatprep.subr.bf16.mxu0 %v5223
      %5911 = vmatpush1.bf16.msra.mxu0 %v5222
      %5912 = vmatprep.subr.bf16.mxu0 %v5227
      %5913 = vmatpush1.bf16.msra.mxu0 %v5226
      %5914 = vmatprep.subr.bf16.mxu0 %v5231
      %5915 = vmatpush1.bf16.msra.mxu0 %v5230
      %5916 = vmatprep.subr.bf16.mxu0 %v5235
      %5917 = vmatpush1.bf16.msra.mxu0 %v5234
      %5918 = vmatprep.subr.bf16.mxu0 %v5239
      %5919 = vmatpush1.bf16.msra.mxu0 %v5238
      %5920 = vmatprep.subr.bf16.mxu0 %v5243
      %5921 = vmatpush1.bf16.msra.mxu0 %v5242
      %5922 = vmatprep.subr.bf16.mxu0 %v5247
      %5923 = vmatpush1.bf16.msra.mxu0 %v5246
      %5924 = vmatprep.subr.bf16.mxu0 %v5251
      %5925 = vmatpush1.bf16.msra.mxu0 %v5250
      %5926 = vmatprep.subr.bf16.mxu0 %v5255
      %5927 = vmatpush1.bf16.msra.mxu0 %v5254
      %5928 = vmatprep.subr.bf16.mxu0 %v5259
      %5929 = vmatpush1.bf16.msra.mxu0 %v5258
      %5930 = vmatprep.subr.bf16.mxu0 %v5263
      %5931 = vmatpush1.bf16.msra.mxu0 %v5262
      %5932 = vmatprep.subr.bf16.mxu0 %v5267
      %5933 = vmatpush1.bf16.msra.mxu0 %v5266
      %5934 = vmatprep.subr.bf16.mxu0 %v5271
      %5935 = vmatpush1.bf16.msra.mxu0 %v5270
      %5936 = vmatprep.subr.bf16.mxu0 %v5275
      %5937 = vmatpush1.bf16.msra.mxu0 %v5274
      %5938 = vmatprep.subr.bf16.mxu0 %v5279
      %5939 = vmatpush1.bf16.msra.mxu0 %v5278
      %5940 = vmatprep.subr.bf16.mxu0 %v5283
      %5941 = vmatpush1.bf16.msra.mxu0 %v5282
      %5942 = vmatprep.mubr.bf16.mxu0 %v5463
      %5943 = vmatmul.mubr.bf16.gmra.mrb[0].mxu0 %v5461
      %v5944 = vpop.f32.mrb[0].mxu0
      %v5945 = vadd.f32 %v5905, %v5944
      %v5946 = vpop.f32.mrb[0].mxu0
      %v5947 = vpop.f32.mrb[0].mxu0
      %v5948 = vpop.f32.mrb[0].mxu0
      %5949 = vdwg.mxu0
      %5950 = vmatprep.subr.bf16.mxu0 %v5287
      %5951 = vmatpush1.bf16.msra.mxu0 %v5286
      %5952 = vmatprep.subr.bf16.mxu0 %v5291
      %5953 = vmatpush1.bf16.msra.mxu0 %v5290
      %5954 = vmatprep.subr.bf16.mxu0 %v5295
      %5955 = vmatpush1.bf16.msra.mxu0 %v5294
      %5956 = vmatprep.subr.bf16.mxu0 %v5299
      %5957 = vmatpush1.bf16.msra.mxu0 %v5298
      %5958 = vmatprep.subr.bf16.mxu0 %v5303
      %5959 = vmatpush1.bf16.msra.mxu0 %v5302
      %5960 = vmatprep.subr.bf16.mxu0 %v5307
      %5961 = vmatpush1.bf16.msra.mxu0 %v5306
      %5962 = vmatprep.subr.bf16.mxu0 %v5311
      %5963 = vmatpush1.bf16.msra.mxu0 %v5310
      %5964 = vmatprep.subr.bf16.mxu0 %v5315
      %5965 = vmatpush1.bf16.msra.mxu0 %v5314
      %5966 = vmatprep.subr.bf16.mxu0 %v5319
      %5967 = vmatpush1.bf16.msra.mxu0 %v5318
      %5968 = vmatprep.subr.bf16.mxu0 %v5323
      %5969 = vmatpush1.bf16.msra.mxu0 %v5322
      %5970 = vmatprep.subr.bf16.mxu0 %v5327
      %5971 = vmatpush1.bf16.msra.mxu0 %v5326
      %5972 = vmatprep.subr.bf16.mxu0 %v5331
      %5973 = vmatpush1.bf16.msra.mxu0 %v5330
      %5974 = vmatprep.subr.bf16.mxu0 %v5335
      %5975 = vmatpush1.bf16.msra.mxu0 %v5334
      %5976 = vmatprep.subr.bf16.mxu0 %v5339
      %5977 = vmatpush1.bf16.msra.mxu0 %v5338
      %5978 = vmatprep.subr.bf16.mxu0 %v5343
      %5979 = vmatpush1.bf16.msra.mxu0 %v5342
      %5980 = vmatprep.subr.bf16.mxu0 %v5347
      %5981 = vmatpush1.bf16.msra.mxu0 %v5346
      %5982 = vmatprep.mubr.bf16.mxu0 %v5479
      %5983 = vmatmul.mubr.bf16.gmra.mrb[0].mxu0 %v5471
      %v5984 = vpop.f32.mrb[0].mxu0
      %v5985 = vadd.f32 %v5945, %v5984
      %v5986 = vpop.f32.mrb[0].mxu0
      %v5987 = vpop.f32.mrb[0].mxu0
      %v5988 = vpop.f32.mrb[0].mxu0
      %5989 = vdwg.mxu0
      %5990 = vmatprep.subr.bf16.mxu0 %v5351
      %5991 = vmatpush1.bf16.msra.mxu0 %v5350
      %5992 = vmatprep.subr.bf16.mxu0 %v5355
      %5993 = vmatpush1.bf16.msra.mxu0 %v5354
      %5994 = vmatprep.subr.bf16.mxu0 %v5359
      %5995 = vmatpush1.bf16.msra.mxu0 %v5358
      %5996 = vmatprep.subr.bf16.mxu0 %v5363
      %5997 = vmatpush1.bf16.msra.mxu0 %v5362
      %5998 = vmatprep.subr.bf16.mxu0 %v5367
      %5999 = vmatpush1.bf16.msra.mxu0 %v5366
      %6000 = vmatprep.subr.bf16.mxu0 %v5371
      %6001 = vmatpush1.bf16.msra.mxu0 %v5370
      %6002 = vmatprep.subr.bf16.mxu0 %v5375
      %6003 = vmatpush1.bf16.msra.mxu0 %v5374
      %6004 = vmatprep.subr.bf16.mxu0 %v5379
      %6005 = vmatpush1.bf16.msra.mxu0 %v5378
      %6006 = vmatprep.subr.bf16.mxu0 %v5383
      %6007 = vmatpush1.bf16.msra.mxu0 %v5382
      %6008 = vmatprep.subr.bf16.mxu0 %v5387
      %6009 = vmatpush1.bf16.msra.mxu0 %v5386
      %6010 = vmatprep.subr.bf16.mxu0 %v5391
      %6011 = vmatpush1.bf16.msra.mxu0 %v5390
      %6012 = vmatprep.subr.bf16.mxu0 %v5395
      %6013 = vmatpush1.bf16.msra.mxu0 %v5394
      %6014 = vmatprep.subr.bf16.mxu0 %v5399
      %6015 = vmatpush1.bf16.msra.mxu0 %v5398
      %6016 = vmatprep.subr.bf16.mxu0 %v5403
      %6017 = vmatpush1.bf16.msra.mxu0 %v5402
      %6018 = vmatprep.subr.bf16.mxu0 %v5407
      %6019 = vmatpush1.bf16.msra.mxu0 %v5406
      %6020 = vmatprep.subr.bf16.mxu0 %v5411
      %6021 = vmatpush1.bf16.msra.mxu0 %v5410
      %6022 = vmatprep.mubr.bf16.mxu0 %v5480
      %6023 = vmatmul.mubr.bf16.gmra.mrb[0].mxu0 %v5478
      %v6024 = vpop.f32.mrb[0].mxu0
      %v6025 = vadd.f32 %v5985, %v6024
      %v6026 = vpop.f32.mrb[0].mxu0
      %v6027 = vpop.f32.mrb[0].mxu0
      %v6028 = vpop.f32.mrb[0].mxu0
      %6029 = vdwg.mxu0
      %6030 = vmatprep.subr.bf16.mxu0 %v5415
      %6031 = vmatpush1.bf16.msra.mxu0 %v5414
      %6032 = vmatprep.subr.bf16.mxu0 %v5419
      %6033 = vmatpush1.bf16.msra.mxu0 %v5418
      %6034 = vmatprep.subr.bf16.mxu0 0
      %6035 = vmatpush1.bf16.msra.mxu0 0
      %6036 = vmatprep.subr.bf16.mxu0 0
      %6037 = vmatpush1.bf16.msra.mxu0 0
      %6038 = vmatprep.subr.bf16.mxu0 0
      %6039 = vmatpush1.bf16.msra.mxu0 0
      %6040 = vmatprep.subr.bf16.mxu0 0
      %6041 = vmatpush1.bf16.msra.mxu0 0
      %6042 = vmatprep.subr.bf16.mxu0 0
      %6043 = vmatpush1.bf16.msra.mxu0 0
      %6044 = vmatprep.subr.bf16.mxu0 0
      %6045 = vmatpush1.bf16.msra.mxu0 0
      %6046 = vmatprep.subr.bf16.mxu0 0
      %6047 = vmatpush1.bf16.msra.mxu0 0
      %6048 = vmatprep.subr.bf16.mxu0 0
      %6049 = vmatpush1.bf16.msra.mxu0 0
      %6050 = vmatprep.subr.bf16.mxu0 0
      %6051 = vmatpush1.bf16.msra.mxu0 0
      %6052 = vmatprep.subr.bf16.mxu0 0
      %6053 = vmatpush1.bf16.msra.mxu0 0
      %6054 = vmatprep.subr.bf16.mxu0 0
      %6055 = vmatpush1.bf16.msra.mxu0 0
      %6056 = vmatprep.subr.bf16.mxu0 0
      %6057 = vmatpush1.bf16.msra.mxu0 0
      %6058 = vmatprep.subr.bf16.mxu0 0
      %6059 = vmatpush1.bf16.msra.mxu0 0
      %6060 = vmatprep.subr.bf16.mxu0 0
      %6061 = vmatpush1.bf16.msra.mxu0 0
      %6062 = vmatprep.mubr.bf16.mxu0 0
      %6063 = vmatmul.mubr.bf16.gmra.mrb[0].mxu0 %v5501
      %v6064 = vpop.f32.mrb[0].mxu0
      %v6065 = vadd.f32 %v6025, %v6064
      %v6066 = vpop.f32.mrb[0].mxu0
      %v6067 = vpop.f32.mrb[0].mxu0
      %v6068 = vpop.f32.mrb[0].mxu0
      %6069 = vdwg.mxu0
      %6071 = vrot.lane.b32.xlu0 %v5784, 122
      %v6072 = vpop.permute.xlu0 %6071
      %6074 = vrot.lane.b32.xlu0 %v5784, 116
      %v6075 = vpop.permute.xlu0 %6074
      %6077 = vrot.lane.b32.xlu0 %v5784, 110
      %v6078 = vpop.permute.xlu0 %6077
      %6080 = vrot.lane.b32.xlu0 %v5784, 104
      %v6081 = vpop.permute.xlu0 %6080
      %6083 = vrot.lane.b32.xlu0 %v5784, 98
      %v6084 = vpop.permute.xlu0 %6083
      %6087 = vrot.lane.b32.xlu0 %v5786, 92
      %v6088 = vpop.permute.xlu0 %6087
      %6090 = vrot.lane.b32.xlu0 %v5786, 86
      %v6091 = vpop.permute.xlu0 %6090
      %6093 = vrot.lane.b32.xlu0 %v5786, 80
      %v6094 = vpop.permute.xlu0 %6093
      %6096 = vrot.lane.b32.xlu0 %v5786, 74
      %v6097 = vpop.permute.xlu0 %6096
      %6099 = vrot.lane.b32.xlu0 %v5786, 68
      %v6100 = vpop.permute.xlu0 %6099
      %6103 = vrot.lane.b32.xlu0 %v5786, 62
      %v6104 = vpop.permute.xlu0 %6103
      %6105 = vrot.lane.b32.xlu0 %v6065, 62
      %v6106 = vpop.permute.xlu0 %6105
      %vm6107 = vcmask 506880
      %v6108 = vsel %vm6107, %v6104, %v6106
      %6110 = vrot.lane.b32.xlu0 %v6065, 56
      %v6111 = vpop.permute.xlu0 %6110
      %6113 = vrot.lane.b32.xlu0 %v6065, 50
      %v6114 = vpop.permute.xlu0 %6113
      %6116 = vrot.lane.b32.xlu0 %v6065, 44
      %v6117 = vpop.permute.xlu0 %6116
      %6119 = vrot.lane.b32.xlu0 %v6065, 38
      %v6120 = vpop.permute.xlu0 %6119
      %v6122 = vsel %vm1117, %v5784, %v6072
      %v6123 = vsel %vm1122, %v6122, %v6075
      %v6124 = vsel %vm1127, %v6123, %v6078
      %v6125 = vsel %vm1132, %v6124, %v6081
      %v6126 = vsel %vm1137, %v6125, %v6084
      %v6127 = vsel %vm1142, %v6126, %v6088
      %v6128 = vsel %vm1147, %v6127, %v6091
      %v6129 = vsel %vm1117, %v6094, %v6097
      %v6130 = vsel %vm1122, %v6129, %v6100
      %v6131 = vsel %vm1127, %v6130, %v6108
      %v6132 = vsel %vm1132, %v6131, %v6111
      %v6133 = vsel %vm1137, %v6132, %v6114
      %v6134 = vsel %vm1142, %v6133, %v6117
      %v6135 = vsel %vm1147, %v6134, %v6120
      %v6136 = vtanh.pop %v6128
      %v6137 = vtanh.pop %v6135
      %v6140 = vcombine.low %v6136, %v6137
      %6142 = vst [vmem:[%s224] sm:$0x77] %v6140
      %p6143 = scmp.lt.s32.totalorder %s16, 1
      %s6144 = scalar_select %p6143, %s16, 1
      %s6145 = smul.addr %s6144, 2
      %s6146 = smul.addr %s6145, 4
      %s6147 = scalar_lea.vmem %s5, %s6146
      // Predicated region
      $region41: #{image_generator_forward.1} parent=39 // pred_check
        %p6148 = pneg %p144
      $region42: #{image_generator_forward.1} parent=39 // pred_check_branch
        %6150 = sbr.rel (%p6148) target = $region44
      $region43: #{image_generator_forward.1} parent=39 // pred_region
        _
      $region44: #{image_generator_forward.1} parent=39 // pred_fallthru
        _
    $region40: #{image_generator_forward.1} parent=5 // pred_fallthru
      _
    %p6151 = scmp.le.s32.totalorder 2, %s11
    // Predicated region
    $region45: #{image_generator_forward.1} parent=5 // pred_check
      %p6152 = pneg %p6151
    $region46: #{image_generator_forward.1} parent=5 // pred_check_branch
      %6154 = sbr.rel (%p6152) target = $region48
    $region47: #{image_generator_forward.1} parent=5 // pred_region
      %s6155 = ssub.s32 %s11, 2
      // Predicated region
      $region49: #{image_generator_forward.1} parent=47 // pred_check
        %p6156 = pneg %p150
      $region50: #{image_generator_forward.1} parent=47 // pred_check_branch
        %6158 = sbr.rel (%p6156) target = $region52
      $region51: #{image_generator_forward.1} parent=47 // pred_region
        %p6159 = scmp.lt.s32.totalorder %s17, 1
        %s6160 = scalar_select %p6159, %s17, 1
        %s6161 = smul.addr %s6160, 2
        %s6162 = smul.addr %s6161, 4
        %s6163 = scalar_lea.vmem %s5, %s6162
      $region52: #{image_generator_forward.1} parent=47 // pred_fallthru
        _
    $region48: #{image_generator_forward.1} parent=5 // pred_fallthru
      _
  $region6: #{image_generator_forward.1} parent=0 // loop_footer
    %s15 = sadd.s32 1, %s11
  $region7: #{image_generator_forward.1} parent=0 // loop_footer_branch
    %10 = sbr.rel target = $region3
  $region8: #{image_generator_forward.1} parent=0 // loop_exit
    _

</llo_original>
